<compile_context>
chip_gen: v6e
topology: v6e:2x2x1
jax: 0.10.0
libtpu: 0.0.40
codegen_flags: <defaults>
</compile_context>

<pallas_src>
import math
from functools import partial

import jax
import jax.numpy as jnp
from jax.experimental import pallas as pl
from jax.experimental.pallas import tpu as pltpu


# --------------------------------------------------------------------------
# Configuration helpers
# --------------------------------------------------------------------------

def _round_up(x, m):
    return (x + m - 1) // m * m


def _vmem_limit_bytes():
    # Conservative default (safe for v7x's 64 MiB part); use the reported
    # capacity when available (v5e/v6e: 128 MiB -> 96 MiB scoped limit).
    cap = 64 * 1024 * 1024
    try:
        cap = int(pltpu.get_tpu_info().vmem_capacity_bytes)
    except Exception:
        pass
    return int(min((cap * 3) // 4, 100 * 1024 * 1024))


_VMEM_LIMIT = _vmem_limit_bytes()

# Single-buffer constant-index operands (weights/biases/LN params): they are
# DMA'd once, so double-buffering them only wastes VMEM.  Set to None to fall
# back to default double-buffering.
_CONST_BUFFERING = pl.Buffered(1) if hasattr(pl, "Buffered") else None


def _cparams():
    return pltpu.CompilerParams(dimension_semantics=("parallel",),
                                vmem_limit_bytes=_VMEM_LIMIT)


def _const_spec(shape):
    """BlockSpec for an operand that is identical for every grid step."""
    nd = len(shape)
    if _CONST_BUFFERING is None:
        return pl.BlockSpec(shape, lambda i: (0,) * nd)
    return pl.BlockSpec(shape, lambda i: (0,) * nd,
                        pipeline_mode=_CONST_BUFFERING)


def _batch_spec(block_shape):
    """BlockSpec whose leading dim is tiled by the (batch) grid."""
    nd = len(block_shape)
    return pl.BlockSpec(block_shape, lambda i: (i,) + (0,) * (nd - 1))


# --------------------------------------------------------------------------
# In-kernel building blocks (traced inside the Pallas kernels)
# --------------------------------------------------------------------------

def _ln_f32(x, g, b, eps):
    mean = jnp.mean(x, axis=-1, keepdims=True)
    var = jnp.mean(jnp.square(x - mean), axis=-1, keepdims=True)
    return (x - mean) * jax.lax.rsqrt(var + eps) * g + b


def _matmul_bias(x_f32, w_ref, b_ref, relu=False):
    y = jnp.dot(x_f32.astype(jnp.bfloat16), w_ref[...],
                preferred_element_type=jnp.float32) + b_ref[...]
    if relu:
        y = jnp.maximum(y, 0.0)
    return y


def _mha_outproj(q, k, v, wo_ref, kp, cs, num_heads):
    """Multi-head attention with the output projection fused per head.

    q: (Tq, D) f32, k/v: (Tk, D) f32, wo_ref: (D, D) bf16 Ref,
    kp: (1, Tk) additive padding bias, cs: (Tq, Tk) additive causal bias or None.
    The 1/sqrt(Dh) scale is folded into the Q projection weights upstream.
    Returns sum_h softmax(q_h k_h^T + bias) v_h @ Wo[h]  ->  (Tq, D) f32.
    """
    D = q.shape[-1]
    Dh = D // num_heads
    acc = None
    for h in range(num_heads):
        sl = slice(h * Dh, (h + 1) * Dh)
        qh = q[:, sl].astype(jnp.bfloat16)
        kh = k[:, sl].astype(jnp.bfloat16)
        vh = v[:, sl].astype(jnp.bfloat16)
        # QK^T via transposed contraction (no k.T relayout in VMEM).
        s = jax.lax.dot_general(qh, kh, (((1,), (1,)), ((), ())),
                                preferred_element_type=jnp.float32)
        s = s + kp
        if cs is not None:
            s = s + cs
        m = jnp.max(s, axis=-1, keepdims=True)
        p = jnp.exp(s - m)
        l = jnp.sum(p, axis=-1, keepdims=True)
        ctx = jnp.dot(p.astype(jnp.bfloat16), vh,
                      preferred_element_type=jnp.float32)
        ctx = ctx * pl.reciprocal(l, approx=True)
        part = jnp.dot(ctx.astype(jnp.bfloat16), wo_ref[sl, :],
                       preferred_element_type=jnp.float32)
        acc = part if acc is None else acc + part
    return acc


# --------------------------------------------------------------------------
# Pallas kernels
# --------------------------------------------------------------------------

def _inproj_pe_kernel(x_ref, w_ref, b_ref, pe_ref, o_ref):
    # x: (1, T, Cin) f32, w: (Cin, D) bf16, b: (1, D) f32, pe: (T, D) f32
    y = jnp.dot(x_ref[0].astype(jnp.bfloat16), w_ref[...],
                preferred_element_type=jnp.float32)
    o_ref[0] = (y + b_ref[...] + pe_ref[...]).astype(o_ref.dtype)


def _encoder_layer_kernel(*refs, num_heads, eps, use_causal):
    if use_causal:
        (x_ref, kp_ref, cs_ref,
         g1_ref, be1_ref, wqkv_ref, bqkv_ref, wo_ref, bo_ref,
         g2_ref, be2_ref, w1_ref, b1_ref, w2_ref, b2_ref, o_ref) = refs
        cs = cs_ref[0]
    else:
        (x_ref, kp_ref,
         g1_ref, be1_ref, wqkv_ref, bqkv_ref, wo_ref, bo_ref,
         g2_ref, be2_ref, w1_ref, b1_ref, w2_ref, b2_ref, o_ref) = refs
        cs = None

    x = x_ref[0].astype(jnp.float32)                  # (T, D) residual stream
    D = x.shape[-1]
    kp = kp_ref[0]                                    # (1, T)

    # -- self-attention sub-block (pre-norm), fully fused --
    xn = _ln_f32(x, g1_ref[...], be1_ref[...], eps)
    qkv = _matmul_bias(xn, wqkv_ref, bqkv_ref)        # (T, 3D)
    attn = _mha_outproj(qkv[:, :D], qkv[:, D:2 * D], qkv[:, 2 * D:],
                        wo_ref, kp, cs, num_heads)
    x = x + attn + bo_ref[...]

    # -- feed-forward sub-block (pre-norm), fully fused --
    h = _matmul_bias(_ln_f32(x, g2_ref[...], be2_ref[...], eps),
                     w1_ref, b1_ref, relu=True)       # (T, F)
    x = x + _matmul_bias(h, w2_ref, b2_ref)

    o_ref[0] = x.astype(o_ref.dtype)


def _decoder_layer_kernel(*refs, num_heads, eps, use_tgt_causal):
    if use_tgt_causal:
        (y_ref, enc_ref, tkp_ref, tcs_ref, skp_ref,
         sg_ref, sb_ref, wqkv_ref, bqkv_ref, wos_ref, bos_ref,
         etg_ref, etb_ref,
         cg_ref, cb_ref, wqc_ref, bqc_ref, wkvc_ref, bkvc_ref, woc_ref, boc_ref,
         fg_ref, fb_ref, w1_ref, b1_ref, w2_ref, b2_ref, o_ref) = refs
        tcs = tcs_ref[0]
    else:
        (y_ref, enc_ref, tkp_ref, skp_ref,
         sg_ref, sb_ref, wqkv_ref, bqkv_ref, wos_ref, bos_ref,
         etg_ref, etb_ref,
         cg_ref, cb_ref, wqc_ref, bqc_ref, wkvc_ref, bkvc_ref, woc_ref, boc_ref,
         fg_ref, fb_ref, w1_ref, b1_ref, w2_ref, b2_ref, o_ref) = refs
        tcs = None

    y = y_ref[0].astype(jnp.float32)                  # (U, D) residual stream
    D = y.shape[-1]

    # -- decoder self-attention (causal + tgt key padding) --
    yn = _ln_f32(y, sg_ref[...], sb_ref[...], eps)
    qkv = _matmul_bias(yn, wqkv_ref, bqkv_ref)        # (U, 3D)
    attn = _mha_outproj(qkv[:, :D], qkv[:, D:2 * D], qkv[:, 2 * D:],
                        wos_ref, tkp_ref[0], tcs, num_heads)
    y = y + attn + bos_ref[...]

    # -- cross-attention: encoder tail-LN + K/V projection fused in-kernel --
    enc_n = _ln_f32(enc_ref[0].astype(jnp.float32), etg_ref[...], etb_ref[...],
                    eps)
    kv = _matmul_bias(enc_n, wkvc_ref, bkvc_ref)      # (T, 2D)
    qc = _matmul_bias(_ln_f32(y, cg_ref[...], cb_ref[...], eps),
                      wqc_ref, bqc_ref)               # (U, D)
    attn_c = _mha_outproj(qc, kv[:, :D], kv[:, D:], woc_ref, skp_ref[0], None,
                          num_heads)
    y = y + attn_c + boc_ref[...]

    # -- feed-forward --
    h = _matmul_bias(_ln_f32(y, fg_ref[...], fb_ref[...], eps),
                     w1_ref, b1_ref, relu=True)
    y = y + _matmul_bias(h, w2_ref, b2_ref)

    o_ref[0] = y.astype(o_ref.dtype)


def _ln_head_kernel(y_ref, g_ref, b_ref, w_ref, bh_ref, o_ref, *, eps):
    # decoder tail LayerNorm fused with the (lane-padded) classification head
    yn = _ln_f32(y_ref[0].astype(jnp.float32), g_ref[...], b_ref[...], eps)
    o_ref[0] = (jnp.dot(yn.astype(jnp.bfloat16), w_ref[...],
                        preferred_element_type=jnp.float32)
                + bh_ref[...]).astype(o_ref.dtype)


# --------------------------------------------------------------------------
# pallas_call wrappers
# --------------------------------------------------------------------------

def input_projection(x, w, b, pe):
    """(N, T, Cin) -> (N, T, D) = x @ w + b + pe   (PE add fused in-kernel)."""
    N, T, Cin = x.shape
    D = w.shape[-1]
    return pl.pallas_call(
        _inproj_pe_kernel,
        out_shape=jax.ShapeDtypeStruct((N, T, D), jnp.float32),
        grid=(N,),
        in_specs=[
            _batch_spec((1, T, Cin)),
            _const_spec((Cin, D)),
            _const_spec((1, D)),
            _const_spec((T, D)),
        ],
        out_specs=_batch_spec((1, T, D)),
        compiler_params=_cparams(),
    )(x, w, b, pe)


def encoder_layer(x, lp, kp_bias, cs_bias, num_heads, eps):
    N, T, D = x.shape
    F = lp["ffw_w1"].shape[-1]
    use_causal = cs_bias is not None

    args = [x, kp_bias]
    in_specs = [_batch_spec((1, T, D)), _batch_spec((1, 1, T))]
    if use_causal:
        args.append(cs_bias)
        in_specs.append(_const_spec((1, T, T)))
    args += [lp["ln_sattn_g"], lp["ln_sattn_b"],
             lp["sattn"]["wqkv"], lp["sattn"]["bqkv"],
             lp["sattn"]["wo"], lp["sattn"]["bo"],
             lp["ln_ffw_g"], lp["ln_ffw_b"],
             lp["ffw_w1"], lp["ffw_b1"], lp["ffw_w2"], lp["ffw_b2"]]
    in_specs += [
        _const_spec((1, D)), _const_spec((1, D)),
        _const_spec((D, 3 * D)), _const_spec((1, 3 * D)),
        _const_spec((D, D)), _const_spec((1, D)),
        _const_spec((1, D)), _const_spec((1, D)),
        _const_spec((D, F)), _const_spec((1, F)),
        _const_spec((F, D)), _const_spec((1, D)),
    ]
    return pl.pallas_call(
        partial(_encoder_layer_kernel, num_heads=num_heads, eps=eps,
                use_causal=use_causal),
        out_shape=jax.ShapeDtypeStruct((N, T, D), jnp.float32),
        grid=(N,),
        in_specs=in_specs,
        out_specs=_batch_spec((1, T, D)),
        compiler_params=_cparams(),
    )(*args)


def decoder_layer(y, enc, lp, tgt_kp, tgt_cs, src_kp, enc_tail_g, enc_tail_b,
                  num_heads, eps):
    N, U, D = y.shape
    T = enc.shape[1]
    F = lp["ffw_w1"].shape[-1]
    use_causal = tgt_cs is not None

    args = [y, enc, tgt_kp]
    in_specs = [_batch_spec((1, U, D)), _batch_spec((1, T, D)),
                _batch_spec((1, 1, U))]
    if use_causal:
        args.append(tgt_cs)
        in_specs.append(_const_spec((1, U, U)))
    args.append(src_kp)
    in_specs.append(_batch_spec((1, 1, T)))

    args += [lp["ln_sattn_g"], lp["ln_sattn_b"],
             lp["sattn"]["wqkv"], lp["sattn"]["bqkv"],
             lp["sattn"]["wo"], lp["sattn"]["bo"],
             enc_tail_g, enc_tail_b,
             lp["ln_cattn_g"], lp["ln_cattn_b"],
             lp["cattn"]["wq"], lp["cattn"]["bq"],
             lp["cattn"]["wkv"], lp["cattn"]["bkv"],
             lp["cattn"]["wo"], lp["cattn"]["bo"],
             lp["ln_ffw_g"], lp["ln_ffw_b"],
             lp["ffw_w1"], lp["ffw_b1"], lp["ffw_w2"], lp["ffw_b2"]]
    in_specs += [
        _const_spec((1, D)), _const_spec((1, D)),
        _const_spec((D, 3 * D)), _const_spec((1, 3 * D)),
        _const_spec((D, D)), _const_spec((1, D)),
        _const_spec((1, D)), _const_spec((1, D)),
        _const_spec((1, D)), _const_spec((1, D)),
        _const_spec((D, D)), _const_spec((1, D)),
        _const_spec((D, 2 * D)), _const_spec((1, 2 * D)),
        _const_spec((D, D)), _const_spec((1, D)),
        _const_spec((1, D)), _const_spec((1, D)),
        _const_spec((D, F)), _const_spec((1, F)),
        _const_spec((F, D)), _const_spec((1, D)),
    ]
    return pl.pallas_call(
        partial(_decoder_layer_kernel, num_heads=num_heads, eps=eps,
                use_tgt_causal=use_causal),
        out_shape=jax.ShapeDtypeStruct((N, U, D), jnp.float32),
        grid=(N,),
        in_specs=in_specs,
        out_specs=_batch_spec((1, U, D)),
        compiler_params=_cparams(),
    )(*args)


def decoder_head(y, g, b, w, bh, eps):
    """Decoder tail LayerNorm + classification head, lane-padded to 128."""
    N, U, D = y.shape
    V = w.shape[-1]
    Vp = _round_up(V, 128)
    if Vp != V:
        # Lane-dense output: pad head to a multiple of 128 lanes so the kernel
        # issues unmasked full-lane stores; logits are sliced once afterwards.
        w = jnp.pad(w, ((0, 0), (0, Vp - V)))
        bh = jnp.pad(bh, ((0, 0), (0, Vp - V)))
    out = pl.pallas_call(
        partial(_ln_head_kernel, eps=eps),
        out_shape=jax.ShapeDtypeStruct((N, U, Vp), jnp.float32),
        grid=(N,),
        in_specs=[
            _batch_spec((1, U, D)),
            _const_spec((1, D)), _const_spec((1, D)),
            _const_spec((D, Vp)), _const_spec((1, Vp)),
        ],
        out_specs=_batch_spec((1, U, Vp)),
        compiler_params=_cparams(),
    )(y, g, b, w, bh)
    return out[..., :V]


# --------------------------------------------------------------------------
# Model glue (plain JAX)
# --------------------------------------------------------------------------

def padding_bias(key_padding_mask, N, Tk):
    """Boolean mask (N, Tk), True = valid key -> additive bias (N, 1, Tk)."""
    if key_padding_mask is None:
        return jnp.zeros((N, 1, Tk), jnp.float32)
    allow = key_padding_mask.astype(bool).reshape(N, 1, Tk)
    return jnp.where(allow, 0.0, -1e9).astype(jnp.float32)


def causal_bias(causal_mask, Tq, Tk):
    """Boolean mask (Tq, Tk), True = attend -> additive bias (1, Tq, Tk) or None."""
    if causal_mask is None:
        return None
    allow = causal_mask.astype(bool).reshape(1, Tq, Tk)
    return jnp.where(allow, 0.0, -1e9).astype(jnp.float32)


def sinusoidal_pe(T, D):
    pos = jnp.arange(T, dtype=jnp.float32)[:, None]
    div = jnp.exp(jnp.arange(0, D, 2, dtype=jnp.float32)
                  * (-math.log(10000.0) / D))
    pe = jnp.zeros((T, D), jnp.float32)
    pe = pe.at[:, 0::2].set(jnp.sin(pos * div))
    pe = pe.at[:, 1::2].set(jnp.cos(pos * div))
    return pe


def transformer_cslr_forward(params, src_feature, tgt_tokens,
                             src_causal_mask, src_padding_mask,
                             tgt_causal_mask, tgt_padding_mask,
                             *, num_heads_enc=1, num_heads_dec=1, eps=1e-5):
    N, C, T, J = src_feature.shape
    # (N, C, T, J) -> (N, T, C, J) -> (N, T, C*J)  [matches PyTorch permute/reshape]
    x = jnp.transpose(src_feature, (0, 2, 1, 3)).reshape(N, T, C * J)
    D = params["in_w"].shape[-1]

    # ---------------- encoder ----------------
    x = input_projection(x, params["in_w"], params["in_b"],
                         sinusoidal_pe(T, D))          # linear + PE (dropout_pe -> id)
    src_kp = padding_bias(src_padding_mask, N, T)
    src_cs = causal_bias(src_causal_mask, T, T)
    for lp in params["enc_layers"]:
        x = encoder_layer(x, lp, src_kp, src_cs, num_heads_enc, eps)
    enc = x    # raw encoder output; tail-LN is fused into every decoder layer

    # ---------------- decoder ----------------
    U = tgt_tokens.shape[1]
    # sqrt(D) embedding scale is folded into the embedding table at preprocess.
    y = params["embed"][tgt_tokens] + sinusoidal_pe(U, D)[None]
    tgt_kp = padding_bias(tgt_padding_mask, N, U)
    tgt_cs = causal_bias(tgt_causal_mask, U, U)
    for lp in params["dec_layers"]:
        y = decoder_layer(y, enc, lp, tgt_kp, tgt_cs, src_kp,
                          params["enc_tail_g"], params["enc_tail_b"],
                          num_heads_dec, eps)
    # decoder tail LayerNorm fused with the classification head
    return decoder_head(y, params["dec_tail_g"], params["dec_tail_b"],
                        params["head_w"], params["head_b"], eps)


# --------------------------------------------------------------------------
# Deterministic parameter init (PyTorch-style layout) + one-time preprocessing
# --------------------------------------------------------------------------

def _dense(key, fan_in, fan_out):
    k1, k2 = jax.random.split(key)
    w = jax.random.normal(k1, (fan_in, fan_out), jnp.float32) * 0.02
    b = jax.random.normal(k2, (fan_out,), jnp.float32) * 0.02
    return w, b


def _attn_params(key, D):
    ks = jax.random.split(key, 4)
    wq, bq = _dense(ks[0], D, D)
    wk, bk = _dense(ks[1], D, D)
    wv, bv = _dense(ks[2], D, D)
    wo, bo = _dense(ks[3], D, D)
    return dict(wq=wq, bq=bq, wk=wk, bk=bk, wv=wv, bv=bv, wo=wo, bo=bo)


def _enc_layer_params(key, D, F):
    ks = jax.random.split(key, 3)
    w1, b1 = _dense(ks[1], D, F)
    w2, b2 = _dense(ks[2], F, D)
    return dict(sattn=_attn_params(ks[0], D),
                ln_sattn_g=jnp.ones(D), ln_sattn_b=jnp.zeros(D),
                ln_ffw_g=jnp.ones(D), ln_ffw_b=jnp.zeros(D),
                ffw_w1=w1, ffw_b1=b1, ffw_w2=w2, ffw_b2=b2)


def _dec_layer_params(key, D, F):
    ks = jax.random.split(key, 4)
    w1, b1 = _dense(ks[2], D, F)
    w2, b2 = _dense(ks[3], F, D)
    return dict(sattn=_attn_params(ks[0], D), cattn=_attn_params(ks[1], D),
                ln_sattn_g=jnp.ones(D), ln_sattn_b=jnp.zeros(D),
                ln_cattn_g=jnp.ones(D), ln_cattn_b=jnp.zeros(D),
                ln_ffw_g=jnp.ones(D), ln_ffw_b=jnp.zeros(D),
                ffw_w1=w1, ffw_b1=b1, ffw_w2=w2, ffw_b2=b2)


def init_params(key, in_channels, inter_channels, out_channels, padding_val,
                tren_num_layers=1, trde_num_layers=1,
                tren_dim_ffw=64, trde_dim_ffw=64):
    keys = jax.random.split(key, 8)
    D = inter_channels
    in_w, in_b = _dense(keys[0], in_channels, D)
    embed = jax.random.normal(keys[1], (out_channels, D), jnp.float32) * 0.02
    embed = embed.at[padding_val].set(0.0)            # padding_idx row = 0
    head_w, head_b = _dense(keys[2], D, out_channels)
    enc_layers = [_enc_layer_params(k, D, tren_dim_ffw)
                  for k in jax.random.split(keys[3], tren_num_layers)]
    dec_layers = [_dec_layer_params(k, D, trde_dim_ffw)
                  for k in jax.random.split(keys[4], trde_num_layers)]
    return dict(in_w=in_w, in_b=in_b,
                enc_layers=enc_layers,
                enc_tail_g=jnp.ones(D), enc_tail_b=jnp.zeros(D),
                embed=embed,
                dec_layers=dec_layers,
                dec_tail_g=jnp.ones(D), dec_tail_b=jnp.zeros(D),
                head_w=head_w, head_b=head_b)


def preprocess_params(p, num_heads_enc=1, num_heads_dec=1):
    """One-time conversion: fuse Q/K/V (and K/V) weights, fold the 1/sqrt(Dh)
    attention scale into the Q projection, fold sqrt(D) into the embedding,
    pre-cast matmul weights to bf16 and reshape 1-D params to (1, N)."""
    bf = lambda w: jnp.asarray(w, jnp.bfloat16)
    row = lambda v: jnp.asarray(v, jnp.float32).reshape(1, -1)
    D = p["in_w"].shape[-1]

    def attn_self(a, num_heads):
        scale = 1.0 / math.sqrt(D // num_heads)
        wqkv = jnp.concatenate([a["wq"] * scale, a["wk"], a["wv"]], axis=1)
        bqkv = jnp.concatenate([a["bq"] * scale, a["bk"], a["bv"]])
        return dict(wqkv=bf(wqkv), bqkv=row(bqkv), wo=bf(a["wo"]),
                    bo=row(a["bo"]))

    def attn_cross(a, num_heads):
        scale = 1.0 / math.sqrt(D // num_heads)
        return dict(wq=bf(a["wq"] * scale), bq=row(a["bq"] * scale),
                    wkv=bf(jnp.concatenate([a["wk"], a["wv"]], axis=1)),
                    bkv=row(jnp.concatenate([a["bk"], a["bv"]])),
                    wo=bf(a["wo"]), bo=row(a["bo"]))

    def enc_layer(lp):
        return dict(sattn=attn_self(lp["sattn"], num_heads_enc),
                    ln_sattn_g=row(lp["ln_sattn_g"]), ln_sattn_b=row(lp["ln_sattn_b"]),
                    ln_ffw_g=row(lp["ln_ffw_g"]), ln_ffw_b=row(lp["ln_ffw_b"]),
                    ffw_w1=bf(lp["ffw_w1"]), ffw_b1=row(lp["ffw_b1"]),
                    ffw_w2=bf(lp["ffw_w2"]), ffw_b2=row(lp["ffw_b2"]))

    def dec_layer(lp):
        return dict(sattn=attn_self(lp["sattn"], num_heads_dec),
                    cattn=attn_cross(lp["cattn"], num_heads_dec),
                    ln_sattn_g=row(lp["ln_sattn_g"]), ln_sattn_b=row(lp["ln_sattn_b"]),
                    ln_cattn_g=row(lp["ln_cattn_g"]), ln_cattn_b=row(lp["ln_cattn_b"]),
                    ln_ffw_g=row(lp["ln_ffw_g"]), ln_ffw_b=row(lp["ln_ffw_b"]),
                    ffw_w1=bf(lp["ffw_w1"]), ffw_b1=row(lp["ffw_b1"]),
                    ffw_w2=bf(lp["ffw_w2"]), ffw_b2=row(lp["ffw_b2"]))

    return dict(
        in_w=bf(p["in_w"]), in_b=row(p["in_b"]),
        enc_layers=[enc_layer(lp) for lp in p["enc_layers"]],
        enc_tail_g=row(p["enc_tail_g"]), enc_tail_b=row(p["enc_tail_b"]),
        embed=jnp.asarray(p["embed"], jnp.float32) * math.sqrt(D),
        dec_layers=[dec_layer(lp) for lp in p["dec_layers"]],
        dec_tail_g=row(p["dec_tail_g"]), dec_tail_b=row(p["dec_tail_b"]),
        head_w=bf(p["head_w"]), head_b=row(p["head_b"]))


# --------------------------------------------------------------------------
# Demo
# --------------------------------------------------------------------------

if __name__ == "__main__":
    key = jax.random.PRNGKey(0)

    # Small shapes consistent with the module:
    N, C, T, J = 2, 4, 16, 4          # src_feature: (N, C, T, J), in_channels = C*J
    in_channels = C * J               # 16
    inter_channels = 32               # model dim D
    out_channels = 10                 # vocab size
    padding_val = 0
    U = 8                             # target sequence length

    k_param, k_src, k_tgt = jax.random.split(key, 3)
    raw_params = init_params(k_param, in_channels, inter_channels, out_channels,
                             padding_val, tren_num_layers=1, trde_num_layers=1,
                             tren_dim_ffw=64, trde_dim_ffw=64)
    params = preprocess_params(raw_params, num_heads_enc=1, num_heads_dec=1)

    src_feature = jax.random.normal(k_src, (N, C, T, J), jnp.float32)
    tgt_tokens = jax.random.randint(k_tgt, (N, U), 0, out_channels).astype(jnp.int32)

    # Boolean masks, True = attend / valid token.  No causal constraint on the
    # encoder (equivalent to an all-True src causal mask); a mask array is also
    # supported and would take the causal kernel variant.
    src_causal_mask = None
    src_padding_mask = jnp.arange(T)[None, :] < jnp.array([[T], [T - 4]])   # (N, T)
    tgt_causal_mask = jnp.tril(jnp.ones((U, U), bool))                      # (U, U)
    tgt_padding_mask = jnp.arange(U)[None, :] < jnp.array([[U], [U - 2]])   # (N, U)

    def _run():
        fwd = jax.jit(partial(transformer_cslr_forward,
                              num_heads_enc=1, num_heads_dec=1, eps=1e-5))
        return jax.block_until_ready(
            fwd(params, src_feature, tgt_tokens,
                src_causal_mask, src_padding_mask,
                tgt_causal_mask, tgt_padding_mask))

    try:
        preds = _run()
    except Exception:
        # Safety net: if this jax version rejects single-buffered constant
        # operands, retry with default double-buffering (perf hint only).
        _CONST_BUFFERING = None
        preds = _run()

    assert preds.shape == (N, U, out_channels)
    assert bool(jnp.all(jnp.isfinite(preds)))
    print("KERNEL_OK")
</pallas_src>

<mosaic_0001>
module attributes {stable_mosaic.version = 11 : i64} {
  func.func @_inproj_pe_kernel(%arg0: i32, %arg1: memref<1x16x16xf32, #tpu.memory_space<vmem>>, %arg2: memref<16x32xbf16, #tpu.memory_space<vmem>>, %arg3: memref<1x32xf32, #tpu.memory_space<vmem>>, %arg4: memref<16x32xf32, #tpu.memory_space<vmem>>, %arg5: memref<1x16x32xf32, #tpu.memory_space<vmem>>) attributes {dimension_semantics = [#tpu.dimension_semantics<parallel>], iteration_bounds = array<i64: 2>, scalar_prefetch = 0 : i64, scratch_operands = 0 : i64, tpu.core_type = #tpu.core_type<tc>, window_params = [{transform_indices = @transform_0, window_bounds = array<i64: 1, 16, 16>}, {pipeline_mode = #tpu.pipeline_mode<synchronous>, transform_indices = @transform_1, window_bounds = array<i64: 16, 32>}, {pipeline_mode = #tpu.pipeline_mode<synchronous>, transform_indices = @transform_2, window_bounds = array<i64: 1, 32>}, {pipeline_mode = #tpu.pipeline_mode<synchronous>, transform_indices = @transform_3, window_bounds = array<i64: 16, 32>}, {transform_indices = @transform_4, window_bounds = array<i64: 1, 16, 32>}]} {
    %c0 = arith.constant 0 : index
    %c0_0 = arith.constant 0 : index
    %c0_1 = arith.constant 0 : index
    %0 = vector.load %arg1[%c0, %c0_0, %c0_1] : memref<1x16x16xf32, #tpu.memory_space<vmem>>, vector<1x16x16xf32>
    %1 = vector.shape_cast %0 : vector<1x16x16xf32> to vector<16x16xf32>
    %2 = arith.truncf %1 : vector<16x16xf32> to vector<16x16xbf16>
    %c0_2 = arith.constant 0 : index
    %c0_3 = arith.constant 0 : index
    %3 = vector.load %arg2[%c0_2, %c0_3] : memref<16x32xbf16, #tpu.memory_space<vmem>>, vector<16x32xbf16>
    %cst = arith.constant dense<0.000000e+00> : vector<16x32xf32>
    %4 = tpu.matmul %2, %3, %cst {dimension_numbers = #tpu.dot_dimension_numbers<[1], [0], [0], [1], [0, 0, 1, 1], [], []>} : vector<16x16xbf16>, vector<16x32xbf16>, vector<16x32xf32> -> vector<16x32xf32>
    %c0_4 = arith.constant 0 : index
    %c0_5 = arith.constant 0 : index
    %5 = vector.load %arg3[%c0_4, %c0_5] : memref<1x32xf32, #tpu.memory_space<vmem>>, vector<1x32xf32>
    %6 = vector.broadcast %5 : vector<1x32xf32> to vector<16x32xf32>
    %7 = arith.addf %4, %6 : vector<16x32xf32>
    %c0_6 = arith.constant 0 : index
    %c0_7 = arith.constant 0 : index
    %8 = vector.load %arg4[%c0_6, %c0_7] : memref<16x32xf32, #tpu.memory_space<vmem>>, vector<16x32xf32>
    %9 = arith.addf %7, %8 : vector<16x32xf32>
    %c0_8 = arith.constant 0 : index
    %c0_9 = arith.constant 0 : index
    %c0_10 = arith.constant 0 : index
    %10 = vector.load %arg5[%c0_8, %c0_9, %c0_10] : memref<1x16x32xf32, #tpu.memory_space<vmem>>, vector<1x16x32xf32>
    %11 = vector.shape_cast %10 : vector<1x16x32xf32> to vector<16x32xf32>
    %12 = vector.shape_cast %9 : vector<16x32xf32> to vector<1x16x32xf32>
    tpu.vector_store %arg5[%c0_8, %c0_9, %c0_10], %12 {strides = array<i32>} : memref<1x16x32xf32, #tpu.memory_space<vmem>>, vector<1x16x32xf32>,
    return
  }
  func.func @transform_0(%arg0: i32) -> (i32, i32, i32) {
    %c0_i32 = arith.constant 0 : i32
    %c0_i32_0 = arith.constant 0 : i32
    %c0_i32_1 = arith.constant 0 : i32
    return %arg0, %c0_i32, %c0_i32_0 : i32, i32, i32
  }
  func.func @transform_1(%arg0: i32) -> (i32, i32) {
    %c0_i32 = arith.constant 0 : i32
    %c0_i32_0 = arith.constant 0 : i32
    %c0_i32_1 = arith.constant 0 : i32
    return %c0_i32, %c0_i32_0 : i32, i32
  }
  func.func @transform_2(%arg0: i32) -> (i32, i32) {
    %c0_i32 = arith.constant 0 : i32
    %c0_i32_0 = arith.constant 0 : i32
    %c0_i32_1 = arith.constant 0 : i32
    return %c0_i32, %c0_i32_0 : i32, i32
  }
  func.func @transform_3(%arg0: i32) -> (i32, i32) {
    %c0_i32 = arith.constant 0 : i32
    %c0_i32_0 = arith.constant 0 : i32
    %c0_i32_1 = arith.constant 0 : i32
    return %c0_i32, %c0_i32_0 : i32, i32
  }
  func.func @transform_4(%arg0: i32) -> (i32, i32, i32) {
    %c0_i32 = arith.constant 0 : i32
    %c0_i32_0 = arith.constant 0 : i32
    %c0_i32_1 = arith.constant 0 : i32
    return %arg0, %c0_i32, %c0_i32_0 : i32, i32, i32
  }
}

module attributes {stable_mosaic.version = 11 : i64} {
  func.func @_encoder_layer_kernel(%arg0: i32, %arg1: memref<1x16x32xf32, #tpu.memory_space<vmem>>, %arg2: memref<1x1x16xf32, #tpu.memory_space<vmem>>, %arg3: memref<1x32xf32, #tpu.memory_space<vmem>>, %arg4: memref<1x32xf32, #tpu.memory_space<vmem>>, %arg5: memref<32x96xbf16, #tpu.memory_space<vmem>>, %arg6: memref<1x96xf32, #tpu.memory_space<vmem>>, %arg7: memref<32x32xbf16, #tpu.memory_space<vmem>>, %arg8: memref<1x32xf32, #tpu.memory_space<vmem>>, %arg9: memref<1x32xf32, #tpu.memory_space<vmem>>, %arg10: memref<1x32xf32, #tpu.memory_space<vmem>>, %arg11: memref<32x64xbf16, #tpu.memory_space<vmem>>, %arg12: memref<1x64xf32, #tpu.memory_space<vmem>>, %arg13: memref<64x32xbf16, #tpu.memory_space<vmem>>, %arg14: memref<1x32xf32, #tpu.memory_space<vmem>>, %arg15: memref<1x16x32xf32, #tpu.memory_space<vmem>>) attributes {dimension_semantics = [#tpu.dimension_semantics<parallel>], iteration_bounds = array<i64: 2>, scalar_prefetch = 0 : i64, scratch_operands = 0 : i64, tpu.core_type = #tpu.core_type<tc>, window_params = [{transform_indices = @transform_0, window_bounds = array<i64: 1, 16, 32>}, {transform_indices = @transform_1, window_bounds = array<i64: 1, 1, 16>}, {pipeline_mode = #tpu.pipeline_mode<synchronous>, transform_indices = @transform_2, window_bounds = array<i64: 1, 32>}, {pipeline_mode = #tpu.pipeline_mode<synchronous>, transform_indices = @transform_3, window_bounds = array<i64: 1, 32>}, {pipeline_mode = #tpu.pipeline_mode<synchronous>, transform_indices = @transform_4, window_bounds = array<i64: 32, 96>}, {pipeline_mode = #tpu.pipeline_mode<synchronous>, transform_indices = @transform_5, window_bounds = array<i64: 1, 96>}, {pipeline_mode = #tpu.pipeline_mode<synchronous>, transform_indices = @transform_6, window_bounds = array<i64: 32, 32>}, {pipeline_mode = #tpu.pipeline_mode<synchronous>, transform_indices = @transform_7, window_bounds = array<i64: 1, 32>}, {pipeline_mode = #tpu.pipeline_mode<synchronous>, transform_indices = @transform_8, window_bounds = array<i64: 1, 32>}, {pipeline_mode = #tpu.pipeline_mode<synchronous>, transform_indices = @transform_9, window_bounds = array<i64: 1, 32>}, {pipeline_mode = #tpu.pipeline_mode<synchronous>, transform_indices = @transform_10, window_bounds = array<i64: 32, 64>}, {pipeline_mode = #tpu.pipeline_mode<synchronous>, transform_indices = @transform_11, window_bounds = array<i64: 1, 64>}, {pipeline_mode = #tpu.pipeline_mode<synchronous>, transform_indices = @transform_12, window_bounds = array<i64: 64, 32>}, {pipeline_mode = #tpu.pipeline_mode<synchronous>, transform_indices = @transform_13, window_bounds = array<i64: 1, 32>}, {transform_indices = @transform_14, window_bounds = array<i64: 1, 16, 32>}]} {
    %c0 = arith.constant 0 : index
    %c0_0 = arith.constant 0 : index
    %c0_1 = arith.constant 0 : index
    %0 = vector.load %arg1[%c0, %c0_0, %c0_1] : memref<1x16x32xf32, #tpu.memory_space<vmem>>, vector<1x16x32xf32>
    %1 = vector.shape_cast %0 : vector<1x16x32xf32> to vector<16x32xf32>
    %c0_2 = arith.constant 0 : index
    %c0_3 = arith.constant 0 : index
    %c0_4 = arith.constant 0 : index
    %2 = vector.load %arg2[%c0_2, %c0_3, %c0_4] : memref<1x1x16xf32, #tpu.memory_space<vmem>>, vector<1x1x16xf32>
    %3 = vector.shape_cast %2 : vector<1x1x16xf32> to vector<1x16xf32>
    %c0_5 = arith.constant 0 : index
    %c0_6 = arith.constant 0 : index
    %4 = vector.load %arg3[%c0_5, %c0_6] : memref<1x32xf32, #tpu.memory_space<vmem>>, vector<1x32xf32>
    %c0_7 = arith.constant 0 : index
    %c0_8 = arith.constant 0 : index
    %5 = vector.load %arg4[%c0_7, %c0_8] : memref<1x32xf32, #tpu.memory_space<vmem>>, vector<1x32xf32>
    %cst = arith.constant dense<0.000000e+00> : vector<16xf32>
    %6 = vector.multi_reduction <add>, %1, %cst [1] : vector<16x32xf32> to vector<16xf32>
    %7 = vector.shape_cast %6 : vector<16xf32> to vector<16x1xf32>
    %cst_9 = arith.constant 3.200000e+01 : f32
    %8 = vector.broadcast %cst_9 : f32 to vector<16x1xf32>
    %9 = arith.divf %7, %8 : vector<16x1xf32>
    %10 = vector.broadcast %9 : vector<16x1xf32> to vector<16x32xf32>
    %11 = arith.subf %1, %10 : vector<16x32xf32>
    %12 = arith.mulf %11, %11 : vector<16x32xf32>
    %cst_10 = arith.constant dense<0.000000e+00> : vector<16xf32>
    %13 = vector.multi_reduction <add>, %12, %cst_10 [1] : vector<16x32xf32> to vector<16xf32>
    %14 = vector.shape_cast %13 : vector<16xf32> to vector<16x1xf32>
    %cst_11 = arith.constant 3.200000e+01 : f32
    %15 = vector.broadcast %cst_11 : f32 to vector<16x1xf32>
    %16 = arith.divf %14, %15 : vector<16x1xf32>
    %17 = vector.broadcast %9 : vector<16x1xf32> to vector<16x32xf32>
    %18 = arith.subf %1, %17 : vector<16x32xf32>
    %cst_12 = arith.constant 9.99999974E-6 : f32
    %19 = vector.broadcast %cst_12 : f32 to vector<16x1xf32>
    %20 = arith.addf %16, %19 : vector<16x1xf32>
    %21 = math.rsqrt %20 : vector<16x1xf32>
    %22 = vector.broadcast %21 : vector<16x1xf32> to vector<16x32xf32>
    %23 = arith.mulf %18, %22 : vector<16x32xf32>
    %24 = vector.broadcast %4 : vector<1x32xf32> to vector<16x32xf32>
    %25 = arith.mulf %23, %24 : vector<16x32xf32>
    %26 = vector.broadcast %5 : vector<1x32xf32> to vector<16x32xf32>
    %27 = arith.addf %25, %26 : vector<16x32xf32>
    %28 = arith.truncf %27 : vector<16x32xf32> to vector<16x32xbf16>
    %c0_13 = arith.constant 0 : index
    %c0_14 = arith.constant 0 : index
    %29 = vector.load %arg5[%c0_13, %c0_14] : memref<32x96xbf16, #tpu.memory_space<vmem>>, vector<32x96xbf16>
    %cst_15 = arith.constant dense<0.000000e+00> : vector<16x96xf32>
    %30 = tpu.matmul %28, %29, %cst_15 {dimension_numbers = #tpu.dot_dimension_numbers<[1], [0], [0], [1], [0, 0, 1, 1], [], []>} : vector<16x32xbf16>, vector<32x96xbf16>, vector<16x96xf32> -> vector<16x96xf32>
    %c0_16 = arith.constant 0 : index
    %c0_17 = arith.constant 0 : index
    %31 = vector.load %arg6[%c0_16, %c0_17] : memref<1x96xf32, #tpu.memory_space<vmem>>, vector<1x96xf32>
    %32 = vector.broadcast %31 : vector<1x96xf32> to vector<16x96xf32>
    %33 = arith.addf %30, %32 : vector<16x96xf32>
    %34 = vector.extract_strided_slice %33 {offsets = [0, 0], sizes = [16, 32], strides = [1, 1]} : vector<16x96xf32> to vector<16x32xf32>
    %35 = vector.extract_strided_slice %33 {offsets = [0, 32], sizes = [16, 32], strides = [1, 1]} : vector<16x96xf32> to vector<16x32xf32>
    %36 = vector.extract_strided_slice %33 {offsets = [0, 64], sizes = [16, 32], strides = [1, 1]} : vector<16x96xf32> to vector<16x32xf32>
    %37 = arith.truncf %34 : vector<16x32xf32> to vector<16x32xbf16>
    %38 = arith.truncf %35 : vector<16x32xf32> to vector<16x32xbf16>
    %39 = arith.truncf %36 : vector<16x32xf32> to vector<16x32xbf16>
    %cst_18 = arith.constant dense<0.000000e+00> : vector<16x16xf32>
    %40 = tpu.matmul %37, %38, %cst_18 {dimension_numbers = #tpu.dot_dimension_numbers<[1], [1], [0], [0], [0, 0, 1, 0], [], []>} : vector<16x32xbf16>, vector<16x32xbf16>, vector<16x16xf32> -> vector<16x16xf32>
    %41 = vector.broadcast %3 : vector<1x16xf32> to vector<16x16xf32>
    %42 = arith.addf %40, %41 : vector<16x16xf32>
    %cst_19 = arith.constant dense<0xFF800000> : vector<16xf32>
    %43 = vector.multi_reduction <maximumf>, %42, %cst_19 [1] : vector<16x16xf32> to vector<16xf32>
    %44 = vector.shape_cast %43 : vector<16xf32> to vector<16x1xf32>
    %45 = vector.broadcast %44 : vector<16x1xf32> to vector<16x16xf32>
    %46 = arith.subf %42, %45 : vector<16x16xf32>
    %47 = math.exp %46 : vector<16x16xf32>
    %cst_20 = arith.constant dense<0.000000e+00> : vector<16xf32>
    %48 = vector.multi_reduction <add>, %47, %cst_20 [1] : vector<16x16xf32> to vector<16xf32>
    %49 = vector.shape_cast %48 : vector<16xf32> to vector<16x1xf32>
    %50 = arith.truncf %47 : vector<16x16xf32> to vector<16x16xbf16>
    %cst_21 = arith.constant dense<0.000000e+00> : vector<16x32xf32>
    %51 = tpu.matmul %50, %39, %cst_21 {dimension_numbers = #tpu.dot_dimension_numbers<[1], [0], [0], [1], [0, 0, 1, 1], [], []>} : vector<16x16xbf16>, vector<16x32xbf16>, vector<16x32xf32> -> vector<16x32xf32>
    %52 = tpu.reciprocal %49 {approx = true} : vector<16x1xf32> -> vector<16x1xf32>
    %53 = vector.broadcast %52 : vector<16x1xf32> to vector<16x32xf32>
    %54 = arith.mulf %51, %53 : vector<16x32xf32>
    %55 = arith.truncf %54 : vector<16x32xf32> to vector<16x32xbf16>
    %c0_22 = arith.constant 0 : index
    %c0_23 = arith.constant 0 : index
    %56 = vector.load %arg7[%c0_22, %c0_23] : memref<32x32xbf16, #tpu.memory_space<vmem>>, vector<32x32xbf16>
    %cst_24 = arith.constant dense<0.000000e+00> : vector<16x32xf32>
    %57 = tpu.matmul %55, %56, %cst_24 {dimension_numbers = #tpu.dot_dimension_numbers<[1], [0], [0], [1], [0, 0, 1, 1], [], []>} : vector<16x32xbf16>, vector<32x32xbf16>, vector<16x32xf32> -> vector<16x32xf32>
    %58 = arith.addf %1, %57 : vector<16x32xf32>
    %c0_25 = arith.constant 0 : index
    %c0_26 = arith.constant 0 : index
    %59 = vector.load %arg8[%c0_25, %c0_26] : memref<1x32xf32, #tpu.memory_space<vmem>>, vector<1x32xf32>
    %60 = vector.broadcast %59 : vector<1x32xf32> to vector<16x32xf32>
    %61 = arith.addf %58, %60 : vector<16x32xf32>
    %c0_27 = arith.constant 0 : index
    %c0_28 = arith.constant 0 : index
    %62 = vector.load %arg9[%c0_27, %c0_28] : memref<1x32xf32, #tpu.memory_space<vmem>>, vector<1x32xf32>
    %c0_29 = arith.constant 0 : index
    %c0_30 = arith.constant 0 : index
    %63 = vector.load %arg10[%c0_29, %c0_30] : memref<1x32xf32, #tpu.memory_space<vmem>>, vector<1x32xf32>
    %cst_31 = arith.constant dense<0.000000e+00> : vector<16xf32>
    %64 = vector.multi_reduction <add>, %61, %cst_31 [1] : vector<16x32xf32> to vector<16xf32>
    %65 = vector.shape_cast %64 : vector<16xf32> to vector<16x1xf32>
    %cst_32 = arith.constant 3.200000e+01 : f32
    %66 = vector.broadcast %cst_32 : f32 to vector<16x1xf32>
    %67 = arith.divf %65, %66 : vector<16x1xf32>
    %68 = vector.broadcast %67 : vector<16x1xf32> to vector<16x32xf32>
    %69 = arith.subf %61, %68 : vector<16x32xf32>
    %70 = arith.mulf %69, %69 : vector<16x32xf32>
    %cst_33 = arith.constant dense<0.000000e+00> : vector<16xf32>
    %71 = vector.multi_reduction <add>, %70, %cst_33 [1] : vector<16x32xf32> to vector<16xf32>
    %72 = vector.shape_cast %71 : vector<16xf32> to vector<16x1xf32>
    %cst_34 = arith.constant 3.200000e+01 : f32
    %73 = vector.broadcast %cst_34 : f32 to vector<16x1xf32>
    %74 = arith.divf %72, %73 : vector<16x1xf32>
    %75 = vector.broadcast %67 : vector<16x1xf32> to vector<16x32xf32>
    %76 = arith.subf %61, %75 : vector<16x32xf32>
    %cst_35 = arith.constant 9.99999974E-6 : f32
    %77 = vector.broadcast %cst_35 : f32 to vector<16x1xf32>
    %78 = arith.addf %74, %77 : vector<16x1xf32>
    %79 = math.rsqrt %78 : vector<16x1xf32>
    %80 = vector.broadcast %79 : vector<16x1xf32> to vector<16x32xf32>
    %81 = arith.mulf %76, %80 : vector<16x32xf32>
    %82 = vector.broadcast %62 : vector<1x32xf32> to vector<16x32xf32>
    %83 = arith.mulf %81, %82 : vector<16x32xf32>
    %84 = vector.broadcast %63 : vector<1x32xf32> to vector<16x32xf32>
    %85 = arith.addf %83, %84 : vector<16x32xf32>
    %86 = arith.truncf %85 : vector<16x32xf32> to vector<16x32xbf16>
    %c0_36 = arith.constant 0 : index
    %c0_37 = arith.constant 0 : index
    %87 = vector.load %arg11[%c0_36, %c0_37] : memref<32x64xbf16, #tpu.memory_space<vmem>>, vector<32x64xbf16>
    %cst_38 = arith.constant dense<0.000000e+00> : vector<16x64xf32>
    %88 = tpu.matmul %86, %87, %cst_38 {dimension_numbers = #tpu.dot_dimension_numbers<[1], [0], [0], [1], [0, 0, 1, 1], [], []>} : vector<16x32xbf16>, vector<32x64xbf16>, vector<16x64xf32> -> vector<16x64xf32>
    %c0_39 = arith.constant 0 : index
    %c0_40 = arith.constant 0 : index
    %89 = vector.load %arg12[%c0_39, %c0_40] : memref<1x64xf32, #tpu.memory_space<vmem>>, vector<1x64xf32>
    %90 = vector.broadcast %89 : vector<1x64xf32> to vector<16x64xf32>
    %91 = arith.addf %88, %90 : vector<16x64xf32>
    %cst_41 = arith.constant 0.000000e+00 : f32
    %92 = vector.broadcast %cst_41 : f32 to vector<16x64xf32>
    %93 = arith.maximumf %91, %92 : vector<16x64xf32>
    %94 = arith.truncf %93 : vector<16x64xf32> to vector<16x64xbf16>
    %c0_42 = arith.constant 0 : index
    %c0_43 = arith.constant 0 : index
    %95 = vector.load %arg13[%c0_42, %c0_43] : memref<64x32xbf16, #tpu.memory_space<vmem>>, vector<64x32xbf16>
    %cst_44 = arith.constant dense<0.000000e+00> : vector<16x32xf32>
    %96 = tpu.matmul %94, %95, %cst_44 {dimension_numbers = #tpu.dot_dimension_numbers<[1], [0], [0], [1], [0, 0, 1, 1], [], []>} : vector<16x64xbf16>, vector<64x32xbf16>, vector<16x32xf32> -> vector<16x32xf32>
    %c0_45 = arith.constant 0 : index
    %c0_46 = arith.constant 0 : index
    %97 = vector.load %arg14[%c0_45, %c0_46] : memref<1x32xf32, #tpu.memory_space<vmem>>, vector<1x32xf32>
    %98 = vector.broadcast %97 : vector<1x32xf32> to vector<16x32xf32>
    %99 = arith.addf %96, %98 : vector<16x32xf32>
    %100 = arith.addf %61, %99 : vector<16x32xf32>
    %c0_47 = arith.constant 0 : index
    %c0_48 = arith.constant 0 : index
    %c0_49 = arith.constant 0 : index
    %101 = vector.load %arg15[%c0_47, %c0_48, %c0_49] : memref<1x16x32xf32, #tpu.memory_space<vmem>>, vector<1x16x32xf32>
    %102 = vector.shape_cast %101 : vector<1x16x32xf32> to vector<16x32xf32>
    %103 = vector.shape_cast %100 : vector<16x32xf32> to vector<1x16x32xf32>
    tpu.vector_store %arg15[%c0_47, %c0_48, %c0_49], %103 {strides = array<i32>} : memref<1x16x32xf32, #tpu.memory_space<vmem>>, vector<1x16x32xf32>,
    return
  }
  func.func @transform_0(%arg0: i32) -> (i32, i32, i32) {
    %c0_i32 = arith.constant 0 : i32
    %c0_i32_0 = arith.constant 0 : i32
    %c0_i32_1 = arith.constant 0 : i32
    return %arg0, %c0_i32, %c0_i32_0 : i32, i32, i32
  }
  func.func @transform_1(%arg0: i32) -> (i32, i32, i32) {
    %c0_i32 = arith.constant 0 : i32
    %c0_i32_0 = arith.constant 0 : i32
    %c0_i32_1 = arith.constant 0 : i32
    return %arg0, %c0_i32, %c0_i32_0 : i32, i32, i32
  }
  func.func @transform_2(%arg0: i32) -> (i32, i32) {
    %c0_i32 = arith.constant 0 : i32
    %c0_i32_0 = arith.constant 0 : i32
    %c0_i32_1 = arith.constant 0 : i32
    return %c0_i32, %c0_i32_0 : i32, i32
  }
  func.func @transform_3(%arg0: i32) -> (i32, i32) {
    %c0_i32 = arith.constant 0 : i32
    %c0_i32_0 = arith.constant 0 : i32
    %c0_i32_1 = arith.constant 0 : i32
    return %c0_i32, %c0_i32_0 : i32, i32
  }
  func.func @transform_4(%arg0: i32) -> (i32, i32) {
    %c0_i32 = arith.constant 0 : i32
    %c0_i32_0 = arith.constant 0 : i32
    %c0_i32_1 = arith.constant 0 : i32
    return %c0_i32, %c0_i32_0 : i32, i32
  }
  func.func @transform_5(%arg0: i32) -> (i32, i32) {
    %c0_i32 = arith.constant 0 : i32
    %c0_i32_0 = arith.constant 0 : i32
    %c0_i32_1 = arith.constant 0 : i32
    return %c0_i32, %c0_i32_0 : i32, i32
  }
  func.func @transform_6(%arg0: i32) -> (i32, i32) {
    %c0_i32 = arith.constant 0 : i32
    %c0_i32_0 = arith.constant 0 : i32
    %c0_i32_1 = arith.constant 0 : i32
    return %c0_i32, %c0_i32_0 : i32, i32
  }
  func.func @transform_7(%arg0: i32) -> (i32, i32) {
    %c0_i32 = arith.constant 0 : i32
    %c0_i32_0 = arith.constant 0 : i32
    %c0_i32_1 = arith.constant 0 : i32
    return %c0_i32, %c0_i32_0 : i32, i32
  }
  func.func @transform_8(%arg0: i32) -> (i32, i32) {
    %c0_i32 = arith.constant 0 : i32
    %c0_i32_0 = arith.constant 0 : i32
    %c0_i32_1 = arith.constant 0 : i32
    return %c0_i32, %c0_i32_0 : i32, i32
  }
  func.func @transform_9(%arg0: i32) -> (i32, i32) {
    %c0_i32 = arith.constant 0 : i32
    %c0_i32_0 = arith.constant 0 : i32
    %c0_i32_1 = arith.constant 0 : i32
    return %c0_i32, %c0_i32_0 : i32, i32
  }
  func.func @transform_10(%arg0: i32) -> (i32, i32) {
    %c0_i32 = arith.constant 0 : i32
    %c0_i32_0 = arith.constant 0 : i32
    %c0_i32_1 = arith.constant 0 : i32
    return %c0_i32, %c0_i32_0 : i32, i32
  }
  func.func @transform_11(%arg0: i32) -> (i32, i32) {
    %c0_i32 = arith.constant 0 : i32
    %c0_i32_0 = arith.constant 0 : i32
    %c0_i32_1 = arith.constant 0 : i32
    return %c0_i32, %c0_i32_0 : i32, i32
  }
  func.func @transform_12(%arg0: i32) -> (i32, i32) {
    %c0_i32 = arith.constant 0 : i32
    %c0_i32_0 = arith.constant 0 : i32
    %c0_i32_1 = arith.constant 0 : i32
    return %c0_i32, %c0_i32_0 : i32, i32
  }
  func.func @transform_13(%arg0: i32) -> (i32, i32) {
    %c0_i32 = arith.constant 0 : i32
    %c0_i32_0 = arith.constant 0 : i32
    %c0_i32_1 = arith.constant 0 : i32
    return %c0_i32, %c0_i32_0 : i32, i32
  }
  func.func @transform_14(%arg0: i32) -> (i32, i32, i32) {
    %c0_i32 = arith.constant 0 : i32
    %c0_i32_0 = arith.constant 0 : i32
    %c0_i32_1 = arith.constant 0 : i32
    return %arg0, %c0_i32, %c0_i32_0 : i32, i32, i32
  }
}

module attributes {stable_mosaic.version = 11 : i64} {
  func.func @_decoder_layer_kernel(%arg0: i32, %arg1: memref<1x8x32xf32, #tpu.memory_space<vmem>>, %arg2: memref<1x16x32xf32, #tpu.memory_space<vmem>>, %arg3: memref<1x1x8xf32, #tpu.memory_space<vmem>>, %arg4: memref<1x8x8xf32, #tpu.memory_space<vmem>>, %arg5: memref<1x1x16xf32, #tpu.memory_space<vmem>>, %arg6: memref<1x32xf32, #tpu.memory_space<vmem>>, %arg7: memref<1x32xf32, #tpu.memory_space<vmem>>, %arg8: memref<32x96xbf16, #tpu.memory_space<vmem>>, %arg9: memref<1x96xf32, #tpu.memory_space<vmem>>, %arg10: memref<32x32xbf16, #tpu.memory_space<vmem>>, %arg11: memref<1x32xf32, #tpu.memory_space<vmem>>, %arg12: memref<1x32xf32, #tpu.memory_space<vmem>>, %arg13: memref<1x32xf32, #tpu.memory_space<vmem>>, %arg14: memref<1x32xf32, #tpu.memory_space<vmem>>, %arg15: memref<1x32xf32, #tpu.memory_space<vmem>>, %arg16: memref<32x32xbf16, #tpu.memory_space<vmem>>, %arg17: memref<1x32xf32, #tpu.memory_space<vmem>>, %arg18: memref<32x64xbf16, #tpu.memory_space<vmem>>, %arg19: memref<1x64xf32, #tpu.memory_space<vmem>>, %arg20: memref<32x32xbf16, #tpu.memory_space<vmem>>, %arg21: memref<1x32xf32, #tpu.memory_space<vmem>>, %arg22: memref<1x32xf32, #tpu.memory_space<vmem>>, %arg23: memref<1x32xf32, #tpu.memory_space<vmem>>, %arg24: memref<32x64xbf16, #tpu.memory_space<vmem>>, %arg25: memref<1x64xf32, #tpu.memory_space<vmem>>, %arg26: memref<64x32xbf16, #tpu.memory_space<vmem>>, %arg27: memref<1x32xf32, #tpu.memory_space<vmem>>, %arg28: memref<1x8x32xf32, #tpu.memory_space<vmem>>) attributes {dimension_semantics = [#tpu.dimension_semantics<parallel>], iteration_bounds = array<i64: 2>, scalar_prefetch = 0 : i64, scratch_operands = 0 : i64, tpu.core_type = #tpu.core_type<tc>, window_params = [{transform_indices = @transform_0, window_bounds = array<i64: 1, 8, 32>}, {transform_indices = @transform_1, window_bounds = array<i64: 1, 16, 32>}, {transform_indices = @transform_2, window_bounds = array<i64: 1, 1, 8>}, {pipeline_mode = #tpu.pipeline_mode<synchronous>, transform_indices = @transform_3, window_bounds = array<i64: 1, 8, 8>}, {transform_indices = @transform_4, window_bounds = array<i64: 1, 1, 16>}, {pipeline_mode = #tpu.pipeline_mode<synchronous>, transform_indices = @transform_5, window_bounds = array<i64: 1, 32>}, {pipeline_mode = #tpu.pipeline_mode<synchronous>, transform_indices = @transform_6, window_bounds = array<i64: 1, 32>}, {pipeline_mode = #tpu.pipeline_mode<synchronous>, transform_indices = @transform_7, window_bounds = array<i64: 32, 96>}, {pipeline_mode = #tpu.pipeline_mode<synchronous>, transform_indices = @transform_8, window_bounds = array<i64: 1, 96>}, {pipeline_mode = #tpu.pipeline_mode<synchronous>, transform_indices = @transform_9, window_bounds = array<i64: 32, 32>}, {pipeline_mode = #tpu.pipeline_mode<synchronous>, transform_indices = @transform_10, window_bounds = array<i64: 1, 32>}, {pipeline_mode = #tpu.pipeline_mode<synchronous>, transform_indices = @transform_11, window_bounds = array<i64: 1, 32>}, {pipeline_mode = #tpu.pipeline_mode<synchronous>, transform_indices = @transform_12, window_bounds = array<i64: 1, 32>}, {pipeline_mode = #tpu.pipeline_mode<synchronous>, transform_indices = @transform_13, window_bounds = array<i64: 1, 32>}, {pipeline_mode = #tpu.pipeline_mode<synchronous>, transform_indices = @transform_14, window_bounds = array<i64: 1, 32>}, {pipeline_mode = #tpu.pipeline_mode<synchronous>, transform_indices = @transform_15, window_bounds = array<i64: 32, 32>}, {pipeline_mode = #tpu.pipeline_mode<synchronous>, transform_indices = @transform_16, window_bounds = array<i64: 1, 32>}, {pipeline_mode = #tpu.pipeline_mode<synchronous>, transform_indices = @transform_17, window_bounds = array<i64: 32, 64>}, {pipeline_mode = #tpu.pipeline_mode<synchronous>, transform_indices = @transform_18, window_bounds = array<i64: 1, 64>}, {pipeline_mode = #tpu.pipeline_mode<synchronous>, transform_indices = @transform_19, window_bounds = array<i64: 32, 32>}, {pipeline_mode = #tpu.pipeline_mode<synchronous>, transform_indices = @transform_20, window_bounds = array<i64: 1, 32>}, {pipeline_mode = #tpu.pipeline_mode<synchronous>, transform_indices = @transform_21, window_bounds = array<i64: 1, 32>}, {pipeline_mode = #tpu.pipeline_mode<synchronous>, transform_indices = @transform_22, window_bounds = array<i64: 1, 32>}, {pipeline_mode = #tpu.pipeline_mode<synchronous>, transform_indices = @transform_23, window_bounds = array<i64: 32, 64>}, {pipeline_mode = #tpu.pipeline_mode<synchronous>, transform_indices = @transform_24, window_bounds = array<i64: 1, 64>}, {pipeline_mode = #tpu.pipeline_mode<synchronous>, transform_indices = @transform_25, window_bounds = array<i64: 64, 32>}, {pipeline_mode = #tpu.pipeline_mode<synchronous>, transform_indices = @transform_26, window_bounds = array<i64: 1, 32>}, {transform_indices = @transform_27, window_bounds = array<i64: 1, 8, 32>}]} {
    %c0 = arith.constant 0 : index
    %c0_0 = arith.constant 0 : index
    %c0_1 = arith.constant 0 : index
    %0 = vector.load %arg4[%c0, %c0_0, %c0_1] : memref<1x8x8xf32, #tpu.memory_space<vmem>>, vector<1x8x8xf32>
    %1 = vector.shape_cast %0 : vector<1x8x8xf32> to vector<8x8xf32>
    %c0_2 = arith.constant 0 : index
    %c0_3 = arith.constant 0 : index
    %c0_4 = arith.constant 0 : index
    %2 = vector.load %arg1[%c0_2, %c0_3, %c0_4] : memref<1x8x32xf32, #tpu.memory_space<vmem>>, vector<1x8x32xf32>
    %3 = vector.shape_cast %2 : vector<1x8x32xf32> to vector<8x32xf32>
    %c0_5 = arith.constant 0 : index
    %c0_6 = arith.constant 0 : index
    %4 = vector.load %arg6[%c0_5, %c0_6] : memref<1x32xf32, #tpu.memory_space<vmem>>, vector<1x32xf32>
    %c0_7 = arith.constant 0 : index
    %c0_8 = arith.constant 0 : index
    %5 = vector.load %arg7[%c0_7, %c0_8] : memref<1x32xf32, #tpu.memory_space<vmem>>, vector<1x32xf32>
    %cst = arith.constant dense<0.000000e+00> : vector<8xf32>
    %6 = vector.multi_reduction <add>, %3, %cst [1] : vector<8x32xf32> to vector<8xf32>
    %7 = vector.shape_cast %6 : vector<8xf32> to vector<8x1xf32>
    %cst_9 = arith.constant 3.200000e+01 : f32
    %8 = vector.broadcast %cst_9 : f32 to vector<8x1xf32>
    %9 = arith.divf %7, %8 : vector<8x1xf32>
    %10 = vector.broadcast %9 : vector<8x1xf32> to vector<8x32xf32>
    %11 = arith.subf %3, %10 : vector<8x32xf32>
    %12 = arith.mulf %11, %11 : vector<8x32xf32>
    %cst_10 = arith.constant dense<0.000000e+00> : vector<8xf32>
    %13 = vector.multi_reduction <add>, %12, %cst_10 [1] : vector<8x32xf32> to vector<8xf32>
    %14 = vector.shape_cast %13 : vector<8xf32> to vector<8x1xf32>
    %cst_11 = arith.constant 3.200000e+01 : f32
    %15 = vector.broadcast %cst_11 : f32 to vector<8x1xf32>
    %16 = arith.divf %14, %15 : vector<8x1xf32>
    %17 = vector.broadcast %9 : vector<8x1xf32> to vector<8x32xf32>
    %18 = arith.subf %3, %17 : vector<8x32xf32>
    %cst_12 = arith.constant 9.99999974E-6 : f32
    %19 = vector.broadcast %cst_12 : f32 to vector<8x1xf32>
    %20 = arith.addf %16, %19 : vector<8x1xf32>
    %21 = math.rsqrt %20 : vector<8x1xf32>
    %22 = vector.broadcast %21 : vector<8x1xf32> to vector<8x32xf32>
    %23 = arith.mulf %18, %22 : vector<8x32xf32>
    %24 = vector.broadcast %4 : vector<1x32xf32> to vector<8x32xf32>
    %25 = arith.mulf %23, %24 : vector<8x32xf32>
    %26 = vector.broadcast %5 : vector<1x32xf32> to vector<8x32xf32>
    %27 = arith.addf %25, %26 : vector<8x32xf32>
    %28 = arith.truncf %27 : vector<8x32xf32> to vector<8x32xbf16>
    %c0_13 = arith.constant 0 : index
    %c0_14 = arith.constant 0 : index
    %29 = vector.load %arg8[%c0_13, %c0_14] : memref<32x96xbf16, #tpu.memory_space<vmem>>, vector<32x96xbf16>
    %cst_15 = arith.constant dense<0.000000e+00> : vector<8x96xf32>
    %30 = tpu.matmul %28, %29, %cst_15 {dimension_numbers = #tpu.dot_dimension_numbers<[1], [0], [0], [1], [0, 0, 1, 1], [], []>} : vector<8x32xbf16>, vector<32x96xbf16>, vector<8x96xf32> -> vector<8x96xf32>
    %c0_16 = arith.constant 0 : index
    %c0_17 = arith.constant 0 : index
    %31 = vector.load %arg9[%c0_16, %c0_17] : memref<1x96xf32, #tpu.memory_space<vmem>>, vector<1x96xf32>
    %32 = vector.broadcast %31 : vector<1x96xf32> to vector<8x96xf32>
    %33 = arith.addf %30, %32 : vector<8x96xf32>
    %34 = vector.extract_strided_slice %33 {offsets = [0, 0], sizes = [8, 32], strides = [1, 1]} : vector<8x96xf32> to vector<8x32xf32>
    %35 = vector.extract_strided_slice %33 {offsets = [0, 32], sizes = [8, 32], strides = [1, 1]} : vector<8x96xf32> to vector<8x32xf32>
    %36 = vector.extract_strided_slice %33 {offsets = [0, 64], sizes = [8, 32], strides = [1, 1]} : vector<8x96xf32> to vector<8x32xf32>
    %c0_18 = arith.constant 0 : index
    %c0_19 = arith.constant 0 : index
    %c0_20 = arith.constant 0 : index
    %37 = vector.load %arg3[%c0_18, %c0_19, %c0_20] : memref<1x1x8xf32, #tpu.memory_space<vmem>>, vector<1x1x8xf32>
    %38 = vector.shape_cast %37 : vector<1x1x8xf32> to vector<1x8xf32>
    %39 = arith.truncf %34 : vector<8x32xf32> to vector<8x32xbf16>
    %40 = arith.truncf %35 : vector<8x32xf32> to vector<8x32xbf16>
    %41 = arith.truncf %36 : vector<8x32xf32> to vector<8x32xbf16>
    %cst_21 = arith.constant dense<0.000000e+00> : vector<8x8xf32>
    %42 = tpu.matmul %39, %40, %cst_21 {dimension_numbers = #tpu.dot_dimension_numbers<[1], [1], [0], [0], [0, 0, 1, 0], [], []>} : vector<8x32xbf16>, vector<8x32xbf16>, vector<8x8xf32> -> vector<8x8xf32>
    %43 = vector.broadcast %38 : vector<1x8xf32> to vector<8x8xf32>
    %44 = arith.addf %42, %43 : vector<8x8xf32>
    %45 = arith.addf %44, %1 : vector<8x8xf32>
    %cst_22 = arith.constant dense<0xFF800000> : vector<8xf32>
    %46 = vector.multi_reduction <maximumf>, %45, %cst_22 [1] : vector<8x8xf32> to vector<8xf32>
    %47 = vector.shape_cast %46 : vector<8xf32> to vector<8x1xf32>
    %48 = vector.broadcast %47 : vector<8x1xf32> to vector<8x8xf32>
    %49 = arith.subf %45, %48 : vector<8x8xf32>
    %50 = math.exp %49 : vector<8x8xf32>
    %cst_23 = arith.constant dense<0.000000e+00> : vector<8xf32>
    %51 = vector.multi_reduction <add>, %50, %cst_23 [1] : vector<8x8xf32> to vector<8xf32>
    %52 = vector.shape_cast %51 : vector<8xf32> to vector<8x1xf32>
    %53 = arith.truncf %50 : vector<8x8xf32> to vector<8x8xbf16>
    %cst_24 = arith.constant dense<0.000000e+00> : vector<8x32xf32>
    %54 = tpu.matmul %53, %41, %cst_24 {dimension_numbers = #tpu.dot_dimension_numbers<[1], [0], [0], [1], [0, 0, 1, 1], [], []>} : vector<8x8xbf16>, vector<8x32xbf16>, vector<8x32xf32> -> vector<8x32xf32>
    %55 = tpu.reciprocal %52 {approx = true} : vector<8x1xf32> -> vector<8x1xf32>
    %56 = vector.broadcast %55 : vector<8x1xf32> to vector<8x32xf32>
    %57 = arith.mulf %54, %56 : vector<8x32xf32>
    %58 = arith.truncf %57 : vector<8x32xf32> to vector<8x32xbf16>
    %c0_25 = arith.constant 0 : index
    %c0_26 = arith.constant 0 : index
    %59 = vector.load %arg10[%c0_25, %c0_26] : memref<32x32xbf16, #tpu.memory_space<vmem>>, vector<32x32xbf16>
    %cst_27 = arith.constant dense<0.000000e+00> : vector<8x32xf32>
    %60 = tpu.matmul %58, %59, %cst_27 {dimension_numbers = #tpu.dot_dimension_numbers<[1], [0], [0], [1], [0, 0, 1, 1], [], []>} : vector<8x32xbf16>, vector<32x32xbf16>, vector<8x32xf32> -> vector<8x32xf32>
    %61 = arith.addf %3, %60 : vector<8x32xf32>
    %c0_28 = arith.constant 0 : index
    %c0_29 = arith.constant 0 : index
    %62 = vector.load %arg11[%c0_28, %c0_29] : memref<1x32xf32, #tpu.memory_space<vmem>>, vector<1x32xf32>
    %63 = vector.broadcast %62 : vector<1x32xf32> to vector<8x32xf32>
    %64 = arith.addf %61, %63 : vector<8x32xf32>
    %c0_30 = arith.constant 0 : index
    %c0_31 = arith.constant 0 : index
    %c0_32 = arith.constant 0 : index
    %65 = vector.load %arg2[%c0_30, %c0_31, %c0_32] : memref<1x16x32xf32, #tpu.memory_space<vmem>>, vector<1x16x32xf32>
    %66 = vector.shape_cast %65 : vector<1x16x32xf32> to vector<16x32xf32>
    %c0_33 = arith.constant 0 : index
    %c0_34 = arith.constant 0 : index
    %67 = vector.load %arg12[%c0_33, %c0_34] : memref<1x32xf32, #tpu.memory_space<vmem>>, vector<1x32xf32>
    %c0_35 = arith.constant 0 : index
    %c0_36 = arith.constant 0 : index
    %68 = vector.load %arg13[%c0_35, %c0_36] : memref<1x32xf32, #tpu.memory_space<vmem>>, vector<1x32xf32>
    %cst_37 = arith.constant dense<0.000000e+00> : vector<16xf32>
    %69 = vector.multi_reduction <add>, %66, %cst_37 [1] : vector<16x32xf32> to vector<16xf32>
    %70 = vector.shape_cast %69 : vector<16xf32> to vector<16x1xf32>
    %cst_38 = arith.constant 3.200000e+01 : f32
    %71 = vector.broadcast %cst_38 : f32 to vector<16x1xf32>
    %72 = arith.divf %70, %71 : vector<16x1xf32>
    %73 = vector.broadcast %72 : vector<16x1xf32> to vector<16x32xf32>
    %74 = arith.subf %66, %73 : vector<16x32xf32>
    %75 = arith.mulf %74, %74 : vector<16x32xf32>
    %cst_39 = arith.constant dense<0.000000e+00> : vector<16xf32>
    %76 = vector.multi_reduction <add>, %75, %cst_39 [1] : vector<16x32xf32> to vector<16xf32>
    %77 = vector.shape_cast %76 : vector<16xf32> to vector<16x1xf32>
    %cst_40 = arith.constant 3.200000e+01 : f32
    %78 = vector.broadcast %cst_40 : f32 to vector<16x1xf32>
    %79 = arith.divf %77, %78 : vector<16x1xf32>
    %80 = vector.broadcast %72 : vector<16x1xf32> to vector<16x32xf32>
    %81 = arith.subf %66, %80 : vector<16x32xf32>
    %cst_41 = arith.constant 9.99999974E-6 : f32
    %82 = vector.broadcast %cst_41 : f32 to vector<16x1xf32>
    %83 = arith.addf %79, %82 : vector<16x1xf32>
    %84 = math.rsqrt %83 : vector<16x1xf32>
    %85 = vector.broadcast %84 : vector<16x1xf32> to vector<16x32xf32>
    %86 = arith.mulf %81, %85 : vector<16x32xf32>
    %87 = vector.broadcast %67 : vector<1x32xf32> to vector<16x32xf32>
    %88 = arith.mulf %86, %87 : vector<16x32xf32>
    %89 = vector.broadcast %68 : vector<1x32xf32> to vector<16x32xf32>
    %90 = arith.addf %88, %89 : vector<16x32xf32>
    %91 = arith.truncf %90 : vector<16x32xf32> to vector<16x32xbf16>
    %c0_42 = arith.constant 0 : index
    %c0_43 = arith.constant 0 : index
    %92 = vector.load %arg18[%c0_42, %c0_43] : memref<32x64xbf16, #tpu.memory_space<vmem>>, vector<32x64xbf16>
    %cst_44 = arith.constant dense<0.000000e+00> : vector<16x64xf32>
    %93 = tpu.matmul %91, %92, %cst_44 {dimension_numbers = #tpu.dot_dimension_numbers<[1], [0], [0], [1], [0, 0, 1, 1], [], []>} : vector<16x32xbf16>, vector<32x64xbf16>, vector<16x64xf32> -> vector<16x64xf32>
    %c0_45 = arith.constant 0 : index
    %c0_46 = arith.constant 0 : index
    %94 = vector.load %arg19[%c0_45, %c0_46] : memref<1x64xf32, #tpu.memory_space<vmem>>, vector<1x64xf32>
    %95 = vector.broadcast %94 : vector<1x64xf32> to vector<16x64xf32>
    %96 = arith.addf %93, %95 : vector<16x64xf32>
    %c0_47 = arith.constant 0 : index
    %c0_48 = arith.constant 0 : index
    %97 = vector.load %arg14[%c0_47, %c0_48] : memref<1x32xf32, #tpu.memory_space<vmem>>, vector<1x32xf32>
    %c0_49 = arith.constant 0 : index
    %c0_50 = arith.constant 0 : index
    %98 = vector.load %arg15[%c0_49, %c0_50] : memref<1x32xf32, #tpu.memory_space<vmem>>, vector<1x32xf32>
    %cst_51 = arith.constant dense<0.000000e+00> : vector<8xf32>
    %99 = vector.multi_reduction <add>, %64, %cst_51 [1] : vector<8x32xf32> to vector<8xf32>
    %100 = vector.shape_cast %99 : vector<8xf32> to vector<8x1xf32>
    %cst_52 = arith.constant 3.200000e+01 : f32
    %101 = vector.broadcast %cst_52 : f32 to vector<8x1xf32>
    %102 = arith.divf %100, %101 : vector<8x1xf32>
    %103 = vector.broadcast %102 : vector<8x1xf32> to vector<8x32xf32>
    %104 = arith.subf %64, %103 : vector<8x32xf32>
    %105 = arith.mulf %104, %104 : vector<8x32xf32>
    %cst_53 = arith.constant dense<0.000000e+00> : vector<8xf32>
    %106 = vector.multi_reduction <add>, %105, %cst_53 [1] : vector<8x32xf32> to vector<8xf32>
    %107 = vector.shape_cast %106 : vector<8xf32> to vector<8x1xf32>
    %cst_54 = arith.constant 3.200000e+01 : f32
    %108 = vector.broadcast %cst_54 : f32 to vector<8x1xf32>
    %109 = arith.divf %107, %108 : vector<8x1xf32>
    %110 = vector.broadcast %102 : vector<8x1xf32> to vector<8x32xf32>
    %111 = arith.subf %64, %110 : vector<8x32xf32>
    %cst_55 = arith.constant 9.99999974E-6 : f32
    %112 = vector.broadcast %cst_55 : f32 to vector<8x1xf32>
    %113 = arith.addf %109, %112 : vector<8x1xf32>
    %114 = math.rsqrt %113 : vector<8x1xf32>
    %115 = vector.broadcast %114 : vector<8x1xf32> to vector<8x32xf32>
    %116 = arith.mulf %111, %115 : vector<8x32xf32>
    %117 = vector.broadcast %97 : vector<1x32xf32> to vector<8x32xf32>
    %118 = arith.mulf %116, %117 : vector<8x32xf32>
    %119 = vector.broadcast %98 : vector<1x32xf32> to vector<8x32xf32>
    %120 = arith.addf %118, %119 : vector<8x32xf32>
    %121 = arith.truncf %120 : vector<8x32xf32> to vector<8x32xbf16>
    %c0_56 = arith.constant 0 : index
    %c0_57 = arith.constant 0 : index
    %122 = vector.load %arg16[%c0_56, %c0_57] : memref<32x32xbf16, #tpu.memory_space<vmem>>, vector<32x32xbf16>
    %cst_58 = arith.constant dense<0.000000e+00> : vector<8x32xf32>
    %123 = tpu.matmul %121, %122, %cst_58 {dimension_numbers = #tpu.dot_dimension_numbers<[1], [0], [0], [1], [0, 0, 1, 1], [], []>} : vector<8x32xbf16>, vector<32x32xbf16>, vector<8x32xf32> -> vector<8x32xf32>
    %c0_59 = arith.constant 0 : index
    %c0_60 = arith.constant 0 : index
    %124 = vector.load %arg17[%c0_59, %c0_60] : memref<1x32xf32, #tpu.memory_space<vmem>>, vector<1x32xf32>
    %125 = vector.broadcast %124 : vector<1x32xf32> to vector<8x32xf32>
    %126 = arith.addf %123, %125 : vector<8x32xf32>
    %127 = vector.extract_strided_slice %96 {offsets = [0, 0], sizes = [16, 32], strides = [1, 1]} : vector<16x64xf32> to vector<16x32xf32>
    %128 = vector.extract_strided_slice %96 {offsets = [0, 32], sizes = [16, 32], strides = [1, 1]} : vector<16x64xf32> to vector<16x32xf32>
    %c0_61 = arith.constant 0 : index
    %c0_62 = arith.constant 0 : index
    %c0_63 = arith.constant 0 : index
    %129 = vector.load %arg5[%c0_61, %c0_62, %c0_63] : memref<1x1x16xf32, #tpu.memory_space<vmem>>, vector<1x1x16xf32>
    %130 = vector.shape_cast %129 : vector<1x1x16xf32> to vector<1x16xf32>
    %131 = arith.truncf %126 : vector<8x32xf32> to vector<8x32xbf16>
    %132 = arith.truncf %127 : vector<16x32xf32> to vector<16x32xbf16>
    %133 = arith.truncf %128 : vector<16x32xf32> to vector<16x32xbf16>
    %cst_64 = arith.constant dense<0.000000e+00> : vector<8x16xf32>
    %134 = tpu.matmul %131, %132, %cst_64 {dimension_numbers = #tpu.dot_dimension_numbers<[1], [1], [0], [0], [0, 0, 1, 0], [], []>} : vector<8x32xbf16>, vector<16x32xbf16>, vector<8x16xf32> -> vector<8x16xf32>
    %135 = vector.broadcast %130 : vector<1x16xf32> to vector<8x16xf32>
    %136 = arith.addf %134, %135 : vector<8x16xf32>
    %cst_65 = arith.constant dense<0xFF800000> : vector<8xf32>
    %137 = vector.multi_reduction <maximumf>, %136, %cst_65 [1] : vector<8x16xf32> to vector<8xf32>
    %138 = vector.shape_cast %137 : vector<8xf32> to vector<8x1xf32>
    %139 = vector.broadcast %138 : vector<8x1xf32> to vector<8x16xf32>
    %140 = arith.subf %136, %139 : vector<8x16xf32>
    %141 = math.exp %140 : vector<8x16xf32>
    %cst_66 = arith.constant dense<0.000000e+00> : vector<8xf32>
    %142 = vector.multi_reduction <add>, %141, %cst_66 [1] : vector<8x16xf32> to vector<8xf32>
    %143 = vector.shape_cast %142 : vector<8xf32> to vector<8x1xf32>
    %144 = arith.truncf %141 : vector<8x16xf32> to vector<8x16xbf16>
    %cst_67 = arith.constant dense<0.000000e+00> : vector<8x32xf32>
    %145 = tpu.matmul %144, %133, %cst_67 {dimension_numbers = #tpu.dot_dimension_numbers<[1], [0], [0], [1], [0, 0, 1, 1], [], []>} : vector<8x16xbf16>, vector<16x32xbf16>, vector<8x32xf32> -> vector<8x32xf32>
    %146 = tpu.reciprocal %143 {approx = true} : vector<8x1xf32> -> vector<8x1xf32>
    %147 = vector.broadcast %146 : vector<8x1xf32> to vector<8x32xf32>
    %148 = arith.mulf %145, %147 : vector<8x32xf32>
    %149 = arith.truncf %148 : vector<8x32xf32> to vector<8x32xbf16>
    %c0_68 = arith.constant 0 : index
    %c0_69 = arith.constant 0 : index
    %150 = vector.load %arg20[%c0_68, %c0_69] : memref<32x32xbf16, #tpu.memory_space<vmem>>, vector<32x32xbf16>
    %cst_70 = arith.constant dense<0.000000e+00> : vector<8x32xf32>
    %151 = tpu.matmul %149, %150, %cst_70 {dimension_numbers = #tpu.dot_dimension_numbers<[1], [0], [0], [1], [0, 0, 1, 1], [], []>} : vector<8x32xbf16>, vector<32x32xbf16>, vector<8x32xf32> -> vector<8x32xf32>
    %152 = arith.addf %64, %151 : vector<8x32xf32>
    %c0_71 = arith.constant 0 : index
    %c0_72 = arith.constant 0 : index
    %153 = vector.load %arg21[%c0_71, %c0_72] : memref<1x32xf32, #tpu.memory_space<vmem>>, vector<1x32xf32>
    %154 = vector.broadcast %153 : vector<1x32xf32> to vector<8x32xf32>
    %155 = arith.addf %152, %154 : vector<8x32xf32>
    %c0_73 = arith.constant 0 : index
    %c0_74 = arith.constant 0 : index
    %156 = vector.load %arg22[%c0_73, %c0_74] : memref<1x32xf32, #tpu.memory_space<vmem>>, vector<1x32xf32>
    %c0_75 = arith.constant 0 : index
    %c0_76 = arith.constant 0 : index
    %157 = vector.load %arg23[%c0_75, %c0_76] : memref<1x32xf32, #tpu.memory_space<vmem>>, vector<1x32xf32>
    %cst_77 = arith.constant dense<0.000000e+00> : vector<8xf32>
    %158 = vector.multi_reduction <add>, %155, %cst_77 [1] : vector<8x32xf32> to vector<8xf32>
    %159 = vector.shape_cast %158 : vector<8xf32> to vector<8x1xf32>
    %cst_78 = arith.constant 3.200000e+01 : f32
    %160 = vector.broadcast %cst_78 : f32 to vector<8x1xf32>
    %161 = arith.divf %159, %160 : vector<8x1xf32>
    %162 = vector.broadcast %161 : vector<8x1xf32> to vector<8x32xf32>
    %163 = arith.subf %155, %162 : vector<8x32xf32>
    %164 = arith.mulf %163, %163 : vector<8x32xf32>
    %cst_79 = arith.constant dense<0.000000e+00> : vector<8xf32>
    %165 = vector.multi_reduction <add>, %164, %cst_79 [1] : vector<8x32xf32> to vector<8xf32>
    %166 = vector.shape_cast %165 : vector<8xf32> to vector<8x1xf32>
    %cst_80 = arith.constant 3.200000e+01 : f32
    %167 = vector.broadcast %cst_80 : f32 to vector<8x1xf32>
    %168 = arith.divf %166, %167 : vector<8x1xf32>
    %169 = vector.broadcast %161 : vector<8x1xf32> to vector<8x32xf32>
    %170 = arith.subf %155, %169 : vector<8x32xf32>
    %cst_81 = arith.constant 9.99999974E-6 : f32
    %171 = vector.broadcast %cst_81 : f32 to vector<8x1xf32>
    %172 = arith.addf %168, %171 : vector<8x1xf32>
    %173 = math.rsqrt %172 : vector<8x1xf32>
    %174 = vector.broadcast %173 : vector<8x1xf32> to vector<8x32xf32>
    %175 = arith.mulf %170, %174 : vector<8x32xf32>
    %176 = vector.broadcast %156 : vector<1x32xf32> to vector<8x32xf32>
    %177 = arith.mulf %175, %176 : vector<8x32xf32>
    %178 = vector.broadcast %157 : vector<1x32xf32> to vector<8x32xf32>
    %179 = arith.addf %177, %178 : vector<8x32xf32>
    %180 = arith.truncf %179 : vector<8x32xf32> to vector<8x32xbf16>
    %c0_82 = arith.constant 0 : index
    %c0_83 = arith.constant 0 : index
    %181 = vector.load %arg24[%c0_82, %c0_83] : memref<32x64xbf16, #tpu.memory_space<vmem>>, vector<32x64xbf16>
    %cst_84 = arith.constant dense<0.000000e+00> : vector<8x64xf32>
    %182 = tpu.matmul %180, %181, %cst_84 {dimension_numbers = #tpu.dot_dimension_numbers<[1], [0], [0], [1], [0, 0, 1, 1], [], []>} : vector<8x32xbf16>, vector<32x64xbf16>, vector<8x64xf32> -> vector<8x64xf32>
    %c0_85 = arith.constant 0 : index
    %c0_86 = arith.constant 0 : index
    %183 = vector.load %arg25[%c0_85, %c0_86] : memref<1x64xf32, #tpu.memory_space<vmem>>, vector<1x64xf32>
    %184 = vector.broadcast %183 : vector<1x64xf32> to vector<8x64xf32>
    %185 = arith.addf %182, %184 : vector<8x64xf32>
    %cst_87 = arith.constant 0.000000e+00 : f32
    %186 = vector.broadcast %cst_87 : f32 to vector<8x64xf32>
    %187 = arith.maximumf %185, %186 : vector<8x64xf32>
    %188 = arith.truncf %187 : vector<8x64xf32> to vector<8x64xbf16>
    %c0_88 = arith.constant 0 : index
    %c0_89 = arith.constant 0 : index
    %189 = vector.load %arg26[%c0_88, %c0_89] : memref<64x32xbf16, #tpu.memory_space<vmem>>, vector<64x32xbf16>
    %cst_90 = arith.constant dense<0.000000e+00> : vector<8x32xf32>
    %190 = tpu.matmul %188, %189, %cst_90 {dimension_numbers = #tpu.dot_dimension_numbers<[1], [0], [0], [1], [0, 0, 1, 1], [], []>} : vector<8x64xbf16>, vector<64x32xbf16>, vector<8x32xf32> -> vector<8x32xf32>
    %c0_91 = arith.constant 0 : index
    %c0_92 = arith.constant 0 : index
    %191 = vector.load %arg27[%c0_91, %c0_92] : memref<1x32xf32, #tpu.memory_space<vmem>>, vector<1x32xf32>
    %192 = vector.broadcast %191 : vector<1x32xf32> to vector<8x32xf32>
    %193 = arith.addf %190, %192 : vector<8x32xf32>
    %194 = arith.addf %155, %193 : vector<8x32xf32>
    %c0_93 = arith.constant 0 : index
    %c0_94 = arith.constant 0 : index
    %c0_95 = arith.constant 0 : index
    %195 = vector.load %arg28[%c0_93, %c0_94, %c0_95] : memref<1x8x32xf32, #tpu.memory_space<vmem>>, vector<1x8x32xf32>
    %196 = vector.shape_cast %195 : vector<1x8x32xf32> to vector<8x32xf32>
    %197 = vector.shape_cast %194 : vector<8x32xf32> to vector<1x8x32xf32>
    tpu.vector_store %arg28[%c0_93, %c0_94, %c0_95], %197 {strides = array<i32>} : memref<1x8x32xf32, #tpu.memory_space<vmem>>, vector<1x8x32xf32>,
    return
  }
  func.func @transform_0(%arg0: i32) -> (i32, i32, i32) {
    %c0_i32 = arith.constant 0 : i32
    %c0_i32_0 = arith.constant 0 : i32
    %c0_i32_1 = arith.constant 0 : i32
    return %arg0, %c0_i32, %c0_i32_0 : i32, i32, i32
  }
  func.func @transform_1(%arg0: i32) -> (i32, i32, i32) {
    %c0_i32 = arith.constant 0 : i32
    %c0_i32_0 = arith.constant 0 : i32
    %c0_i32_1 = arith.constant 0 : i32
    return %arg0, %c0_i32, %c0_i32_0 : i32, i32, i32
  }
  func.func @transform_2(%arg0: i32) -> (i32, i32, i32) {
    %c0_i32 = arith.constant 0 : i32
    %c0_i32_0 = arith.constant 0 : i32
    %c0_i32_1 = arith.constant 0 : i32
    return %arg0, %c0_i32, %c0_i32_0 : i32, i32, i32
  }
  func.func @transform_3(%arg0: i32) -> (i32, i32, i32) {
    %c0_i32 = arith.constant 0 : i32
    %c0_i32_0 = arith.constant 0 : i32
    %c0_i32_1 = arith.constant 0 : i32
    %c0_i32_2 = arith.constant 0 : i32
    return %c0_i32, %c0_i32_0, %c0_i32_1 : i32, i32, i32
  }
  func.func @transform_4(%arg0: i32) -> (i32, i32, i32) {
    %c0_i32 = arith.constant 0 : i32
    %c0_i32_0 = arith.constant 0 : i32
    %c0_i32_1 = arith.constant 0 : i32
    return %arg0, %c0_i32, %c0_i32_0 : i32, i32, i32
  }
  func.func @transform_5(%arg0: i32) -> (i32, i32) {
    %c0_i32 = arith.constant 0 : i32
    %c0_i32_0 = arith.constant 0 : i32
    %c0_i32_1 = arith.constant 0 : i32
    return %c0_i32, %c0_i32_0 : i32, i32
  }
  func.func @transform_6(%arg0: i32) -> (i32, i32) {
    %c0_i32 = arith.constant 0 : i32
    %c0_i32_0 = arith.constant 0 : i32
    %c0_i32_1 = arith.constant 0 : i32
    return %c0_i32, %c0_i32_0 : i32, i32
  }
  func.func @transform_7(%arg0: i32) -> (i32, i32) {
    %c0_i32 = arith.constant 0 : i32
    %c0_i32_0 = arith.constant 0 : i32
    %c0_i32_1 = arith.constant 0 : i32
    return %c0_i32, %c0_i32_0 : i32, i32
  }
  func.func @transform_8(%arg0: i32) -> (i32, i32) {
    %c0_i32 = arith.constant 0 : i32
    %c0_i32_0 = arith.constant 0 : i32
    %c0_i32_1 = arith.constant 0 : i32
    return %c0_i32, %c0_i32_0 : i32, i32
  }
  func.func @transform_9(%arg0: i32) -> (i32, i32) {
    %c0_i32 = arith.constant 0 : i32
    %c0_i32_0 = arith.constant 0 : i32
    %c0_i32_1 = arith.constant 0 : i32
    return %c0_i32, %c0_i32_0 : i32, i32
  }
  func.func @transform_10(%arg0: i32) -> (i32, i32) {
    %c0_i32 = arith.constant 0 : i32
    %c0_i32_0 = arith.constant 0 : i32
    %c0_i32_1 = arith.constant 0 : i32
    return %c0_i32, %c0_i32_0 : i32, i32
  }
  func.func @transform_11(%arg0: i32) -> (i32, i32) {
    %c0_i32 = arith.constant 0 : i32
    %c0_i32_0 = arith.constant 0 : i32
    %c0_i32_1 = arith.constant 0 : i32
    return %c0_i32, %c0_i32_0 : i32, i32
  }
  func.func @transform_12(%arg0: i32) -> (i32, i32) {
    %c0_i32 = arith.constant 0 : i32
    %c0_i32_0 = arith.constant 0 : i32
    %c0_i32_1 = arith.constant 0 : i32
    return %c0_i32, %c0_i32_0 : i32, i32
  }
  func.func @transform_13(%arg0: i32) -> (i32, i32) {
    %c0_i32 = arith.constant 0 : i32
    %c0_i32_0 = arith.constant 0 : i32
    %c0_i32_1 = arith.constant 0 : i32
    return %c0_i32, %c0_i32_0 : i32, i32
  }
  func.func @transform_14(%arg0: i32) -> (i32, i32) {
    %c0_i32 = arith.constant 0 : i32
    %c0_i32_0 = arith.constant 0 : i32
    %c0_i32_1 = arith.constant 0 : i32
    return %c0_i32, %c0_i32_0 : i32, i32
  }
  func.func @transform_15(%arg0: i32) -> (i32, i32) {
    %c0_i32 = arith.constant 0 : i32
    %c0_i32_0 = arith.constant 0 : i32
    %c0_i32_1 = arith.constant 0 : i32
    return %c0_i32, %c0_i32_0 : i32, i32
  }
  func.func @transform_16(%arg0: i32) -> (i32, i32) {
    %c0_i32 = arith.constant 0 : i32
    %c0_i32_0 = arith.constant 0 : i32
    %c0_i32_1 = arith.constant 0 : i32
    return %c0_i32, %c0_i32_0 : i32, i32
  }
  func.func @transform_17(%arg0: i32) -> (i32, i32) {
    %c0_i32 = arith.constant 0 : i32
    %c0_i32_0 = arith.constant 0 : i32
    %c0_i32_1 = arith.constant 0 : i32
    return %c0_i32, %c0_i32_0 : i32, i32
  }
  func.func @transform_18(%arg0: i32) -> (i32, i32) {
    %c0_i32 = arith.constant 0 : i32
    %c0_i32_0 = arith.constant 0 : i32
    %c0_i32_1 = arith.constant 0 : i32
    return %c0_i32, %c0_i32_0 : i32, i32
  }
  func.func @transform_19(%arg0: i32) -> (i32, i32) {
    %c0_i32 = arith.constant 0 : i32
    %c0_i32_0 = arith.constant 0 : i32
    %c0_i32_1 = arith.constant 0 : i32
    return %c0_i32, %c0_i32_0 : i32, i32
  }
  func.func @transform_20(%arg0: i32) -> (i32, i32) {
    %c0_i32 = arith.constant 0 : i32
    %c0_i32_0 = arith.constant 0 : i32
    %c0_i32_1 = arith.constant 0 : i32
    return %c0_i32, %c0_i32_0 : i32, i32
  }
  func.func @transform_21(%arg0: i32) -> (i32, i32) {
    %c0_i32 = arith.constant 0 : i32
    %c0_i32_0 = arith.constant 0 : i32
    %c0_i32_1 = arith.constant 0 : i32
    return %c0_i32, %c0_i32_0 : i32, i32
  }
  func.func @transform_22(%arg0: i32) -> (i32, i32) {
    %c0_i32 = arith.constant 0 : i32
    %c0_i32_0 = arith.constant 0 : i32
    %c0_i32_1 = arith.constant 0 : i32
    return %c0_i32, %c0_i32_0 : i32, i32
  }
  func.func @transform_23(%arg0: i32) -> (i32, i32) {
    %c0_i32 = arith.constant 0 : i32
    %c0_i32_0 = arith.constant 0 : i32
    %c0_i32_1 = arith.constant 0 : i32
    return %c0_i32, %c0_i32_0 : i32, i32
  }
  func.func @transform_24(%arg0: i32) -> (i32, i32) {
    %c0_i32 = arith.constant 0 : i32
    %c0_i32_0 = arith.constant 0 : i32
    %c0_i32_1 = arith.constant 0 : i32
    return %c0_i32, %c0_i32_0 : i32, i32
  }
  func.func @transform_25(%arg0: i32) -> (i32, i32) {
    %c0_i32 = arith.constant 0 : i32
    %c0_i32_0 = arith.constant 0 : i32
    %c0_i32_1 = arith.constant 0 : i32
    return %c0_i32, %c0_i32_0 : i32, i32
  }
  func.func @transform_26(%arg0: i32) -> (i32, i32) {
    %c0_i32 = arith.constant 0 : i32
    %c0_i32_0 = arith.constant 0 : i32
    %c0_i32_1 = arith.constant 0 : i32
    return %c0_i32, %c0_i32_0 : i32, i32
  }
  func.func @transform_27(%arg0: i32) -> (i32, i32, i32) {
    %c0_i32 = arith.constant 0 : i32
    %c0_i32_0 = arith.constant 0 : i32
    %c0_i32_1 = arith.constant 0 : i32
    return %arg0, %c0_i32, %c0_i32_0 : i32, i32, i32
  }
}

module attributes {stable_mosaic.version = 11 : i64} {
  func.func @_ln_head_kernel(%arg0: i32, %arg1: memref<1x8x32xf32, #tpu.memory_space<vmem>>, %arg2: memref<1x32xf32, #tpu.memory_space<vmem>>, %arg3: memref<1x32xf32, #tpu.memory_space<vmem>>, %arg4: memref<32x128xbf16, #tpu.memory_space<vmem>>, %arg5: memref<1x128xf32, #tpu.memory_space<vmem>>, %arg6: memref<1x8x128xf32, #tpu.memory_space<vmem>>) attributes {dimension_semantics = [#tpu.dimension_semantics<parallel>], iteration_bounds = array<i64: 2>, scalar_prefetch = 0 : i64, scratch_operands = 0 : i64, tpu.core_type = #tpu.core_type<tc>, window_params = [{transform_indices = @transform_0, window_bounds = array<i64: 1, 8, 32>}, {pipeline_mode = #tpu.pipeline_mode<synchronous>, transform_indices = @transform_1, window_bounds = array<i64: 1, 32>}, {pipeline_mode = #tpu.pipeline_mode<synchronous>, transform_indices = @transform_2, window_bounds = array<i64: 1, 32>}, {pipeline_mode = #tpu.pipeline_mode<synchronous>, transform_indices = @transform_3, window_bounds = array<i64: 32, 128>}, {pipeline_mode = #tpu.pipeline_mode<synchronous>, transform_indices = @transform_4, window_bounds = array<i64: 1, 128>}, {transform_indices = @transform_5, window_bounds = array<i64: 1, 8, 128>}]} {
    %c0 = arith.constant 0 : index
    %c0_0 = arith.constant 0 : index
    %c0_1 = arith.constant 0 : index
    %0 = vector.load %arg1[%c0, %c0_0, %c0_1] : memref<1x8x32xf32, #tpu.memory_space<vmem>>, vector<1x8x32xf32>
    %1 = vector.shape_cast %0 : vector<1x8x32xf32> to vector<8x32xf32>
    %c0_2 = arith.constant 0 : index
    %c0_3 = arith.constant 0 : index
    %2 = vector.load %arg2[%c0_2, %c0_3] : memref<1x32xf32, #tpu.memory_space<vmem>>, vector<1x32xf32>
    %c0_4 = arith.constant 0 : index
    %c0_5 = arith.constant 0 : index
    %3 = vector.load %arg3[%c0_4, %c0_5] : memref<1x32xf32, #tpu.memory_space<vmem>>, vector<1x32xf32>
    %cst = arith.constant dense<0.000000e+00> : vector<8xf32>
    %4 = vector.multi_reduction <add>, %1, %cst [1] : vector<8x32xf32> to vector<8xf32>
    %5 = vector.shape_cast %4 : vector<8xf32> to vector<8x1xf32>
    %cst_6 = arith.constant 3.200000e+01 : f32
    %6 = vector.broadcast %cst_6 : f32 to vector<8x1xf32>
    %7 = arith.divf %5, %6 : vector<8x1xf32>
    %8 = vector.broadcast %7 : vector<8x1xf32> to vector<8x32xf32>
    %9 = arith.subf %1, %8 : vector<8x32xf32>
    %10 = arith.mulf %9, %9 : vector<8x32xf32>
    %cst_7 = arith.constant dense<0.000000e+00> : vector<8xf32>
    %11 = vector.multi_reduction <add>, %10, %cst_7 [1] : vector<8x32xf32> to vector<8xf32>
    %12 = vector.shape_cast %11 : vector<8xf32> to vector<8x1xf32>
    %cst_8 = arith.constant 3.200000e+01 : f32
    %13 = vector.broadcast %cst_8 : f32 to vector<8x1xf32>
    %14 = arith.divf %12, %13 : vector<8x1xf32>
    %15 = vector.broadcast %7 : vector<8x1xf32> to vector<8x32xf32>
    %16 = arith.subf %1, %15 : vector<8x32xf32>
    %cst_9 = arith.constant 9.99999974E-6 : f32
    %17 = vector.broadcast %cst_9 : f32 to vector<8x1xf32>
    %18 = arith.addf %14, %17 : vector<8x1xf32>
    %19 = math.rsqrt %18 : vector<8x1xf32>
    %20 = vector.broadcast %19 : vector<8x1xf32> to vector<8x32xf32>
    %21 = arith.mulf %16, %20 : vector<8x32xf32>
    %22 = vector.broadcast %2 : vector<1x32xf32> to vector<8x32xf32>
    %23 = arith.mulf %21, %22 : vector<8x32xf32>
    %24 = vector.broadcast %3 : vector<1x32xf32> to vector<8x32xf32>
    %25 = arith.addf %23, %24 : vector<8x32xf32>
    %26 = arith.truncf %25 : vector<8x32xf32> to vector<8x32xbf16>
    %c0_10 = arith.constant 0 : index
    %c0_11 = arith.constant 0 : index
    %27 = vector.load %arg4[%c0_10, %c0_11] : memref<32x128xbf16, #tpu.memory_space<vmem>>, vector<32x128xbf16>
    %cst_12 = arith.constant dense<0.000000e+00> : vector<8x128xf32>
    %28 = tpu.matmul %26, %27, %cst_12 {dimension_numbers = #tpu.dot_dimension_numbers<[1], [0], [0], [1], [0, 0, 1, 1], [], []>} : vector<8x32xbf16>, vector<32x128xbf16>, vector<8x128xf32> -> vector<8x128xf32>
    %c0_13 = arith.constant 0 : index
    %c0_14 = arith.constant 0 : index
    %29 = vector.load %arg5[%c0_13, %c0_14] : memref<1x128xf32, #tpu.memory_space<vmem>>, vector<1x128xf32>
    %30 = vector.broadcast %29 : vector<1x128xf32> to vector<8x128xf32>
    %31 = arith.addf %28, %30 : vector<8x128xf32>
    %c0_15 = arith.constant 0 : index
    %c0_16 = arith.constant 0 : index
    %c0_17 = arith.constant 0 : index
    %32 = vector.load %arg6[%c0_15, %c0_16, %c0_17] : memref<1x8x128xf32, #tpu.memory_space<vmem>>, vector<1x8x128xf32>
    %33 = vector.shape_cast %32 : vector<1x8x128xf32> to vector<8x128xf32>
    %34 = vector.shape_cast %31 : vector<8x128xf32> to vector<1x8x128xf32>
    tpu.vector_store %arg6[%c0_15, %c0_16, %c0_17], %34 {strides = array<i32>} : memref<1x8x128xf32, #tpu.memory_space<vmem>>, vector<1x8x128xf32>,
    return
  }
  func.func @transform_0(%arg0: i32) -> (i32, i32, i32) {
    %c0_i32 = arith.constant 0 : i32
    %c0_i32_0 = arith.constant 0 : i32
    %c0_i32_1 = arith.constant 0 : i32
    return %arg0, %c0_i32, %c0_i32_0 : i32, i32, i32
  }
  func.func @transform_1(%arg0: i32) -> (i32, i32) {
    %c0_i32 = arith.constant 0 : i32
    %c0_i32_0 = arith.constant 0 : i32
    %c0_i32_1 = arith.constant 0 : i32
    return %c0_i32, %c0_i32_0 : i32, i32
  }
  func.func @transform_2(%arg0: i32) -> (i32, i32) {
    %c0_i32 = arith.constant 0 : i32
    %c0_i32_0 = arith.constant 0 : i32
    %c0_i32_1 = arith.constant 0 : i32
    return %c0_i32, %c0_i32_0 : i32, i32
  }
  func.func @transform_3(%arg0: i32) -> (i32, i32) {
    %c0_i32 = arith.constant 0 : i32
    %c0_i32_0 = arith.constant 0 : i32
    %c0_i32_1 = arith.constant 0 : i32
    return %c0_i32, %c0_i32_0 : i32, i32
  }
  func.func @transform_4(%arg0: i32) -> (i32, i32) {
    %c0_i32 = arith.constant 0 : i32
    %c0_i32_0 = arith.constant 0 : i32
    %c0_i32_1 = arith.constant 0 : i32
    return %c0_i32, %c0_i32_0 : i32, i32
  }
  func.func @transform_5(%arg0: i32) -> (i32, i32, i32) {
    %c0_i32 = arith.constant 0 : i32
    %c0_i32_0 = arith.constant 0 : i32
    %c0_i32_1 = arith.constant 0 : i32
    return %arg0, %c0_i32, %c0_i32_0 : i32, i32, i32
  }
}

module attributes {stable_mosaic.version = 11 : i64} {
  func.func @_inproj_pe_kernel(%arg0: i32, %arg1: memref<1x16x16xf32, #tpu.memory_space<vmem>>, %arg2: memref<16x32xbf16, #tpu.memory_space<vmem>>, %arg3: memref<1x32xf32, #tpu.memory_space<vmem>>, %arg4: memref<16x32xf32, #tpu.memory_space<vmem>>, %arg5: memref<1x16x32xf32, #tpu.memory_space<vmem>>) attributes {dimension_semantics = [#tpu.dimension_semantics<parallel>], iteration_bounds = array<i64: 2>, scalar_prefetch = 0 : i64, scratch_operands = 0 : i64, tpu.core_type = #tpu.core_type<tc>, window_params = [{transform_indices = @transform_0, window_bounds = array<i64: 1, 16, 16>}, {pipeline_mode = #tpu.pipeline_mode<synchronous>, transform_indices = @transform_1, window_bounds = array<i64: 16, 32>}, {pipeline_mode = #tpu.pipeline_mode<synchronous>, transform_indices = @transform_2, window_bounds = array<i64: 1, 32>}, {pipeline_mode = #tpu.pipeline_mode<synchronous>, transform_indices = @transform_3, window_bounds = array<i64: 16, 32>}, {transform_indices = @transform_4, window_bounds = array<i64: 1, 16, 32>}]} {
    %c0 = arith.constant 0 : index
    %c0_0 = arith.constant 0 : index
    %c0_1 = arith.constant 0 : index
    %0 = vector.load %arg1[%c0, %c0_0, %c0_1] : memref<1x16x16xf32, #tpu.memory_space<vmem>>, vector<1x16x16xf32>
    %1 = vector.shape_cast %0 : vector<1x16x16xf32> to vector<16x16xf32>
    %2 = arith.truncf %1 : vector<16x16xf32> to vector<16x16xbf16>
    %c0_2 = arith.constant 0 : index
    %c0_3 = arith.constant 0 : index
    %3 = vector.load %arg2[%c0_2, %c0_3] : memref<16x32xbf16, #tpu.memory_space<vmem>>, vector<16x32xbf16>
    %cst = arith.constant dense<0.000000e+00> : vector<16x32xf32>
    %4 = tpu.matmul %2, %3, %cst {dimension_numbers = #tpu.dot_dimension_numbers<[1], [0], [0], [1], [0, 0, 1, 1], [], []>} : vector<16x16xbf16>, vector<16x32xbf16>, vector<16x32xf32> -> vector<16x32xf32>
    %c0_4 = arith.constant 0 : index
    %c0_5 = arith.constant 0 : index
    %5 = vector.load %arg3[%c0_4, %c0_5] : memref<1x32xf32, #tpu.memory_space<vmem>>, vector<1x32xf32>
    %6 = vector.broadcast %5 : vector<1x32xf32> to vector<16x32xf32>
    %7 = arith.addf %4, %6 : vector<16x32xf32>
    %c0_6 = arith.constant 0 : index
    %c0_7 = arith.constant 0 : index
    %8 = vector.load %arg4[%c0_6, %c0_7] : memref<16x32xf32, #tpu.memory_space<vmem>>, vector<16x32xf32>
    %9 = arith.addf %7, %8 : vector<16x32xf32>
    %c0_8 = arith.constant 0 : index
    %c0_9 = arith.constant 0 : index
    %c0_10 = arith.constant 0 : index
    %10 = vector.load %arg5[%c0_8, %c0_9, %c0_10] : memref<1x16x32xf32, #tpu.memory_space<vmem>>, vector<1x16x32xf32>
    %11 = vector.shape_cast %10 : vector<1x16x32xf32> to vector<16x32xf32>
    %12 = vector.shape_cast %9 : vector<16x32xf32> to vector<1x16x32xf32>
    tpu.vector_store %arg5[%c0_8, %c0_9, %c0_10], %12 {strides = array<i32>} : memref<1x16x32xf32, #tpu.memory_space<vmem>>, vector<1x16x32xf32>,
    return
  }
  func.func @transform_0(%arg0: i32) -> (i32, i32, i32) {
    %c0_i32 = arith.constant 0 : i32
    %c0_i32_0 = arith.constant 0 : i32
    %c0_i32_1 = arith.constant 0 : i32
    return %arg0, %c0_i32, %c0_i32_0 : i32, i32, i32
  }
  func.func @transform_1(%arg0: i32) -> (i32, i32) {
    %c0_i32 = arith.constant 0 : i32
    %c0_i32_0 = arith.constant 0 : i32
    %c0_i32_1 = arith.constant 0 : i32
    return %c0_i32, %c0_i32_0 : i32, i32
  }
  func.func @transform_2(%arg0: i32) -> (i32, i32) {
    %c0_i32 = arith.constant 0 : i32
    %c0_i32_0 = arith.constant 0 : i32
    %c0_i32_1 = arith.constant 0 : i32
    return %c0_i32, %c0_i32_0 : i32, i32
  }
  func.func @transform_3(%arg0: i32) -> (i32, i32) {
    %c0_i32 = arith.constant 0 : i32
    %c0_i32_0 = arith.constant 0 : i32
    %c0_i32_1 = arith.constant 0 : i32
    return %c0_i32, %c0_i32_0 : i32, i32
  }
  func.func @transform_4(%arg0: i32) -> (i32, i32, i32) {
    %c0_i32 = arith.constant 0 : i32
    %c0_i32_0 = arith.constant 0 : i32
    %c0_i32_1 = arith.constant 0 : i32
    return %arg0, %c0_i32, %c0_i32_0 : i32, i32, i32
  }
}

module attributes {stable_mosaic.version = 11 : i64} {
  func.func @_encoder_layer_kernel(%arg0: i32, %arg1: memref<1x16x32xf32, #tpu.memory_space<vmem>>, %arg2: memref<1x1x16xf32, #tpu.memory_space<vmem>>, %arg3: memref<1x32xf32, #tpu.memory_space<vmem>>, %arg4: memref<1x32xf32, #tpu.memory_space<vmem>>, %arg5: memref<32x96xbf16, #tpu.memory_space<vmem>>, %arg6: memref<1x96xf32, #tpu.memory_space<vmem>>, %arg7: memref<32x32xbf16, #tpu.memory_space<vmem>>, %arg8: memref<1x32xf32, #tpu.memory_space<vmem>>, %arg9: memref<1x32xf32, #tpu.memory_space<vmem>>, %arg10: memref<1x32xf32, #tpu.memory_space<vmem>>, %arg11: memref<32x64xbf16, #tpu.memory_space<vmem>>, %arg12: memref<1x64xf32, #tpu.memory_space<vmem>>, %arg13: memref<64x32xbf16, #tpu.memory_space<vmem>>, %arg14: memref<1x32xf32, #tpu.memory_space<vmem>>, %arg15: memref<1x16x32xf32, #tpu.memory_space<vmem>>) attributes {dimension_semantics = [#tpu.dimension_semantics<parallel>], iteration_bounds = array<i64: 2>, scalar_prefetch = 0 : i64, scratch_operands = 0 : i64, tpu.core_type = #tpu.core_type<tc>, window_params = [{transform_indices = @transform_0, window_bounds = array<i64: 1, 16, 32>}, {transform_indices = @transform_1, window_bounds = array<i64: 1, 1, 16>}, {pipeline_mode = #tpu.pipeline_mode<synchronous>, transform_indices = @transform_2, window_bounds = array<i64: 1, 32>}, {pipeline_mode = #tpu.pipeline_mode<synchronous>, transform_indices = @transform_3, window_bounds = array<i64: 1, 32>}, {pipeline_mode = #tpu.pipeline_mode<synchronous>, transform_indices = @transform_4, window_bounds = array<i64: 32, 96>}, {pipeline_mode = #tpu.pipeline_mode<synchronous>, transform_indices = @transform_5, window_bounds = array<i64: 1, 96>}, {pipeline_mode = #tpu.pipeline_mode<synchronous>, transform_indices = @transform_6, window_bounds = array<i64: 32, 32>}, {pipeline_mode = #tpu.pipeline_mode<synchronous>, transform_indices = @transform_7, window_bounds = array<i64: 1, 32>}, {pipeline_mode = #tpu.pipeline_mode<synchronous>, transform_indices = @transform_8, window_bounds = array<i64: 1, 32>}, {pipeline_mode = #tpu.pipeline_mode<synchronous>, transform_indices = @transform_9, window_bounds = array<i64: 1, 32>}, {pipeline_mode = #tpu.pipeline_mode<synchronous>, transform_indices = @transform_10, window_bounds = array<i64: 32, 64>}, {pipeline_mode = #tpu.pipeline_mode<synchronous>, transform_indices = @transform_11, window_bounds = array<i64: 1, 64>}, {pipeline_mode = #tpu.pipeline_mode<synchronous>, transform_indices = @transform_12, window_bounds = array<i64: 64, 32>}, {pipeline_mode = #tpu.pipeline_mode<synchronous>, transform_indices = @transform_13, window_bounds = array<i64: 1, 32>}, {transform_indices = @transform_14, window_bounds = array<i64: 1, 16, 32>}]} {
    %c0 = arith.constant 0 : index
    %c0_0 = arith.constant 0 : index
    %c0_1 = arith.constant 0 : index
    %0 = vector.load %arg1[%c0, %c0_0, %c0_1] : memref<1x16x32xf32, #tpu.memory_space<vmem>>, vector<1x16x32xf32>
    %1 = vector.shape_cast %0 : vector<1x16x32xf32> to vector<16x32xf32>
    %c0_2 = arith.constant 0 : index
    %c0_3 = arith.constant 0 : index
    %c0_4 = arith.constant 0 : index
    %2 = vector.load %arg2[%c0_2, %c0_3, %c0_4] : memref<1x1x16xf32, #tpu.memory_space<vmem>>, vector<1x1x16xf32>
    %3 = vector.shape_cast %2 : vector<1x1x16xf32> to vector<1x16xf32>
    %c0_5 = arith.constant 0 : index
    %c0_6 = arith.constant 0 : index
    %4 = vector.load %arg3[%c0_5, %c0_6] : memref<1x32xf32, #tpu.memory_space<vmem>>, vector<1x32xf32>
    %c0_7 = arith.constant 0 : index
    %c0_8 = arith.constant 0 : index
    %5 = vector.load %arg4[%c0_7, %c0_8] : memref<1x32xf32, #tpu.memory_space<vmem>>, vector<1x32xf32>
    %cst = arith.constant dense<0.000000e+00> : vector<16xf32>
    %6 = vector.multi_reduction <add>, %1, %cst [1] : vector<16x32xf32> to vector<16xf32>
    %7 = vector.shape_cast %6 : vector<16xf32> to vector<16x1xf32>
    %cst_9 = arith.constant 3.200000e+01 : f32
    %8 = vector.broadcast %cst_9 : f32 to vector<16x1xf32>
    %9 = arith.divf %7, %8 : vector<16x1xf32>
    %10 = vector.broadcast %9 : vector<16x1xf32> to vector<16x32xf32>
    %11 = arith.subf %1, %10 : vector<16x32xf32>
    %12 = arith.mulf %11, %11 : vector<16x32xf32>
    %cst_10 = arith.constant dense<0.000000e+00> : vector<16xf32>
    %13 = vector.multi_reduction <add>, %12, %cst_10 [1] : vector<16x32xf32> to vector<16xf32>
    %14 = vector.shape_cast %13 : vector<16xf32> to vector<16x1xf32>
    %cst_11 = arith.constant 3.200000e+01 : f32
    %15 = vector.broadcast %cst_11 : f32 to vector<16x1xf32>
    %16 = arith.divf %14, %15 : vector<16x1xf32>
    %17 = vector.broadcast %9 : vector<16x1xf32> to vector<16x32xf32>
    %18 = arith.subf %1, %17 : vector<16x32xf32>
    %cst_12 = arith.constant 9.99999974E-6 : f32
    %19 = vector.broadcast %cst_12 : f32 to vector<16x1xf32>
    %20 = arith.addf %16, %19 : vector<16x1xf32>
    %21 = math.rsqrt %20 : vector<16x1xf32>
    %22 = vector.broadcast %21 : vector<16x1xf32> to vector<16x32xf32>
    %23 = arith.mulf %18, %22 : vector<16x32xf32>
    %24 = vector.broadcast %4 : vector<1x32xf32> to vector<16x32xf32>
    %25 = arith.mulf %23, %24 : vector<16x32xf32>
    %26 = vector.broadcast %5 : vector<1x32xf32> to vector<16x32xf32>
    %27 = arith.addf %25, %26 : vector<16x32xf32>
    %28 = arith.truncf %27 : vector<16x32xf32> to vector<16x32xbf16>
    %c0_13 = arith.constant 0 : index
    %c0_14 = arith.constant 0 : index
    %29 = vector.load %arg5[%c0_13, %c0_14] : memref<32x96xbf16, #tpu.memory_space<vmem>>, vector<32x96xbf16>
    %cst_15 = arith.constant dense<0.000000e+00> : vector<16x96xf32>
    %30 = tpu.matmul %28, %29, %cst_15 {dimension_numbers = #tpu.dot_dimension_numbers<[1], [0], [0], [1], [0, 0, 1, 1], [], []>} : vector<16x32xbf16>, vector<32x96xbf16>, vector<16x96xf32> -> vector<16x96xf32>
    %c0_16 = arith.constant 0 : index
    %c0_17 = arith.constant 0 : index
    %31 = vector.load %arg6[%c0_16, %c0_17] : memref<1x96xf32, #tpu.memory_space<vmem>>, vector<1x96xf32>
    %32 = vector.broadcast %31 : vector<1x96xf32> to vector<16x96xf32>
    %33 = arith.addf %30, %32 : vector<16x96xf32>
    %34 = vector.extract_strided_slice %33 {offsets = [0, 0], sizes = [16, 32], strides = [1, 1]} : vector<16x96xf32> to vector<16x32xf32>
    %35 = vector.extract_strided_slice %33 {offsets = [0, 32], sizes = [16, 32], strides = [1, 1]} : vector<16x96xf32> to vector<16x32xf32>
    %36 = vector.extract_strided_slice %33 {offsets = [0, 64], sizes = [16, 32], strides = [1, 1]} : vector<16x96xf32> to vector<16x32xf32>
    %37 = arith.truncf %34 : vector<16x32xf32> to vector<16x32xbf16>
    %38 = arith.truncf %35 : vector<16x32xf32> to vector<16x32xbf16>
    %39 = arith.truncf %36 : vector<16x32xf32> to vector<16x32xbf16>
    %cst_18 = arith.constant dense<0.000000e+00> : vector<16x16xf32>
    %40 = tpu.matmul %37, %38, %cst_18 {dimension_numbers = #tpu.dot_dimension_numbers<[1], [1], [0], [0], [0, 0, 1, 0], [], []>} : vector<16x32xbf16>, vector<16x32xbf16>, vector<16x16xf32> -> vector<16x16xf32>
    %41 = vector.broadcast %3 : vector<1x16xf32> to vector<16x16xf32>
    %42 = arith.addf %40, %41 : vector<16x16xf32>
    %cst_19 = arith.constant dense<0xFF800000> : vector<16xf32>
    %43 = vector.multi_reduction <maximumf>, %42, %cst_19 [1] : vector<16x16xf32> to vector<16xf32>
    %44 = vector.shape_cast %43 : vector<16xf32> to vector<16x1xf32>
    %45 = vector.broadcast %44 : vector<16x1xf32> to vector<16x16xf32>
    %46 = arith.subf %42, %45 : vector<16x16xf32>
    %47 = math.exp %46 : vector<16x16xf32>
    %cst_20 = arith.constant dense<0.000000e+00> : vector<16xf32>
    %48 = vector.multi_reduction <add>, %47, %cst_20 [1] : vector<16x16xf32> to vector<16xf32>
    %49 = vector.shape_cast %48 : vector<16xf32> to vector<16x1xf32>
    %50 = arith.truncf %47 : vector<16x16xf32> to vector<16x16xbf16>
    %cst_21 = arith.constant dense<0.000000e+00> : vector<16x32xf32>
    %51 = tpu.matmul %50, %39, %cst_21 {dimension_numbers = #tpu.dot_dimension_numbers<[1], [0], [0], [1], [0, 0, 1, 1], [], []>} : vector<16x16xbf16>, vector<16x32xbf16>, vector<16x32xf32> -> vector<16x32xf32>
    %52 = tpu.reciprocal %49 {approx = true} : vector<16x1xf32> -> vector<16x1xf32>
    %53 = vector.broadcast %52 : vector<16x1xf32> to vector<16x32xf32>
    %54 = arith.mulf %51, %53 : vector<16x32xf32>
    %55 = arith.truncf %54 : vector<16x32xf32> to vector<16x32xbf16>
    %c0_22 = arith.constant 0 : index
    %c0_23 = arith.constant 0 : index
    %56 = vector.load %arg7[%c0_22, %c0_23] : memref<32x32xbf16, #tpu.memory_space<vmem>>, vector<32x32xbf16>
    %cst_24 = arith.constant dense<0.000000e+00> : vector<16x32xf32>
    %57 = tpu.matmul %55, %56, %cst_24 {dimension_numbers = #tpu.dot_dimension_numbers<[1], [0], [0], [1], [0, 0, 1, 1], [], []>} : vector<16x32xbf16>, vector<32x32xbf16>, vector<16x32xf32> -> vector<16x32xf32>
    %58 = arith.addf %1, %57 : vector<16x32xf32>
    %c0_25 = arith.constant 0 : index
    %c0_26 = arith.constant 0 : index
    %59 = vector.load %arg8[%c0_25, %c0_26] : memref<1x32xf32, #tpu.memory_space<vmem>>, vector<1x32xf32>
    %60 = vector.broadcast %59 : vector<1x32xf32> to vector<16x32xf32>
    %61 = arith.addf %58, %60 : vector<16x32xf32>
    %c0_27 = arith.constant 0 : index
    %c0_28 = arith.constant 0 : index
    %62 = vector.load %arg9[%c0_27, %c0_28] : memref<1x32xf32, #tpu.memory_space<vmem>>, vector<1x32xf32>
    %c0_29 = arith.constant 0 : index
    %c0_30 = arith.constant 0 : index
    %63 = vector.load %arg10[%c0_29, %c0_30] : memref<1x32xf32, #tpu.memory_space<vmem>>, vector<1x32xf32>
    %cst_31 = arith.constant dense<0.000000e+00> : vector<16xf32>
    %64 = vector.multi_reduction <add>, %61, %cst_31 [1] : vector<16x32xf32> to vector<16xf32>
    %65 = vector.shape_cast %64 : vector<16xf32> to vector<16x1xf32>
    %cst_32 = arith.constant 3.200000e+01 : f32
    %66 = vector.broadcast %cst_32 : f32 to vector<16x1xf32>
    %67 = arith.divf %65, %66 : vector<16x1xf32>
    %68 = vector.broadcast %67 : vector<16x1xf32> to vector<16x32xf32>
    %69 = arith.subf %61, %68 : vector<16x32xf32>
    %70 = arith.mulf %69, %69 : vector<16x32xf32>
    %cst_33 = arith.constant dense<0.000000e+00> : vector<16xf32>
    %71 = vector.multi_reduction <add>, %70, %cst_33 [1] : vector<16x32xf32> to vector<16xf32>
    %72 = vector.shape_cast %71 : vector<16xf32> to vector<16x1xf32>
    %cst_34 = arith.constant 3.200000e+01 : f32
    %73 = vector.broadcast %cst_34 : f32 to vector<16x1xf32>
    %74 = arith.divf %72, %73 : vector<16x1xf32>
    %75 = vector.broadcast %67 : vector<16x1xf32> to vector<16x32xf32>
    %76 = arith.subf %61, %75 : vector<16x32xf32>
    %cst_35 = arith.constant 9.99999974E-6 : f32
    %77 = vector.broadcast %cst_35 : f32 to vector<16x1xf32>
    %78 = arith.addf %74, %77 : vector<16x1xf32>
    %79 = math.rsqrt %78 : vector<16x1xf32>
    %80 = vector.broadcast %79 : vector<16x1xf32> to vector<16x32xf32>
    %81 = arith.mulf %76, %80 : vector<16x32xf32>
    %82 = vector.broadcast %62 : vector<1x32xf32> to vector<16x32xf32>
    %83 = arith.mulf %81, %82 : vector<16x32xf32>
    %84 = vector.broadcast %63 : vector<1x32xf32> to vector<16x32xf32>
    %85 = arith.addf %83, %84 : vector<16x32xf32>
    %86 = arith.truncf %85 : vector<16x32xf32> to vector<16x32xbf16>
    %c0_36 = arith.constant 0 : index
    %c0_37 = arith.constant 0 : index
    %87 = vector.load %arg11[%c0_36, %c0_37] : memref<32x64xbf16, #tpu.memory_space<vmem>>, vector<32x64xbf16>
    %cst_38 = arith.constant dense<0.000000e+00> : vector<16x64xf32>
    %88 = tpu.matmul %86, %87, %cst_38 {dimension_numbers = #tpu.dot_dimension_numbers<[1], [0], [0], [1], [0, 0, 1, 1], [], []>} : vector<16x32xbf16>, vector<32x64xbf16>, vector<16x64xf32> -> vector<16x64xf32>
    %c0_39 = arith.constant 0 : index
    %c0_40 = arith.constant 0 : index
    %89 = vector.load %arg12[%c0_39, %c0_40] : memref<1x64xf32, #tpu.memory_space<vmem>>, vector<1x64xf32>
    %90 = vector.broadcast %89 : vector<1x64xf32> to vector<16x64xf32>
    %91 = arith.addf %88, %90 : vector<16x64xf32>
    %cst_41 = arith.constant 0.000000e+00 : f32
    %92 = vector.broadcast %cst_41 : f32 to vector<16x64xf32>
    %93 = arith.maximumf %91, %92 : vector<16x64xf32>
    %94 = arith.truncf %93 : vector<16x64xf32> to vector<16x64xbf16>
    %c0_42 = arith.constant 0 : index
    %c0_43 = arith.constant 0 : index
    %95 = vector.load %arg13[%c0_42, %c0_43] : memref<64x32xbf16, #tpu.memory_space<vmem>>, vector<64x32xbf16>
    %cst_44 = arith.constant dense<0.000000e+00> : vector<16x32xf32>
    %96 = tpu.matmul %94, %95, %cst_44 {dimension_numbers = #tpu.dot_dimension_numbers<[1], [0], [0], [1], [0, 0, 1, 1], [], []>} : vector<16x64xbf16>, vector<64x32xbf16>, vector<16x32xf32> -> vector<16x32xf32>
    %c0_45 = arith.constant 0 : index
    %c0_46 = arith.constant 0 : index
    %97 = vector.load %arg14[%c0_45, %c0_46] : memref<1x32xf32, #tpu.memory_space<vmem>>, vector<1x32xf32>
    %98 = vector.broadcast %97 : vector<1x32xf32> to vector<16x32xf32>
    %99 = arith.addf %96, %98 : vector<16x32xf32>
    %100 = arith.addf %61, %99 : vector<16x32xf32>
    %c0_47 = arith.constant 0 : index
    %c0_48 = arith.constant 0 : index
    %c0_49 = arith.constant 0 : index
    %101 = vector.load %arg15[%c0_47, %c0_48, %c0_49] : memref<1x16x32xf32, #tpu.memory_space<vmem>>, vector<1x16x32xf32>
    %102 = vector.shape_cast %101 : vector<1x16x32xf32> to vector<16x32xf32>
    %103 = vector.shape_cast %100 : vector<16x32xf32> to vector<1x16x32xf32>
    tpu.vector_store %arg15[%c0_47, %c0_48, %c0_49], %103 {strides = array<i32>} : memref<1x16x32xf32, #tpu.memory_space<vmem>>, vector<1x16x32xf32>,
    return
  }
  func.func @transform_0(%arg0: i32) -> (i32, i32, i32) {
    %c0_i32 = arith.constant 0 : i32
    %c0_i32_0 = arith.constant 0 : i32
    %c0_i32_1 = arith.constant 0 : i32
    return %arg0, %c0_i32, %c0_i32_0 : i32, i32, i32
  }
  func.func @transform_1(%arg0: i32) -> (i32, i32, i32) {
    %c0_i32 = arith.constant 0 : i32
    %c0_i32_0 = arith.constant 0 : i32
    %c0_i32_1 = arith.constant 0 : i32
    return %arg0, %c0_i32, %c0_i32_0 : i32, i32, i32
  }
  func.func @transform_2(%arg0: i32) -> (i32, i32) {
    %c0_i32 = arith.constant 0 : i32
    %c0_i32_0 = arith.constant 0 : i32
    %c0_i32_1 = arith.constant 0 : i32
    return %c0_i32, %c0_i32_0 : i32, i32
  }
  func.func @transform_3(%arg0: i32) -> (i32, i32) {
    %c0_i32 = arith.constant 0 : i32
    %c0_i32_0 = arith.constant 0 : i32
    %c0_i32_1 = arith.constant 0 : i32
    return %c0_i32, %c0_i32_0 : i32, i32
  }
  func.func @transform_4(%arg0: i32) -> (i32, i32) {
    %c0_i32 = arith.constant 0 : i32
    %c0_i32_0 = arith.constant 0 : i32
    %c0_i32_1 = arith.constant 0 : i32
    return %c0_i32, %c0_i32_0 : i32, i32
  }
  func.func @transform_5(%arg0: i32) -> (i32, i32) {
    %c0_i32 = arith.constant 0 : i32
    %c0_i32_0 = arith.constant 0 : i32
    %c0_i32_1 = arith.constant 0 : i32
    return %c0_i32, %c0_i32_0 : i32, i32
  }
  func.func @transform_6(%arg0: i32) -> (i32, i32) {
    %c0_i32 = arith.constant 0 : i32
    %c0_i32_0 = arith.constant 0 : i32
    %c0_i32_1 = arith.constant 0 : i32
    return %c0_i32, %c0_i32_0 : i32, i32
  }
  func.func @transform_7(%arg0: i32) -> (i32, i32) {
    %c0_i32 = arith.constant 0 : i32
    %c0_i32_0 = arith.constant 0 : i32
    %c0_i32_1 = arith.constant 0 : i32
    return %c0_i32, %c0_i32_0 : i32, i32
  }
  func.func @transform_8(%arg0: i32) -> (i32, i32) {
    %c0_i32 = arith.constant 0 : i32
    %c0_i32_0 = arith.constant 0 : i32
    %c0_i32_1 = arith.constant 0 : i32
    return %c0_i32, %c0_i32_0 : i32, i32
  }
  func.func @transform_9(%arg0: i32) -> (i32, i32) {
    %c0_i32 = arith.constant 0 : i32
    %c0_i32_0 = arith.constant 0 : i32
    %c0_i32_1 = arith.constant 0 : i32
    return %c0_i32, %c0_i32_0 : i32, i32
  }
  func.func @transform_10(%arg0: i32) -> (i32, i32) {
    %c0_i32 = arith.constant 0 : i32
    %c0_i32_0 = arith.constant 0 : i32
    %c0_i32_1 = arith.constant 0 : i32
    return %c0_i32, %c0_i32_0 : i32, i32
  }
  func.func @transform_11(%arg0: i32) -> (i32, i32) {
    %c0_i32 = arith.constant 0 : i32
    %c0_i32_0 = arith.constant 0 : i32
    %c0_i32_1 = arith.constant 0 : i32
    return %c0_i32, %c0_i32_0 : i32, i32
  }
  func.func @transform_12(%arg0: i32) -> (i32, i32) {
    %c0_i32 = arith.constant 0 : i32
    %c0_i32_0 = arith.constant 0 : i32
    %c0_i32_1 = arith.constant 0 : i32
    return %c0_i32, %c0_i32_0 : i32, i32
  }
  func.func @transform_13(%arg0: i32) -> (i32, i32) {
    %c0_i32 = arith.constant 0 : i32
    %c0_i32_0 = arith.constant 0 : i32
    %c0_i32_1 = arith.constant 0 : i32
    return %c0_i32, %c0_i32_0 : i32, i32
  }
  func.func @transform_14(%arg0: i32) -> (i32, i32, i32) {
    %c0_i32 = arith.constant 0 : i32
    %c0_i32_0 = arith.constant 0 : i32
    %c0_i32_1 = arith.constant 0 : i32
    return %arg0, %c0_i32, %c0_i32_0 : i32, i32, i32
  }
}

module attributes {stable_mosaic.version = 11 : i64} {
  func.func @_decoder_layer_kernel(%arg0: i32, %arg1: memref<1x8x32xf32, #tpu.memory_space<vmem>>, %arg2: memref<1x16x32xf32, #tpu.memory_space<vmem>>, %arg3: memref<1x1x8xf32, #tpu.memory_space<vmem>>, %arg4: memref<1x8x8xf32, #tpu.memory_space<vmem>>, %arg5: memref<1x1x16xf32, #tpu.memory_space<vmem>>, %arg6: memref<1x32xf32, #tpu.memory_space<vmem>>, %arg7: memref<1x32xf32, #tpu.memory_space<vmem>>, %arg8: memref<32x96xbf16, #tpu.memory_space<vmem>>, %arg9: memref<1x96xf32, #tpu.memory_space<vmem>>, %arg10: memref<32x32xbf16, #tpu.memory_space<vmem>>, %arg11: memref<1x32xf32, #tpu.memory_space<vmem>>, %arg12: memref<1x32xf32, #tpu.memory_space<vmem>>, %arg13: memref<1x32xf32, #tpu.memory_space<vmem>>, %arg14: memref<1x32xf32, #tpu.memory_space<vmem>>, %arg15: memref<1x32xf32, #tpu.memory_space<vmem>>, %arg16: memref<32x32xbf16, #tpu.memory_space<vmem>>, %arg17: memref<1x32xf32, #tpu.memory_space<vmem>>, %arg18: memref<32x64xbf16, #tpu.memory_space<vmem>>, %arg19: memref<1x64xf32, #tpu.memory_space<vmem>>, %arg20: memref<32x32xbf16, #tpu.memory_space<vmem>>, %arg21: memref<1x32xf32, #tpu.memory_space<vmem>>, %arg22: memref<1x32xf32, #tpu.memory_space<vmem>>, %arg23: memref<1x32xf32, #tpu.memory_space<vmem>>, %arg24: memref<32x64xbf16, #tpu.memory_space<vmem>>, %arg25: memref<1x64xf32, #tpu.memory_space<vmem>>, %arg26: memref<64x32xbf16, #tpu.memory_space<vmem>>, %arg27: memref<1x32xf32, #tpu.memory_space<vmem>>, %arg28: memref<1x8x32xf32, #tpu.memory_space<vmem>>) attributes {dimension_semantics = [#tpu.dimension_semantics<parallel>], iteration_bounds = array<i64: 2>, scalar_prefetch = 0 : i64, scratch_operands = 0 : i64, tpu.core_type = #tpu.core_type<tc>, window_params = [{transform_indices = @transform_0, window_bounds = array<i64: 1, 8, 32>}, {transform_indices = @transform_1, window_bounds = array<i64: 1, 16, 32>}, {transform_indices = @transform_2, window_bounds = array<i64: 1, 1, 8>}, {pipeline_mode = #tpu.pipeline_mode<synchronous>, transform_indices = @transform_3, window_bounds = array<i64: 1, 8, 8>}, {transform_indices = @transform_4, window_bounds = array<i64: 1, 1, 16>}, {pipeline_mode = #tpu.pipeline_mode<synchronous>, transform_indices = @transform_5, window_bounds = array<i64: 1, 32>}, {pipeline_mode = #tpu.pipeline_mode<synchronous>, transform_indices = @transform_6, window_bounds = array<i64: 1, 32>}, {pipeline_mode = #tpu.pipeline_mode<synchronous>, transform_indices = @transform_7, window_bounds = array<i64: 32, 96>}, {pipeline_mode = #tpu.pipeline_mode<synchronous>, transform_indices = @transform_8, window_bounds = array<i64: 1, 96>}, {pipeline_mode = #tpu.pipeline_mode<synchronous>, transform_indices = @transform_9, window_bounds = array<i64: 32, 32>}, {pipeline_mode = #tpu.pipeline_mode<synchronous>, transform_indices = @transform_10, window_bounds = array<i64: 1, 32>}, {pipeline_mode = #tpu.pipeline_mode<synchronous>, transform_indices = @transform_11, window_bounds = array<i64: 1, 32>}, {pipeline_mode = #tpu.pipeline_mode<synchronous>, transform_indices = @transform_12, window_bounds = array<i64: 1, 32>}, {pipeline_mode = #tpu.pipeline_mode<synchronous>, transform_indices = @transform_13, window_bounds = array<i64: 1, 32>}, {pipeline_mode = #tpu.pipeline_mode<synchronous>, transform_indices = @transform_14, window_bounds = array<i64: 1, 32>}, {pipeline_mode = #tpu.pipeline_mode<synchronous>, transform_indices = @transform_15, window_bounds = array<i64: 32, 32>}, {pipeline_mode = #tpu.pipeline_mode<synchronous>, transform_indices = @transform_16, window_bounds = array<i64: 1, 32>}, {pipeline_mode = #tpu.pipeline_mode<synchronous>, transform_indices = @transform_17, window_bounds = array<i64: 32, 64>}, {pipeline_mode = #tpu.pipeline_mode<synchronous>, transform_indices = @transform_18, window_bounds = array<i64: 1, 64>}, {pipeline_mode = #tpu.pipeline_mode<synchronous>, transform_indices = @transform_19, window_bounds = array<i64: 32, 32>}, {pipeline_mode = #tpu.pipeline_mode<synchronous>, transform_indices = @transform_20, window_bounds = array<i64: 1, 32>}, {pipeline_mode = #tpu.pipeline_mode<synchronous>, transform_indices = @transform_21, window_bounds = array<i64: 1, 32>}, {pipeline_mode = #tpu.pipeline_mode<synchronous>, transform_indices = @transform_22, window_bounds = array<i64: 1, 32>}, {pipeline_mode = #tpu.pipeline_mode<synchronous>, transform_indices = @transform_23, window_bounds = array<i64: 32, 64>}, {pipeline_mode = #tpu.pipeline_mode<synchronous>, transform_indices = @transform_24, window_bounds = array<i64: 1, 64>}, {pipeline_mode = #tpu.pipeline_mode<synchronous>, transform_indices = @transform_25, window_bounds = array<i64: 64, 32>}, {pipeline_mode = #tpu.pipeline_mode<synchronous>, transform_indices = @transform_26, window_bounds = array<i64: 1, 32>}, {transform_indices = @transform_27, window_bounds = array<i64: 1, 8, 32>}]} {
    %c0 = arith.constant 0 : index
    %c0_0 = arith.constant 0 : index
    %c0_1 = arith.constant 0 : index
    %0 = vector.load %arg4[%c0, %c0_0, %c0_1] : memref<1x8x8xf32, #tpu.memory_space<vmem>>, vector<1x8x8xf32>
    %1 = vector.shape_cast %0 : vector<1x8x8xf32> to vector<8x8xf32>
    %c0_2 = arith.constant 0 : index
    %c0_3 = arith.constant 0 : index
    %c0_4 = arith.constant 0 : index
    %2 = vector.load %arg1[%c0_2, %c0_3, %c0_4] : memref<1x8x32xf32, #tpu.memory_space<vmem>>, vector<1x8x32xf32>
    %3 = vector.shape_cast %2 : vector<1x8x32xf32> to vector<8x32xf32>
    %c0_5 = arith.constant 0 : index
    %c0_6 = arith.constant 0 : index
    %4 = vector.load %arg6[%c0_5, %c0_6] : memref<1x32xf32, #tpu.memory_space<vmem>>, vector<1x32xf32>
    %c0_7 = arith.constant 0 : index
    %c0_8 = arith.constant 0 : index
    %5 = vector.load %arg7[%c0_7, %c0_8] : memref<1x32xf32, #tpu.memory_space<vmem>>, vector<1x32xf32>
    %cst = arith.constant dense<0.000000e+00> : vector<8xf32>
    %6 = vector.multi_reduction <add>, %3, %cst [1] : vector<8x32xf32> to vector<8xf32>
    %7 = vector.shape_cast %6 : vector<8xf32> to vector<8x1xf32>
    %cst_9 = arith.constant 3.200000e+01 : f32
    %8 = vector.broadcast %cst_9 : f32 to vector<8x1xf32>
    %9 = arith.divf %7, %8 : vector<8x1xf32>
    %10 = vector.broadcast %9 : vector<8x1xf32> to vector<8x32xf32>
    %11 = arith.subf %3, %10 : vector<8x32xf32>
    %12 = arith.mulf %11, %11 : vector<8x32xf32>
    %cst_10 = arith.constant dense<0.000000e+00> : vector<8xf32>
    %13 = vector.multi_reduction <add>, %12, %cst_10 [1] : vector<8x32xf32> to vector<8xf32>
    %14 = vector.shape_cast %13 : vector<8xf32> to vector<8x1xf32>
    %cst_11 = arith.constant 3.200000e+01 : f32
    %15 = vector.broadcast %cst_11 : f32 to vector<8x1xf32>
    %16 = arith.divf %14, %15 : vector<8x1xf32>
    %17 = vector.broadcast %9 : vector<8x1xf32> to vector<8x32xf32>
    %18 = arith.subf %3, %17 : vector<8x32xf32>
    %cst_12 = arith.constant 9.99999974E-6 : f32
    %19 = vector.broadcast %cst_12 : f32 to vector<8x1xf32>
    %20 = arith.addf %16, %19 : vector<8x1xf32>
    %21 = math.rsqrt %20 : vector<8x1xf32>
    %22 = vector.broadcast %21 : vector<8x1xf32> to vector<8x32xf32>
    %23 = arith.mulf %18, %22 : vector<8x32xf32>
    %24 = vector.broadcast %4 : vector<1x32xf32> to vector<8x32xf32>
    %25 = arith.mulf %23, %24 : vector<8x32xf32>
    %26 = vector.broadcast %5 : vector<1x32xf32> to vector<8x32xf32>
    %27 = arith.addf %25, %26 : vector<8x32xf32>
    %28 = arith.truncf %27 : vector<8x32xf32> to vector<8x32xbf16>
    %c0_13 = arith.constant 0 : index
    %c0_14 = arith.constant 0 : index
    %29 = vector.load %arg8[%c0_13, %c0_14] : memref<32x96xbf16, #tpu.memory_space<vmem>>, vector<32x96xbf16>
    %cst_15 = arith.constant dense<0.000000e+00> : vector<8x96xf32>
    %30 = tpu.matmul %28, %29, %cst_15 {dimension_numbers = #tpu.dot_dimension_numbers<[1], [0], [0], [1], [0, 0, 1, 1], [], []>} : vector<8x32xbf16>, vector<32x96xbf16>, vector<8x96xf32> -> vector<8x96xf32>
    %c0_16 = arith.constant 0 : index
    %c0_17 = arith.constant 0 : index
    %31 = vector.load %arg9[%c0_16, %c0_17] : memref<1x96xf32, #tpu.memory_space<vmem>>, vector<1x96xf32>
    %32 = vector.broadcast %31 : vector<1x96xf32> to vector<8x96xf32>
    %33 = arith.addf %30, %32 : vector<8x96xf32>
    %34 = vector.extract_strided_slice %33 {offsets = [0, 0], sizes = [8, 32], strides = [1, 1]} : vector<8x96xf32> to vector<8x32xf32>
    %35 = vector.extract_strided_slice %33 {offsets = [0, 32], sizes = [8, 32], strides = [1, 1]} : vector<8x96xf32> to vector<8x32xf32>
    %36 = vector.extract_strided_slice %33 {offsets = [0, 64], sizes = [8, 32], strides = [1, 1]} : vector<8x96xf32> to vector<8x32xf32>
    %c0_18 = arith.constant 0 : index
    %c0_19 = arith.constant 0 : index
    %c0_20 = arith.constant 0 : index
    %37 = vector.load %arg3[%c0_18, %c0_19, %c0_20] : memref<1x1x8xf32, #tpu.memory_space<vmem>>, vector<1x1x8xf32>
    %38 = vector.shape_cast %37 : vector<1x1x8xf32> to vector<1x8xf32>
    %39 = arith.truncf %34 : vector<8x32xf32> to vector<8x32xbf16>
    %40 = arith.truncf %35 : vector<8x32xf32> to vector<8x32xbf16>
    %41 = arith.truncf %36 : vector<8x32xf32> to vector<8x32xbf16>
    %cst_21 = arith.constant dense<0.000000e+00> : vector<8x8xf32>
    %42 = tpu.matmul %39, %40, %cst_21 {dimension_numbers = #tpu.dot_dimension_numbers<[1], [1], [0], [0], [0, 0, 1, 0], [], []>} : vector<8x32xbf16>, vector<8x32xbf16>, vector<8x8xf32> -> vector<8x8xf32>
    %43 = vector.broadcast %38 : vector<1x8xf32> to vector<8x8xf32>
    %44 = arith.addf %42, %43 : vector<8x8xf32>
    %45 = arith.addf %44, %1 : vector<8x8xf32>
    %cst_22 = arith.constant dense<0xFF800000> : vector<8xf32>
    %46 = vector.multi_reduction <maximumf>, %45, %cst_22 [1] : vector<8x8xf32> to vector<8xf32>
    %47 = vector.shape_cast %46 : vector<8xf32> to vector<8x1xf32>
    %48 = vector.broadcast %47 : vector<8x1xf32> to vector<8x8xf32>
    %49 = arith.subf %45, %48 : vector<8x8xf32>
    %50 = math.exp %49 : vector<8x8xf32>
    %cst_23 = arith.constant dense<0.000000e+00> : vector<8xf32>
    %51 = vector.multi_reduction <add>, %50, %cst_23 [1] : vector<8x8xf32> to vector<8xf32>
    %52 = vector.shape_cast %51 : vector<8xf32> to vector<8x1xf32>
    %53 = arith.truncf %50 : vector<8x8xf32> to vector<8x8xbf16>
    %cst_24 = arith.constant dense<0.000000e+00> : vector<8x32xf32>
    %54 = tpu.matmul %53, %41, %cst_24 {dimension_numbers = #tpu.dot_dimension_numbers<[1], [0], [0], [1], [0, 0, 1, 1], [], []>} : vector<8x8xbf16>, vector<8x32xbf16>, vector<8x32xf32> -> vector<8x32xf32>
    %55 = tpu.reciprocal %52 {approx = true} : vector<8x1xf32> -> vector<8x1xf32>
    %56 = vector.broadcast %55 : vector<8x1xf32> to vector<8x32xf32>
    %57 = arith.mulf %54, %56 : vector<8x32xf32>
    %58 = arith.truncf %57 : vector<8x32xf32> to vector<8x32xbf16>
    %c0_25 = arith.constant 0 : index
    %c0_26 = arith.constant 0 : index
    %59 = vector.load %arg10[%c0_25, %c0_26] : memref<32x32xbf16, #tpu.memory_space<vmem>>, vector<32x32xbf16>
    %cst_27 = arith.constant dense<0.000000e+00> : vector<8x32xf32>
    %60 = tpu.matmul %58, %59, %cst_27 {dimension_numbers = #tpu.dot_dimension_numbers<[1], [0], [0], [1], [0, 0, 1, 1], [], []>} : vector<8x32xbf16>, vector<32x32xbf16>, vector<8x32xf32> -> vector<8x32xf32>
    %61 = arith.addf %3, %60 : vector<8x32xf32>
    %c0_28 = arith.constant 0 : index
    %c0_29 = arith.constant 0 : index
    %62 = vector.load %arg11[%c0_28, %c0_29] : memref<1x32xf32, #tpu.memory_space<vmem>>, vector<1x32xf32>
    %63 = vector.broadcast %62 : vector<1x32xf32> to vector<8x32xf32>
    %64 = arith.addf %61, %63 : vector<8x32xf32>
    %c0_30 = arith.constant 0 : index
    %c0_31 = arith.constant 0 : index
    %c0_32 = arith.constant 0 : index
    %65 = vector.load %arg2[%c0_30, %c0_31, %c0_32] : memref<1x16x32xf32, #tpu.memory_space<vmem>>, vector<1x16x32xf32>
    %66 = vector.shape_cast %65 : vector<1x16x32xf32> to vector<16x32xf32>
    %c0_33 = arith.constant 0 : index
    %c0_34 = arith.constant 0 : index
    %67 = vector.load %arg12[%c0_33, %c0_34] : memref<1x32xf32, #tpu.memory_space<vmem>>, vector<1x32xf32>
    %c0_35 = arith.constant 0 : index
    %c0_36 = arith.constant 0 : index
    %68 = vector.load %arg13[%c0_35, %c0_36] : memref<1x32xf32, #tpu.memory_space<vmem>>, vector<1x32xf32>
    %cst_37 = arith.constant dense<0.000000e+00> : vector<16xf32>
    %69 = vector.multi_reduction <add>, %66, %cst_37 [1] : vector<16x32xf32> to vector<16xf32>
    %70 = vector.shape_cast %69 : vector<16xf32> to vector<16x1xf32>
    %cst_38 = arith.constant 3.200000e+01 : f32
    %71 = vector.broadcast %cst_38 : f32 to vector<16x1xf32>
    %72 = arith.divf %70, %71 : vector<16x1xf32>
    %73 = vector.broadcast %72 : vector<16x1xf32> to vector<16x32xf32>
    %74 = arith.subf %66, %73 : vector<16x32xf32>
    %75 = arith.mulf %74, %74 : vector<16x32xf32>
    %cst_39 = arith.constant dense<0.000000e+00> : vector<16xf32>
    %76 = vector.multi_reduction <add>, %75, %cst_39 [1] : vector<16x32xf32> to vector<16xf32>
    %77 = vector.shape_cast %76 : vector<16xf32> to vector<16x1xf32>
    %cst_40 = arith.constant 3.200000e+01 : f32
    %78 = vector.broadcast %cst_40 : f32 to vector<16x1xf32>
    %79 = arith.divf %77, %78 : vector<16x1xf32>
    %80 = vector.broadcast %72 : vector<16x1xf32> to vector<16x32xf32>
    %81 = arith.subf %66, %80 : vector<16x32xf32>
    %cst_41 = arith.constant 9.99999974E-6 : f32
    %82 = vector.broadcast %cst_41 : f32 to vector<16x1xf32>
    %83 = arith.addf %79, %82 : vector<16x1xf32>
    %84 = math.rsqrt %83 : vector<16x1xf32>
    %85 = vector.broadcast %84 : vector<16x1xf32> to vector<16x32xf32>
    %86 = arith.mulf %81, %85 : vector<16x32xf32>
    %87 = vector.broadcast %67 : vector<1x32xf32> to vector<16x32xf32>
    %88 = arith.mulf %86, %87 : vector<16x32xf32>
    %89 = vector.broadcast %68 : vector<1x32xf32> to vector<16x32xf32>
    %90 = arith.addf %88, %89 : vector<16x32xf32>
    %91 = arith.truncf %90 : vector<16x32xf32> to vector<16x32xbf16>
    %c0_42 = arith.constant 0 : index
    %c0_43 = arith.constant 0 : index
    %92 = vector.load %arg18[%c0_42, %c0_43] : memref<32x64xbf16, #tpu.memory_space<vmem>>, vector<32x64xbf16>
    %cst_44 = arith.constant dense<0.000000e+00> : vector<16x64xf32>
    %93 = tpu.matmul %91, %92, %cst_44 {dimension_numbers = #tpu.dot_dimension_numbers<[1], [0], [0], [1], [0, 0, 1, 1], [], []>} : vector<16x32xbf16>, vector<32x64xbf16>, vector<16x64xf32> -> vector<16x64xf32>
    %c0_45 = arith.constant 0 : index
    %c0_46 = arith.constant 0 : index
    %94 = vector.load %arg19[%c0_45, %c0_46] : memref<1x64xf32, #tpu.memory_space<vmem>>, vector<1x64xf32>
    %95 = vector.broadcast %94 : vector<1x64xf32> to vector<16x64xf32>
    %96 = arith.addf %93, %95 : vector<16x64xf32>
    %c0_47 = arith.constant 0 : index
    %c0_48 = arith.constant 0 : index
    %97 = vector.load %arg14[%c0_47, %c0_48] : memref<1x32xf32, #tpu.memory_space<vmem>>, vector<1x32xf32>
    %c0_49 = arith.constant 0 : index
    %c0_50 = arith.constant 0 : index
    %98 = vector.load %arg15[%c0_49, %c0_50] : memref<1x32xf32, #tpu.memory_space<vmem>>, vector<1x32xf32>
    %cst_51 = arith.constant dense<0.000000e+00> : vector<8xf32>
    %99 = vector.multi_reduction <add>, %64, %cst_51 [1] : vector<8x32xf32> to vector<8xf32>
    %100 = vector.shape_cast %99 : vector<8xf32> to vector<8x1xf32>
    %cst_52 = arith.constant 3.200000e+01 : f32
    %101 = vector.broadcast %cst_52 : f32 to vector<8x1xf32>
    %102 = arith.divf %100, %101 : vector<8x1xf32>
    %103 = vector.broadcast %102 : vector<8x1xf32> to vector<8x32xf32>
    %104 = arith.subf %64, %103 : vector<8x32xf32>
    %105 = arith.mulf %104, %104 : vector<8x32xf32>
    %cst_53 = arith.constant dense<0.000000e+00> : vector<8xf32>
    %106 = vector.multi_reduction <add>, %105, %cst_53 [1] : vector<8x32xf32> to vector<8xf32>
    %107 = vector.shape_cast %106 : vector<8xf32> to vector<8x1xf32>
    %cst_54 = arith.constant 3.200000e+01 : f32
    %108 = vector.broadcast %cst_54 : f32 to vector<8x1xf32>
    %109 = arith.divf %107, %108 : vector<8x1xf32>
    %110 = vector.broadcast %102 : vector<8x1xf32> to vector<8x32xf32>
    %111 = arith.subf %64, %110 : vector<8x32xf32>
    %cst_55 = arith.constant 9.99999974E-6 : f32
    %112 = vector.broadcast %cst_55 : f32 to vector<8x1xf32>
    %113 = arith.addf %109, %112 : vector<8x1xf32>
    %114 = math.rsqrt %113 : vector<8x1xf32>
    %115 = vector.broadcast %114 : vector<8x1xf32> to vector<8x32xf32>
    %116 = arith.mulf %111, %115 : vector<8x32xf32>
    %117 = vector.broadcast %97 : vector<1x32xf32> to vector<8x32xf32>
    %118 = arith.mulf %116, %117 : vector<8x32xf32>
    %119 = vector.broadcast %98 : vector<1x32xf32> to vector<8x32xf32>
    %120 = arith.addf %118, %119 : vector<8x32xf32>
    %121 = arith.truncf %120 : vector<8x32xf32> to vector<8x32xbf16>
    %c0_56 = arith.constant 0 : index
    %c0_57 = arith.constant 0 : index
    %122 = vector.load %arg16[%c0_56, %c0_57] : memref<32x32xbf16, #tpu.memory_space<vmem>>, vector<32x32xbf16>
    %cst_58 = arith.constant dense<0.000000e+00> : vector<8x32xf32>
    %123 = tpu.matmul %121, %122, %cst_58 {dimension_numbers = #tpu.dot_dimension_numbers<[1], [0], [0], [1], [0, 0, 1, 1], [], []>} : vector<8x32xbf16>, vector<32x32xbf16>, vector<8x32xf32> -> vector<8x32xf32>
    %c0_59 = arith.constant 0 : index
    %c0_60 = arith.constant 0 : index
    %124 = vector.load %arg17[%c0_59, %c0_60] : memref<1x32xf32, #tpu.memory_space<vmem>>, vector<1x32xf32>
    %125 = vector.broadcast %124 : vector<1x32xf32> to vector<8x32xf32>
    %126 = arith.addf %123, %125 : vector<8x32xf32>
    %127 = vector.extract_strided_slice %96 {offsets = [0, 0], sizes = [16, 32], strides = [1, 1]} : vector<16x64xf32> to vector<16x32xf32>
    %128 = vector.extract_strided_slice %96 {offsets = [0, 32], sizes = [16, 32], strides = [1, 1]} : vector<16x64xf32> to vector<16x32xf32>
    %c0_61 = arith.constant 0 : index
    %c0_62 = arith.constant 0 : index
    %c0_63 = arith.constant 0 : index
    %129 = vector.load %arg5[%c0_61, %c0_62, %c0_63] : memref<1x1x16xf32, #tpu.memory_space<vmem>>, vector<1x1x16xf32>
    %130 = vector.shape_cast %129 : vector<1x1x16xf32> to vector<1x16xf32>
    %131 = arith.truncf %126 : vector<8x32xf32> to vector<8x32xbf16>
    %132 = arith.truncf %127 : vector<16x32xf32> to vector<16x32xbf16>
    %133 = arith.truncf %128 : vector<16x32xf32> to vector<16x32xbf16>
    %cst_64 = arith.constant dense<0.000000e+00> : vector<8x16xf32>
    %134 = tpu.matmul %131, %132, %cst_64 {dimension_numbers = #tpu.dot_dimension_numbers<[1], [1], [0], [0], [0, 0, 1, 0], [], []>} : vector<8x32xbf16>, vector<16x32xbf16>, vector<8x16xf32> -> vector<8x16xf32>
    %135 = vector.broadcast %130 : vector<1x16xf32> to vector<8x16xf32>
    %136 = arith.addf %134, %135 : vector<8x16xf32>
    %cst_65 = arith.constant dense<0xFF800000> : vector<8xf32>
    %137 = vector.multi_reduction <maximumf>, %136, %cst_65 [1] : vector<8x16xf32> to vector<8xf32>
    %138 = vector.shape_cast %137 : vector<8xf32> to vector<8x1xf32>
    %139 = vector.broadcast %138 : vector<8x1xf32> to vector<8x16xf32>
    %140 = arith.subf %136, %139 : vector<8x16xf32>
    %141 = math.exp %140 : vector<8x16xf32>
    %cst_66 = arith.constant dense<0.000000e+00> : vector<8xf32>
    %142 = vector.multi_reduction <add>, %141, %cst_66 [1] : vector<8x16xf32> to vector<8xf32>
    %143 = vector.shape_cast %142 : vector<8xf32> to vector<8x1xf32>
    %144 = arith.truncf %141 : vector<8x16xf32> to vector<8x16xbf16>
    %cst_67 = arith.constant dense<0.000000e+00> : vector<8x32xf32>
    %145 = tpu.matmul %144, %133, %cst_67 {dimension_numbers = #tpu.dot_dimension_numbers<[1], [0], [0], [1], [0, 0, 1, 1], [], []>} : vector<8x16xbf16>, vector<16x32xbf16>, vector<8x32xf32> -> vector<8x32xf32>
    %146 = tpu.reciprocal %143 {approx = true} : vector<8x1xf32> -> vector<8x1xf32>
    %147 = vector.broadcast %146 : vector<8x1xf32> to vector<8x32xf32>
    %148 = arith.mulf %145, %147 : vector<8x32xf32>
    %149 = arith.truncf %148 : vector<8x32xf32> to vector<8x32xbf16>
    %c0_68 = arith.constant 0 : index
    %c0_69 = arith.constant 0 : index
    %150 = vector.load %arg20[%c0_68, %c0_69] : memref<32x32xbf16, #tpu.memory_space<vmem>>, vector<32x32xbf16>
    %cst_70 = arith.constant dense<0.000000e+00> : vector<8x32xf32>
    %151 = tpu.matmul %149, %150, %cst_70 {dimension_numbers = #tpu.dot_dimension_numbers<[1], [0], [0], [1], [0, 0, 1, 1], [], []>} : vector<8x32xbf16>, vector<32x32xbf16>, vector<8x32xf32> -> vector<8x32xf32>
    %152 = arith.addf %64, %151 : vector<8x32xf32>
    %c0_71 = arith.constant 0 : index
    %c0_72 = arith.constant 0 : index
    %153 = vector.load %arg21[%c0_71, %c0_72] : memref<1x32xf32, #tpu.memory_space<vmem>>, vector<1x32xf32>
    %154 = vector.broadcast %153 : vector<1x32xf32> to vector<8x32xf32>
    %155 = arith.addf %152, %154 : vector<8x32xf32>
    %c0_73 = arith.constant 0 : index
    %c0_74 = arith.constant 0 : index
    %156 = vector.load %arg22[%c0_73, %c0_74] : memref<1x32xf32, #tpu.memory_space<vmem>>, vector<1x32xf32>
    %c0_75 = arith.constant 0 : index
    %c0_76 = arith.constant 0 : index
    %157 = vector.load %arg23[%c0_75, %c0_76] : memref<1x32xf32, #tpu.memory_space<vmem>>, vector<1x32xf32>
    %cst_77 = arith.constant dense<0.000000e+00> : vector<8xf32>
    %158 = vector.multi_reduction <add>, %155, %cst_77 [1] : vector<8x32xf32> to vector<8xf32>
    %159 = vector.shape_cast %158 : vector<8xf32> to vector<8x1xf32>
    %cst_78 = arith.constant 3.200000e+01 : f32
    %160 = vector.broadcast %cst_78 : f32 to vector<8x1xf32>
    %161 = arith.divf %159, %160 : vector<8x1xf32>
    %162 = vector.broadcast %161 : vector<8x1xf32> to vector<8x32xf32>
    %163 = arith.subf %155, %162 : vector<8x32xf32>
    %164 = arith.mulf %163, %163 : vector<8x32xf32>
    %cst_79 = arith.constant dense<0.000000e+00> : vector<8xf32>
    %165 = vector.multi_reduction <add>, %164, %cst_79 [1] : vector<8x32xf32> to vector<8xf32>
    %166 = vector.shape_cast %165 : vector<8xf32> to vector<8x1xf32>
    %cst_80 = arith.constant 3.200000e+01 : f32
    %167 = vector.broadcast %cst_80 : f32 to vector<8x1xf32>
    %168 = arith.divf %166, %167 : vector<8x1xf32>
    %169 = vector.broadcast %161 : vector<8x1xf32> to vector<8x32xf32>
    %170 = arith.subf %155, %169 : vector<8x32xf32>
    %cst_81 = arith.constant 9.99999974E-6 : f32
    %171 = vector.broadcast %cst_81 : f32 to vector<8x1xf32>
    %172 = arith.addf %168, %171 : vector<8x1xf32>
    %173 = math.rsqrt %172 : vector<8x1xf32>
    %174 = vector.broadcast %173 : vector<8x1xf32> to vector<8x32xf32>
    %175 = arith.mulf %170, %174 : vector<8x32xf32>
    %176 = vector.broadcast %156 : vector<1x32xf32> to vector<8x32xf32>
    %177 = arith.mulf %175, %176 : vector<8x32xf32>
    %178 = vector.broadcast %157 : vector<1x32xf32> to vector<8x32xf32>
    %179 = arith.addf %177, %178 : vector<8x32xf32>
    %180 = arith.truncf %179 : vector<8x32xf32> to vector<8x32xbf16>
    %c0_82 = arith.constant 0 : index
    %c0_83 = arith.constant 0 : index
    %181 = vector.load %arg24[%c0_82, %c0_83] : memref<32x64xbf16, #tpu.memory_space<vmem>>, vector<32x64xbf16>
    %cst_84 = arith.constant dense<0.000000e+00> : vector<8x64xf32>
    %182 = tpu.matmul %180, %181, %cst_84 {dimension_numbers = #tpu.dot_dimension_numbers<[1], [0], [0], [1], [0, 0, 1, 1], [], []>} : vector<8x32xbf16>, vector<32x64xbf16>, vector<8x64xf32> -> vector<8x64xf32>
    %c0_85 = arith.constant 0 : index
    %c0_86 = arith.constant 0 : index
    %183 = vector.load %arg25[%c0_85, %c0_86] : memref<1x64xf32, #tpu.memory_space<vmem>>, vector<1x64xf32>
    %184 = vector.broadcast %183 : vector<1x64xf32> to vector<8x64xf32>
    %185 = arith.addf %182, %184 : vector<8x64xf32>
    %cst_87 = arith.constant 0.000000e+00 : f32
    %186 = vector.broadcast %cst_87 : f32 to vector<8x64xf32>
    %187 = arith.maximumf %185, %186 : vector<8x64xf32>
    %188 = arith.truncf %187 : vector<8x64xf32> to vector<8x64xbf16>
    %c0_88 = arith.constant 0 : index
    %c0_89 = arith.constant 0 : index
    %189 = vector.load %arg26[%c0_88, %c0_89] : memref<64x32xbf16, #tpu.memory_space<vmem>>, vector<64x32xbf16>
    %cst_90 = arith.constant dense<0.000000e+00> : vector<8x32xf32>
    %190 = tpu.matmul %188, %189, %cst_90 {dimension_numbers = #tpu.dot_dimension_numbers<[1], [0], [0], [1], [0, 0, 1, 1], [], []>} : vector<8x64xbf16>, vector<64x32xbf16>, vector<8x32xf32> -> vector<8x32xf32>
    %c0_91 = arith.constant 0 : index
    %c0_92 = arith.constant 0 : index
    %191 = vector.load %arg27[%c0_91, %c0_92] : memref<1x32xf32, #tpu.memory_space<vmem>>, vector<1x32xf32>
    %192 = vector.broadcast %191 : vector<1x32xf32> to vector<8x32xf32>
    %193 = arith.addf %190, %192 : vector<8x32xf32>
    %194 = arith.addf %155, %193 : vector<8x32xf32>
    %c0_93 = arith.constant 0 : index
    %c0_94 = arith.constant 0 : index
    %c0_95 = arith.constant 0 : index
    %195 = vector.load %arg28[%c0_93, %c0_94, %c0_95] : memref<1x8x32xf32, #tpu.memory_space<vmem>>, vector<1x8x32xf32>
    %196 = vector.shape_cast %195 : vector<1x8x32xf32> to vector<8x32xf32>
    %197 = vector.shape_cast %194 : vector<8x32xf32> to vector<1x8x32xf32>
    tpu.vector_store %arg28[%c0_93, %c0_94, %c0_95], %197 {strides = array<i32>} : memref<1x8x32xf32, #tpu.memory_space<vmem>>, vector<1x8x32xf32>,
    return
  }
  func.func @transform_0(%arg0: i32) -> (i32, i32, i32) {
    %c0_i32 = arith.constant 0 : i32
    %c0_i32_0 = arith.constant 0 : i32
    %c0_i32_1 = arith.constant 0 : i32
    return %arg0, %c0_i32, %c0_i32_0 : i32, i32, i32
  }
  func.func @transform_1(%arg0: i32) -> (i32, i32, i32) {
    %c0_i32 = arith.constant 0 : i32
    %c0_i32_0 = arith.constant 0 : i32
    %c0_i32_1 = arith.constant 0 : i32
    return %arg0, %c0_i32, %c0_i32_0 : i32, i32, i32
  }
  func.func @transform_2(%arg0: i32) -> (i32, i32, i32) {
    %c0_i32 = arith.constant 0 : i32
    %c0_i32_0 = arith.constant 0 : i32
    %c0_i32_1 = arith.constant 0 : i32
    return %arg0, %c0_i32, %c0_i32_0 : i32, i32, i32
  }
  func.func @transform_3(%arg0: i32) -> (i32, i32, i32) {
    %c0_i32 = arith.constant 0 : i32
    %c0_i32_0 = arith.constant 0 : i32
    %c0_i32_1 = arith.constant 0 : i32
    %c0_i32_2 = arith.constant 0 : i32
    return %c0_i32, %c0_i32_0, %c0_i32_1 : i32, i32, i32
  }
  func.func @transform_4(%arg0: i32) -> (i32, i32, i32) {
    %c0_i32 = arith.constant 0 : i32
    %c0_i32_0 = arith.constant 0 : i32
    %c0_i32_1 = arith.constant 0 : i32
    return %arg0, %c0_i32, %c0_i32_0 : i32, i32, i32
  }
  func.func @transform_5(%arg0: i32) -> (i32, i32) {
    %c0_i32 = arith.constant 0 : i32
    %c0_i32_0 = arith.constant 0 : i32
    %c0_i32_1 = arith.constant 0 : i32
    return %c0_i32, %c0_i32_0 : i32, i32
  }
  func.func @transform_6(%arg0: i32) -> (i32, i32) {
    %c0_i32 = arith.constant 0 : i32
    %c0_i32_0 = arith.constant 0 : i32
    %c0_i32_1 = arith.constant 0 : i32
    return %c0_i32, %c0_i32_0 : i32, i32
  }
  func.func @transform_7(%arg0: i32) -> (i32, i32) {
    %c0_i32 = arith.constant 0 : i32
    %c0_i32_0 = arith.constant 0 : i32
    %c0_i32_1 = arith.constant 0 : i32
    return %c0_i32, %c0_i32_0 : i32, i32
  }
  func.func @transform_8(%arg0: i32) -> (i32, i32) {
    %c0_i32 = arith.constant 0 : i32
    %c0_i32_0 = arith.constant 0 : i32
    %c0_i32_1 = arith.constant 0 : i32
    return %c0_i32, %c0_i32_0 : i32, i32
  }
  func.func @transform_9(%arg0: i32) -> (i32, i32) {
    %c0_i32 = arith.constant 0 : i32
    %c0_i32_0 = arith.constant 0 : i32
    %c0_i32_1 = arith.constant 0 : i32
    return %c0_i32, %c0_i32_0 : i32, i32
  }
  func.func @transform_10(%arg0: i32) -> (i32, i32) {
    %c0_i32 = arith.constant 0 : i32
    %c0_i32_0 = arith.constant 0 : i32
    %c0_i32_1 = arith.constant 0 : i32
    return %c0_i32, %c0_i32_0 : i32, i32
  }
  func.func @transform_11(%arg0: i32) -> (i32, i32) {
    %c0_i32 = arith.constant 0 : i32
    %c0_i32_0 = arith.constant 0 : i32
    %c0_i32_1 = arith.constant 0 : i32
    return %c0_i32, %c0_i32_0 : i32, i32
  }
  func.func @transform_12(%arg0: i32) -> (i32, i32) {
    %c0_i32 = arith.constant 0 : i32
    %c0_i32_0 = arith.constant 0 : i32
    %c0_i32_1 = arith.constant 0 : i32
    return %c0_i32, %c0_i32_0 : i32, i32
  }
  func.func @transform_13(%arg0: i32) -> (i32, i32) {
    %c0_i32 = arith.constant 0 : i32
    %c0_i32_0 = arith.constant 0 : i32
    %c0_i32_1 = arith.constant 0 : i32
    return %c0_i32, %c0_i32_0 : i32, i32
  }
  func.func @transform_14(%arg0: i32) -> (i32, i32) {
    %c0_i32 = arith.constant 0 : i32
    %c0_i32_0 = arith.constant 0 : i32
    %c0_i32_1 = arith.constant 0 : i32
    return %c0_i32, %c0_i32_0 : i32, i32
  }
  func.func @transform_15(%arg0: i32) -> (i32, i32) {
    %c0_i32 = arith.constant 0 : i32
    %c0_i32_0 = arith.constant 0 : i32
    %c0_i32_1 = arith.constant 0 : i32
    return %c0_i32, %c0_i32_0 : i32, i32
  }
  func.func @transform_16(%arg0: i32) -> (i32, i32) {
    %c0_i32 = arith.constant 0 : i32
    %c0_i32_0 = arith.constant 0 : i32
    %c0_i32_1 = arith.constant 0 : i32
    return %c0_i32, %c0_i32_0 : i32, i32
  }
  func.func @transform_17(%arg0: i32) -> (i32, i32) {
    %c0_i32 = arith.constant 0 : i32
    %c0_i32_0 = arith.constant 0 : i32
    %c0_i32_1 = arith.constant 0 : i32
    return %c0_i32, %c0_i32_0 : i32, i32
  }
  func.func @transform_18(%arg0: i32) -> (i32, i32) {
    %c0_i32 = arith.constant 0 : i32
    %c0_i32_0 = arith.constant 0 : i32
    %c0_i32_1 = arith.constant 0 : i32
    return %c0_i32, %c0_i32_0 : i32, i32
  }
  func.func @transform_19(%arg0: i32) -> (i32, i32) {
    %c0_i32 = arith.constant 0 : i32
    %c0_i32_0 = arith.constant 0 : i32
    %c0_i32_1 = arith.constant 0 : i32
    return %c0_i32, %c0_i32_0 : i32, i32
  }
  func.func @transform_20(%arg0: i32) -> (i32, i32) {
    %c0_i32 = arith.constant 0 : i32
    %c0_i32_0 = arith.constant 0 : i32
    %c0_i32_1 = arith.constant 0 : i32
    return %c0_i32, %c0_i32_0 : i32, i32
  }
  func.func @transform_21(%arg0: i32) -> (i32, i32) {
    %c0_i32 = arith.constant 0 : i32
    %c0_i32_0 = arith.constant 0 : i32
    %c0_i32_1 = arith.constant 0 : i32
    return %c0_i32, %c0_i32_0 : i32, i32
  }
  func.func @transform_22(%arg0: i32) -> (i32, i32) {
    %c0_i32 = arith.constant 0 : i32
    %c0_i32_0 = arith.constant 0 : i32
    %c0_i32_1 = arith.constant 0 : i32
    return %c0_i32, %c0_i32_0 : i32, i32
  }
  func.func @transform_23(%arg0: i32) -> (i32, i32) {
    %c0_i32 = arith.constant 0 : i32
    %c0_i32_0 = arith.constant 0 : i32
    %c0_i32_1 = arith.constant 0 : i32
    return %c0_i32, %c0_i32_0 : i32, i32
  }
  func.func @transform_24(%arg0: i32) -> (i32, i32) {
    %c0_i32 = arith.constant 0 : i32
    %c0_i32_0 = arith.constant 0 : i32
    %c0_i32_1 = arith.constant 0 : i32
    return %c0_i32, %c0_i32_0 : i32, i32
  }
  func.func @transform_25(%arg0: i32) -> (i32, i32) {
    %c0_i32 = arith.constant 0 : i32
    %c0_i32_0 = arith.constant 0 : i32
    %c0_i32_1 = arith.constant 0 : i32
    return %c0_i32, %c0_i32_0 : i32, i32
  }
  func.func @transform_26(%arg0: i32) -> (i32, i32) {
    %c0_i32 = arith.constant 0 : i32
    %c0_i32_0 = arith.constant 0 : i32
    %c0_i32_1 = arith.constant 0 : i32
    return %c0_i32, %c0_i32_0 : i32, i32
  }
  func.func @transform_27(%arg0: i32) -> (i32, i32, i32) {
    %c0_i32 = arith.constant 0 : i32
    %c0_i32_0 = arith.constant 0 : i32
    %c0_i32_1 = arith.constant 0 : i32
    return %arg0, %c0_i32, %c0_i32_0 : i32, i32, i32
  }
}

module attributes {stable_mosaic.version = 11 : i64} {
  func.func @_ln_head_kernel(%arg0: i32, %arg1: memref<1x8x32xf32, #tpu.memory_space<vmem>>, %arg2: memref<1x32xf32, #tpu.memory_space<vmem>>, %arg3: memref<1x32xf32, #tpu.memory_space<vmem>>, %arg4: memref<32x128xbf16, #tpu.memory_space<vmem>>, %arg5: memref<1x128xf32, #tpu.memory_space<vmem>>, %arg6: memref<1x8x128xf32, #tpu.memory_space<vmem>>) attributes {dimension_semantics = [#tpu.dimension_semantics<parallel>], iteration_bounds = array<i64: 2>, scalar_prefetch = 0 : i64, scratch_operands = 0 : i64, tpu.core_type = #tpu.core_type<tc>, window_params = [{transform_indices = @transform_0, window_bounds = array<i64: 1, 8, 32>}, {pipeline_mode = #tpu.pipeline_mode<synchronous>, transform_indices = @transform_1, window_bounds = array<i64: 1, 32>}, {pipeline_mode = #tpu.pipeline_mode<synchronous>, transform_indices = @transform_2, window_bounds = array<i64: 1, 32>}, {pipeline_mode = #tpu.pipeline_mode<synchronous>, transform_indices = @transform_3, window_bounds = array<i64: 32, 128>}, {pipeline_mode = #tpu.pipeline_mode<synchronous>, transform_indices = @transform_4, window_bounds = array<i64: 1, 128>}, {transform_indices = @transform_5, window_bounds = array<i64: 1, 8, 128>}]} {
    %c0 = arith.constant 0 : index
    %c0_0 = arith.constant 0 : index
    %c0_1 = arith.constant 0 : index
    %0 = vector.load %arg1[%c0, %c0_0, %c0_1] : memref<1x8x32xf32, #tpu.memory_space<vmem>>, vector<1x8x32xf32>
    %1 = vector.shape_cast %0 : vector<1x8x32xf32> to vector<8x32xf32>
    %c0_2 = arith.constant 0 : index
    %c0_3 = arith.constant 0 : index
    %2 = vector.load %arg2[%c0_2, %c0_3] : memref<1x32xf32, #tpu.memory_space<vmem>>, vector<1x32xf32>
    %c0_4 = arith.constant 0 : index
    %c0_5 = arith.constant 0 : index
    %3 = vector.load %arg3[%c0_4, %c0_5] : memref<1x32xf32, #tpu.memory_space<vmem>>, vector<1x32xf32>
    %cst = arith.constant dense<0.000000e+00> : vector<8xf32>
    %4 = vector.multi_reduction <add>, %1, %cst [1] : vector<8x32xf32> to vector<8xf32>
    %5 = vector.shape_cast %4 : vector<8xf32> to vector<8x1xf32>
    %cst_6 = arith.constant 3.200000e+01 : f32
    %6 = vector.broadcast %cst_6 : f32 to vector<8x1xf32>
    %7 = arith.divf %5, %6 : vector<8x1xf32>
    %8 = vector.broadcast %7 : vector<8x1xf32> to vector<8x32xf32>
    %9 = arith.subf %1, %8 : vector<8x32xf32>
    %10 = arith.mulf %9, %9 : vector<8x32xf32>
    %cst_7 = arith.constant dense<0.000000e+00> : vector<8xf32>
    %11 = vector.multi_reduction <add>, %10, %cst_7 [1] : vector<8x32xf32> to vector<8xf32>
    %12 = vector.shape_cast %11 : vector<8xf32> to vector<8x1xf32>
    %cst_8 = arith.constant 3.200000e+01 : f32
    %13 = vector.broadcast %cst_8 : f32 to vector<8x1xf32>
    %14 = arith.divf %12, %13 : vector<8x1xf32>
    %15 = vector.broadcast %7 : vector<8x1xf32> to vector<8x32xf32>
    %16 = arith.subf %1, %15 : vector<8x32xf32>
    %cst_9 = arith.constant 9.99999974E-6 : f32
    %17 = vector.broadcast %cst_9 : f32 to vector<8x1xf32>
    %18 = arith.addf %14, %17 : vector<8x1xf32>
    %19 = math.rsqrt %18 : vector<8x1xf32>
    %20 = vector.broadcast %19 : vector<8x1xf32> to vector<8x32xf32>
    %21 = arith.mulf %16, %20 : vector<8x32xf32>
    %22 = vector.broadcast %2 : vector<1x32xf32> to vector<8x32xf32>
    %23 = arith.mulf %21, %22 : vector<8x32xf32>
    %24 = vector.broadcast %3 : vector<1x32xf32> to vector<8x32xf32>
    %25 = arith.addf %23, %24 : vector<8x32xf32>
    %26 = arith.truncf %25 : vector<8x32xf32> to vector<8x32xbf16>
    %c0_10 = arith.constant 0 : index
    %c0_11 = arith.constant 0 : index
    %27 = vector.load %arg4[%c0_10, %c0_11] : memref<32x128xbf16, #tpu.memory_space<vmem>>, vector<32x128xbf16>
    %cst_12 = arith.constant dense<0.000000e+00> : vector<8x128xf32>
    %28 = tpu.matmul %26, %27, %cst_12 {dimension_numbers = #tpu.dot_dimension_numbers<[1], [0], [0], [1], [0, 0, 1, 1], [], []>} : vector<8x32xbf16>, vector<32x128xbf16>, vector<8x128xf32> -> vector<8x128xf32>
    %c0_13 = arith.constant 0 : index
    %c0_14 = arith.constant 0 : index
    %29 = vector.load %arg5[%c0_13, %c0_14] : memref<1x128xf32, #tpu.memory_space<vmem>>, vector<1x128xf32>
    %30 = vector.broadcast %29 : vector<1x128xf32> to vector<8x128xf32>
    %31 = arith.addf %28, %30 : vector<8x128xf32>
    %c0_15 = arith.constant 0 : index
    %c0_16 = arith.constant 0 : index
    %c0_17 = arith.constant 0 : index
    %32 = vector.load %arg6[%c0_15, %c0_16, %c0_17] : memref<1x8x128xf32, #tpu.memory_space<vmem>>, vector<1x8x128xf32>
    %33 = vector.shape_cast %32 : vector<1x8x128xf32> to vector<8x128xf32>
    %34 = vector.shape_cast %31 : vector<8x128xf32> to vector<1x8x128xf32>
    tpu.vector_store %arg6[%c0_15, %c0_16, %c0_17], %34 {strides = array<i32>} : memref<1x8x128xf32, #tpu.memory_space<vmem>>, vector<1x8x128xf32>,
    return
  }
  func.func @transform_0(%arg0: i32) -> (i32, i32, i32) {
    %c0_i32 = arith.constant 0 : i32
    %c0_i32_0 = arith.constant 0 : i32
    %c0_i32_1 = arith.constant 0 : i32
    return %arg0, %c0_i32, %c0_i32_0 : i32, i32, i32
  }
  func.func @transform_1(%arg0: i32) -> (i32, i32) {
    %c0_i32 = arith.constant 0 : i32
    %c0_i32_0 = arith.constant 0 : i32
    %c0_i32_1 = arith.constant 0 : i32
    return %c0_i32, %c0_i32_0 : i32, i32
  }
  func.func @transform_2(%arg0: i32) -> (i32, i32) {
    %c0_i32 = arith.constant 0 : i32
    %c0_i32_0 = arith.constant 0 : i32
    %c0_i32_1 = arith.constant 0 : i32
    return %c0_i32, %c0_i32_0 : i32, i32
  }
  func.func @transform_3(%arg0: i32) -> (i32, i32) {
    %c0_i32 = arith.constant 0 : i32
    %c0_i32_0 = arith.constant 0 : i32
    %c0_i32_1 = arith.constant 0 : i32
    return %c0_i32, %c0_i32_0 : i32, i32
  }
  func.func @transform_4(%arg0: i32) -> (i32, i32) {
    %c0_i32 = arith.constant 0 : i32
    %c0_i32_0 = arith.constant 0 : i32
    %c0_i32_1 = arith.constant 0 : i32
    return %c0_i32, %c0_i32_0 : i32, i32
  }
  func.func @transform_5(%arg0: i32) -> (i32, i32, i32) {
    %c0_i32 = arith.constant 0 : i32
    %c0_i32_0 = arith.constant 0 : i32
    %c0_i32_1 = arith.constant 0 : i32
    return %arg0, %c0_i32, %c0_i32_0 : i32, i32, i32
  }
}

</mosaic_0001>

<llo_original>
// kernel: transformer_cslr_forward.4
$region0: #{transformer_cslr_forward.4}
  #allocation0 [shape = 'u32[]', space=smem, size = 0x4, offset = 0x4, fixed_abs, tag = 'smem constant byte address 0x4 - core index']
  #allocation1 [shape = 'u32[144,128]{1,0:T(1,128)}', space=vmem, size = 0x12000, scoped, tag = 'internal scratch']
  %s0 = inlined_call_operand.vmem [shape: f32[2,16,16], index: 0, kind: input, shape index: {}]
  %s1 = inlined_call_operand.vmem [shape: bf16[16,32], index: 1, kind: input, shape index: {}]
  %s2 = inlined_call_operand.vmem [shape: f32[1,32], index: 2, kind: input, shape index: {}]
  %s3 = inlined_call_operand.vmem [shape: f32[16,32], index: 3, kind: input, shape index: {}]
  %s4 = inlined_call_operand.vmem [shape: f32[2,16,32], index: 4, kind: output, shape index: {}]
  %s5 = sld [smem:[#allocation0]]
  $region49: #{transformer_cslr_forward.4} parent=0
    _
  %s7 = ssub.s32 1, %s5
  %s8 = scalar_select 0, %s7, %s5
  loop: start=0, step=1, limit=4
  $region2: #{transformer_cslr_forward.4} parent=0 // loop_pre_header
    _
  $region3: #{transformer_cslr_forward.4} parent=0 // loop_header
    %s10 = sphi 0, %s14
    %p11 = scmp.ge.s32.totalorder %s10, 4
    %s20 = sphi 0, %s22
    %s23 = sphi 0, %s20
    %s24 = sphi 0, %s23
    %s40 = sphi 0, %s24
    %s44 = sphi 0, %s44
    %s46 = sphi 0, %s44
    %s47 = sphi 0, %s46
    %s61 = sphi 0, %s47
    %s65 = sphi 0, %s65
    %s67 = sphi 0, %s65
    %s68 = sphi 0, %s67
    %s82 = sphi 0, %s68
    %s86 = sphi 0, %s86
    %s88 = sphi 0, %s86
    %s89 = sphi 0, %s88
    %s103 = sphi 0, %s89
    %s109 = sphi 0, %s111
    %s112 = sphi 0, %s109
    %s113 = sphi 0, %s112
    %s129 = sphi 0, %s113
  $region4: #{transformer_cslr_forward.4} parent=0 // loop_header_branch
    %13 = sbr.rel (%p11) target = $region8
  $region5: #{transformer_cslr_forward.4} parent=0 // loop_body
    %s15 = ssub.s32 %s10, 1
    %s16 = ssub.s32 %s10, 2
    %s17 = sadd.s32 %s10, 1
    %s18 = ssub.s32 %s10, %s17
    %p19 = scmp.eq.s32.totalorder %s18, 0
    %s21 = sadd.s32 %s20, 1
    %s22 = scalar_select %p19, %s20, %s21
    %p25 = pneg %p19
    %p26 = scmp.eq.s32.totalorder %s10, 1
    %p27 = por %p25, %p26
    %p28 = scmp.ne.s32.totalorder %s20, %s23
    %p29 = scmp.eq.s32.totalorder %s10, 0
    %p30 = por %p28, %p29
    %p31 = scmp.ne.s32.totalorder %s20, %s23
    %p32 = scmp.eq.s32.totalorder %s15, 1
    %p33 = por %p31, %p32
    %p34 = scmp.ne.s32.totalorder %s23, %s24
    %p35 = scmp.eq.s32.totalorder %s15, 0
    %p36 = por %p34, %p35
    %p37 = scmp.ne.s32.totalorder %s23, %s24
    %p38 = scmp.eq.s32.totalorder %s16, 1
    %p39 = por %p37, %p38
    %p41 = scmp.ne.s32.totalorder %s24, %s40
    %p42 = scmp.eq.s32.totalorder %s16, 0
    %p43 = por %p41, %p42
    %s45 = sadd.s32 %s44, 1
    %p48 = scmp.eq.s32.totalorder %s10, 1
    %p49 = scmp.ne.s32.totalorder %s44, %s46
    %p50 = scmp.eq.s32.totalorder %s10, 0
    %p51 = por %p49, %p50
    %p52 = scmp.ne.s32.totalorder %s44, %s46
    %p53 = scmp.eq.s32.totalorder %s15, 1
    %p54 = por %p52, %p53
    %p55 = scmp.ne.s32.totalorder %s46, %s47
    %p56 = scmp.eq.s32.totalorder %s15, 0
    %p57 = por %p55, %p56
    %p58 = scmp.ne.s32.totalorder %s46, %s47
    %p59 = scmp.eq.s32.totalorder %s16, 1
    %p60 = por %p58, %p59
    %p62 = scmp.ne.s32.totalorder %s47, %s61
    %p63 = scmp.eq.s32.totalorder %s16, 0
    %p64 = por %p62, %p63
    %s66 = sadd.s32 %s65, 1
    %p69 = scmp.eq.s32.totalorder %s10, 1
    %p70 = scmp.ne.s32.totalorder %s65, %s67
    %p71 = scmp.eq.s32.totalorder %s10, 0
    %p72 = por %p70, %p71
    %p73 = scmp.ne.s32.totalorder %s65, %s67
    %p74 = scmp.eq.s32.totalorder %s15, 1
    %p75 = por %p73, %p74
    %p76 = scmp.ne.s32.totalorder %s67, %s68
    %p77 = scmp.eq.s32.totalorder %s15, 0
    %p78 = por %p76, %p77
    %p79 = scmp.ne.s32.totalorder %s67, %s68
    %p80 = scmp.eq.s32.totalorder %s16, 1
    %p81 = por %p79, %p80
    %p83 = scmp.ne.s32.totalorder %s68, %s82
    %p84 = scmp.eq.s32.totalorder %s16, 0
    %p85 = por %p83, %p84
    %s87 = sadd.s32 %s86, 1
    %p90 = scmp.eq.s32.totalorder %s10, 1
    %p91 = scmp.ne.s32.totalorder %s86, %s88
    %p92 = scmp.eq.s32.totalorder %s10, 0
    %p93 = por %p91, %p92
    %p94 = scmp.ne.s32.totalorder %s86, %s88
    %p95 = scmp.eq.s32.totalorder %s15, 1
    %p96 = por %p94, %p95
    %p97 = scmp.ne.s32.totalorder %s88, %s89
    %p98 = scmp.eq.s32.totalorder %s15, 0
    %p99 = por %p97, %p98
    %p100 = scmp.ne.s32.totalorder %s88, %s89
    %p101 = scmp.eq.s32.totalorder %s16, 1
    %p102 = por %p100, %p101
    %p104 = scmp.ne.s32.totalorder %s89, %s103
    %p105 = scmp.eq.s32.totalorder %s16, 0
    %p106 = por %p104, %p105
    %s107 = ssub.s32 %s10, %s17
    %p108 = scmp.eq.s32.totalorder %s107, 0
    %s110 = sadd.s32 %s109, 1
    %s111 = scalar_select %p108, %s109, %s110
    %p114 = pneg %p108
    %p115 = scmp.eq.s32.totalorder %s10, 1
    %p116 = por %p114, %p115
    %p117 = scmp.ne.s32.totalorder %s109, %s112
    %p118 = scmp.eq.s32.totalorder %s10, 0
    %p119 = por %p117, %p118
    %p120 = scmp.ne.s32.totalorder %s109, %s112
    %p121 = scmp.eq.s32.totalorder %s15, 1
    %p122 = por %p120, %p121
    %p123 = scmp.ne.s32.totalorder %s112, %s113
    %p124 = scmp.eq.s32.totalorder %s15, 0
    %p125 = por %p123, %p124
    %p126 = scmp.ne.s32.totalorder %s112, %s113
    %p127 = scmp.eq.s32.totalorder %s16, 1
    %p128 = por %p126, %p127
    %p130 = scmp.ne.s32.totalorder %s113, %s129
    %p131 = scmp.eq.s32.totalorder %s16, 0
    %p132 = por %p130, %p131
    %p133 = scmp.le.s32.totalorder 1, %s10
    %p134 = scmp.lt.s32.totalorder %s10, 3
    %p135 = pnand %p133, %p134
    %p136 = pneg %p135
    // Predicated region
    $region9: #{transformer_cslr_forward.4} parent=5 // pred_check
      _
    $region10: #{transformer_cslr_forward.4} parent=5 // pred_check_branch
      %138 = sbr.rel (%p135) target = $region12
    $region11: #{transformer_cslr_forward.4} parent=5 // pred_region
      %s139 = ssub.s32 %s10, 1
      // Predicated region
      $region13: #{transformer_cslr_forward.4} parent=11 // pred_check
        %p140 = pneg %p57
      $region14: #{transformer_cslr_forward.4} parent=11 // pred_check_branch
        %142 = sbr.rel (%p140) target = $region16
      $region15: #{transformer_cslr_forward.4} parent=11 // pred_region
        _
      $region16: #{transformer_cslr_forward.4} parent=11 // pred_fallthru
        _
      // Predicated region
      $region17: #{transformer_cslr_forward.4} parent=11 // pred_check
        %p143 = pneg %p78
      $region18: #{transformer_cslr_forward.4} parent=11 // pred_check_branch
        %145 = sbr.rel (%p143) target = $region20
      $region19: #{transformer_cslr_forward.4} parent=11 // pred_region
        _
      $region20: #{transformer_cslr_forward.4} parent=11 // pred_fallthru
        _
      // Predicated region
      $region21: #{transformer_cslr_forward.4} parent=11 // pred_check
        %p146 = pneg %p99
      $region22: #{transformer_cslr_forward.4} parent=11 // pred_check_branch
        %148 = sbr.rel (%p146) target = $region24
      $region23: #{transformer_cslr_forward.4} parent=11 // pred_region
        _
      $region24: #{transformer_cslr_forward.4} parent=11 // pred_fallthru
        _
    $region12: #{transformer_cslr_forward.4} parent=5 // pred_fallthru
      _
    %p149 = scmp.lt.s32.totalorder %s10, 2
    // Predicated region
    $region25: #{transformer_cslr_forward.4} parent=5 // pred_check
      %p150 = pneg %p149
    $region26: #{transformer_cslr_forward.4} parent=5 // pred_check_branch
      %152 = sbr.rel (%p150) target = $region28
    $region27: #{transformer_cslr_forward.4} parent=5 // pred_region
      // Predicated region
      $region29: #{transformer_cslr_forward.4} parent=27 // pred_check
        %p153 = pneg %p30
      $region30: #{transformer_cslr_forward.4} parent=27 // pred_check_branch
        %155 = sbr.rel (%p153) target = $region32
      $region31: #{transformer_cslr_forward.4} parent=27 // pred_region
        %p156 = scmp.lt.s32.totalorder %s10, 1
        %s157 = scalar_select %p156, %s10, 1
        %s158 = smul.addr %s157, 2
        %s159 = smul.addr %s158, 8
        %s160 = scalar_lea.vmem %s0, %s159
      $region32: #{transformer_cslr_forward.4} parent=27 // pred_fallthru
        _
    $region28: #{transformer_cslr_forward.4} parent=5 // pred_fallthru
      _
    %p161 = scmp.le.s32.totalorder 1, %s10
    %p162 = scmp.lt.s32.totalorder %s10, 3
    %p163 = pnand %p161, %p162
    %p164 = pneg %p163
    // Predicated region
    $region33: #{transformer_cslr_forward.4} parent=5 // pred_check
      _
    $region34: #{transformer_cslr_forward.4} parent=5 // pred_check_branch
      %166 = sbr.rel (%p163) target = $region36
    $region35: #{transformer_cslr_forward.4} parent=5 // pred_region
      %s167 = ssub.s32 %s10, 1
      %p168 = scmp.lt.s32.totalorder %s15, 1
      %s169 = scalar_select %p168, %s15, 1
      %s170 = smul.addr %s169, 2
      %s171 = smul.addr %s170, 8
      %s172 = scalar_lea.vmem %s0, %s171
      %p173 = pneg %p36
      %p174 = pneg %p33
      %p175 = pneg %p57
      %p176 = pneg %p54
      %p177 = pneg %p78
      %p178 = pneg %p75
      %p179 = pneg %p99
      %p180 = pneg %p96
      %p181 = pneg %p125
      %p182 = pneg %p122
      %p183 = scmp.lt.s32.totalorder %s15, 1
      %s184 = scalar_select %p183, %s15, 1
      %s185 = smul.addr %s184, 2
      %s186 = smul.addr %s185, 8
      %s187 = scalar_lea.vmem %s4, %s186
      %p188 = scmp.lt.s32.totalorder %s15, 1
      %s189 = scalar_select %p188, %s15, 1
      %s190 = smul.addr %s189, 2
      %s191 = smul.addr %s190, 8
      %s192 = scalar_lea.vmem %s0, %s191
      %p193 = scmp.lt.s32.totalorder %s15, 1
      %s194 = scalar_select %p193, %s15, 1
      %s195 = smul.addr %s194, 2
      %s196 = smul.addr %s195, 8
      %s197 = scalar_lea.vmem %s4, %s196
      %v199 = vld [vmem:[%s192] sm:$0xff]
      %v200 = vld [vmem:[%s192 + $0x8] sm:$0xff]
      %v201 = vpack.c.bf16 %v200, %v199
      %v202 = vld [vmem:[%s1] sm:$0xf]
      %v203 = vld [vmem:[%s1 + $0x4] sm:$0xf]
      %v204 = vld [vmem:[%s2] sm:$0x1]
      %v206 = vlaneseq
      %v207 = vshrl.u32 %v206, 7
      %v208 = vsub.s32 0, %v207
      %v209 = vrot.slane %v204, %v208
      %v213 = vunpack.c.l.b16 %v202
      %v214 = vunpack.c.l.b16 %v203
      %v215 = vpack.c.b16 %v214, %v213
      %vm217 = vcmask 130048
      %v219 = vsel %vm217, %v201, 0
      %221 = vmatprep.subr.bf16.mxu0 0
      %222 = vmatpush1.bf16.msra.mxu0 0
      %223 = vmatprep.subr.bf16.mxu0 0
      %224 = vmatpush1.bf16.msra.mxu0 0
      %225 = vmatprep.subr.bf16.mxu0 0
      %226 = vmatpush1.bf16.msra.mxu0 0
      %227 = vmatprep.subr.bf16.mxu0 0
      %228 = vmatpush1.bf16.msra.mxu0 0
      %229 = vmatprep.subr.bf16.mxu0 0
      %230 = vmatpush1.bf16.msra.mxu0 0
      %231 = vmatprep.subr.bf16.mxu0 0
      %232 = vmatpush1.bf16.msra.mxu0 0
      %233 = vmatprep.subr.bf16.mxu0 0
      %234 = vmatpush1.bf16.msra.mxu0 0
      %235 = vmatprep.subr.bf16.mxu0 0
      %236 = vmatpush1.bf16.msra.mxu0 %v215
      %237 = vmatprep.subr.bf16.mxu0 0
      %238 = vmatpush2.bf16.msra.mxu0 0
      %239 = vmatprep.subr.bf16.mxu0 0
      %240 = vmatpush2.bf16.msra.mxu0 0
      %241 = vmatprep.subr.bf16.mxu0 0
      %242 = vmatpush2.bf16.msra.mxu0 0
      %243 = vmatprep.subr.bf16.mxu0 0
      %244 = vmatpush2.bf16.msra.mxu0 0
      %245 = vmatprep.subr.bf16.mxu0 0
      %246 = vmatpush2.bf16.msra.mxu0 0
      %247 = vmatprep.subr.bf16.mxu0 0
      %248 = vmatpush2.bf16.msra.mxu0 0
      %249 = vmatprep.subr.bf16.mxu0 0
      %250 = vmatpush2.bf16.msra.mxu0 0
      %251 = vmatprep.subr.bf16.mxu0 0
      %252 = vmatpush2.bf16.msra.mxu0 0
      %253 = vmatprep.mubr.bf16.mxu0 0
      %254 = vmatmul.mubr.bf16.gmra.mxu0 %v219
      %v255 = vpop.f32.mrf.mxu0
      %v256 = vadd.f32 %v209, %v255
      %v257 = vpop.f32.mrf.mxu0
      %v258 = vpop.f32.mrf.mxu0
      %v259 = vadd.f32 %v209, %v258
      %v260 = vpop.f32.mrf.mxu0
      %261 = vdwg.mxu0
      %v262 = vld [vmem:[%s3] sm:$0xff]
      %v263 = vld [vmem:[%s3 + $0x8] sm:$0xff]
      %v264 = vadd.f32 %v256, %v262
      %v265 = vadd.f32 %v259, %v263
      %vm266 = vcmask 261120
      %267 = vst.msk [vmem:[%s197] sm:$0xff] %vm266, %v264
      %268 = vst.msk [vmem:[%s197 + $0x8] sm:$0xff] %vm266, %v265
      %p269 = scmp.lt.s32.totalorder %s15, 1
      %s270 = scalar_select %p269, %s15, 1
      %s271 = smul.addr %s270, 2
      %s272 = smul.addr %s271, 8
      %s273 = scalar_lea.vmem %s4, %s272
      // Predicated region
      $region37: #{transformer_cslr_forward.4} parent=35 // pred_check
        %p274 = pneg %p122
      $region38: #{transformer_cslr_forward.4} parent=35 // pred_check_branch
        %276 = sbr.rel (%p274) target = $region40
      $region39: #{transformer_cslr_forward.4} parent=35 // pred_region
        _
      $region40: #{transformer_cslr_forward.4} parent=35 // pred_fallthru
        _
    $region36: #{transformer_cslr_forward.4} parent=5 // pred_fallthru
      _
    %p277 = scmp.le.s32.totalorder 2, %s10
    // Predicated region
    $region41: #{transformer_cslr_forward.4} parent=5 // pred_check
      %p278 = pneg %p277
    $region42: #{transformer_cslr_forward.4} parent=5 // pred_check_branch
      %280 = sbr.rel (%p278) target = $region44
    $region43: #{transformer_cslr_forward.4} parent=5 // pred_region
      %s281 = ssub.s32 %s10, 2
      // Predicated region
      $region45: #{transformer_cslr_forward.4} parent=43 // pred_check
        %p282 = pneg %p128
      $region46: #{transformer_cslr_forward.4} parent=43 // pred_check_branch
        %284 = sbr.rel (%p282) target = $region48
      $region47: #{transformer_cslr_forward.4} parent=43 // pred_region
        %p285 = scmp.lt.s32.totalorder %s16, 1
        %s286 = scalar_select %p285, %s16, 1
        %s287 = smul.addr %s286, 2
        %s288 = smul.addr %s287, 8
        %s289 = scalar_lea.vmem %s4, %s288
      $region48: #{transformer_cslr_forward.4} parent=43 // pred_fallthru
        _
    $region44: #{transformer_cslr_forward.4} parent=5 // pred_fallthru
      _
  $region6: #{transformer_cslr_forward.4} parent=0 // loop_footer
    %s14 = sadd.s32 1, %s10
  $region7: #{transformer_cslr_forward.4} parent=0 // loop_footer_branch
    %9 = sbr.rel target = $region3
  $region8: #{transformer_cslr_forward.4} parent=0 // loop_exit
    _

// kernel: transformer_cslr_forward.5
$region0: #{transformer_cslr_forward.5}
  #allocation0 [shape = 'u32[]', space=smem, size = 0x4, offset = 0x4, fixed_abs, tag = 'smem constant byte address 0x4 - core index']
  #allocation1 [shape = 'u32[144,128]{1,0:T(1,128)}', space=vmem, size = 0x12000, scoped, tag = 'internal scratch']
  %s0 = inlined_call_operand.vmem [shape: f32[2,16,32], index: 0, kind: input, shape index: {}]
  %s1 = inlined_call_operand.vmem [shape: f32[2,1,16], index: 1, kind: input, shape index: {}]
  %s2 = inlined_call_operand.vmem [shape: f32[1,32], index: 2, kind: input, shape index: {}]
  %s3 = inlined_call_operand.vmem [shape: f32[1,32], index: 3, kind: input, shape index: {}]
  %s4 = inlined_call_operand.vmem [shape: bf16[32,96], index: 4, kind: input, shape index: {}]
  %s5 = inlined_call_operand.vmem [shape: f32[1,96], index: 5, kind: input, shape index: {}]
  %s6 = inlined_call_operand.vmem [shape: bf16[32,32], index: 6, kind: input, shape index: {}]
  %s7 = inlined_call_operand.vmem [shape: f32[1,32], index: 7, kind: input, shape index: {}]
  %s8 = inlined_call_operand.vmem [shape: f32[1,32], index: 8, kind: input, shape index: {}]
  %s9 = inlined_call_operand.vmem [shape: f32[1,32], index: 9, kind: input, shape index: {}]
  %s10 = inlined_call_operand.vmem [shape: bf16[32,64], index: 10, kind: input, shape index: {}]
  %s11 = inlined_call_operand.vmem [shape: f32[1,64], index: 11, kind: input, shape index: {}]
  %s12 = inlined_call_operand.vmem [shape: bf16[64,32], index: 12, kind: input, shape index: {}]
  %s13 = inlined_call_operand.vmem [shape: f32[1,32], index: 13, kind: input, shape index: {}]
  %s14 = inlined_call_operand.vmem [shape: f32[2,16,32], index: 14, kind: output, shape index: {}]
  %s15 = sld [smem:[#allocation0]]
  $region89: #{transformer_cslr_forward.5} parent=0
    _
  %s17 = ssub.s32 1, %s15
  %s18 = scalar_select 0, %s17, %s15
  loop: start=0, step=1, limit=4
  $region2: #{transformer_cslr_forward.5} parent=0 // loop_pre_header
    _
  $region3: #{transformer_cslr_forward.5} parent=0 // loop_header
    %s20 = sphi 0, %s24
    %p21 = scmp.ge.s32.totalorder %s20, 4
    %s30 = sphi 0, %s32
    %s33 = sphi 0, %s30
    %s34 = sphi 0, %s33
    %s50 = sphi 0, %s34
    %s56 = sphi 0, %s58
    %s59 = sphi 0, %s56
    %s60 = sphi 0, %s59
    %s76 = sphi 0, %s60
    %s80 = sphi 0, %s80
    %s82 = sphi 0, %s80
    %s83 = sphi 0, %s82
    %s97 = sphi 0, %s83
    %s101 = sphi 0, %s101
    %s103 = sphi 0, %s101
    %s104 = sphi 0, %s103
    %s118 = sphi 0, %s104
    %s122 = sphi 0, %s122
    %s124 = sphi 0, %s122
    %s125 = sphi 0, %s124
    %s139 = sphi 0, %s125
    %s143 = sphi 0, %s143
    %s145 = sphi 0, %s143
    %s146 = sphi 0, %s145
    %s160 = sphi 0, %s146
    %s164 = sphi 0, %s164
    %s166 = sphi 0, %s164
    %s167 = sphi 0, %s166
    %s181 = sphi 0, %s167
    %s185 = sphi 0, %s185
    %s187 = sphi 0, %s185
    %s188 = sphi 0, %s187
    %s202 = sphi 0, %s188
    %s206 = sphi 0, %s206
    %s208 = sphi 0, %s206
    %s209 = sphi 0, %s208
    %s223 = sphi 0, %s209
    %s227 = sphi 0, %s227
    %s229 = sphi 0, %s227
    %s230 = sphi 0, %s229
    %s244 = sphi 0, %s230
    %s248 = sphi 0, %s248
    %s250 = sphi 0, %s248
    %s251 = sphi 0, %s250
    %s265 = sphi 0, %s251
    %s269 = sphi 0, %s269
    %s271 = sphi 0, %s269
    %s272 = sphi 0, %s271
    %s286 = sphi 0, %s272
    %s290 = sphi 0, %s290
    %s292 = sphi 0, %s290
    %s293 = sphi 0, %s292
    %s307 = sphi 0, %s293
    %s311 = sphi 0, %s311
    %s313 = sphi 0, %s311
    %s314 = sphi 0, %s313
    %s328 = sphi 0, %s314
    %s334 = sphi 0, %s336
    %s337 = sphi 0, %s334
    %s338 = sphi 0, %s337
    %s354 = sphi 0, %s338
  $region4: #{transformer_cslr_forward.5} parent=0 // loop_header_branch
    %23 = sbr.rel (%p21) target = $region8
  $region5: #{transformer_cslr_forward.5} parent=0 // loop_body
    %s25 = ssub.s32 %s20, 1
    %s26 = ssub.s32 %s20, 2
    %s27 = sadd.s32 %s20, 1
    %s28 = ssub.s32 %s20, %s27
    %p29 = scmp.eq.s32.totalorder %s28, 0
    %s31 = sadd.s32 %s30, 1
    %s32 = scalar_select %p29, %s30, %s31
    %p35 = pneg %p29
    %p36 = scmp.eq.s32.totalorder %s20, 1
    %p37 = por %p35, %p36
    %p38 = scmp.ne.s32.totalorder %s30, %s33
    %p39 = scmp.eq.s32.totalorder %s20, 0
    %p40 = por %p38, %p39
    %p41 = scmp.ne.s32.totalorder %s30, %s33
    %p42 = scmp.eq.s32.totalorder %s25, 1
    %p43 = por %p41, %p42
    %p44 = scmp.ne.s32.totalorder %s33, %s34
    %p45 = scmp.eq.s32.totalorder %s25, 0
    %p46 = por %p44, %p45
    %p47 = scmp.ne.s32.totalorder %s33, %s34
    %p48 = scmp.eq.s32.totalorder %s26, 1
    %p49 = por %p47, %p48
    %p51 = scmp.ne.s32.totalorder %s34, %s50
    %p52 = scmp.eq.s32.totalorder %s26, 0
    %p53 = por %p51, %p52
    %s54 = ssub.s32 %s20, %s27
    %p55 = scmp.eq.s32.totalorder %s54, 0
    %s57 = sadd.s32 %s56, 1
    %s58 = scalar_select %p55, %s56, %s57
    %p61 = pneg %p55
    %p62 = scmp.eq.s32.totalorder %s20, 1
    %p63 = por %p61, %p62
    %p64 = scmp.ne.s32.totalorder %s56, %s59
    %p65 = scmp.eq.s32.totalorder %s20, 0
    %p66 = por %p64, %p65
    %p67 = scmp.ne.s32.totalorder %s56, %s59
    %p68 = scmp.eq.s32.totalorder %s25, 1
    %p69 = por %p67, %p68
    %p70 = scmp.ne.s32.totalorder %s59, %s60
    %p71 = scmp.eq.s32.totalorder %s25, 0
    %p72 = por %p70, %p71
    %p73 = scmp.ne.s32.totalorder %s59, %s60
    %p74 = scmp.eq.s32.totalorder %s26, 1
    %p75 = por %p73, %p74
    %p77 = scmp.ne.s32.totalorder %s60, %s76
    %p78 = scmp.eq.s32.totalorder %s26, 0
    %p79 = por %p77, %p78
    %s81 = sadd.s32 %s80, 1
    %p84 = scmp.eq.s32.totalorder %s20, 1
    %p85 = scmp.ne.s32.totalorder %s80, %s82
    %p86 = scmp.eq.s32.totalorder %s20, 0
    %p87 = por %p85, %p86
    %p88 = scmp.ne.s32.totalorder %s80, %s82
    %p89 = scmp.eq.s32.totalorder %s25, 1
    %p90 = por %p88, %p89
    %p91 = scmp.ne.s32.totalorder %s82, %s83
    %p92 = scmp.eq.s32.totalorder %s25, 0
    %p93 = por %p91, %p92
    %p94 = scmp.ne.s32.totalorder %s82, %s83
    %p95 = scmp.eq.s32.totalorder %s26, 1
    %p96 = por %p94, %p95
    %p98 = scmp.ne.s32.totalorder %s83, %s97
    %p99 = scmp.eq.s32.totalorder %s26, 0
    %p100 = por %p98, %p99
    %s102 = sadd.s32 %s101, 1
    %p105 = scmp.eq.s32.totalorder %s20, 1
    %p106 = scmp.ne.s32.totalorder %s101, %s103
    %p107 = scmp.eq.s32.totalorder %s20, 0
    %p108 = por %p106, %p107
    %p109 = scmp.ne.s32.totalorder %s101, %s103
    %p110 = scmp.eq.s32.totalorder %s25, 1
    %p111 = por %p109, %p110
    %p112 = scmp.ne.s32.totalorder %s103, %s104
    %p113 = scmp.eq.s32.totalorder %s25, 0
    %p114 = por %p112, %p113
    %p115 = scmp.ne.s32.totalorder %s103, %s104
    %p116 = scmp.eq.s32.totalorder %s26, 1
    %p117 = por %p115, %p116
    %p119 = scmp.ne.s32.totalorder %s104, %s118
    %p120 = scmp.eq.s32.totalorder %s26, 0
    %p121 = por %p119, %p120
    %s123 = sadd.s32 %s122, 1
    %p126 = scmp.eq.s32.totalorder %s20, 1
    %p127 = scmp.ne.s32.totalorder %s122, %s124
    %p128 = scmp.eq.s32.totalorder %s20, 0
    %p129 = por %p127, %p128
    %p130 = scmp.ne.s32.totalorder %s122, %s124
    %p131 = scmp.eq.s32.totalorder %s25, 1
    %p132 = por %p130, %p131
    %p133 = scmp.ne.s32.totalorder %s124, %s125
    %p134 = scmp.eq.s32.totalorder %s25, 0
    %p135 = por %p133, %p134
    %p136 = scmp.ne.s32.totalorder %s124, %s125
    %p137 = scmp.eq.s32.totalorder %s26, 1
    %p138 = por %p136, %p137
    %p140 = scmp.ne.s32.totalorder %s125, %s139
    %p141 = scmp.eq.s32.totalorder %s26, 0
    %p142 = por %p140, %p141
    %s144 = sadd.s32 %s143, 1
    %p147 = scmp.eq.s32.totalorder %s20, 1
    %p148 = scmp.ne.s32.totalorder %s143, %s145
    %p149 = scmp.eq.s32.totalorder %s20, 0
    %p150 = por %p148, %p149
    %p151 = scmp.ne.s32.totalorder %s143, %s145
    %p152 = scmp.eq.s32.totalorder %s25, 1
    %p153 = por %p151, %p152
    %p154 = scmp.ne.s32.totalorder %s145, %s146
    %p155 = scmp.eq.s32.totalorder %s25, 0
    %p156 = por %p154, %p155
    %p157 = scmp.ne.s32.totalorder %s145, %s146
    %p158 = scmp.eq.s32.totalorder %s26, 1
    %p159 = por %p157, %p158
    %p161 = scmp.ne.s32.totalorder %s146, %s160
    %p162 = scmp.eq.s32.totalorder %s26, 0
    %p163 = por %p161, %p162
    %s165 = sadd.s32 %s164, 1
    %p168 = scmp.eq.s32.totalorder %s20, 1
    %p169 = scmp.ne.s32.totalorder %s164, %s166
    %p170 = scmp.eq.s32.totalorder %s20, 0
    %p171 = por %p169, %p170
    %p172 = scmp.ne.s32.totalorder %s164, %s166
    %p173 = scmp.eq.s32.totalorder %s25, 1
    %p174 = por %p172, %p173
    %p175 = scmp.ne.s32.totalorder %s166, %s167
    %p176 = scmp.eq.s32.totalorder %s25, 0
    %p177 = por %p175, %p176
    %p178 = scmp.ne.s32.totalorder %s166, %s167
    %p179 = scmp.eq.s32.totalorder %s26, 1
    %p180 = por %p178, %p179
    %p182 = scmp.ne.s32.totalorder %s167, %s181
    %p183 = scmp.eq.s32.totalorder %s26, 0
    %p184 = por %p182, %p183
    %s186 = sadd.s32 %s185, 1
    %p189 = scmp.eq.s32.totalorder %s20, 1
    %p190 = scmp.ne.s32.totalorder %s185, %s187
    %p191 = scmp.eq.s32.totalorder %s20, 0
    %p192 = por %p190, %p191
    %p193 = scmp.ne.s32.totalorder %s185, %s187
    %p194 = scmp.eq.s32.totalorder %s25, 1
    %p195 = por %p193, %p194
    %p196 = scmp.ne.s32.totalorder %s187, %s188
    %p197 = scmp.eq.s32.totalorder %s25, 0
    %p198 = por %p196, %p197
    %p199 = scmp.ne.s32.totalorder %s187, %s188
    %p200 = scmp.eq.s32.totalorder %s26, 1
    %p201 = por %p199, %p200
    %p203 = scmp.ne.s32.totalorder %s188, %s202
    %p204 = scmp.eq.s32.totalorder %s26, 0
    %p205 = por %p203, %p204
    %s207 = sadd.s32 %s206, 1
    %p210 = scmp.eq.s32.totalorder %s20, 1
    %p211 = scmp.ne.s32.totalorder %s206, %s208
    %p212 = scmp.eq.s32.totalorder %s20, 0
    %p213 = por %p211, %p212
    %p214 = scmp.ne.s32.totalorder %s206, %s208
    %p215 = scmp.eq.s32.totalorder %s25, 1
    %p216 = por %p214, %p215
    %p217 = scmp.ne.s32.totalorder %s208, %s209
    %p218 = scmp.eq.s32.totalorder %s25, 0
    %p219 = por %p217, %p218
    %p220 = scmp.ne.s32.totalorder %s208, %s209
    %p221 = scmp.eq.s32.totalorder %s26, 1
    %p222 = por %p220, %p221
    %p224 = scmp.ne.s32.totalorder %s209, %s223
    %p225 = scmp.eq.s32.totalorder %s26, 0
    %p226 = por %p224, %p225
    %s228 = sadd.s32 %s227, 1
    %p231 = scmp.eq.s32.totalorder %s20, 1
    %p232 = scmp.ne.s32.totalorder %s227, %s229
    %p233 = scmp.eq.s32.totalorder %s20, 0
    %p234 = por %p232, %p233
    %p235 = scmp.ne.s32.totalorder %s227, %s229
    %p236 = scmp.eq.s32.totalorder %s25, 1
    %p237 = por %p235, %p236
    %p238 = scmp.ne.s32.totalorder %s229, %s230
    %p239 = scmp.eq.s32.totalorder %s25, 0
    %p240 = por %p238, %p239
    %p241 = scmp.ne.s32.totalorder %s229, %s230
    %p242 = scmp.eq.s32.totalorder %s26, 1
    %p243 = por %p241, %p242
    %p245 = scmp.ne.s32.totalorder %s230, %s244
    %p246 = scmp.eq.s32.totalorder %s26, 0
    %p247 = por %p245, %p246
    %s249 = sadd.s32 %s248, 1
    %p252 = scmp.eq.s32.totalorder %s20, 1
    %p253 = scmp.ne.s32.totalorder %s248, %s250
    %p254 = scmp.eq.s32.totalorder %s20, 0
    %p255 = por %p253, %p254
    %p256 = scmp.ne.s32.totalorder %s248, %s250
    %p257 = scmp.eq.s32.totalorder %s25, 1
    %p258 = por %p256, %p257
    %p259 = scmp.ne.s32.totalorder %s250, %s251
    %p260 = scmp.eq.s32.totalorder %s25, 0
    %p261 = por %p259, %p260
    %p262 = scmp.ne.s32.totalorder %s250, %s251
    %p263 = scmp.eq.s32.totalorder %s26, 1
    %p264 = por %p262, %p263
    %p266 = scmp.ne.s32.totalorder %s251, %s265
    %p267 = scmp.eq.s32.totalorder %s26, 0
    %p268 = por %p266, %p267
    %s270 = sadd.s32 %s269, 1
    %p273 = scmp.eq.s32.totalorder %s20, 1
    %p274 = scmp.ne.s32.totalorder %s269, %s271
    %p275 = scmp.eq.s32.totalorder %s20, 0
    %p276 = por %p274, %p275
    %p277 = scmp.ne.s32.totalorder %s269, %s271
    %p278 = scmp.eq.s32.totalorder %s25, 1
    %p279 = por %p277, %p278
    %p280 = scmp.ne.s32.totalorder %s271, %s272
    %p281 = scmp.eq.s32.totalorder %s25, 0
    %p282 = por %p280, %p281
    %p283 = scmp.ne.s32.totalorder %s271, %s272
    %p284 = scmp.eq.s32.totalorder %s26, 1
    %p285 = por %p283, %p284
    %p287 = scmp.ne.s32.totalorder %s272, %s286
    %p288 = scmp.eq.s32.totalorder %s26, 0
    %p289 = por %p287, %p288
    %s291 = sadd.s32 %s290, 1
    %p294 = scmp.eq.s32.totalorder %s20, 1
    %p295 = scmp.ne.s32.totalorder %s290, %s292
    %p296 = scmp.eq.s32.totalorder %s20, 0
    %p297 = por %p295, %p296
    %p298 = scmp.ne.s32.totalorder %s290, %s292
    %p299 = scmp.eq.s32.totalorder %s25, 1
    %p300 = por %p298, %p299
    %p301 = scmp.ne.s32.totalorder %s292, %s293
    %p302 = scmp.eq.s32.totalorder %s25, 0
    %p303 = por %p301, %p302
    %p304 = scmp.ne.s32.totalorder %s292, %s293
    %p305 = scmp.eq.s32.totalorder %s26, 1
    %p306 = por %p304, %p305
    %p308 = scmp.ne.s32.totalorder %s293, %s307
    %p309 = scmp.eq.s32.totalorder %s26, 0
    %p310 = por %p308, %p309
    %s312 = sadd.s32 %s311, 1
    %p315 = scmp.eq.s32.totalorder %s20, 1
    %p316 = scmp.ne.s32.totalorder %s311, %s313
    %p317 = scmp.eq.s32.totalorder %s20, 0
    %p318 = por %p316, %p317
    %p319 = scmp.ne.s32.totalorder %s311, %s313
    %p320 = scmp.eq.s32.totalorder %s25, 1
    %p321 = por %p319, %p320
    %p322 = scmp.ne.s32.totalorder %s313, %s314
    %p323 = scmp.eq.s32.totalorder %s25, 0
    %p324 = por %p322, %p323
    %p325 = scmp.ne.s32.totalorder %s313, %s314
    %p326 = scmp.eq.s32.totalorder %s26, 1
    %p327 = por %p325, %p326
    %p329 = scmp.ne.s32.totalorder %s314, %s328
    %p330 = scmp.eq.s32.totalorder %s26, 0
    %p331 = por %p329, %p330
    %s332 = ssub.s32 %s20, %s27
    %p333 = scmp.eq.s32.totalorder %s332, 0
    %s335 = sadd.s32 %s334, 1
    %s336 = scalar_select %p333, %s334, %s335
    %p339 = pneg %p333
    %p340 = scmp.eq.s32.totalorder %s20, 1
    %p341 = por %p339, %p340
    %p342 = scmp.ne.s32.totalorder %s334, %s337
    %p343 = scmp.eq.s32.totalorder %s20, 0
    %p344 = por %p342, %p343
    %p345 = scmp.ne.s32.totalorder %s334, %s337
    %p346 = scmp.eq.s32.totalorder %s25, 1
    %p347 = por %p345, %p346
    %p348 = scmp.ne.s32.totalorder %s337, %s338
    %p349 = scmp.eq.s32.totalorder %s25, 0
    %p350 = por %p348, %p349
    %p351 = scmp.ne.s32.totalorder %s337, %s338
    %p352 = scmp.eq.s32.totalorder %s26, 1
    %p353 = por %p351, %p352
    %p355 = scmp.ne.s32.totalorder %s338, %s354
    %p356 = scmp.eq.s32.totalorder %s26, 0
    %p357 = por %p355, %p356
    %p358 = scmp.le.s32.totalorder 1, %s20
    %p359 = scmp.lt.s32.totalorder %s20, 3
    %p360 = pnand %p358, %p359
    %p361 = pneg %p360
    // Predicated region
    $region9: #{transformer_cslr_forward.5} parent=5 // pred_check
      _
    $region10: #{transformer_cslr_forward.5} parent=5 // pred_check_branch
      %363 = sbr.rel (%p360) target = $region12
    $region11: #{transformer_cslr_forward.5} parent=5 // pred_region
      %s364 = ssub.s32 %s20, 1
      // Predicated region
      $region13: #{transformer_cslr_forward.5} parent=11 // pred_check
        %p365 = pneg %p93
      $region14: #{transformer_cslr_forward.5} parent=11 // pred_check_branch
        %367 = sbr.rel (%p365) target = $region16
      $region15: #{transformer_cslr_forward.5} parent=11 // pred_region
        _
      $region16: #{transformer_cslr_forward.5} parent=11 // pred_fallthru
        _
      // Predicated region
      $region17: #{transformer_cslr_forward.5} parent=11 // pred_check
        %p368 = pneg %p114
      $region18: #{transformer_cslr_forward.5} parent=11 // pred_check_branch
        %370 = sbr.rel (%p368) target = $region20
      $region19: #{transformer_cslr_forward.5} parent=11 // pred_region
        _
      $region20: #{transformer_cslr_forward.5} parent=11 // pred_fallthru
        _
      // Predicated region
      $region21: #{transformer_cslr_forward.5} parent=11 // pred_check
        %p371 = pneg %p135
      $region22: #{transformer_cslr_forward.5} parent=11 // pred_check_branch
        %373 = sbr.rel (%p371) target = $region24
      $region23: #{transformer_cslr_forward.5} parent=11 // pred_region
        _
      $region24: #{transformer_cslr_forward.5} parent=11 // pred_fallthru
        _
      // Predicated region
      $region25: #{transformer_cslr_forward.5} parent=11 // pred_check
        %p374 = pneg %p156
      $region26: #{transformer_cslr_forward.5} parent=11 // pred_check_branch
        %376 = sbr.rel (%p374) target = $region28
      $region27: #{transformer_cslr_forward.5} parent=11 // pred_region
        _
      $region28: #{transformer_cslr_forward.5} parent=11 // pred_fallthru
        _
      // Predicated region
      $region29: #{transformer_cslr_forward.5} parent=11 // pred_check
        %p377 = pneg %p177
      $region30: #{transformer_cslr_forward.5} parent=11 // pred_check_branch
        %379 = sbr.rel (%p377) target = $region32
      $region31: #{transformer_cslr_forward.5} parent=11 // pred_region
        _
      $region32: #{transformer_cslr_forward.5} parent=11 // pred_fallthru
        _
      // Predicated region
      $region33: #{transformer_cslr_forward.5} parent=11 // pred_check
        %p380 = pneg %p198
      $region34: #{transformer_cslr_forward.5} parent=11 // pred_check_branch
        %382 = sbr.rel (%p380) target = $region36
      $region35: #{transformer_cslr_forward.5} parent=11 // pred_region
        _
      $region36: #{transformer_cslr_forward.5} parent=11 // pred_fallthru
        _
      // Predicated region
      $region37: #{transformer_cslr_forward.5} parent=11 // pred_check
        %p383 = pneg %p219
      $region38: #{transformer_cslr_forward.5} parent=11 // pred_check_branch
        %385 = sbr.rel (%p383) target = $region40
      $region39: #{transformer_cslr_forward.5} parent=11 // pred_region
        _
      $region40: #{transformer_cslr_forward.5} parent=11 // pred_fallthru
        _
      // Predicated region
      $region41: #{transformer_cslr_forward.5} parent=11 // pred_check
        %p386 = pneg %p240
      $region42: #{transformer_cslr_forward.5} parent=11 // pred_check_branch
        %388 = sbr.rel (%p386) target = $region44
      $region43: #{transformer_cslr_forward.5} parent=11 // pred_region
        _
      $region44: #{transformer_cslr_forward.5} parent=11 // pred_fallthru
        _
      // Predicated region
      $region45: #{transformer_cslr_forward.5} parent=11 // pred_check
        %p389 = pneg %p261
      $region46: #{transformer_cslr_forward.5} parent=11 // pred_check_branch
        %391 = sbr.rel (%p389) target = $region48
      $region47: #{transformer_cslr_forward.5} parent=11 // pred_region
        _
      $region48: #{transformer_cslr_forward.5} parent=11 // pred_fallthru
        _
      // Predicated region
      $region49: #{transformer_cslr_forward.5} parent=11 // pred_check
        %p392 = pneg %p282
      $region50: #{transformer_cslr_forward.5} parent=11 // pred_check_branch
        %394 = sbr.rel (%p392) target = $region52
      $region51: #{transformer_cslr_forward.5} parent=11 // pred_region
        _
      $region52: #{transformer_cslr_forward.5} parent=11 // pred_fallthru
        _
      // Predicated region
      $region53: #{transformer_cslr_forward.5} parent=11 // pred_check
        %p395 = pneg %p303
      $region54: #{transformer_cslr_forward.5} parent=11 // pred_check_branch
        %397 = sbr.rel (%p395) target = $region56
      $region55: #{transformer_cslr_forward.5} parent=11 // pred_region
        _
      $region56: #{transformer_cslr_forward.5} parent=11 // pred_fallthru
        _
      // Predicated region
      $region57: #{transformer_cslr_forward.5} parent=11 // pred_check
        %p398 = pneg %p324
      $region58: #{transformer_cslr_forward.5} parent=11 // pred_check_branch
        %400 = sbr.rel (%p398) target = $region60
      $region59: #{transformer_cslr_forward.5} parent=11 // pred_region
        _
      $region60: #{transformer_cslr_forward.5} parent=11 // pred_fallthru
        _
    $region12: #{transformer_cslr_forward.5} parent=5 // pred_fallthru
      _
    %p401 = scmp.lt.s32.totalorder %s20, 2
    // Predicated region
    $region61: #{transformer_cslr_forward.5} parent=5 // pred_check
      %p402 = pneg %p401
    $region62: #{transformer_cslr_forward.5} parent=5 // pred_check_branch
      %404 = sbr.rel (%p402) target = $region64
    $region63: #{transformer_cslr_forward.5} parent=5 // pred_region
      // Predicated region
      $region65: #{transformer_cslr_forward.5} parent=63 // pred_check
        %p405 = pneg %p40
      $region66: #{transformer_cslr_forward.5} parent=63 // pred_check_branch
        %407 = sbr.rel (%p405) target = $region68
      $region67: #{transformer_cslr_forward.5} parent=63 // pred_region
        %p408 = scmp.lt.s32.totalorder %s20, 1
        %s409 = scalar_select %p408, %s20, 1
        %s410 = smul.addr %s409, 2
        %s411 = smul.addr %s410, 8
        %s412 = scalar_lea.vmem %s0, %s411
      $region68: #{transformer_cslr_forward.5} parent=63 // pred_fallthru
        _
      // Predicated region
      $region69: #{transformer_cslr_forward.5} parent=63 // pred_check
        %p413 = pneg %p66
      $region70: #{transformer_cslr_forward.5} parent=63 // pred_check_branch
        %415 = sbr.rel (%p413) target = $region72
      $region71: #{transformer_cslr_forward.5} parent=63 // pred_region
        %p416 = scmp.lt.s32.totalorder %s20, 1
        %s417 = scalar_select %p416, %s20, 1
        %s418 = scalar_lea.vmem %s1, %s417
      $region72: #{transformer_cslr_forward.5} parent=63 // pred_fallthru
        _
    $region64: #{transformer_cslr_forward.5} parent=5 // pred_fallthru
      _
    %p419 = scmp.le.s32.totalorder 1, %s20
    %p420 = scmp.lt.s32.totalorder %s20, 3
    %p421 = pnand %p419, %p420
    %p422 = pneg %p421
    // Predicated region
    $region73: #{transformer_cslr_forward.5} parent=5 // pred_check
      _
    $region74: #{transformer_cslr_forward.5} parent=5 // pred_check_branch
      %424 = sbr.rel (%p421) target = $region76
    $region75: #{transformer_cslr_forward.5} parent=5 // pred_region
      %s425 = ssub.s32 %s20, 1
      %p426 = scmp.lt.s32.totalorder %s25, 1
      %s427 = scalar_select %p426, %s25, 1
      %s428 = smul.addr %s427, 2
      %s429 = smul.addr %s428, 8
      %s430 = scalar_lea.vmem %s0, %s429
      %p431 = pneg %p46
      %p432 = pneg %p43
      %p433 = scmp.lt.s32.totalorder %s25, 1
      %s434 = scalar_select %p433, %s25, 1
      %s435 = scalar_lea.vmem %s1, %s434
      %p436 = pneg %p72
      %p437 = pneg %p69
      %p438 = pneg %p93
      %p439 = pneg %p90
      %p440 = pneg %p114
      %p441 = pneg %p111
      %p442 = pneg %p135
      %p443 = pneg %p132
      %p444 = pneg %p156
      %p445 = pneg %p153
      %p446 = pneg %p177
      %p447 = pneg %p174
      %p448 = pneg %p198
      %p449 = pneg %p195
      %p450 = pneg %p219
      %p451 = pneg %p216
      %p452 = pneg %p240
      %p453 = pneg %p237
      %p454 = pneg %p261
      %p455 = pneg %p258
      %p456 = pneg %p282
      %p457 = pneg %p279
      %p458 = pneg %p303
      %p459 = pneg %p300
      %p460 = pneg %p324
      %p461 = pneg %p321
      %p462 = pneg %p350
      %p463 = pneg %p347
      %p464 = scmp.lt.s32.totalorder %s25, 1
      %s465 = scalar_select %p464, %s25, 1
      %s466 = smul.addr %s465, 2
      %s467 = smul.addr %s466, 8
      %s468 = scalar_lea.vmem %s14, %s467
      %p469 = scmp.lt.s32.totalorder %s25, 1
      %s470 = scalar_select %p469, %s25, 1
      %s471 = smul.addr %s470, 2
      %s472 = smul.addr %s471, 8
      %s473 = scalar_lea.vmem %s0, %s472
      %p474 = scmp.lt.s32.totalorder %s25, 1
      %s475 = scalar_select %p474, %s25, 1
      %s476 = scalar_lea.vmem %s1, %s475
      %p477 = scmp.lt.s32.totalorder %s25, 1
      %s478 = scalar_select %p477, %s25, 1
      %s479 = smul.addr %s478, 2
      %s480 = smul.addr %s479, 8
      %s481 = scalar_lea.vmem %s14, %s480
      %v483 = vld [vmem:[%s473] sm:$0xff]
      %v484 = vld [vmem:[%s473 + $0x8] sm:$0xff]
      %v485 = vld [vmem:[%s476] sm:$0x1]
      %v486 = vld [vmem:[%s2] sm:$0x1]
      %v487 = vld [vmem:[%s3] sm:$0x1]
      %vm488 = vcmask 261120
      %v489 = vsel %vm488, %v483, 0.0
      %490 = vadd.xlane.f32.xlu0 %v489
      %v491 = vpop.xlane.xlu0 %490
      %v492 = vsel %vm488, %v484, 0.0
      %493 = vadd.xlane.f32.xlu0 %v492
      %v494 = vpop.xlane.xlu0 %493
      %v495 = vrcp.pop 32.0
      %v496 = vmul.f32 %v491, %v495
      %v497 = vmul.f32 %v494, %v495
      %v498 = vsub.f32 %v483, %v496
      %v499 = vsub.f32 %v484, %v497
      %v500 = vmul.f32 %v498, %v498
      %v501 = vmul.f32 %v499, %v499
      %v502 = vsel %vm488, %v500, 0.0
      %503 = vadd.xlane.f32.xlu0 %v502
      %v504 = vpop.xlane.xlu0 %503
      %v505 = vsel %vm488, %v501, 0.0
      %506 = vadd.xlane.f32.xlu0 %v505
      %v507 = vpop.xlane.xlu0 %506
      %v508 = vmul.f32 %v504, %v495
      %v509 = vmul.f32 %v507, %v495
      %v510 = vadd.f32 %v508, 1e-05
      %v511 = vadd.f32 %v509, 1e-05
      %v512 = vrsqrt.pop %v510
      %v513 = vrsqrt.pop %v511
      %v514 = vmul.f32 %v498, %v512
      %v515 = vmul.f32 %v499, %v513
      %v517 = vlaneseq
      %v518 = vshrl.u32 %v517, 7
      %v519 = vsub.s32 0, %v518
      %v520 = vrot.slane %v486, %v519
      %v522 = vmul.f32 %v514, %v520
      %v523 = vmul.f32 %v515, %v520
      %v525 = vlaneseq
      %v526 = vshrl.u32 %v525, 7
      %v527 = vsub.s32 0, %v526
      %v528 = vrot.slane %v487, %v527
      %v530 = vadd.f32 %v522, %v528
      %v531 = vadd.f32 %v523, %v528
      %v532 = vpack.c.bf16 %v531, %v530
      %v533 = vld [vmem:[%s4] sm:$0xf]
      %v534 = vld [vmem:[%s4 + $0x4] sm:$0xf]
      %v535 = vld [vmem:[%s4 + $0x8] sm:$0xf]
      %v536 = vld [vmem:[%s4 + $0xc] sm:$0xf]
      %v537 = vld [vmem:[%s5] sm:$0x1]
      %v539 = vlaneseq
      %v540 = vshrl.u32 %v539, 7
      %v541 = vsub.s32 0, %v540
      %v542 = vrot.slane %v537, %v541
      %v548 = vunpack.c.l.b16 %v533
      %v549 = vunpack.c.l.b16 %v534
      %v550 = vunpack.c.l.b16 %v535
      %v551 = vunpack.c.l.b16 %v536
      %v552 = vpack.c.b16 %v549, %v548
      %v553 = vpack.c.b16 %v551, %v550
      %v557 = vsel %vm488, %v532, 0
      %559 = vmatprep.subr.bf16.mxu0 0
      %560 = vmatpush1.bf16.msra.mxu0 0
      %561 = vmatprep.subr.bf16.mxu0 0
      %562 = vmatpush1.bf16.msra.mxu0 0
      %563 = vmatprep.subr.bf16.mxu0 0
      %564 = vmatpush1.bf16.msra.mxu0 0
      %565 = vmatprep.subr.bf16.mxu0 0
      %566 = vmatpush1.bf16.msra.mxu0 0
      %567 = vmatprep.subr.bf16.mxu0 0
      %568 = vmatpush1.bf16.msra.mxu0 0
      %569 = vmatprep.subr.bf16.mxu0 0
      %570 = vmatpush1.bf16.msra.mxu0 0
      %571 = vmatprep.subr.bf16.mxu0 0
      %572 = vmatpush1.bf16.msra.mxu0 %v553
      %573 = vmatprep.subr.bf16.mxu0 0
      %574 = vmatpush1.bf16.msra.mxu0 %v552
      %575 = vmatprep.subr.bf16.mxu0 0
      %576 = vmatpush2.bf16.msra.mxu0 0
      %577 = vmatprep.subr.bf16.mxu0 0
      %578 = vmatpush2.bf16.msra.mxu0 0
      %579 = vmatprep.subr.bf16.mxu0 0
      %580 = vmatpush2.bf16.msra.mxu0 0
      %581 = vmatprep.subr.bf16.mxu0 0
      %582 = vmatpush2.bf16.msra.mxu0 0
      %583 = vmatprep.subr.bf16.mxu0 0
      %584 = vmatpush2.bf16.msra.mxu0 0
      %585 = vmatprep.subr.bf16.mxu0 0
      %586 = vmatpush2.bf16.msra.mxu0 0
      %587 = vmatprep.subr.bf16.mxu0 0
      %588 = vmatpush2.bf16.msra.mxu0 0
      %589 = vmatprep.subr.bf16.mxu0 0
      %590 = vmatpush2.bf16.msra.mxu0 0
      %591 = vmatprep.mubr.bf16.mxu0 0
      %592 = vmatmul.mubr.bf16.gmra.mxu0 %v557
      %v593 = vpop.f32.mrf.mxu0
      %v594 = vadd.f32 %v542, %v593
      %v595 = vpop.f32.mrf.mxu0
      %v596 = vpop.f32.mrf.mxu0
      %v597 = vadd.f32 %v542, %v596
      %v598 = vpop.f32.mrf.mxu0
      %599 = vdwg.mxu0
      %v600 = vpack.c.bf16 %v597, %v594
      %v602 = vlaneseq
      %v603 = vshrl.u32 %v602, 7
      %v604 = vsub.s32 0, %v603
      %v605 = vrot.slane %v485, %v604
      %608 = vrot.lane.b32.xlu0 %v600, 96
      %v609 = vpop.permute.xlu0 %608
      %v611 = vsel %vm488, %v600, 0
      %v614 = vsel %vm488, %v609, 0
      %616 = vmatprep.subr.bf16.mxu0 0
      %617 = vmatpush1.bf16.xpose.msra.mxu0 0
      %618 = vmatprep.subr.bf16.mxu0 0
      %619 = vmatpush1.bf16.xpose.msra.mxu0 0
      %620 = vmatprep.subr.bf16.mxu0 0
      %621 = vmatpush1.bf16.xpose.msra.mxu0 0
      %622 = vmatprep.subr.bf16.mxu0 0
      %623 = vmatpush1.bf16.xpose.msra.mxu0 0
      %624 = vmatprep.subr.bf16.mxu0 0
      %625 = vmatpush1.bf16.xpose.msra.mxu0 0
      %626 = vmatprep.subr.bf16.mxu0 0
      %627 = vmatpush1.bf16.xpose.msra.mxu0 0
      %628 = vmatprep.subr.bf16.mxu0 0
      %629 = vmatpush1.bf16.xpose.msra.mxu0 0
      %630 = vmatprep.subr.bf16.mxu0 0
      %631 = vmatpush1.bf16.xpose.msra.mxu0 %v614
      %632 = vmatprep.subr.bf16.mxu0 0
      %633 = vmatpush2.bf16.xpose.msra.mxu0 0
      %634 = vmatprep.subr.bf16.mxu0 0
      %635 = vmatpush2.bf16.xpose.msra.mxu0 0
      %636 = vmatprep.subr.bf16.mxu0 0
      %637 = vmatpush2.bf16.xpose.msra.mxu0 0
      %638 = vmatprep.subr.bf16.mxu0 0
      %639 = vmatpush2.bf16.xpose.msra.mxu0 0
      %640 = vmatprep.subr.bf16.mxu0 0
      %641 = vmatpush2.bf16.xpose.msra.mxu0 0
      %642 = vmatprep.subr.bf16.mxu0 0
      %643 = vmatpush2.bf16.xpose.msra.mxu0 0
      %644 = vmatprep.subr.bf16.mxu0 0
      %645 = vmatpush2.bf16.xpose.msra.mxu0 0
      %646 = vmatprep.subr.bf16.mxu0 0
      %647 = vmatpush2.bf16.xpose.msra.mxu0 0
      %648 = vmatprep.mubr.bf16.mxu0 0
      %649 = vmatmul.mubr.bf16.gmra.mxu0 %v611
      %v650 = vpop.f32.mrf.mxu0
      %v651 = vadd.f32 %v605, %v650
      %v652 = vpop.f32.mrf.mxu0
      %v653 = vpop.f32.mrf.mxu0
      %v654 = vadd.f32 %v605, %v653
      %v655 = vpop.f32.mrf.mxu0
      %656 = vdwg.mxu0
      %vm657 = vcmask 130048
      %v658 = vsel %vm657, %v651, -inf
      %659 = vmax.xlane.f32.xlu0 %v658
      %v660 = vpop.xlane.xlu0 %659
      %v661 = vsel %vm657, %v654, -inf
      %662 = vmax.xlane.f32.xlu0 %v661
      %v663 = vpop.xlane.xlu0 %662
      %v664 = vsub.f32 %v651, %v660
      %v665 = vsub.f32 %v654, %v663
      %v666 = vmul.f32 %v664, 1.442695
      %v667 = vpow.pop %v666
      %v668 = vmul.f32 %v665, 1.442695
      %v669 = vpow.pop %v668
      %v670 = vsel %vm657, %v667, 0.0
      %671 = vadd.xlane.f32.xlu0 %v670
      %v672 = vpop.xlane.xlu0 %671
      %v673 = vsel %vm657, %v669, 0.0
      %674 = vadd.xlane.f32.xlu0 %v673
      %v675 = vpop.xlane.xlu0 %674
      %v676 = vpack.c.bf16 %v669, %v667
      %677 = vrot.lane.b32.xlu0 %v600, 64
      %v678 = vpop.permute.xlu0 %677
      %v681 = vsel %vm657, %v676, 0
      %683 = vmatprep.subr.bf16.mxu0 0
      %684 = vmatpush1.bf16.msra.mxu0 0
      %685 = vmatprep.subr.bf16.mxu0 0
      %686 = vmatpush1.bf16.msra.mxu0 0
      %687 = vmatprep.subr.bf16.mxu0 0
      %688 = vmatpush1.bf16.msra.mxu0 0
      %689 = vmatprep.subr.bf16.mxu0 0
      %690 = vmatpush1.bf16.msra.mxu0 0
      %691 = vmatprep.subr.bf16.mxu0 0
      %692 = vmatpush1.bf16.msra.mxu0 0
      %693 = vmatprep.subr.bf16.mxu0 0
      %694 = vmatpush1.bf16.msra.mxu0 0
      %695 = vmatprep.subr.bf16.mxu0 0
      %696 = vmatpush1.bf16.msra.mxu0 0
      %697 = vmatprep.subr.bf16.mxu0 0
      %698 = vmatpush1.bf16.msra.mxu0 %v678
      %699 = vmatprep.subr.bf16.mxu0 0
      %700 = vmatpush2.bf16.msra.mxu0 0
      %701 = vmatprep.subr.bf16.mxu0 0
      %702 = vmatpush2.bf16.msra.mxu0 0
      %703 = vmatprep.subr.bf16.mxu0 0
      %704 = vmatpush2.bf16.msra.mxu0 0
      %705 = vmatprep.subr.bf16.mxu0 0
      %706 = vmatpush2.bf16.msra.mxu0 0
      %707 = vmatprep.subr.bf16.mxu0 0
      %708 = vmatpush2.bf16.msra.mxu0 0
      %709 = vmatprep.subr.bf16.mxu0 0
      %710 = vmatpush2.bf16.msra.mxu0 0
      %711 = vmatprep.subr.bf16.mxu0 0
      %712 = vmatpush2.bf16.msra.mxu0 0
      %713 = vmatprep.subr.bf16.mxu0 0
      %714 = vmatpush2.bf16.msra.mxu0 0
      %715 = vmatprep.mubr.bf16.mxu0 0
      %716 = vmatmul.mubr.bf16.gmra.mxu0 %v681
      %v717 = vpop.f32.mrf.mxu0
      %v718 = vadd.f32 0.0, %v717
      %v719 = vpop.f32.mrf.mxu0
      %v720 = vpop.f32.mrf.mxu0
      %v721 = vadd.f32 0.0, %v720
      %v722 = vpop.f32.mrf.mxu0
      %723 = vdwg.mxu0
      %v724 = vrcp.pop %v672
      %v725 = vrcp.pop %v675
      %v726 = vmul.f32 %v718, %v724
      %v727 = vmul.f32 %v721, %v725
      %v728 = vpack.c.bf16 %v727, %v726
      %v729 = vld [vmem:[%s6] sm:$0xf]
      %v730 = vld [vmem:[%s6 + $0x4] sm:$0xf]
      %v731 = vld [vmem:[%s6 + $0x8] sm:$0xf]
      %v732 = vld [vmem:[%s6 + $0xc] sm:$0xf]
      %v737 = vunpack.c.l.b16 %v729
      %v738 = vunpack.c.l.b16 %v730
      %v739 = vunpack.c.l.b16 %v731
      %v740 = vunpack.c.l.b16 %v732
      %v741 = vpack.c.b16 %v738, %v737
      %v742 = vpack.c.b16 %v740, %v739
      %v746 = vsel %vm488, %v728, 0
      %748 = vmatprep.subr.bf16.mxu0 0
      %749 = vmatpush1.bf16.msra.mxu0 0
      %750 = vmatprep.subr.bf16.mxu0 0
      %751 = vmatpush1.bf16.msra.mxu0 0
      %752 = vmatprep.subr.bf16.mxu0 0
      %753 = vmatpush1.bf16.msra.mxu0 0
      %754 = vmatprep.subr.bf16.mxu0 0
      %755 = vmatpush1.bf16.msra.mxu0 0
      %756 = vmatprep.subr.bf16.mxu0 0
      %757 = vmatpush1.bf16.msra.mxu0 0
      %758 = vmatprep.subr.bf16.mxu0 0
      %759 = vmatpush1.bf16.msra.mxu0 0
      %760 = vmatprep.subr.bf16.mxu0 0
      %761 = vmatpush1.bf16.msra.mxu0 %v742
      %762 = vmatprep.subr.bf16.mxu0 0
      %763 = vmatpush1.bf16.msra.mxu0 %v741
      %764 = vmatprep.subr.bf16.mxu0 0
      %765 = vmatpush2.bf16.msra.mxu0 0
      %766 = vmatprep.subr.bf16.mxu0 0
      %767 = vmatpush2.bf16.msra.mxu0 0
      %768 = vmatprep.subr.bf16.mxu0 0
      %769 = vmatpush2.bf16.msra.mxu0 0
      %770 = vmatprep.subr.bf16.mxu0 0
      %771 = vmatpush2.bf16.msra.mxu0 0
      %772 = vmatprep.subr.bf16.mxu0 0
      %773 = vmatpush2.bf16.msra.mxu0 0
      %774 = vmatprep.subr.bf16.mxu0 0
      %775 = vmatpush2.bf16.msra.mxu0 0
      %776 = vmatprep.subr.bf16.mxu0 0
      %777 = vmatpush2.bf16.msra.mxu0 0
      %778 = vmatprep.subr.bf16.mxu0 0
      %779 = vmatpush2.bf16.msra.mxu0 0
      %780 = vmatprep.mubr.bf16.mxu0 0
      %781 = vmatmul.mubr.bf16.gmra.mxu0 %v746
      %v782 = vpop.f32.mrf.mxu0
      %v783 = vadd.f32 0.0, %v782
      %v784 = vpop.f32.mrf.mxu0
      %v785 = vpop.f32.mrf.mxu0
      %v786 = vadd.f32 0.0, %v785
      %v787 = vpop.f32.mrf.mxu0
      %788 = vdwg.mxu0
      %v789 = vadd.f32 %v483, %v783
      %v790 = vadd.f32 %v484, %v786
      %v791 = vld [vmem:[%s7] sm:$0x1]
      %v793 = vlaneseq
      %v794 = vshrl.u32 %v793, 7
      %v795 = vsub.s32 0, %v794
      %v796 = vrot.slane %v791, %v795
      %v798 = vadd.f32 %v789, %v796
      %v799 = vadd.f32 %v790, %v796
      %v800 = vld [vmem:[%s8] sm:$0x1]
      %v801 = vld [vmem:[%s9] sm:$0x1]
      %v802 = vsel %vm488, %v798, 0.0
      %803 = vadd.xlane.f32.xlu0 %v802
      %v804 = vpop.xlane.xlu0 %803
      %v805 = vsel %vm488, %v799, 0.0
      %806 = vadd.xlane.f32.xlu0 %v805
      %v807 = vpop.xlane.xlu0 %806
      %v808 = vmul.f32 %v804, %v495
      %v809 = vmul.f32 %v807, %v495
      %v810 = vsub.f32 %v798, %v808
      %v811 = vsub.f32 %v799, %v809
      %v812 = vmul.f32 %v810, %v810
      %v813 = vmul.f32 %v811, %v811
      %v814 = vsel %vm488, %v812, 0.0
      %815 = vadd.xlane.f32.xlu0 %v814
      %v816 = vpop.xlane.xlu0 %815
      %v817 = vsel %vm488, %v813, 0.0
      %818 = vadd.xlane.f32.xlu0 %v817
      %v819 = vpop.xlane.xlu0 %818
      %v820 = vmul.f32 %v816, %v495
      %v821 = vmul.f32 %v819, %v495
      %v822 = vadd.f32 %v820, 1e-05
      %v823 = vadd.f32 %v821, 1e-05
      %v824 = vrsqrt.pop %v822
      %v825 = vrsqrt.pop %v823
      %v826 = vmul.f32 %v810, %v824
      %v827 = vmul.f32 %v811, %v825
      %v829 = vlaneseq
      %v830 = vshrl.u32 %v829, 7
      %v831 = vsub.s32 0, %v830
      %v832 = vrot.slane %v800, %v831
      %v834 = vmul.f32 %v826, %v832
      %v835 = vmul.f32 %v827, %v832
      %v837 = vlaneseq
      %v838 = vshrl.u32 %v837, 7
      %v839 = vsub.s32 0, %v838
      %v840 = vrot.slane %v801, %v839
      %v842 = vadd.f32 %v834, %v840
      %v843 = vadd.f32 %v835, %v840
      %v844 = vpack.c.bf16 %v843, %v842
      %v845 = vld [vmem:[%s10] sm:$0xf]
      %v846 = vld [vmem:[%s10 + $0x4] sm:$0xf]
      %v847 = vld [vmem:[%s10 + $0x8] sm:$0xf]
      %v848 = vld [vmem:[%s10 + $0xc] sm:$0xf]
      %v849 = vld [vmem:[%s11] sm:$0x1]
      %v851 = vlaneseq
      %v852 = vshrl.u32 %v851, 7
      %v853 = vsub.s32 0, %v852
      %v854 = vrot.slane %v849, %v853
      %v860 = vunpack.c.l.b16 %v845
      %v861 = vunpack.c.l.b16 %v846
      %v862 = vunpack.c.l.b16 %v847
      %v863 = vunpack.c.l.b16 %v848
      %v864 = vpack.c.b16 %v861, %v860
      %v865 = vpack.c.b16 %v863, %v862
      %v869 = vsel %vm488, %v844, 0
      %871 = vmatprep.subr.bf16.mxu0 0
      %872 = vmatpush1.bf16.msra.mxu0 0
      %873 = vmatprep.subr.bf16.mxu0 0
      %874 = vmatpush1.bf16.msra.mxu0 0
      %875 = vmatprep.subr.bf16.mxu0 0
      %876 = vmatpush1.bf16.msra.mxu0 0
      %877 = vmatprep.subr.bf16.mxu0 0
      %878 = vmatpush1.bf16.msra.mxu0 0
      %879 = vmatprep.subr.bf16.mxu0 0
      %880 = vmatpush1.bf16.msra.mxu0 0
      %881 = vmatprep.subr.bf16.mxu0 0
      %882 = vmatpush1.bf16.msra.mxu0 0
      %883 = vmatprep.subr.bf16.mxu0 0
      %884 = vmatpush1.bf16.msra.mxu0 %v865
      %885 = vmatprep.subr.bf16.mxu0 0
      %886 = vmatpush1.bf16.msra.mxu0 %v864
      %887 = vmatprep.subr.bf16.mxu0 0
      %888 = vmatpush2.bf16.msra.mxu0 0
      %889 = vmatprep.subr.bf16.mxu0 0
      %890 = vmatpush2.bf16.msra.mxu0 0
      %891 = vmatprep.subr.bf16.mxu0 0
      %892 = vmatpush2.bf16.msra.mxu0 0
      %893 = vmatprep.subr.bf16.mxu0 0
      %894 = vmatpush2.bf16.msra.mxu0 0
      %895 = vmatprep.subr.bf16.mxu0 0
      %896 = vmatpush2.bf16.msra.mxu0 0
      %897 = vmatprep.subr.bf16.mxu0 0
      %898 = vmatpush2.bf16.msra.mxu0 0
      %899 = vmatprep.subr.bf16.mxu0 0
      %900 = vmatpush2.bf16.msra.mxu0 0
      %901 = vmatprep.subr.bf16.mxu0 0
      %902 = vmatpush2.bf16.msra.mxu0 0
      %903 = vmatprep.mubr.bf16.mxu0 0
      %904 = vmatmul.mubr.bf16.gmra.mxu0 %v869
      %v905 = vpop.f32.mrf.mxu0
      %v906 = vadd.f32 %v854, %v905
      %v907 = vpop.f32.mrf.mxu0
      %v908 = vpop.f32.mrf.mxu0
      %v909 = vadd.f32 %v854, %v908
      %v910 = vpop.f32.mrf.mxu0
      %911 = vdwg.mxu0
      %v912 = vmax.f32 %v906, 0.0
      %v913 = vmax.f32 %v909, 0.0
      %v914 = vpack.c.bf16 %v913, %v912
      %v915 = vld [vmem:[%s12] sm:$0xf]
      %v916 = vld [vmem:[%s12 + $0x4] sm:$0xf]
      %v917 = vld [vmem:[%s12 + $0x8] sm:$0xf]
      %v918 = vld [vmem:[%s12 + $0xc] sm:$0xf]
      %v919 = vld [vmem:[%s12 + $0x10] sm:$0xf]
      %v920 = vld [vmem:[%s12 + $0x14] sm:$0xf]
      %v921 = vld [vmem:[%s12 + $0x18] sm:$0xf]
      %v922 = vld [vmem:[%s12 + $0x1c] sm:$0xf]
      %v923 = vld [vmem:[%s13] sm:$0x1]
      %v925 = vlaneseq
      %v926 = vshrl.u32 %v925, 7
      %v927 = vsub.s32 0, %v926
      %v928 = vrot.slane %v923, %v927
      %v938 = vunpack.c.l.b16 %v915
      %v939 = vunpack.c.l.b16 %v916
      %v940 = vunpack.c.l.b16 %v917
      %v941 = vunpack.c.l.b16 %v918
      %v942 = vunpack.c.l.b16 %v919
      %v943 = vunpack.c.l.b16 %v920
      %v944 = vunpack.c.l.b16 %v921
      %v945 = vunpack.c.l.b16 %v922
      %v946 = vpack.c.b16 %v939, %v938
      %v947 = vpack.c.b16 %v941, %v940
      %v948 = vpack.c.b16 %v943, %v942
      %v949 = vpack.c.b16 %v945, %v944
      %vm954 = vcmask 523264
      %v956 = vsel %vm954, %v914, 0
      %958 = vmatprep.subr.bf16.mxu0 0
      %959 = vmatpush1.bf16.msra.mxu0 0
      %960 = vmatprep.subr.bf16.mxu0 0
      %961 = vmatpush1.bf16.msra.mxu0 0
      %962 = vmatprep.subr.bf16.mxu0 0
      %963 = vmatpush1.bf16.msra.mxu0 0
      %964 = vmatprep.subr.bf16.mxu0 0
      %965 = vmatpush1.bf16.msra.mxu0 0
      %966 = vmatprep.subr.bf16.mxu0 0
      %967 = vmatpush1.bf16.msra.mxu0 %v949
      %968 = vmatprep.subr.bf16.mxu0 0
      %969 = vmatpush1.bf16.msra.mxu0 %v948
      %970 = vmatprep.subr.bf16.mxu0 0
      %971 = vmatpush1.bf16.msra.mxu0 %v947
      %972 = vmatprep.subr.bf16.mxu0 0
      %973 = vmatpush1.bf16.msra.mxu0 %v946
      %974 = vmatprep.subr.bf16.mxu0 0
      %975 = vmatpush2.bf16.msra.mxu0 0
      %976 = vmatprep.subr.bf16.mxu0 0
      %977 = vmatpush2.bf16.msra.mxu0 0
      %978 = vmatprep.subr.bf16.mxu0 0
      %979 = vmatpush2.bf16.msra.mxu0 0
      %980 = vmatprep.subr.bf16.mxu0 0
      %981 = vmatpush2.bf16.msra.mxu0 0
      %982 = vmatprep.subr.bf16.mxu0 0
      %983 = vmatpush2.bf16.msra.mxu0 0
      %984 = vmatprep.subr.bf16.mxu0 0
      %985 = vmatpush2.bf16.msra.mxu0 0
      %986 = vmatprep.subr.bf16.mxu0 0
      %987 = vmatpush2.bf16.msra.mxu0 0
      %988 = vmatprep.subr.bf16.mxu0 0
      %989 = vmatpush2.bf16.msra.mxu0 0
      %990 = vmatprep.mubr.bf16.mxu0 0
      %991 = vmatmul.mubr.bf16.gmra.mxu0 %v956
      %v992 = vpop.f32.mrf.mxu0
      %v993 = vadd.f32 %v928, %v992
      %v994 = vpop.f32.mrf.mxu0
      %v995 = vpop.f32.mrf.mxu0
      %v996 = vadd.f32 %v928, %v995
      %v997 = vpop.f32.mrf.mxu0
      %998 = vdwg.mxu0
      %v999 = vadd.f32 %v798, %v993
      %v1000 = vadd.f32 %v799, %v996
      %1001 = vst.msk [vmem:[%s481] sm:$0xff] %vm488, %v999
      %1002 = vst.msk [vmem:[%s481 + $0x8] sm:$0xff] %vm488, %v1000
      %p1003 = scmp.lt.s32.totalorder %s25, 1
      %s1004 = scalar_select %p1003, %s25, 1
      %s1005 = smul.addr %s1004, 2
      %s1006 = smul.addr %s1005, 8
      %s1007 = scalar_lea.vmem %s14, %s1006
      // Predicated region
      $region77: #{transformer_cslr_forward.5} parent=75 // pred_check
        %p1008 = pneg %p347
      $region78: #{transformer_cslr_forward.5} parent=75 // pred_check_branch
        %1010 = sbr.rel (%p1008) target = $region80
      $region79: #{transformer_cslr_forward.5} parent=75 // pred_region
        _
      $region80: #{transformer_cslr_forward.5} parent=75 // pred_fallthru
        _
    $region76: #{transformer_cslr_forward.5} parent=5 // pred_fallthru
      _
    %p1011 = scmp.le.s32.totalorder 2, %s20
    // Predicated region
    $region81: #{transformer_cslr_forward.5} parent=5 // pred_check
      %p1012 = pneg %p1011
    $region82: #{transformer_cslr_forward.5} parent=5 // pred_check_branch
      %1014 = sbr.rel (%p1012) target = $region84
    $region83: #{transformer_cslr_forward.5} parent=5 // pred_region
      %s1015 = ssub.s32 %s20, 2
      // Predicated region
      $region85: #{transformer_cslr_forward.5} parent=83 // pred_check
        %p1016 = pneg %p353
      $region86: #{transformer_cslr_forward.5} parent=83 // pred_check_branch
        %1018 = sbr.rel (%p1016) target = $region88
      $region87: #{transformer_cslr_forward.5} parent=83 // pred_region
        %p1019 = scmp.lt.s32.totalorder %s26, 1
        %s1020 = scalar_select %p1019, %s26, 1
        %s1021 = smul.addr %s1020, 2
        %s1022 = smul.addr %s1021, 8
        %s1023 = scalar_lea.vmem %s14, %s1022
      $region88: #{transformer_cslr_forward.5} parent=83 // pred_fallthru
        _
    $region84: #{transformer_cslr_forward.5} parent=5 // pred_fallthru
      _
  $region6: #{transformer_cslr_forward.5} parent=0 // loop_footer
    %s24 = sadd.s32 1, %s20
  $region7: #{transformer_cslr_forward.5} parent=0 // loop_footer_branch
    %19 = sbr.rel target = $region3
  $region8: #{transformer_cslr_forward.5} parent=0 // loop_exit
    _

// kernel: transformer_cslr_forward.7
$region0: #{transformer_cslr_forward.7}
  #allocation0 [shape = 'u32[]', space=smem, size = 0x4, offset = 0x4, fixed_abs, tag = 'smem constant byte address 0x4 - core index']
  #allocation1 [shape = 'u32[144,128]{1,0:T(1,128)}', space=vmem, size = 0x12000, scoped, tag = 'internal scratch']
  %s0 = inlined_call_operand.vmem [shape: f32[2,8,32], index: 0, kind: input, shape index: {}]
  %s1 = inlined_call_operand.vmem [shape: f32[1,32], index: 1, kind: input, shape index: {}]
  %s2 = inlined_call_operand.vmem [shape: f32[1,32], index: 2, kind: input, shape index: {}]
  %s3 = inlined_call_operand.vmem [shape: bf16[32,128], index: 3, kind: input, shape index: {}]
  %s4 = inlined_call_operand.vmem [shape: f32[1,128], index: 4, kind: input, shape index: {}]
  %s5 = inlined_call_operand.hbm [shape: f32[2,8,128], index: 5, kind: output, shape index: {}]
  %s6 = sld [smem:[#allocation0]]
  $region53: #{transformer_cslr_forward.7} parent=0
    _
  %s8 = ssub.s32 1, %s6
  %s9 = scalar_select 0, %s8, %s6
  $region1: #{transformer_cslr_forward.7} parent=0
    #allocation2 [shape = 'u8[8192]{0}', space=vmem, size = 0x2000, scoped, tag = 'output window, operand 0']
    #allocation3 [shape = 's32[2]{0}', space=sflag, size = 0x8, scoped, tag = 'scoped memory for transformer_cslr_forward.7']
    %10 = vsyncpa [#allocation3], 0
    %s11 = scalar_lea.sflag [#allocation3], 1
    %12 = vsyncpa %s11, 0
    loop: start=0, step=1, limit=4
    $region2: #{transformer_cslr_forward.7} parent=1 // loop_pre_header
      _
    $region3: #{transformer_cslr_forward.7} parent=1 // loop_header
      %s14 = sphi 0, %s18
      %p15 = scmp.ge.s32.totalorder %s14, 4
      %s24 = sphi 0, %s26
      %s27 = sphi 0, %s24
      %s28 = sphi 0, %s27
      %s44 = sphi 0, %s28
      %s48 = sphi 0, %s48
      %s50 = sphi 0, %s48
      %s51 = sphi 0, %s50
      %s65 = sphi 0, %s51
      %s69 = sphi 0, %s69
      %s71 = sphi 0, %s69
      %s72 = sphi 0, %s71
      %s86 = sphi 0, %s72
      %s90 = sphi 0, %s90
      %s92 = sphi 0, %s90
      %s93 = sphi 0, %s92
      %s107 = sphi 0, %s93
      %s111 = sphi 0, %s111
      %s113 = sphi 0, %s111
      %s114 = sphi 0, %s113
      %s128 = sphi 0, %s114
      %s134 = sphi 0, %s136
      %s137 = sphi 0, %s134
      %s138 = sphi 0, %s137
      %s154 = sphi 0, %s138
    $region4: #{transformer_cslr_forward.7} parent=1 // loop_header_branch
      %17 = sbr.rel (%p15) target = $region8
    $region5: #{transformer_cslr_forward.7} parent=1 // loop_body
      %s19 = ssub.s32 %s14, 1
      %s20 = ssub.s32 %s14, 2
      %s21 = sadd.s32 %s14, 1
      %s22 = ssub.s32 %s14, %s21
      %p23 = scmp.eq.s32.totalorder %s22, 0
      %s25 = sadd.s32 %s24, 1
      %s26 = scalar_select %p23, %s24, %s25
      %p29 = pneg %p23
      %p30 = scmp.eq.s32.totalorder %s14, 1
      %p31 = por %p29, %p30
      %p32 = scmp.ne.s32.totalorder %s24, %s27
      %p33 = scmp.eq.s32.totalorder %s14, 0
      %p34 = por %p32, %p33
      %p35 = scmp.ne.s32.totalorder %s24, %s27
      %p36 = scmp.eq.s32.totalorder %s19, 1
      %p37 = por %p35, %p36
      %p38 = scmp.ne.s32.totalorder %s27, %s28
      %p39 = scmp.eq.s32.totalorder %s19, 0
      %p40 = por %p38, %p39
      %p41 = scmp.ne.s32.totalorder %s27, %s28
      %p42 = scmp.eq.s32.totalorder %s20, 1
      %p43 = por %p41, %p42
      %p45 = scmp.ne.s32.totalorder %s28, %s44
      %p46 = scmp.eq.s32.totalorder %s20, 0
      %p47 = por %p45, %p46
      %s49 = sadd.s32 %s48, 1
      %p52 = scmp.eq.s32.totalorder %s14, 1
      %p53 = scmp.ne.s32.totalorder %s48, %s50
      %p54 = scmp.eq.s32.totalorder %s14, 0
      %p55 = por %p53, %p54
      %p56 = scmp.ne.s32.totalorder %s48, %s50
      %p57 = scmp.eq.s32.totalorder %s19, 1
      %p58 = por %p56, %p57
      %p59 = scmp.ne.s32.totalorder %s50, %s51
      %p60 = scmp.eq.s32.totalorder %s19, 0
      %p61 = por %p59, %p60
      %p62 = scmp.ne.s32.totalorder %s50, %s51
      %p63 = scmp.eq.s32.totalorder %s20, 1
      %p64 = por %p62, %p63
      %p66 = scmp.ne.s32.totalorder %s51, %s65
      %p67 = scmp.eq.s32.totalorder %s20, 0
      %p68 = por %p66, %p67
      %s70 = sadd.s32 %s69, 1
      %p73 = scmp.eq.s32.totalorder %s14, 1
      %p74 = scmp.ne.s32.totalorder %s69, %s71
      %p75 = scmp.eq.s32.totalorder %s14, 0
      %p76 = por %p74, %p75
      %p77 = scmp.ne.s32.totalorder %s69, %s71
      %p78 = scmp.eq.s32.totalorder %s19, 1
      %p79 = por %p77, %p78
      %p80 = scmp.ne.s32.totalorder %s71, %s72
      %p81 = scmp.eq.s32.totalorder %s19, 0
      %p82 = por %p80, %p81
      %p83 = scmp.ne.s32.totalorder %s71, %s72
      %p84 = scmp.eq.s32.totalorder %s20, 1
      %p85 = por %p83, %p84
      %p87 = scmp.ne.s32.totalorder %s72, %s86
      %p88 = scmp.eq.s32.totalorder %s20, 0
      %p89 = por %p87, %p88
      %s91 = sadd.s32 %s90, 1
      %p94 = scmp.eq.s32.totalorder %s14, 1
      %p95 = scmp.ne.s32.totalorder %s90, %s92
      %p96 = scmp.eq.s32.totalorder %s14, 0
      %p97 = por %p95, %p96
      %p98 = scmp.ne.s32.totalorder %s90, %s92
      %p99 = scmp.eq.s32.totalorder %s19, 1
      %p100 = por %p98, %p99
      %p101 = scmp.ne.s32.totalorder %s92, %s93
      %p102 = scmp.eq.s32.totalorder %s19, 0
      %p103 = por %p101, %p102
      %p104 = scmp.ne.s32.totalorder %s92, %s93
      %p105 = scmp.eq.s32.totalorder %s20, 1
      %p106 = por %p104, %p105
      %p108 = scmp.ne.s32.totalorder %s93, %s107
      %p109 = scmp.eq.s32.totalorder %s20, 0
      %p110 = por %p108, %p109
      %s112 = sadd.s32 %s111, 1
      %p115 = scmp.eq.s32.totalorder %s14, 1
      %p116 = scmp.ne.s32.totalorder %s111, %s113
      %p117 = scmp.eq.s32.totalorder %s14, 0
      %p118 = por %p116, %p117
      %p119 = scmp.ne.s32.totalorder %s111, %s113
      %p120 = scmp.eq.s32.totalorder %s19, 1
      %p121 = por %p119, %p120
      %p122 = scmp.ne.s32.totalorder %s113, %s114
      %p123 = scmp.eq.s32.totalorder %s19, 0
      %p124 = por %p122, %p123
      %p125 = scmp.ne.s32.totalorder %s113, %s114
      %p126 = scmp.eq.s32.totalorder %s20, 1
      %p127 = por %p125, %p126
      %p129 = scmp.ne.s32.totalorder %s114, %s128
      %p130 = scmp.eq.s32.totalorder %s20, 0
      %p131 = por %p129, %p130
      %s132 = ssub.s32 %s14, %s21
      %p133 = scmp.eq.s32.totalorder %s132, 0
      %s135 = sadd.s32 %s134, 1
      %s136 = scalar_select %p133, %s134, %s135
      %p139 = pneg %p133
      %p140 = scmp.eq.s32.totalorder %s14, 1
      %p141 = por %p139, %p140
      %p142 = scmp.ne.s32.totalorder %s134, %s137
      %p143 = scmp.eq.s32.totalorder %s14, 0
      %p144 = por %p142, %p143
      %p145 = scmp.ne.s32.totalorder %s134, %s137
      %p146 = scmp.eq.s32.totalorder %s19, 1
      %p147 = por %p145, %p146
      %p148 = scmp.ne.s32.totalorder %s137, %s138
      %p149 = scmp.eq.s32.totalorder %s19, 0
      %p150 = por %p148, %p149
      %p151 = scmp.ne.s32.totalorder %s137, %s138
      %p152 = scmp.eq.s32.totalorder %s20, 1
      %p153 = por %p151, %p152
      %p155 = scmp.ne.s32.totalorder %s138, %s154
      %p156 = scmp.eq.s32.totalorder %s20, 0
      %p157 = por %p155, %p156
      %p158 = scmp.le.s32.totalorder 1, %s14
      %p159 = scmp.lt.s32.totalorder %s14, 3
      %p160 = pnand %p158, %p159
      %p161 = pneg %p160
      // Predicated region
      $region9: #{transformer_cslr_forward.7} parent=5 // pred_check
        _
      $region10: #{transformer_cslr_forward.7} parent=5 // pred_check_branch
        %163 = sbr.rel (%p160) target = $region12
      $region11: #{transformer_cslr_forward.7} parent=5 // pred_region
        %s164 = ssub.s32 %s14, 1
        // Predicated region
        $region13: #{transformer_cslr_forward.7} parent=11 // pred_check
          %p165 = pneg %p61
        $region14: #{transformer_cslr_forward.7} parent=11 // pred_check_branch
          %167 = sbr.rel (%p165) target = $region16
        $region15: #{transformer_cslr_forward.7} parent=11 // pred_region
          _
        $region16: #{transformer_cslr_forward.7} parent=11 // pred_fallthru
          _
        // Predicated region
        $region17: #{transformer_cslr_forward.7} parent=11 // pred_check
          %p168 = pneg %p82
        $region18: #{transformer_cslr_forward.7} parent=11 // pred_check_branch
          %170 = sbr.rel (%p168) target = $region20
        $region19: #{transformer_cslr_forward.7} parent=11 // pred_region
          _
        $region20: #{transformer_cslr_forward.7} parent=11 // pred_fallthru
          _
        // Predicated region
        $region21: #{transformer_cslr_forward.7} parent=11 // pred_check
          %p171 = pneg %p103
        $region22: #{transformer_cslr_forward.7} parent=11 // pred_check_branch
          %173 = sbr.rel (%p171) target = $region24
        $region23: #{transformer_cslr_forward.7} parent=11 // pred_region
          _
        $region24: #{transformer_cslr_forward.7} parent=11 // pred_fallthru
          _
        // Predicated region
        $region25: #{transformer_cslr_forward.7} parent=11 // pred_check
          %p174 = pneg %p124
        $region26: #{transformer_cslr_forward.7} parent=11 // pred_check_branch
          %176 = sbr.rel (%p174) target = $region28
        $region27: #{transformer_cslr_forward.7} parent=11 // pred_region
          _
        $region28: #{transformer_cslr_forward.7} parent=11 // pred_fallthru
          _
      $region12: #{transformer_cslr_forward.7} parent=5 // pred_fallthru
        _
      %p177 = scmp.lt.s32.totalorder %s14, 2
      // Predicated region
      $region29: #{transformer_cslr_forward.7} parent=5 // pred_check
        %p178 = pneg %p177
      $region30: #{transformer_cslr_forward.7} parent=5 // pred_check_branch
        %180 = sbr.rel (%p178) target = $region32
      $region31: #{transformer_cslr_forward.7} parent=5 // pred_region
        // Predicated region
        $region33: #{transformer_cslr_forward.7} parent=31 // pred_check
          %p181 = pneg %p34
        $region34: #{transformer_cslr_forward.7} parent=31 // pred_check_branch
          %183 = sbr.rel (%p181) target = $region36
        $region35: #{transformer_cslr_forward.7} parent=31 // pred_region
          %p184 = scmp.lt.s32.totalorder %s14, 1
          %s185 = scalar_select %p184, %s14, 1
          %s186 = smul.addr %s185, 8
          %s187 = scalar_lea.vmem %s0, %s186
        $region36: #{transformer_cslr_forward.7} parent=31 // pred_fallthru
          _
      $region32: #{transformer_cslr_forward.7} parent=5 // pred_fallthru
        _
      %p188 = scmp.le.s32.totalorder 1, %s14
      %p189 = scmp.lt.s32.totalorder %s14, 3
      %p190 = pnand %p188, %p189
      %p191 = pneg %p190
      // Predicated region
      $region37: #{transformer_cslr_forward.7} parent=5 // pred_check
        _
      $region38: #{transformer_cslr_forward.7} parent=5 // pred_check_branch
        %193 = sbr.rel (%p190) target = $region40
      $region39: #{transformer_cslr_forward.7} parent=5 // pred_region
        %s194 = ssub.s32 %s14, 1
        %p195 = scmp.lt.s32.totalorder %s19, 1
        %s196 = scalar_select %p195, %s19, 1
        %s197 = smul.addr %s196, 8
        %s198 = scalar_lea.vmem %s0, %s197
        %p199 = pneg %p40
        %p200 = pneg %p37
        %p201 = pneg %p61
        %p202 = pneg %p58
        %p203 = pneg %p82
        %p204 = pneg %p79
        %p205 = pneg %p103
        %p206 = pneg %p100
        %p207 = pneg %p124
        %p208 = pneg %p121
        %p209 = pneg %p150
        %p210 = pneg %p147
        %s211 = sand.u32 %s137, 1
        %s212 = scalar_lea.sflag [#allocation3], %s211
        %s213 = sand.u32 %s137, 1
        %s214 = smul.addr %s213, 8
        %s215 = scalar_lea.vmem [#allocation2], %s214
        %p216 = scmp.lt.s32.totalorder %s19, 1
        %s217 = scalar_select %p216, %s19, 1
        %s218 = smul.addr %s217, 8
        %s219 = scalar_lea.vmem %s0, %s218
        %v221 = vld [vmem:[%s219] sm:$0xff]
        %v222 = vld [vmem:[%s1] sm:$0x1]
        %v223 = vld [vmem:[%s2] sm:$0x1]
        %vm224 = vcmask 261120
        %v225 = vsel %vm224, %v221, 0.0
        %226 = vadd.xlane.f32.xlu0 %v225
        %v227 = vpop.xlane.xlu0 %226
        %v228 = vrcp.pop 32.0
        %v229 = vmul.f32 %v227, %v228
        %v230 = vsub.f32 %v221, %v229
        %v231 = vmul.f32 %v230, %v230
        %v232 = vsel %vm224, %v231, 0.0
        %233 = vadd.xlane.f32.xlu0 %v232
        %v234 = vpop.xlane.xlu0 %233
        %v235 = vmul.f32 %v234, %v228
        %v236 = vadd.f32 %v235, 1e-05
        %v237 = vrsqrt.pop %v236
        %v238 = vmul.f32 %v230, %v237
        %v240 = vlaneseq
        %v241 = vshrl.u32 %v240, 7
        %v242 = vsub.s32 0, %v241
        %v243 = vrot.slane %v222, %v242
        %v245 = vmul.f32 %v238, %v243
        %v247 = vlaneseq
        %v248 = vshrl.u32 %v247, 7
        %v249 = vsub.s32 0, %v248
        %v250 = vrot.slane %v223, %v249
        %v252 = vadd.f32 %v245, %v250
        %v253 = vpack.c.bf16 %v252, %v252
        %v254 = vld [vmem:[%s3] sm:$0xf]
        %v255 = vld [vmem:[%s3 + $0x4] sm:$0xf]
        %v256 = vld [vmem:[%s3 + $0x8] sm:$0xf]
        %v257 = vld [vmem:[%s3 + $0xc] sm:$0xf]
        %v258 = vld [vmem:[%s4] sm:$0x1]
        %v260 = vlaneseq
        %v261 = vshrl.u32 %v260, 7
        %v262 = vsub.s32 0, %v261
        %v263 = vrot.slane %v258, %v262
        %v269 = vunpack.c.l.b16 %v254
        %v270 = vunpack.c.l.b16 %v255
        %v271 = vunpack.c.l.b16 %v256
        %v272 = vunpack.c.l.b16 %v257
        %v273 = vpack.c.b16 %v270, %v269
        %v274 = vpack.c.b16 %v272, %v271
        %v278 = vsel %vm224, %v253, 0
        %280 = vmatprep.subr.bf16.mxu0 0
        %281 = vmatpush1.bf16.msra.mxu0 0
        %282 = vmatprep.subr.bf16.mxu0 0
        %283 = vmatpush1.bf16.msra.mxu0 0
        %284 = vmatprep.subr.bf16.mxu0 0
        %285 = vmatpush1.bf16.msra.mxu0 0
        %286 = vmatprep.subr.bf16.mxu0 0
        %287 = vmatpush1.bf16.msra.mxu0 0
        %288 = vmatprep.subr.bf16.mxu0 0
        %289 = vmatpush1.bf16.msra.mxu0 0
        %290 = vmatprep.subr.bf16.mxu0 0
        %291 = vmatpush1.bf16.msra.mxu0 0
        %292 = vmatprep.subr.bf16.mxu0 0
        %293 = vmatpush1.bf16.msra.mxu0 %v274
        %294 = vmatprep.subr.bf16.mxu0 0
        %295 = vmatpush1.bf16.msra.mxu0 %v273
        %296 = vmatprep.subr.bf16.mxu0 0
        %297 = vmatpush2.bf16.msra.mxu0 0
        %298 = vmatprep.subr.bf16.mxu0 0
        %299 = vmatpush2.bf16.msra.mxu0 0
        %300 = vmatprep.subr.bf16.mxu0 0
        %301 = vmatpush2.bf16.msra.mxu0 0
        %302 = vmatprep.subr.bf16.mxu0 0
        %303 = vmatpush2.bf16.msra.mxu0 0
        %304 = vmatprep.subr.bf16.mxu0 0
        %305 = vmatpush2.bf16.msra.mxu0 0
        %306 = vmatprep.subr.bf16.mxu0 0
        %307 = vmatpush2.bf16.msra.mxu0 0
        %308 = vmatprep.subr.bf16.mxu0 0
        %309 = vmatpush2.bf16.msra.mxu0 0
        %310 = vmatprep.subr.bf16.mxu0 0
        %311 = vmatpush2.bf16.msra.mxu0 0
        %312 = vmatprep.mubr.bf16.mxu0 0
        %313 = vmatmul.mubr.bf16.gmra.mxu0 %v278
        %v314 = vpop.f32.mrf.mxu0
        %v315 = vadd.f32 %v263, %v314
        %v316 = vpop.f32.mrf.mxu0
        %v317 = vpop.f32.mrf.mxu0
        %v318 = vpop.f32.mrf.mxu0
        %319 = vdwg.mxu0
        %320 = vst [vmem:[%s215] sm:$0xff] %v315
        %s321 = sand.u32 %s137, 1
        %s322 = scalar_lea.sflag [#allocation3], %s321
        %s323 = sand.u32 %s137, 1
        %s324 = smul.addr %s323, 8
        %s325 = scalar_lea.vmem [#allocation2], %s324
        // Predicated region
        $region41: #{transformer_cslr_forward.7} parent=39 // pred_check
          %p326 = pneg %p147
        $region42: #{transformer_cslr_forward.7} parent=39 // pred_check_branch
          %328 = sbr.rel (%p326) target = $region44
        $region43: #{transformer_cslr_forward.7} parent=39 // pred_region
          %s330 = ssub.s32 128, 128
          %331 = vsyncadd %s322, %s330
          %s332 = smul.addr %s19, 128
          %s333 = scalar_lea.hbm %s5, %s332
          %s335 = sshll.u32 %s325, 4
          %s336 = int_to_ptr.vmem [resolvable:$true] %s335
          %338 = dma.vmem_to_hbm [thread:$0]  %s336, 128, %s333, %s322
        $region44: #{transformer_cslr_forward.7} parent=39 // pred_fallthru
          _
      $region40: #{transformer_cslr_forward.7} parent=5 // pred_fallthru
        _
      %p339 = scmp.le.s32.totalorder 2, %s14
      // Predicated region
      $region45: #{transformer_cslr_forward.7} parent=5 // pred_check
        %p340 = pneg %p339
      $region46: #{transformer_cslr_forward.7} parent=5 // pred_check_branch
        %342 = sbr.rel (%p340) target = $region48
      $region47: #{transformer_cslr_forward.7} parent=5 // pred_region
        %s343 = ssub.s32 %s14, 2
        // Predicated region
        $region49: #{transformer_cslr_forward.7} parent=47 // pred_check
          %p344 = pneg %p153
        $region50: #{transformer_cslr_forward.7} parent=47 // pred_check_branch
          %346 = sbr.rel (%p344) target = $region52
        $region51: #{transformer_cslr_forward.7} parent=47 // pred_region
          %s347 = sand.u32 %s138, 1
          %s348 = scalar_lea.sflag [#allocation3], %s347
          %s349 = sand.u32 %s138, 1
          %s350 = smul.addr %s349, 8
          %s351 = scalar_lea.vmem [#allocation2], %s350
          %352 = dma.done %s348, 128
        $region52: #{transformer_cslr_forward.7} parent=47 // pred_fallthru
          _
      $region48: #{transformer_cslr_forward.7} parent=5 // pred_fallthru
        _
    $region6: #{transformer_cslr_forward.7} parent=1 // loop_footer
      %s18 = sadd.s32 1, %s14
    $region7: #{transformer_cslr_forward.7} parent=1 // loop_footer_branch
      %13 = sbr.rel target = $region3
    $region8: #{transformer_cslr_forward.7} parent=1 // loop_exit
      _
    %353 = vsyncpa [#allocation3], 1
    %s354 = scalar_lea.sflag [#allocation3], 1
    %355 = vsyncpa %s354, 1

// kernel: transformer_cslr_forward.6
$region0: #{transformer_cslr_forward.6}
  #allocation0 [shape = 'u32[]', space=smem, size = 0x4, offset = 0x4, fixed_abs, tag = 'smem constant byte address 0x4 - core index']
  #allocation1 [shape = 'u32[144,128]{1,0:T(1,128)}', space=vmem, size = 0x12000, scoped, tag = 'internal scratch']
  %s0 = inlined_call_operand.vmem [shape: f32[2,8,32], index: 0, kind: input, shape index: {}]
  %s1 = inlined_call_operand.vmem [shape: f32[2,16,32], index: 1, kind: input, shape index: {}]
  %s2 = inlined_call_operand.vmem [shape: f32[2,1,8], index: 2, kind: input, shape index: {}]
  %s3 = inlined_call_operand.vmem [shape: f32[1,8,8], index: 3, kind: input, shape index: {}]
  %s4 = inlined_call_operand.vmem [shape: f32[2,1,16], index: 4, kind: input, shape index: {}]
  %s5 = inlined_call_operand.vmem [shape: f32[1,32], index: 5, kind: input, shape index: {}]
  %s6 = inlined_call_operand.vmem [shape: f32[1,32], index: 6, kind: input, shape index: {}]
  %s7 = inlined_call_operand.vmem [shape: bf16[32,96], index: 7, kind: input, shape index: {}]
  %s8 = inlined_call_operand.vmem [shape: f32[1,96], index: 8, kind: input, shape index: {}]
  %s9 = inlined_call_operand.vmem [shape: bf16[32,32], index: 9, kind: input, shape index: {}]
  %s10 = inlined_call_operand.vmem [shape: f32[1,32], index: 10, kind: input, shape index: {}]
  %s11 = inlined_call_operand.vmem [shape: f32[1,32], index: 11, kind: input, shape index: {}]
  %s12 = inlined_call_operand.vmem [shape: f32[1,32], index: 12, kind: input, shape index: {}]
  %s13 = inlined_call_operand.vmem [shape: f32[1,32], index: 13, kind: input, shape index: {}]
  %s14 = inlined_call_operand.vmem [shape: f32[1,32], index: 14, kind: input, shape index: {}]
  %s15 = inlined_call_operand.vmem [shape: bf16[32,32], index: 15, kind: input, shape index: {}]
  %s16 = inlined_call_operand.vmem [shape: f32[1,32], index: 16, kind: input, shape index: {}]
  %s17 = inlined_call_operand.vmem [shape: bf16[32,64], index: 17, kind: input, shape index: {}]
  %s18 = inlined_call_operand.vmem [shape: f32[1,64], index: 18, kind: input, shape index: {}]
  %s19 = inlined_call_operand.vmem [shape: bf16[32,32], index: 19, kind: input, shape index: {}]
  %s20 = inlined_call_operand.vmem [shape: f32[1,32], index: 20, kind: input, shape index: {}]
  %s21 = inlined_call_operand.vmem [shape: f32[1,32], index: 21, kind: input, shape index: {}]
  %s22 = inlined_call_operand.vmem [shape: f32[1,32], index: 22, kind: input, shape index: {}]
  %s23 = inlined_call_operand.vmem [shape: bf16[32,64], index: 23, kind: input, shape index: {}]
  %s24 = inlined_call_operand.vmem [shape: f32[1,64], index: 24, kind: input, shape index: {}]
  %s25 = inlined_call_operand.vmem [shape: bf16[64,32], index: 25, kind: input, shape index: {}]
  %s26 = inlined_call_operand.vmem [shape: f32[1,32], index: 26, kind: input, shape index: {}]
  %s27 = inlined_call_operand.vmem [shape: f32[2,8,32], index: 27, kind: output, shape index: {}]
  %s28 = sld [smem:[#allocation0]]
  $region141: #{transformer_cslr_forward.6} parent=0
    _
  %s30 = ssub.s32 1, %s28
  %s31 = scalar_select 0, %s30, %s28
  loop: start=0, step=1, limit=4
  $region2: #{transformer_cslr_forward.6} parent=0 // loop_pre_header
    _
  $region3: #{transformer_cslr_forward.6} parent=0 // loop_header
    %s33 = sphi 0, %s37
    %p34 = scmp.ge.s32.totalorder %s33, 4
    %s43 = sphi 0, %s45
    %s46 = sphi 0, %s43
    %s47 = sphi 0, %s46
    %s63 = sphi 0, %s47
    %s69 = sphi 0, %s71
    %s72 = sphi 0, %s69
    %s73 = sphi 0, %s72
    %s89 = sphi 0, %s73
    %s95 = sphi 0, %s97
    %s98 = sphi 0, %s95
    %s99 = sphi 0, %s98
    %s115 = sphi 0, %s99
    %s119 = sphi 0, %s119
    %s121 = sphi 0, %s119
    %s122 = sphi 0, %s121
    %s136 = sphi 0, %s122
    %s142 = sphi 0, %s144
    %s145 = sphi 0, %s142
    %s146 = sphi 0, %s145
    %s162 = sphi 0, %s146
    %s166 = sphi 0, %s166
    %s168 = sphi 0, %s166
    %s169 = sphi 0, %s168
    %s183 = sphi 0, %s169
    %s187 = sphi 0, %s187
    %s189 = sphi 0, %s187
    %s190 = sphi 0, %s189
    %s204 = sphi 0, %s190
    %s208 = sphi 0, %s208
    %s210 = sphi 0, %s208
    %s211 = sphi 0, %s210
    %s225 = sphi 0, %s211
    %s229 = sphi 0, %s229
    %s231 = sphi 0, %s229
    %s232 = sphi 0, %s231
    %s246 = sphi 0, %s232
    %s250 = sphi 0, %s250
    %s252 = sphi 0, %s250
    %s253 = sphi 0, %s252
    %s267 = sphi 0, %s253
    %s271 = sphi 0, %s271
    %s273 = sphi 0, %s271
    %s274 = sphi 0, %s273
    %s288 = sphi 0, %s274
    %s292 = sphi 0, %s292
    %s294 = sphi 0, %s292
    %s295 = sphi 0, %s294
    %s309 = sphi 0, %s295
    %s313 = sphi 0, %s313
    %s315 = sphi 0, %s313
    %s316 = sphi 0, %s315
    %s330 = sphi 0, %s316
    %s334 = sphi 0, %s334
    %s336 = sphi 0, %s334
    %s337 = sphi 0, %s336
    %s351 = sphi 0, %s337
    %s355 = sphi 0, %s355
    %s357 = sphi 0, %s355
    %s358 = sphi 0, %s357
    %s372 = sphi 0, %s358
    %s376 = sphi 0, %s376
    %s378 = sphi 0, %s376
    %s379 = sphi 0, %s378
    %s393 = sphi 0, %s379
    %s397 = sphi 0, %s397
    %s399 = sphi 0, %s397
    %s400 = sphi 0, %s399
    %s414 = sphi 0, %s400
    %s418 = sphi 0, %s418
    %s420 = sphi 0, %s418
    %s421 = sphi 0, %s420
    %s435 = sphi 0, %s421
    %s439 = sphi 0, %s439
    %s441 = sphi 0, %s439
    %s442 = sphi 0, %s441
    %s456 = sphi 0, %s442
    %s460 = sphi 0, %s460
    %s462 = sphi 0, %s460
    %s463 = sphi 0, %s462
    %s477 = sphi 0, %s463
    %s481 = sphi 0, %s481
    %s483 = sphi 0, %s481
    %s484 = sphi 0, %s483
    %s498 = sphi 0, %s484
    %s502 = sphi 0, %s502
    %s504 = sphi 0, %s502
    %s505 = sphi 0, %s504
    %s519 = sphi 0, %s505
    %s523 = sphi 0, %s523
    %s525 = sphi 0, %s523
    %s526 = sphi 0, %s525
    %s540 = sphi 0, %s526
    %s544 = sphi 0, %s544
    %s546 = sphi 0, %s544
    %s547 = sphi 0, %s546
    %s561 = sphi 0, %s547
    %s565 = sphi 0, %s565
    %s567 = sphi 0, %s565
    %s568 = sphi 0, %s567
    %s582 = sphi 0, %s568
    %s586 = sphi 0, %s586
    %s588 = sphi 0, %s586
    %s589 = sphi 0, %s588
    %s603 = sphi 0, %s589
    %s607 = sphi 0, %s607
    %s609 = sphi 0, %s607
    %s610 = sphi 0, %s609
    %s624 = sphi 0, %s610
    %s630 = sphi 0, %s632
    %s633 = sphi 0, %s630
    %s634 = sphi 0, %s633
    %s650 = sphi 0, %s634
  $region4: #{transformer_cslr_forward.6} parent=0 // loop_header_branch
    %36 = sbr.rel (%p34) target = $region8
  $region5: #{transformer_cslr_forward.6} parent=0 // loop_body
    %s38 = ssub.s32 %s33, 1
    %s39 = ssub.s32 %s33, 2
    %s40 = sadd.s32 %s33, 1
    %s41 = ssub.s32 %s33, %s40
    %p42 = scmp.eq.s32.totalorder %s41, 0
    %s44 = sadd.s32 %s43, 1
    %s45 = scalar_select %p42, %s43, %s44
    %p48 = pneg %p42
    %p49 = scmp.eq.s32.totalorder %s33, 1
    %p50 = por %p48, %p49
    %p51 = scmp.ne.s32.totalorder %s43, %s46
    %p52 = scmp.eq.s32.totalorder %s33, 0
    %p53 = por %p51, %p52
    %p54 = scmp.ne.s32.totalorder %s43, %s46
    %p55 = scmp.eq.s32.totalorder %s38, 1
    %p56 = por %p54, %p55
    %p57 = scmp.ne.s32.totalorder %s46, %s47
    %p58 = scmp.eq.s32.totalorder %s38, 0
    %p59 = por %p57, %p58
    %p60 = scmp.ne.s32.totalorder %s46, %s47
    %p61 = scmp.eq.s32.totalorder %s39, 1
    %p62 = por %p60, %p61
    %p64 = scmp.ne.s32.totalorder %s47, %s63
    %p65 = scmp.eq.s32.totalorder %s39, 0
    %p66 = por %p64, %p65
    %s67 = ssub.s32 %s33, %s40
    %p68 = scmp.eq.s32.totalorder %s67, 0
    %s70 = sadd.s32 %s69, 1
    %s71 = scalar_select %p68, %s69, %s70
    %p74 = pneg %p68
    %p75 = scmp.eq.s32.totalorder %s33, 1
    %p76 = por %p74, %p75
    %p77 = scmp.ne.s32.totalorder %s69, %s72
    %p78 = scmp.eq.s32.totalorder %s33, 0
    %p79 = por %p77, %p78
    %p80 = scmp.ne.s32.totalorder %s69, %s72
    %p81 = scmp.eq.s32.totalorder %s38, 1
    %p82 = por %p80, %p81
    %p83 = scmp.ne.s32.totalorder %s72, %s73
    %p84 = scmp.eq.s32.totalorder %s38, 0
    %p85 = por %p83, %p84
    %p86 = scmp.ne.s32.totalorder %s72, %s73
    %p87 = scmp.eq.s32.totalorder %s39, 1
    %p88 = por %p86, %p87
    %p90 = scmp.ne.s32.totalorder %s73, %s89
    %p91 = scmp.eq.s32.totalorder %s39, 0
    %p92 = por %p90, %p91
    %s93 = ssub.s32 %s33, %s40
    %p94 = scmp.eq.s32.totalorder %s93, 0
    %s96 = sadd.s32 %s95, 1
    %s97 = scalar_select %p94, %s95, %s96
    %p100 = pneg %p94
    %p101 = scmp.eq.s32.totalorder %s33, 1
    %p102 = por %p100, %p101
    %p103 = scmp.ne.s32.totalorder %s95, %s98
    %p104 = scmp.eq.s32.totalorder %s33, 0
    %p105 = por %p103, %p104
    %p106 = scmp.ne.s32.totalorder %s95, %s98
    %p107 = scmp.eq.s32.totalorder %s38, 1
    %p108 = por %p106, %p107
    %p109 = scmp.ne.s32.totalorder %s98, %s99
    %p110 = scmp.eq.s32.totalorder %s38, 0
    %p111 = por %p109, %p110
    %p112 = scmp.ne.s32.totalorder %s98, %s99
    %p113 = scmp.eq.s32.totalorder %s39, 1
    %p114 = por %p112, %p113
    %p116 = scmp.ne.s32.totalorder %s99, %s115
    %p117 = scmp.eq.s32.totalorder %s39, 0
    %p118 = por %p116, %p117
    %s120 = sadd.s32 %s119, 1
    %p123 = scmp.eq.s32.totalorder %s33, 1
    %p124 = scmp.ne.s32.totalorder %s119, %s121
    %p125 = scmp.eq.s32.totalorder %s33, 0
    %p126 = por %p124, %p125
    %p127 = scmp.ne.s32.totalorder %s119, %s121
    %p128 = scmp.eq.s32.totalorder %s38, 1
    %p129 = por %p127, %p128
    %p130 = scmp.ne.s32.totalorder %s121, %s122
    %p131 = scmp.eq.s32.totalorder %s38, 0
    %p132 = por %p130, %p131
    %p133 = scmp.ne.s32.totalorder %s121, %s122
    %p134 = scmp.eq.s32.totalorder %s39, 1
    %p135 = por %p133, %p134
    %p137 = scmp.ne.s32.totalorder %s122, %s136
    %p138 = scmp.eq.s32.totalorder %s39, 0
    %p139 = por %p137, %p138
    %s140 = ssub.s32 %s33, %s40
    %p141 = scmp.eq.s32.totalorder %s140, 0
    %s143 = sadd.s32 %s142, 1
    %s144 = scalar_select %p141, %s142, %s143
    %p147 = pneg %p141
    %p148 = scmp.eq.s32.totalorder %s33, 1
    %p149 = por %p147, %p148
    %p150 = scmp.ne.s32.totalorder %s142, %s145
    %p151 = scmp.eq.s32.totalorder %s33, 0
    %p152 = por %p150, %p151
    %p153 = scmp.ne.s32.totalorder %s142, %s145
    %p154 = scmp.eq.s32.totalorder %s38, 1
    %p155 = por %p153, %p154
    %p156 = scmp.ne.s32.totalorder %s145, %s146
    %p157 = scmp.eq.s32.totalorder %s38, 0
    %p158 = por %p156, %p157
    %p159 = scmp.ne.s32.totalorder %s145, %s146
    %p160 = scmp.eq.s32.totalorder %s39, 1
    %p161 = por %p159, %p160
    %p163 = scmp.ne.s32.totalorder %s146, %s162
    %p164 = scmp.eq.s32.totalorder %s39, 0
    %p165 = por %p163, %p164
    %s167 = sadd.s32 %s166, 1
    %p170 = scmp.eq.s32.totalorder %s33, 1
    %p171 = scmp.ne.s32.totalorder %s166, %s168
    %p172 = scmp.eq.s32.totalorder %s33, 0
    %p173 = por %p171, %p172
    %p174 = scmp.ne.s32.totalorder %s166, %s168
    %p175 = scmp.eq.s32.totalorder %s38, 1
    %p176 = por %p174, %p175
    %p177 = scmp.ne.s32.totalorder %s168, %s169
    %p178 = scmp.eq.s32.totalorder %s38, 0
    %p179 = por %p177, %p178
    %p180 = scmp.ne.s32.totalorder %s168, %s169
    %p181 = scmp.eq.s32.totalorder %s39, 1
    %p182 = por %p180, %p181
    %p184 = scmp.ne.s32.totalorder %s169, %s183
    %p185 = scmp.eq.s32.totalorder %s39, 0
    %p186 = por %p184, %p185
    %s188 = sadd.s32 %s187, 1
    %p191 = scmp.eq.s32.totalorder %s33, 1
    %p192 = scmp.ne.s32.totalorder %s187, %s189
    %p193 = scmp.eq.s32.totalorder %s33, 0
    %p194 = por %p192, %p193
    %p195 = scmp.ne.s32.totalorder %s187, %s189
    %p196 = scmp.eq.s32.totalorder %s38, 1
    %p197 = por %p195, %p196
    %p198 = scmp.ne.s32.totalorder %s189, %s190
    %p199 = scmp.eq.s32.totalorder %s38, 0
    %p200 = por %p198, %p199
    %p201 = scmp.ne.s32.totalorder %s189, %s190
    %p202 = scmp.eq.s32.totalorder %s39, 1
    %p203 = por %p201, %p202
    %p205 = scmp.ne.s32.totalorder %s190, %s204
    %p206 = scmp.eq.s32.totalorder %s39, 0
    %p207 = por %p205, %p206
    %s209 = sadd.s32 %s208, 1
    %p212 = scmp.eq.s32.totalorder %s33, 1
    %p213 = scmp.ne.s32.totalorder %s208, %s210
    %p214 = scmp.eq.s32.totalorder %s33, 0
    %p215 = por %p213, %p214
    %p216 = scmp.ne.s32.totalorder %s208, %s210
    %p217 = scmp.eq.s32.totalorder %s38, 1
    %p218 = por %p216, %p217
    %p219 = scmp.ne.s32.totalorder %s210, %s211
    %p220 = scmp.eq.s32.totalorder %s38, 0
    %p221 = por %p219, %p220
    %p222 = scmp.ne.s32.totalorder %s210, %s211
    %p223 = scmp.eq.s32.totalorder %s39, 1
    %p224 = por %p222, %p223
    %p226 = scmp.ne.s32.totalorder %s211, %s225
    %p227 = scmp.eq.s32.totalorder %s39, 0
    %p228 = por %p226, %p227
    %s230 = sadd.s32 %s229, 1
    %p233 = scmp.eq.s32.totalorder %s33, 1
    %p234 = scmp.ne.s32.totalorder %s229, %s231
    %p235 = scmp.eq.s32.totalorder %s33, 0
    %p236 = por %p234, %p235
    %p237 = scmp.ne.s32.totalorder %s229, %s231
    %p238 = scmp.eq.s32.totalorder %s38, 1
    %p239 = por %p237, %p238
    %p240 = scmp.ne.s32.totalorder %s231, %s232
    %p241 = scmp.eq.s32.totalorder %s38, 0
    %p242 = por %p240, %p241
    %p243 = scmp.ne.s32.totalorder %s231, %s232
    %p244 = scmp.eq.s32.totalorder %s39, 1
    %p245 = por %p243, %p244
    %p247 = scmp.ne.s32.totalorder %s232, %s246
    %p248 = scmp.eq.s32.totalorder %s39, 0
    %p249 = por %p247, %p248
    %s251 = sadd.s32 %s250, 1
    %p254 = scmp.eq.s32.totalorder %s33, 1
    %p255 = scmp.ne.s32.totalorder %s250, %s252
    %p256 = scmp.eq.s32.totalorder %s33, 0
    %p257 = por %p255, %p256
    %p258 = scmp.ne.s32.totalorder %s250, %s252
    %p259 = scmp.eq.s32.totalorder %s38, 1
    %p260 = por %p258, %p259
    %p261 = scmp.ne.s32.totalorder %s252, %s253
    %p262 = scmp.eq.s32.totalorder %s38, 0
    %p263 = por %p261, %p262
    %p264 = scmp.ne.s32.totalorder %s252, %s253
    %p265 = scmp.eq.s32.totalorder %s39, 1
    %p266 = por %p264, %p265
    %p268 = scmp.ne.s32.totalorder %s253, %s267
    %p269 = scmp.eq.s32.totalorder %s39, 0
    %p270 = por %p268, %p269
    %s272 = sadd.s32 %s271, 1
    %p275 = scmp.eq.s32.totalorder %s33, 1
    %p276 = scmp.ne.s32.totalorder %s271, %s273
    %p277 = scmp.eq.s32.totalorder %s33, 0
    %p278 = por %p276, %p277
    %p279 = scmp.ne.s32.totalorder %s271, %s273
    %p280 = scmp.eq.s32.totalorder %s38, 1
    %p281 = por %p279, %p280
    %p282 = scmp.ne.s32.totalorder %s273, %s274
    %p283 = scmp.eq.s32.totalorder %s38, 0
    %p284 = por %p282, %p283
    %p285 = scmp.ne.s32.totalorder %s273, %s274
    %p286 = scmp.eq.s32.totalorder %s39, 1
    %p287 = por %p285, %p286
    %p289 = scmp.ne.s32.totalorder %s274, %s288
    %p290 = scmp.eq.s32.totalorder %s39, 0
    %p291 = por %p289, %p290
    %s293 = sadd.s32 %s292, 1
    %p296 = scmp.eq.s32.totalorder %s33, 1
    %p297 = scmp.ne.s32.totalorder %s292, %s294
    %p298 = scmp.eq.s32.totalorder %s33, 0
    %p299 = por %p297, %p298
    %p300 = scmp.ne.s32.totalorder %s292, %s294
    %p301 = scmp.eq.s32.totalorder %s38, 1
    %p302 = por %p300, %p301
    %p303 = scmp.ne.s32.totalorder %s294, %s295
    %p304 = scmp.eq.s32.totalorder %s38, 0
    %p305 = por %p303, %p304
    %p306 = scmp.ne.s32.totalorder %s294, %s295
    %p307 = scmp.eq.s32.totalorder %s39, 1
    %p308 = por %p306, %p307
    %p310 = scmp.ne.s32.totalorder %s295, %s309
    %p311 = scmp.eq.s32.totalorder %s39, 0
    %p312 = por %p310, %p311
    %s314 = sadd.s32 %s313, 1
    %p317 = scmp.eq.s32.totalorder %s33, 1
    %p318 = scmp.ne.s32.totalorder %s313, %s315
    %p319 = scmp.eq.s32.totalorder %s33, 0
    %p320 = por %p318, %p319
    %p321 = scmp.ne.s32.totalorder %s313, %s315
    %p322 = scmp.eq.s32.totalorder %s38, 1
    %p323 = por %p321, %p322
    %p324 = scmp.ne.s32.totalorder %s315, %s316
    %p325 = scmp.eq.s32.totalorder %s38, 0
    %p326 = por %p324, %p325
    %p327 = scmp.ne.s32.totalorder %s315, %s316
    %p328 = scmp.eq.s32.totalorder %s39, 1
    %p329 = por %p327, %p328
    %p331 = scmp.ne.s32.totalorder %s316, %s330
    %p332 = scmp.eq.s32.totalorder %s39, 0
    %p333 = por %p331, %p332
    %s335 = sadd.s32 %s334, 1
    %p338 = scmp.eq.s32.totalorder %s33, 1
    %p339 = scmp.ne.s32.totalorder %s334, %s336
    %p340 = scmp.eq.s32.totalorder %s33, 0
    %p341 = por %p339, %p340
    %p342 = scmp.ne.s32.totalorder %s334, %s336
    %p343 = scmp.eq.s32.totalorder %s38, 1
    %p344 = por %p342, %p343
    %p345 = scmp.ne.s32.totalorder %s336, %s337
    %p346 = scmp.eq.s32.totalorder %s38, 0
    %p347 = por %p345, %p346
    %p348 = scmp.ne.s32.totalorder %s336, %s337
    %p349 = scmp.eq.s32.totalorder %s39, 1
    %p350 = por %p348, %p349
    %p352 = scmp.ne.s32.totalorder %s337, %s351
    %p353 = scmp.eq.s32.totalorder %s39, 0
    %p354 = por %p352, %p353
    %s356 = sadd.s32 %s355, 1
    %p359 = scmp.eq.s32.totalorder %s33, 1
    %p360 = scmp.ne.s32.totalorder %s355, %s357
    %p361 = scmp.eq.s32.totalorder %s33, 0
    %p362 = por %p360, %p361
    %p363 = scmp.ne.s32.totalorder %s355, %s357
    %p364 = scmp.eq.s32.totalorder %s38, 1
    %p365 = por %p363, %p364
    %p366 = scmp.ne.s32.totalorder %s357, %s358
    %p367 = scmp.eq.s32.totalorder %s38, 0
    %p368 = por %p366, %p367
    %p369 = scmp.ne.s32.totalorder %s357, %s358
    %p370 = scmp.eq.s32.totalorder %s39, 1
    %p371 = por %p369, %p370
    %p373 = scmp.ne.s32.totalorder %s358, %s372
    %p374 = scmp.eq.s32.totalorder %s39, 0
    %p375 = por %p373, %p374
    %s377 = sadd.s32 %s376, 1
    %p380 = scmp.eq.s32.totalorder %s33, 1
    %p381 = scmp.ne.s32.totalorder %s376, %s378
    %p382 = scmp.eq.s32.totalorder %s33, 0
    %p383 = por %p381, %p382
    %p384 = scmp.ne.s32.totalorder %s376, %s378
    %p385 = scmp.eq.s32.totalorder %s38, 1
    %p386 = por %p384, %p385
    %p387 = scmp.ne.s32.totalorder %s378, %s379
    %p388 = scmp.eq.s32.totalorder %s38, 0
    %p389 = por %p387, %p388
    %p390 = scmp.ne.s32.totalorder %s378, %s379
    %p391 = scmp.eq.s32.totalorder %s39, 1
    %p392 = por %p390, %p391
    %p394 = scmp.ne.s32.totalorder %s379, %s393
    %p395 = scmp.eq.s32.totalorder %s39, 0
    %p396 = por %p394, %p395
    %s398 = sadd.s32 %s397, 1
    %p401 = scmp.eq.s32.totalorder %s33, 1
    %p402 = scmp.ne.s32.totalorder %s397, %s399
    %p403 = scmp.eq.s32.totalorder %s33, 0
    %p404 = por %p402, %p403
    %p405 = scmp.ne.s32.totalorder %s397, %s399
    %p406 = scmp.eq.s32.totalorder %s38, 1
    %p407 = por %p405, %p406
    %p408 = scmp.ne.s32.totalorder %s399, %s400
    %p409 = scmp.eq.s32.totalorder %s38, 0
    %p410 = por %p408, %p409
    %p411 = scmp.ne.s32.totalorder %s399, %s400
    %p412 = scmp.eq.s32.totalorder %s39, 1
    %p413 = por %p411, %p412
    %p415 = scmp.ne.s32.totalorder %s400, %s414
    %p416 = scmp.eq.s32.totalorder %s39, 0
    %p417 = por %p415, %p416
    %s419 = sadd.s32 %s418, 1
    %p422 = scmp.eq.s32.totalorder %s33, 1
    %p423 = scmp.ne.s32.totalorder %s418, %s420
    %p424 = scmp.eq.s32.totalorder %s33, 0
    %p425 = por %p423, %p424
    %p426 = scmp.ne.s32.totalorder %s418, %s420
    %p427 = scmp.eq.s32.totalorder %s38, 1
    %p428 = por %p426, %p427
    %p429 = scmp.ne.s32.totalorder %s420, %s421
    %p430 = scmp.eq.s32.totalorder %s38, 0
    %p431 = por %p429, %p430
    %p432 = scmp.ne.s32.totalorder %s420, %s421
    %p433 = scmp.eq.s32.totalorder %s39, 1
    %p434 = por %p432, %p433
    %p436 = scmp.ne.s32.totalorder %s421, %s435
    %p437 = scmp.eq.s32.totalorder %s39, 0
    %p438 = por %p436, %p437
    %s440 = sadd.s32 %s439, 1
    %p443 = scmp.eq.s32.totalorder %s33, 1
    %p444 = scmp.ne.s32.totalorder %s439, %s441
    %p445 = scmp.eq.s32.totalorder %s33, 0
    %p446 = por %p444, %p445
    %p447 = scmp.ne.s32.totalorder %s439, %s441
    %p448 = scmp.eq.s32.totalorder %s38, 1
    %p449 = por %p447, %p448
    %p450 = scmp.ne.s32.totalorder %s441, %s442
    %p451 = scmp.eq.s32.totalorder %s38, 0
    %p452 = por %p450, %p451
    %p453 = scmp.ne.s32.totalorder %s441, %s442
    %p454 = scmp.eq.s32.totalorder %s39, 1
    %p455 = por %p453, %p454
    %p457 = scmp.ne.s32.totalorder %s442, %s456
    %p458 = scmp.eq.s32.totalorder %s39, 0
    %p459 = por %p457, %p458
    %s461 = sadd.s32 %s460, 1
    %p464 = scmp.eq.s32.totalorder %s33, 1
    %p465 = scmp.ne.s32.totalorder %s460, %s462
    %p466 = scmp.eq.s32.totalorder %s33, 0
    %p467 = por %p465, %p466
    %p468 = scmp.ne.s32.totalorder %s460, %s462
    %p469 = scmp.eq.s32.totalorder %s38, 1
    %p470 = por %p468, %p469
    %p471 = scmp.ne.s32.totalorder %s462, %s463
    %p472 = scmp.eq.s32.totalorder %s38, 0
    %p473 = por %p471, %p472
    %p474 = scmp.ne.s32.totalorder %s462, %s463
    %p475 = scmp.eq.s32.totalorder %s39, 1
    %p476 = por %p474, %p475
    %p478 = scmp.ne.s32.totalorder %s463, %s477
    %p479 = scmp.eq.s32.totalorder %s39, 0
    %p480 = por %p478, %p479
    %s482 = sadd.s32 %s481, 1
    %p485 = scmp.eq.s32.totalorder %s33, 1
    %p486 = scmp.ne.s32.totalorder %s481, %s483
    %p487 = scmp.eq.s32.totalorder %s33, 0
    %p488 = por %p486, %p487
    %p489 = scmp.ne.s32.totalorder %s481, %s483
    %p490 = scmp.eq.s32.totalorder %s38, 1
    %p491 = por %p489, %p490
    %p492 = scmp.ne.s32.totalorder %s483, %s484
    %p493 = scmp.eq.s32.totalorder %s38, 0
    %p494 = por %p492, %p493
    %p495 = scmp.ne.s32.totalorder %s483, %s484
    %p496 = scmp.eq.s32.totalorder %s39, 1
    %p497 = por %p495, %p496
    %p499 = scmp.ne.s32.totalorder %s484, %s498
    %p500 = scmp.eq.s32.totalorder %s39, 0
    %p501 = por %p499, %p500
    %s503 = sadd.s32 %s502, 1
    %p506 = scmp.eq.s32.totalorder %s33, 1
    %p507 = scmp.ne.s32.totalorder %s502, %s504
    %p508 = scmp.eq.s32.totalorder %s33, 0
    %p509 = por %p507, %p508
    %p510 = scmp.ne.s32.totalorder %s502, %s504
    %p511 = scmp.eq.s32.totalorder %s38, 1
    %p512 = por %p510, %p511
    %p513 = scmp.ne.s32.totalorder %s504, %s505
    %p514 = scmp.eq.s32.totalorder %s38, 0
    %p515 = por %p513, %p514
    %p516 = scmp.ne.s32.totalorder %s504, %s505
    %p517 = scmp.eq.s32.totalorder %s39, 1
    %p518 = por %p516, %p517
    %p520 = scmp.ne.s32.totalorder %s505, %s519
    %p521 = scmp.eq.s32.totalorder %s39, 0
    %p522 = por %p520, %p521
    %s524 = sadd.s32 %s523, 1
    %p527 = scmp.eq.s32.totalorder %s33, 1
    %p528 = scmp.ne.s32.totalorder %s523, %s525
    %p529 = scmp.eq.s32.totalorder %s33, 0
    %p530 = por %p528, %p529
    %p531 = scmp.ne.s32.totalorder %s523, %s525
    %p532 = scmp.eq.s32.totalorder %s38, 1
    %p533 = por %p531, %p532
    %p534 = scmp.ne.s32.totalorder %s525, %s526
    %p535 = scmp.eq.s32.totalorder %s38, 0
    %p536 = por %p534, %p535
    %p537 = scmp.ne.s32.totalorder %s525, %s526
    %p538 = scmp.eq.s32.totalorder %s39, 1
    %p539 = por %p537, %p538
    %p541 = scmp.ne.s32.totalorder %s526, %s540
    %p542 = scmp.eq.s32.totalorder %s39, 0
    %p543 = por %p541, %p542
    %s545 = sadd.s32 %s544, 1
    %p548 = scmp.eq.s32.totalorder %s33, 1
    %p549 = scmp.ne.s32.totalorder %s544, %s546
    %p550 = scmp.eq.s32.totalorder %s33, 0
    %p551 = por %p549, %p550
    %p552 = scmp.ne.s32.totalorder %s544, %s546
    %p553 = scmp.eq.s32.totalorder %s38, 1
    %p554 = por %p552, %p553
    %p555 = scmp.ne.s32.totalorder %s546, %s547
    %p556 = scmp.eq.s32.totalorder %s38, 0
    %p557 = por %p555, %p556
    %p558 = scmp.ne.s32.totalorder %s546, %s547
    %p559 = scmp.eq.s32.totalorder %s39, 1
    %p560 = por %p558, %p559
    %p562 = scmp.ne.s32.totalorder %s547, %s561
    %p563 = scmp.eq.s32.totalorder %s39, 0
    %p564 = por %p562, %p563
    %s566 = sadd.s32 %s565, 1
    %p569 = scmp.eq.s32.totalorder %s33, 1
    %p570 = scmp.ne.s32.totalorder %s565, %s567
    %p571 = scmp.eq.s32.totalorder %s33, 0
    %p572 = por %p570, %p571
    %p573 = scmp.ne.s32.totalorder %s565, %s567
    %p574 = scmp.eq.s32.totalorder %s38, 1
    %p575 = por %p573, %p574
    %p576 = scmp.ne.s32.totalorder %s567, %s568
    %p577 = scmp.eq.s32.totalorder %s38, 0
    %p578 = por %p576, %p577
    %p579 = scmp.ne.s32.totalorder %s567, %s568
    %p580 = scmp.eq.s32.totalorder %s39, 1
    %p581 = por %p579, %p580
    %p583 = scmp.ne.s32.totalorder %s568, %s582
    %p584 = scmp.eq.s32.totalorder %s39, 0
    %p585 = por %p583, %p584
    %s587 = sadd.s32 %s586, 1
    %p590 = scmp.eq.s32.totalorder %s33, 1
    %p591 = scmp.ne.s32.totalorder %s586, %s588
    %p592 = scmp.eq.s32.totalorder %s33, 0
    %p593 = por %p591, %p592
    %p594 = scmp.ne.s32.totalorder %s586, %s588
    %p595 = scmp.eq.s32.totalorder %s38, 1
    %p596 = por %p594, %p595
    %p597 = scmp.ne.s32.totalorder %s588, %s589
    %p598 = scmp.eq.s32.totalorder %s38, 0
    %p599 = por %p597, %p598
    %p600 = scmp.ne.s32.totalorder %s588, %s589
    %p601 = scmp.eq.s32.totalorder %s39, 1
    %p602 = por %p600, %p601
    %p604 = scmp.ne.s32.totalorder %s589, %s603
    %p605 = scmp.eq.s32.totalorder %s39, 0
    %p606 = por %p604, %p605
    %s608 = sadd.s32 %s607, 1
    %p611 = scmp.eq.s32.totalorder %s33, 1
    %p612 = scmp.ne.s32.totalorder %s607, %s609
    %p613 = scmp.eq.s32.totalorder %s33, 0
    %p614 = por %p612, %p613
    %p615 = scmp.ne.s32.totalorder %s607, %s609
    %p616 = scmp.eq.s32.totalorder %s38, 1
    %p617 = por %p615, %p616
    %p618 = scmp.ne.s32.totalorder %s609, %s610
    %p619 = scmp.eq.s32.totalorder %s38, 0
    %p620 = por %p618, %p619
    %p621 = scmp.ne.s32.totalorder %s609, %s610
    %p622 = scmp.eq.s32.totalorder %s39, 1
    %p623 = por %p621, %p622
    %p625 = scmp.ne.s32.totalorder %s610, %s624
    %p626 = scmp.eq.s32.totalorder %s39, 0
    %p627 = por %p625, %p626
    %s628 = ssub.s32 %s33, %s40
    %p629 = scmp.eq.s32.totalorder %s628, 0
    %s631 = sadd.s32 %s630, 1
    %s632 = scalar_select %p629, %s630, %s631
    %p635 = pneg %p629
    %p636 = scmp.eq.s32.totalorder %s33, 1
    %p637 = por %p635, %p636
    %p638 = scmp.ne.s32.totalorder %s630, %s633
    %p639 = scmp.eq.s32.totalorder %s33, 0
    %p640 = por %p638, %p639
    %p641 = scmp.ne.s32.totalorder %s630, %s633
    %p642 = scmp.eq.s32.totalorder %s38, 1
    %p643 = por %p641, %p642
    %p644 = scmp.ne.s32.totalorder %s633, %s634
    %p645 = scmp.eq.s32.totalorder %s38, 0
    %p646 = por %p644, %p645
    %p647 = scmp.ne.s32.totalorder %s633, %s634
    %p648 = scmp.eq.s32.totalorder %s39, 1
    %p649 = por %p647, %p648
    %p651 = scmp.ne.s32.totalorder %s634, %s650
    %p652 = scmp.eq.s32.totalorder %s39, 0
    %p653 = por %p651, %p652
    %p654 = scmp.le.s32.totalorder 1, %s33
    %p655 = scmp.lt.s32.totalorder %s33, 3
    %p656 = pnand %p654, %p655
    %p657 = pneg %p656
    // Predicated region
    $region9: #{transformer_cslr_forward.6} parent=5 // pred_check
      _
    $region10: #{transformer_cslr_forward.6} parent=5 // pred_check_branch
      %659 = sbr.rel (%p656) target = $region12
    $region11: #{transformer_cslr_forward.6} parent=5 // pred_region
      %s660 = ssub.s32 %s33, 1
      // Predicated region
      $region13: #{transformer_cslr_forward.6} parent=11 // pred_check
        %p661 = pneg %p132
      $region14: #{transformer_cslr_forward.6} parent=11 // pred_check_branch
        %663 = sbr.rel (%p661) target = $region16
      $region15: #{transformer_cslr_forward.6} parent=11 // pred_region
        _
      $region16: #{transformer_cslr_forward.6} parent=11 // pred_fallthru
        _
      // Predicated region
      $region17: #{transformer_cslr_forward.6} parent=11 // pred_check
        %p664 = pneg %p179
      $region18: #{transformer_cslr_forward.6} parent=11 // pred_check_branch
        %666 = sbr.rel (%p664) target = $region20
      $region19: #{transformer_cslr_forward.6} parent=11 // pred_region
        _
      $region20: #{transformer_cslr_forward.6} parent=11 // pred_fallthru
        _
      // Predicated region
      $region21: #{transformer_cslr_forward.6} parent=11 // pred_check
        %p667 = pneg %p200
      $region22: #{transformer_cslr_forward.6} parent=11 // pred_check_branch
        %669 = sbr.rel (%p667) target = $region24
      $region23: #{transformer_cslr_forward.6} parent=11 // pred_region
        _
      $region24: #{transformer_cslr_forward.6} parent=11 // pred_fallthru
        _
      // Predicated region
      $region25: #{transformer_cslr_forward.6} parent=11 // pred_check
        %p670 = pneg %p221
      $region26: #{transformer_cslr_forward.6} parent=11 // pred_check_branch
        %672 = sbr.rel (%p670) target = $region28
      $region27: #{transformer_cslr_forward.6} parent=11 // pred_region
        _
      $region28: #{transformer_cslr_forward.6} parent=11 // pred_fallthru
        _
      // Predicated region
      $region29: #{transformer_cslr_forward.6} parent=11 // pred_check
        %p673 = pneg %p242
      $region30: #{transformer_cslr_forward.6} parent=11 // pred_check_branch
        %675 = sbr.rel (%p673) target = $region32
      $region31: #{transformer_cslr_forward.6} parent=11 // pred_region
        _
      $region32: #{transformer_cslr_forward.6} parent=11 // pred_fallthru
        _
      // Predicated region
      $region33: #{transformer_cslr_forward.6} parent=11 // pred_check
        %p676 = pneg %p263
      $region34: #{transformer_cslr_forward.6} parent=11 // pred_check_branch
        %678 = sbr.rel (%p676) target = $region36
      $region35: #{transformer_cslr_forward.6} parent=11 // pred_region
        _
      $region36: #{transformer_cslr_forward.6} parent=11 // pred_fallthru
        _
      // Predicated region
      $region37: #{transformer_cslr_forward.6} parent=11 // pred_check
        %p679 = pneg %p284
      $region38: #{transformer_cslr_forward.6} parent=11 // pred_check_branch
        %681 = sbr.rel (%p679) target = $region40
      $region39: #{transformer_cslr_forward.6} parent=11 // pred_region
        _
      $region40: #{transformer_cslr_forward.6} parent=11 // pred_fallthru
        _
      // Predicated region
      $region41: #{transformer_cslr_forward.6} parent=11 // pred_check
        %p682 = pneg %p305
      $region42: #{transformer_cslr_forward.6} parent=11 // pred_check_branch
        %684 = sbr.rel (%p682) target = $region44
      $region43: #{transformer_cslr_forward.6} parent=11 // pred_region
        _
      $region44: #{transformer_cslr_forward.6} parent=11 // pred_fallthru
        _
      // Predicated region
      $region45: #{transformer_cslr_forward.6} parent=11 // pred_check
        %p685 = pneg %p326
      $region46: #{transformer_cslr_forward.6} parent=11 // pred_check_branch
        %687 = sbr.rel (%p685) target = $region48
      $region47: #{transformer_cslr_forward.6} parent=11 // pred_region
        _
      $region48: #{transformer_cslr_forward.6} parent=11 // pred_fallthru
        _
      // Predicated region
      $region49: #{transformer_cslr_forward.6} parent=11 // pred_check
        %p688 = pneg %p347
      $region50: #{transformer_cslr_forward.6} parent=11 // pred_check_branch
        %690 = sbr.rel (%p688) target = $region52
      $region51: #{transformer_cslr_forward.6} parent=11 // pred_region
        _
      $region52: #{transformer_cslr_forward.6} parent=11 // pred_fallthru
        _
      // Predicated region
      $region53: #{transformer_cslr_forward.6} parent=11 // pred_check
        %p691 = pneg %p368
      $region54: #{transformer_cslr_forward.6} parent=11 // pred_check_branch
        %693 = sbr.rel (%p691) target = $region56
      $region55: #{transformer_cslr_forward.6} parent=11 // pred_region
        _
      $region56: #{transformer_cslr_forward.6} parent=11 // pred_fallthru
        _
      // Predicated region
      $region57: #{transformer_cslr_forward.6} parent=11 // pred_check
        %p694 = pneg %p389
      $region58: #{transformer_cslr_forward.6} parent=11 // pred_check_branch
        %696 = sbr.rel (%p694) target = $region60
      $region59: #{transformer_cslr_forward.6} parent=11 // pred_region
        _
      $region60: #{transformer_cslr_forward.6} parent=11 // pred_fallthru
        _
      // Predicated region
      $region61: #{transformer_cslr_forward.6} parent=11 // pred_check
        %p697 = pneg %p410
      $region62: #{transformer_cslr_forward.6} parent=11 // pred_check_branch
        %699 = sbr.rel (%p697) target = $region64
      $region63: #{transformer_cslr_forward.6} parent=11 // pred_region
        _
      $region64: #{transformer_cslr_forward.6} parent=11 // pred_fallthru
        _
      // Predicated region
      $region65: #{transformer_cslr_forward.6} parent=11 // pred_check
        %p700 = pneg %p431
      $region66: #{transformer_cslr_forward.6} parent=11 // pred_check_branch
        %702 = sbr.rel (%p700) target = $region68
      $region67: #{transformer_cslr_forward.6} parent=11 // pred_region
        _
      $region68: #{transformer_cslr_forward.6} parent=11 // pred_fallthru
        _
      // Predicated region
      $region69: #{transformer_cslr_forward.6} parent=11 // pred_check
        %p703 = pneg %p452
      $region70: #{transformer_cslr_forward.6} parent=11 // pred_check_branch
        %705 = sbr.rel (%p703) target = $region72
      $region71: #{transformer_cslr_forward.6} parent=11 // pred_region
        _
      $region72: #{transformer_cslr_forward.6} parent=11 // pred_fallthru
        _
      // Predicated region
      $region73: #{transformer_cslr_forward.6} parent=11 // pred_check
        %p706 = pneg %p473
      $region74: #{transformer_cslr_forward.6} parent=11 // pred_check_branch
        %708 = sbr.rel (%p706) target = $region76
      $region75: #{transformer_cslr_forward.6} parent=11 // pred_region
        _
      $region76: #{transformer_cslr_forward.6} parent=11 // pred_fallthru
        _
      // Predicated region
      $region77: #{transformer_cslr_forward.6} parent=11 // pred_check
        %p709 = pneg %p494
      $region78: #{transformer_cslr_forward.6} parent=11 // pred_check_branch
        %711 = sbr.rel (%p709) target = $region80
      $region79: #{transformer_cslr_forward.6} parent=11 // pred_region
        _
      $region80: #{transformer_cslr_forward.6} parent=11 // pred_fallthru
        _
      // Predicated region
      $region81: #{transformer_cslr_forward.6} parent=11 // pred_check
        %p712 = pneg %p515
      $region82: #{transformer_cslr_forward.6} parent=11 // pred_check_branch
        %714 = sbr.rel (%p712) target = $region84
      $region83: #{transformer_cslr_forward.6} parent=11 // pred_region
        _
      $region84: #{transformer_cslr_forward.6} parent=11 // pred_fallthru
        _
      // Predicated region
      $region85: #{transformer_cslr_forward.6} parent=11 // pred_check
        %p715 = pneg %p536
      $region86: #{transformer_cslr_forward.6} parent=11 // pred_check_branch
        %717 = sbr.rel (%p715) target = $region88
      $region87: #{transformer_cslr_forward.6} parent=11 // pred_region
        _
      $region88: #{transformer_cslr_forward.6} parent=11 // pred_fallthru
        _
      // Predicated region
      $region89: #{transformer_cslr_forward.6} parent=11 // pred_check
        %p718 = pneg %p557
      $region90: #{transformer_cslr_forward.6} parent=11 // pred_check_branch
        %720 = sbr.rel (%p718) target = $region92
      $region91: #{transformer_cslr_forward.6} parent=11 // pred_region
        _
      $region92: #{transformer_cslr_forward.6} parent=11 // pred_fallthru
        _
      // Predicated region
      $region93: #{transformer_cslr_forward.6} parent=11 // pred_check
        %p721 = pneg %p578
      $region94: #{transformer_cslr_forward.6} parent=11 // pred_check_branch
        %723 = sbr.rel (%p721) target = $region96
      $region95: #{transformer_cslr_forward.6} parent=11 // pred_region
        _
      $region96: #{transformer_cslr_forward.6} parent=11 // pred_fallthru
        _
      // Predicated region
      $region97: #{transformer_cslr_forward.6} parent=11 // pred_check
        %p724 = pneg %p599
      $region98: #{transformer_cslr_forward.6} parent=11 // pred_check_branch
        %726 = sbr.rel (%p724) target = $region100
      $region99: #{transformer_cslr_forward.6} parent=11 // pred_region
        _
      $region100: #{transformer_cslr_forward.6} parent=11 // pred_fallthru
        _
      // Predicated region
      $region101: #{transformer_cslr_forward.6} parent=11 // pred_check
        %p727 = pneg %p620
      $region102: #{transformer_cslr_forward.6} parent=11 // pred_check_branch
        %729 = sbr.rel (%p727) target = $region104
      $region103: #{transformer_cslr_forward.6} parent=11 // pred_region
        _
      $region104: #{transformer_cslr_forward.6} parent=11 // pred_fallthru
        _
    $region12: #{transformer_cslr_forward.6} parent=5 // pred_fallthru
      _
    %p730 = scmp.lt.s32.totalorder %s33, 2
    // Predicated region
    $region105: #{transformer_cslr_forward.6} parent=5 // pred_check
      %p731 = pneg %p730
    $region106: #{transformer_cslr_forward.6} parent=5 // pred_check_branch
      %733 = sbr.rel (%p731) target = $region108
    $region107: #{transformer_cslr_forward.6} parent=5 // pred_region
      // Predicated region
      $region109: #{transformer_cslr_forward.6} parent=107 // pred_check
        %p734 = pneg %p53
      $region110: #{transformer_cslr_forward.6} parent=107 // pred_check_branch
        %736 = sbr.rel (%p734) target = $region112
      $region111: #{transformer_cslr_forward.6} parent=107 // pred_region
        %p737 = scmp.lt.s32.totalorder %s33, 1
        %s738 = scalar_select %p737, %s33, 1
        %s739 = smul.addr %s738, 8
        %s740 = scalar_lea.vmem %s0, %s739
      $region112: #{transformer_cslr_forward.6} parent=107 // pred_fallthru
        _
      // Predicated region
      $region113: #{transformer_cslr_forward.6} parent=107 // pred_check
        %p741 = pneg %p79
      $region114: #{transformer_cslr_forward.6} parent=107 // pred_check_branch
        %743 = sbr.rel (%p741) target = $region116
      $region115: #{transformer_cslr_forward.6} parent=107 // pred_region
        %p744 = scmp.lt.s32.totalorder %s33, 1
        %s745 = scalar_select %p744, %s33, 1
        %s746 = smul.addr %s745, 2
        %s747 = smul.addr %s746, 8
        %s748 = scalar_lea.vmem %s1, %s747
      $region116: #{transformer_cslr_forward.6} parent=107 // pred_fallthru
        _
      // Predicated region
      $region117: #{transformer_cslr_forward.6} parent=107 // pred_check
        %p749 = pneg %p105
      $region118: #{transformer_cslr_forward.6} parent=107 // pred_check_branch
        %751 = sbr.rel (%p749) target = $region120
      $region119: #{transformer_cslr_forward.6} parent=107 // pred_region
        %p752 = scmp.lt.s32.totalorder %s33, 1
        %s753 = scalar_select %p752, %s33, 1
        %s754 = scalar_lea.vmem %s2, %s753
      $region120: #{transformer_cslr_forward.6} parent=107 // pred_fallthru
        _
      // Predicated region
      $region121: #{transformer_cslr_forward.6} parent=107 // pred_check
        %p755 = pneg %p152
      $region122: #{transformer_cslr_forward.6} parent=107 // pred_check_branch
        %757 = sbr.rel (%p755) target = $region124
      $region123: #{transformer_cslr_forward.6} parent=107 // pred_region
        %p758 = scmp.lt.s32.totalorder %s33, 1
        %s759 = scalar_select %p758, %s33, 1
        %s760 = scalar_lea.vmem %s4, %s759
      $region124: #{transformer_cslr_forward.6} parent=107 // pred_fallthru
        _
    $region108: #{transformer_cslr_forward.6} parent=5 // pred_fallthru
      _
    %p761 = scmp.le.s32.totalorder 1, %s33
    %p762 = scmp.lt.s32.totalorder %s33, 3
    %p763 = pnand %p761, %p762
    %p764 = pneg %p763
    // Predicated region
    $region125: #{transformer_cslr_forward.6} parent=5 // pred_check
      _
    $region126: #{transformer_cslr_forward.6} parent=5 // pred_check_branch
      %766 = sbr.rel (%p763) target = $region128
    $region127: #{transformer_cslr_forward.6} parent=5 // pred_region
      %s767 = ssub.s32 %s33, 1
      %p768 = scmp.lt.s32.totalorder %s38, 1
      %s769 = scalar_select %p768, %s38, 1
      %s770 = smul.addr %s769, 8
      %s771 = scalar_lea.vmem %s0, %s770
      %p772 = pneg %p59
      %p773 = pneg %p56
      %p774 = scmp.lt.s32.totalorder %s38, 1
      %s775 = scalar_select %p774, %s38, 1
      %s776 = smul.addr %s775, 2
      %s777 = smul.addr %s776, 8
      %s778 = scalar_lea.vmem %s1, %s777
      %p779 = pneg %p85
      %p780 = pneg %p82
      %p781 = scmp.lt.s32.totalorder %s38, 1
      %s782 = scalar_select %p781, %s38, 1
      %s783 = scalar_lea.vmem %s2, %s782
      %p784 = pneg %p111
      %p785 = pneg %p108
      %p786 = pneg %p132
      %p787 = pneg %p129
      %p788 = scmp.lt.s32.totalorder %s38, 1
      %s789 = scalar_select %p788, %s38, 1
      %s790 = scalar_lea.vmem %s4, %s789
      %p791 = pneg %p158
      %p792 = pneg %p155
      %p793 = pneg %p179
      %p794 = pneg %p176
      %p795 = pneg %p200
      %p796 = pneg %p197
      %p797 = pneg %p221
      %p798 = pneg %p218
      %p799 = pneg %p242
      %p800 = pneg %p239
      %p801 = pneg %p263
      %p802 = pneg %p260
      %p803 = pneg %p284
      %p804 = pneg %p281
      %p805 = pneg %p305
      %p806 = pneg %p302
      %p807 = pneg %p326
      %p808 = pneg %p323
      %p809 = pneg %p347
      %p810 = pneg %p344
      %p811 = pneg %p368
      %p812 = pneg %p365
      %p813 = pneg %p389
      %p814 = pneg %p386
      %p815 = pneg %p410
      %p816 = pneg %p407
      %p817 = pneg %p431
      %p818 = pneg %p428
      %p819 = pneg %p452
      %p820 = pneg %p449
      %p821 = pneg %p473
      %p822 = pneg %p470
      %p823 = pneg %p494
      %p824 = pneg %p491
      %p825 = pneg %p515
      %p826 = pneg %p512
      %p827 = pneg %p536
      %p828 = pneg %p533
      %p829 = pneg %p557
      %p830 = pneg %p554
      %p831 = pneg %p578
      %p832 = pneg %p575
      %p833 = pneg %p599
      %p834 = pneg %p596
      %p835 = pneg %p620
      %p836 = pneg %p617
      %p837 = pneg %p646
      %p838 = pneg %p643
      %p839 = scmp.lt.s32.totalorder %s38, 1
      %s840 = scalar_select %p839, %s38, 1
      %s841 = smul.addr %s840, 8
      %s842 = scalar_lea.vmem %s27, %s841
      %p843 = scmp.lt.s32.totalorder %s38, 1
      %s844 = scalar_select %p843, %s38, 1
      %s845 = smul.addr %s844, 8
      %s846 = scalar_lea.vmem %s0, %s845
      %p847 = scmp.lt.s32.totalorder %s38, 1
      %s848 = scalar_select %p847, %s38, 1
      %s849 = smul.addr %s848, 2
      %s850 = smul.addr %s849, 8
      %s851 = scalar_lea.vmem %s1, %s850
      %p852 = scmp.lt.s32.totalorder %s38, 1
      %s853 = scalar_select %p852, %s38, 1
      %s854 = scalar_lea.vmem %s2, %s853
      %p855 = scmp.lt.s32.totalorder %s38, 1
      %s856 = scalar_select %p855, %s38, 1
      %s857 = scalar_lea.vmem %s4, %s856
      %p858 = scmp.lt.s32.totalorder %s38, 1
      %s859 = scalar_select %p858, %s38, 1
      %s860 = smul.addr %s859, 8
      %s861 = scalar_lea.vmem %s27, %s860
      %v863 = vld [vmem:[%s3] sm:$0xff]
      %v864 = vld [vmem:[%s846] sm:$0xff]
      %v865 = vld [vmem:[%s5] sm:$0x1]
      %v866 = vld [vmem:[%s6] sm:$0x1]
      %vm867 = vcmask 261120
      %v868 = vsel %vm867, %v864, 0.0
      %869 = vadd.xlane.f32.xlu0 %v868
      %v870 = vpop.xlane.xlu0 %869
      %v871 = vrcp.pop 32.0
      %v872 = vmul.f32 %v870, %v871
      %v873 = vsub.f32 %v864, %v872
      %v874 = vmul.f32 %v873, %v873
      %v875 = vsel %vm867, %v874, 0.0
      %876 = vadd.xlane.f32.xlu0 %v875
      %v877 = vpop.xlane.xlu0 %876
      %v878 = vmul.f32 %v877, %v871
      %v879 = vadd.f32 %v878, 1e-05
      %v880 = vrsqrt.pop %v879
      %v881 = vmul.f32 %v873, %v880
      %v883 = vlaneseq
      %v884 = vshrl.u32 %v883, 7
      %v885 = vsub.s32 0, %v884
      %v886 = vrot.slane %v865, %v885
      %v888 = vmul.f32 %v881, %v886
      %v890 = vlaneseq
      %v891 = vshrl.u32 %v890, 7
      %v892 = vsub.s32 0, %v891
      %v893 = vrot.slane %v866, %v892
      %v895 = vadd.f32 %v888, %v893
      %v896 = vpack.c.bf16 %v895, %v895
      %v897 = vld [vmem:[%s7] sm:$0xf]
      %v898 = vld [vmem:[%s7 + $0x4] sm:$0xf]
      %v899 = vld [vmem:[%s7 + $0x8] sm:$0xf]
      %v900 = vld [vmem:[%s7 + $0xc] sm:$0xf]
      %v901 = vld [vmem:[%s8] sm:$0x1]
      %v903 = vlaneseq
      %v904 = vshrl.u32 %v903, 7
      %v905 = vsub.s32 0, %v904
      %v906 = vrot.slane %v901, %v905
      %v912 = vunpack.c.l.b16 %v897
      %v913 = vunpack.c.l.b16 %v898
      %v914 = vunpack.c.l.b16 %v899
      %v915 = vunpack.c.l.b16 %v900
      %v916 = vpack.c.b16 %v913, %v912
      %v917 = vpack.c.b16 %v915, %v914
      %v921 = vsel %vm867, %v896, 0
      %923 = vmatprep.subr.bf16.mxu0 0
      %924 = vmatpush1.bf16.msra.mxu0 0
      %925 = vmatprep.subr.bf16.mxu0 0
      %926 = vmatpush1.bf16.msra.mxu0 0
      %927 = vmatprep.subr.bf16.mxu0 0
      %928 = vmatpush1.bf16.msra.mxu0 0
      %929 = vmatprep.subr.bf16.mxu0 0
      %930 = vmatpush1.bf16.msra.mxu0 0
      %931 = vmatprep.subr.bf16.mxu0 0
      %932 = vmatpush1.bf16.msra.mxu0 0
      %933 = vmatprep.subr.bf16.mxu0 0
      %934 = vmatpush1.bf16.msra.mxu0 0
      %935 = vmatprep.subr.bf16.mxu0 0
      %936 = vmatpush1.bf16.msra.mxu0 %v917
      %937 = vmatprep.subr.bf16.mxu0 0
      %938 = vmatpush1.bf16.msra.mxu0 %v916
      %939 = vmatprep.subr.bf16.mxu0 0
      %940 = vmatpush2.bf16.msra.mxu0 0
      %941 = vmatprep.subr.bf16.mxu0 0
      %942 = vmatpush2.bf16.msra.mxu0 0
      %943 = vmatprep.subr.bf16.mxu0 0
      %944 = vmatpush2.bf16.msra.mxu0 0
      %945 = vmatprep.subr.bf16.mxu0 0
      %946 = vmatpush2.bf16.msra.mxu0 0
      %947 = vmatprep.subr.bf16.mxu0 0
      %948 = vmatpush2.bf16.msra.mxu0 0
      %949 = vmatprep.subr.bf16.mxu0 0
      %950 = vmatpush2.bf16.msra.mxu0 0
      %951 = vmatprep.subr.bf16.mxu0 0
      %952 = vmatpush2.bf16.msra.mxu0 0
      %953 = vmatprep.subr.bf16.mxu0 0
      %954 = vmatpush2.bf16.msra.mxu0 0
      %955 = vmatprep.mubr.bf16.mxu0 0
      %956 = vmatmul.mubr.bf16.gmra.mxu0 %v921
      %v957 = vpop.f32.mrf.mxu0
      %v958 = vadd.f32 %v906, %v957
      %v959 = vpop.f32.mrf.mxu0
      %v960 = vpop.f32.mrf.mxu0
      %v961 = vpop.f32.mrf.mxu0
      %962 = vdwg.mxu0
      %v963 = vld [vmem:[%s854] sm:$0x1]
      %v964 = vpack.c.bf16 %v958, %v958
      %v966 = vlaneseq
      %v967 = vshrl.u32 %v966, 7
      %v968 = vsub.s32 0, %v967
      %v969 = vrot.slane %v963, %v968
      %972 = vrot.lane.b32.xlu0 %v964, 96
      %v973 = vpop.permute.xlu0 %972
      %v975 = vsel %vm867, %v964, 0
      %v978 = vsel %vm867, %v973, 0
      %980 = vmatprep.subr.bf16.mxu0 0
      %981 = vmatpush1.bf16.xpose.msra.mxu0 0
      %982 = vmatprep.subr.bf16.mxu0 0
      %983 = vmatpush1.bf16.xpose.msra.mxu0 0
      %984 = vmatprep.subr.bf16.mxu0 0
      %985 = vmatpush1.bf16.xpose.msra.mxu0 0
      %986 = vmatprep.subr.bf16.mxu0 0
      %987 = vmatpush1.bf16.xpose.msra.mxu0 0
      %988 = vmatprep.subr.bf16.mxu0 0
      %989 = vmatpush1.bf16.xpose.msra.mxu0 0
      %990 = vmatprep.subr.bf16.mxu0 0
      %991 = vmatpush1.bf16.xpose.msra.mxu0 0
      %992 = vmatprep.subr.bf16.mxu0 0
      %993 = vmatpush1.bf16.xpose.msra.mxu0 0
      %994 = vmatprep.subr.bf16.mxu0 0
      %995 = vmatpush1.bf16.xpose.msra.mxu0 %v978
      %996 = vmatprep.subr.bf16.mxu0 0
      %997 = vmatpush2.bf16.xpose.msra.mxu0 0
      %998 = vmatprep.subr.bf16.mxu0 0
      %999 = vmatpush2.bf16.xpose.msra.mxu0 0
      %1000 = vmatprep.subr.bf16.mxu0 0
      %1001 = vmatpush2.bf16.xpose.msra.mxu0 0
      %1002 = vmatprep.subr.bf16.mxu0 0
      %1003 = vmatpush2.bf16.xpose.msra.mxu0 0
      %1004 = vmatprep.subr.bf16.mxu0 0
      %1005 = vmatpush2.bf16.xpose.msra.mxu0 0
      %1006 = vmatprep.subr.bf16.mxu0 0
      %1007 = vmatpush2.bf16.xpose.msra.mxu0 0
      %1008 = vmatprep.subr.bf16.mxu0 0
      %1009 = vmatpush2.bf16.xpose.msra.mxu0 0
      %1010 = vmatprep.subr.bf16.mxu0 0
      %1011 = vmatpush2.bf16.xpose.msra.mxu0 0
      %1012 = vmatprep.mubr.bf16.mxu0 0
      %1013 = vmatmul.mubr.bf16.gmra.mxu0 %v975
      %v1014 = vpop.f32.mrf.mxu0
      %v1015 = vadd.f32 %v969, %v1014
      %v1016 = vpop.f32.mrf.mxu0
      %v1017 = vpop.f32.mrf.mxu0
      %v1018 = vpop.f32.mrf.mxu0
      %1019 = vdwg.mxu0
      %v1020 = vadd.f32 %v1015, %v863
      %vm1021 = vcmask 64512
      %v1022 = vsel %vm1021, %v1020, -inf
      %1023 = vmax.xlane.f32.xlu0 %v1022
      %v1024 = vpop.xlane.xlu0 %1023
      %v1025 = vsub.f32 %v1020, %v1024
      %v1026 = vmul.f32 %v1025, 1.442695
      %v1027 = vpow.pop %v1026
      %v1028 = vsel %vm1021, %v1027, 0.0
      %1029 = vadd.xlane.f32.xlu0 %v1028
      %v1030 = vpop.xlane.xlu0 %1029
      %v1031 = vpack.c.bf16 %v1027, %v1027
      %1032 = vrot.lane.b32.xlu0 %v964, 64
      %v1033 = vpop.permute.xlu0 %1032
      %v1035 = vsel %vm1021, %v1031, 0
      %vm1037 = vcmask 1043456
      %v1039 = vsel %vm1037, %v1033, 0
      %1041 = vmatprep.subr.bf16.mxu0 0
      %1042 = vmatpush1.bf16.msra.mxu0 0
      %1043 = vmatprep.subr.bf16.mxu0 0
      %1044 = vmatpush1.bf16.msra.mxu0 0
      %1045 = vmatprep.subr.bf16.mxu0 0
      %1046 = vmatpush1.bf16.msra.mxu0 0
      %1047 = vmatprep.subr.bf16.mxu0 0
      %1048 = vmatpush1.bf16.msra.mxu0 0
      %1049 = vmatprep.subr.bf16.mxu0 0
      %1050 = vmatpush1.bf16.msra.mxu0 0
      %1051 = vmatprep.subr.bf16.mxu0 0
      %1052 = vmatpush1.bf16.msra.mxu0 0
      %1053 = vmatprep.subr.bf16.mxu0 0
      %1054 = vmatpush1.bf16.msra.mxu0 0
      %1055 = vmatprep.subr.bf16.mxu0 0
      %1056 = vmatpush1.bf16.msra.mxu0 %v1039
      %1057 = vmatprep.subr.bf16.mxu0 0
      %1058 = vmatpush2.bf16.msra.mxu0 0
      %1059 = vmatprep.subr.bf16.mxu0 0
      %1060 = vmatpush2.bf16.msra.mxu0 0
      %1061 = vmatprep.subr.bf16.mxu0 0
      %1062 = vmatpush2.bf16.msra.mxu0 0
      %1063 = vmatprep.subr.bf16.mxu0 0
      %1064 = vmatpush2.bf16.msra.mxu0 0
      %1065 = vmatprep.subr.bf16.mxu0 0
      %1066 = vmatpush2.bf16.msra.mxu0 0
      %1067 = vmatprep.subr.bf16.mxu0 0
      %1068 = vmatpush2.bf16.msra.mxu0 0
      %1069 = vmatprep.subr.bf16.mxu0 0
      %1070 = vmatpush2.bf16.msra.mxu0 0
      %1071 = vmatprep.subr.bf16.mxu0 0
      %1072 = vmatpush2.bf16.msra.mxu0 0
      %1073 = vmatprep.mubr.bf16.mxu0 0
      %1074 = vmatmul.mubr.bf16.gmra.mxu0 %v1035
      %v1075 = vpop.f32.mrf.mxu0
      %v1076 = vadd.f32 0.0, %v1075
      %v1077 = vpop.f32.mrf.mxu0
      %v1078 = vpop.f32.mrf.mxu0
      %v1079 = vpop.f32.mrf.mxu0
      %1080 = vdwg.mxu0
      %v1081 = vrcp.pop %v1030
      %v1082 = vmul.f32 %v1076, %v1081
      %v1083 = vpack.c.bf16 %v1082, %v1082
      %v1084 = vld [vmem:[%s9] sm:$0xf]
      %v1085 = vld [vmem:[%s9 + $0x4] sm:$0xf]
      %v1086 = vld [vmem:[%s9 + $0x8] sm:$0xf]
      %v1087 = vld [vmem:[%s9 + $0xc] sm:$0xf]
      %v1092 = vunpack.c.l.b16 %v1084
      %v1093 = vunpack.c.l.b16 %v1085
      %v1094 = vunpack.c.l.b16 %v1086
      %v1095 = vunpack.c.l.b16 %v1087
      %v1096 = vpack.c.b16 %v1093, %v1092
      %v1097 = vpack.c.b16 %v1095, %v1094
      %v1101 = vsel %vm867, %v1083, 0
      %1103 = vmatprep.subr.bf16.mxu0 0
      %1104 = vmatpush1.bf16.msra.mxu0 0
      %1105 = vmatprep.subr.bf16.mxu0 0
      %1106 = vmatpush1.bf16.msra.mxu0 0
      %1107 = vmatprep.subr.bf16.mxu0 0
      %1108 = vmatpush1.bf16.msra.mxu0 0
      %1109 = vmatprep.subr.bf16.mxu0 0
      %1110 = vmatpush1.bf16.msra.mxu0 0
      %1111 = vmatprep.subr.bf16.mxu0 0
      %1112 = vmatpush1.bf16.msra.mxu0 0
      %1113 = vmatprep.subr.bf16.mxu0 0
      %1114 = vmatpush1.bf16.msra.mxu0 0
      %1115 = vmatprep.subr.bf16.mxu0 0
      %1116 = vmatpush1.bf16.msra.mxu0 %v1097
      %1117 = vmatprep.subr.bf16.mxu0 0
      %1118 = vmatpush1.bf16.msra.mxu0 %v1096
      %1119 = vmatprep.subr.bf16.mxu0 0
      %1120 = vmatpush2.bf16.msra.mxu0 0
      %1121 = vmatprep.subr.bf16.mxu0 0
      %1122 = vmatpush2.bf16.msra.mxu0 0
      %1123 = vmatprep.subr.bf16.mxu0 0
      %1124 = vmatpush2.bf16.msra.mxu0 0
      %1125 = vmatprep.subr.bf16.mxu0 0
      %1126 = vmatpush2.bf16.msra.mxu0 0
      %1127 = vmatprep.subr.bf16.mxu0 0
      %1128 = vmatpush2.bf16.msra.mxu0 0
      %1129 = vmatprep.subr.bf16.mxu0 0
      %1130 = vmatpush2.bf16.msra.mxu0 0
      %1131 = vmatprep.subr.bf16.mxu0 0
      %1132 = vmatpush2.bf16.msra.mxu0 0
      %1133 = vmatprep.subr.bf16.mxu0 0
      %1134 = vmatpush2.bf16.msra.mxu0 0
      %1135 = vmatprep.mubr.bf16.mxu0 0
      %1136 = vmatmul.mubr.bf16.gmra.mxu0 %v1101
      %v1137 = vpop.f32.mrf.mxu0
      %v1138 = vadd.f32 0.0, %v1137
      %v1139 = vpop.f32.mrf.mxu0
      %v1140 = vpop.f32.mrf.mxu0
      %v1141 = vpop.f32.mrf.mxu0
      %1142 = vdwg.mxu0
      %v1143 = vadd.f32 %v864, %v1138
      %v1144 = vld [vmem:[%s10] sm:$0x1]
      %v1146 = vlaneseq
      %v1147 = vshrl.u32 %v1146, 7
      %v1148 = vsub.s32 0, %v1147
      %v1149 = vrot.slane %v1144, %v1148
      %v1151 = vadd.f32 %v1143, %v1149
      %v1152 = vld [vmem:[%s851] sm:$0xff]
      %v1153 = vld [vmem:[%s851 + $0x8] sm:$0xff]
      %v1154 = vld [vmem:[%s11] sm:$0x1]
      %v1155 = vld [vmem:[%s12] sm:$0x1]
      %v1156 = vsel %vm867, %v1152, 0.0
      %1157 = vadd.xlane.f32.xlu0 %v1156
      %v1158 = vpop.xlane.xlu0 %1157
      %v1159 = vsel %vm867, %v1153, 0.0
      %1160 = vadd.xlane.f32.xlu0 %v1159
      %v1161 = vpop.xlane.xlu0 %1160
      %v1162 = vmul.f32 %v1158, %v871
      %v1163 = vmul.f32 %v1161, %v871
      %v1164 = vsub.f32 %v1152, %v1162
      %v1165 = vsub.f32 %v1153, %v1163
      %v1166 = vmul.f32 %v1164, %v1164
      %v1167 = vmul.f32 %v1165, %v1165
      %v1168 = vsel %vm867, %v1166, 0.0
      %1169 = vadd.xlane.f32.xlu0 %v1168
      %v1170 = vpop.xlane.xlu0 %1169
      %v1171 = vsel %vm867, %v1167, 0.0
      %1172 = vadd.xlane.f32.xlu0 %v1171
      %v1173 = vpop.xlane.xlu0 %1172
      %v1174 = vmul.f32 %v1170, %v871
      %v1175 = vmul.f32 %v1173, %v871
      %v1176 = vadd.f32 %v1174, 1e-05
      %v1177 = vadd.f32 %v1175, 1e-05
      %v1178 = vrsqrt.pop %v1176
      %v1179 = vrsqrt.pop %v1177
      %v1180 = vmul.f32 %v1164, %v1178
      %v1181 = vmul.f32 %v1165, %v1179
      %v1183 = vlaneseq
      %v1184 = vshrl.u32 %v1183, 7
      %v1185 = vsub.s32 0, %v1184
      %v1186 = vrot.slane %v1154, %v1185
      %v1188 = vmul.f32 %v1180, %v1186
      %v1189 = vmul.f32 %v1181, %v1186
      %v1191 = vlaneseq
      %v1192 = vshrl.u32 %v1191, 7
      %v1193 = vsub.s32 0, %v1192
      %v1194 = vrot.slane %v1155, %v1193
      %v1196 = vadd.f32 %v1188, %v1194
      %v1197 = vadd.f32 %v1189, %v1194
      %v1198 = vpack.c.bf16 %v1197, %v1196
      %v1199 = vld [vmem:[%s17] sm:$0xf]
      %v1200 = vld [vmem:[%s17 + $0x4] sm:$0xf]
      %v1201 = vld [vmem:[%s17 + $0x8] sm:$0xf]
      %v1202 = vld [vmem:[%s17 + $0xc] sm:$0xf]
      %v1203 = vld [vmem:[%s18] sm:$0x1]
      %v1205 = vlaneseq
      %v1206 = vshrl.u32 %v1205, 7
      %v1207 = vsub.s32 0, %v1206
      %v1208 = vrot.slane %v1203, %v1207
      %v1214 = vunpack.c.l.b16 %v1199
      %v1215 = vunpack.c.l.b16 %v1200
      %v1216 = vunpack.c.l.b16 %v1201
      %v1217 = vunpack.c.l.b16 %v1202
      %v1218 = vpack.c.b16 %v1215, %v1214
      %v1219 = vpack.c.b16 %v1217, %v1216
      %v1223 = vsel %vm867, %v1198, 0
      %1225 = vmatprep.subr.bf16.mxu0 0
      %1226 = vmatpush1.bf16.msra.mxu0 0
      %1227 = vmatprep.subr.bf16.mxu0 0
      %1228 = vmatpush1.bf16.msra.mxu0 0
      %1229 = vmatprep.subr.bf16.mxu0 0
      %1230 = vmatpush1.bf16.msra.mxu0 0
      %1231 = vmatprep.subr.bf16.mxu0 0
      %1232 = vmatpush1.bf16.msra.mxu0 0
      %1233 = vmatprep.subr.bf16.mxu0 0
      %1234 = vmatpush1.bf16.msra.mxu0 0
      %1235 = vmatprep.subr.bf16.mxu0 0
      %1236 = vmatpush1.bf16.msra.mxu0 0
      %1237 = vmatprep.subr.bf16.mxu0 0
      %1238 = vmatpush1.bf16.msra.mxu0 %v1219
      %1239 = vmatprep.subr.bf16.mxu0 0
      %1240 = vmatpush1.bf16.msra.mxu0 %v1218
      %1241 = vmatprep.subr.bf16.mxu0 0
      %1242 = vmatpush2.bf16.msra.mxu0 0
      %1243 = vmatprep.subr.bf16.mxu0 0
      %1244 = vmatpush2.bf16.msra.mxu0 0
      %1245 = vmatprep.subr.bf16.mxu0 0
      %1246 = vmatpush2.bf16.msra.mxu0 0
      %1247 = vmatprep.subr.bf16.mxu0 0
      %1248 = vmatpush2.bf16.msra.mxu0 0
      %1249 = vmatprep.subr.bf16.mxu0 0
      %1250 = vmatpush2.bf16.msra.mxu0 0
      %1251 = vmatprep.subr.bf16.mxu0 0
      %1252 = vmatpush2.bf16.msra.mxu0 0
      %1253 = vmatprep.subr.bf16.mxu0 0
      %1254 = vmatpush2.bf16.msra.mxu0 0
      %1255 = vmatprep.subr.bf16.mxu0 0
      %1256 = vmatpush2.bf16.msra.mxu0 0
      %1257 = vmatprep.mubr.bf16.mxu0 0
      %1258 = vmatmul.mubr.bf16.gmra.mxu0 %v1223
      %v1259 = vpop.f32.mrf.mxu0
      %v1260 = vadd.f32 %v1208, %v1259
      %v1261 = vpop.f32.mrf.mxu0
      %v1262 = vpop.f32.mrf.mxu0
      %v1263 = vadd.f32 %v1208, %v1262
      %v1264 = vpop.f32.mrf.mxu0
      %1265 = vdwg.mxu0
      %v1266 = vld [vmem:[%s13] sm:$0x1]
      %v1267 = vld [vmem:[%s14] sm:$0x1]
      %v1268 = vsel %vm867, %v1151, 0.0
      %1269 = vadd.xlane.f32.xlu0 %v1268
      %v1270 = vpop.xlane.xlu0 %1269
      %v1271 = vmul.f32 %v1270, %v871
      %v1272 = vsub.f32 %v1151, %v1271
      %v1273 = vmul.f32 %v1272, %v1272
      %v1274 = vsel %vm867, %v1273, 0.0
      %1275 = vadd.xlane.f32.xlu0 %v1274
      %v1276 = vpop.xlane.xlu0 %1275
      %v1277 = vmul.f32 %v1276, %v871
      %v1278 = vadd.f32 %v1277, 1e-05
      %v1279 = vrsqrt.pop %v1278
      %v1280 = vmul.f32 %v1272, %v1279
      %v1282 = vlaneseq
      %v1283 = vshrl.u32 %v1282, 7
      %v1284 = vsub.s32 0, %v1283
      %v1285 = vrot.slane %v1266, %v1284
      %v1287 = vmul.f32 %v1280, %v1285
      %v1289 = vlaneseq
      %v1290 = vshrl.u32 %v1289, 7
      %v1291 = vsub.s32 0, %v1290
      %v1292 = vrot.slane %v1267, %v1291
      %v1294 = vadd.f32 %v1287, %v1292
      %v1295 = vpack.c.bf16 %v1294, %v1294
      %v1296 = vld [vmem:[%s15] sm:$0xf]
      %v1297 = vld [vmem:[%s15 + $0x4] sm:$0xf]
      %v1298 = vld [vmem:[%s15 + $0x8] sm:$0xf]
      %v1299 = vld [vmem:[%s15 + $0xc] sm:$0xf]
      %v1300 = vld [vmem:[%s16] sm:$0x1]
      %v1302 = vlaneseq
      %v1303 = vshrl.u32 %v1302, 7
      %v1304 = vsub.s32 0, %v1303
      %v1305 = vrot.slane %v1300, %v1304
      %v1311 = vunpack.c.l.b16 %v1296
      %v1312 = vunpack.c.l.b16 %v1297
      %v1313 = vunpack.c.l.b16 %v1298
      %v1314 = vunpack.c.l.b16 %v1299
      %v1315 = vpack.c.b16 %v1312, %v1311
      %v1316 = vpack.c.b16 %v1314, %v1313
      %v1320 = vsel %vm867, %v1295, 0
      %1322 = vmatprep.subr.bf16.mxu0 0
      %1323 = vmatpush1.bf16.msra.mxu0 0
      %1324 = vmatprep.subr.bf16.mxu0 0
      %1325 = vmatpush1.bf16.msra.mxu0 0
      %1326 = vmatprep.subr.bf16.mxu0 0
      %1327 = vmatpush1.bf16.msra.mxu0 0
      %1328 = vmatprep.subr.bf16.mxu0 0
      %1329 = vmatpush1.bf16.msra.mxu0 0
      %1330 = vmatprep.subr.bf16.mxu0 0
      %1331 = vmatpush1.bf16.msra.mxu0 0
      %1332 = vmatprep.subr.bf16.mxu0 0
      %1333 = vmatpush1.bf16.msra.mxu0 0
      %1334 = vmatprep.subr.bf16.mxu0 0
      %1335 = vmatpush1.bf16.msra.mxu0 %v1316
      %1336 = vmatprep.subr.bf16.mxu0 0
      %1337 = vmatpush1.bf16.msra.mxu0 %v1315
      %1338 = vmatprep.subr.bf16.mxu0 0
      %1339 = vmatpush2.bf16.msra.mxu0 0
      %1340 = vmatprep.subr.bf16.mxu0 0
      %1341 = vmatpush2.bf16.msra.mxu0 0
      %1342 = vmatprep.subr.bf16.mxu0 0
      %1343 = vmatpush2.bf16.msra.mxu0 0
      %1344 = vmatprep.subr.bf16.mxu0 0
      %1345 = vmatpush2.bf16.msra.mxu0 0
      %1346 = vmatprep.subr.bf16.mxu0 0
      %1347 = vmatpush2.bf16.msra.mxu0 0
      %1348 = vmatprep.subr.bf16.mxu0 0
      %1349 = vmatpush2.bf16.msra.mxu0 0
      %1350 = vmatprep.subr.bf16.mxu0 0
      %1351 = vmatpush2.bf16.msra.mxu0 0
      %1352 = vmatprep.subr.bf16.mxu0 0
      %1353 = vmatpush2.bf16.msra.mxu0 0
      %1354 = vmatprep.mubr.bf16.mxu0 0
      %1355 = vmatmul.mubr.bf16.gmra.mxu0 %v1320
      %v1356 = vpop.f32.mrf.mxu0
      %v1357 = vadd.f32 %v1305, %v1356
      %v1358 = vpop.f32.mrf.mxu0
      %v1359 = vpop.f32.mrf.mxu0
      %v1360 = vpop.f32.mrf.mxu0
      %1361 = vdwg.mxu0
      %v1362 = vld [vmem:[%s857] sm:$0x1]
      %v1363 = vpack.c.bf16 %v1357, %v1357
      %v1364 = vpack.c.bf16 %v1263, %v1260
      %v1366 = vlaneseq
      %v1367 = vshrl.u32 %v1366, 7
      %v1368 = vsub.s32 0, %v1367
      %v1369 = vrot.slane %v1362, %v1368
      %v1372 = vsel %vm867, %v1363, 0
      %v1375 = vsel %vm867, %v1364, 0
      %1377 = vmatprep.subr.bf16.mxu0 0
      %1378 = vmatpush1.bf16.xpose.msra.mxu0 0
      %1379 = vmatprep.subr.bf16.mxu0 0
      %1380 = vmatpush1.bf16.xpose.msra.mxu0 0
      %1381 = vmatprep.subr.bf16.mxu0 0
      %1382 = vmatpush1.bf16.xpose.msra.mxu0 0
      %1383 = vmatprep.subr.bf16.mxu0 0
      %1384 = vmatpush1.bf16.xpose.msra.mxu0 0
      %1385 = vmatprep.subr.bf16.mxu0 0
      %1386 = vmatpush1.bf16.xpose.msra.mxu0 0
      %1387 = vmatprep.subr.bf16.mxu0 0
      %1388 = vmatpush1.bf16.xpose.msra.mxu0 0
      %1389 = vmatprep.subr.bf16.mxu0 0
      %1390 = vmatpush1.bf16.xpose.msra.mxu0 0
      %1391 = vmatprep.subr.bf16.mxu0 0
      %1392 = vmatpush1.bf16.xpose.msra.mxu0 %v1375
      %1393 = vmatprep.subr.bf16.mxu0 0
      %1394 = vmatpush2.bf16.xpose.msra.mxu0 0
      %1395 = vmatprep.subr.bf16.mxu0 0
      %1396 = vmatpush2.bf16.xpose.msra.mxu0 0
      %1397 = vmatprep.subr.bf16.mxu0 0
      %1398 = vmatpush2.bf16.xpose.msra.mxu0 0
      %1399 = vmatprep.subr.bf16.mxu0 0
      %1400 = vmatpush2.bf16.xpose.msra.mxu0 0
      %1401 = vmatprep.subr.bf16.mxu0 0
      %1402 = vmatpush2.bf16.xpose.msra.mxu0 0
      %1403 = vmatprep.subr.bf16.mxu0 0
      %1404 = vmatpush2.bf16.xpose.msra.mxu0 0
      %1405 = vmatprep.subr.bf16.mxu0 0
      %1406 = vmatpush2.bf16.xpose.msra.mxu0 0
      %1407 = vmatprep.subr.bf16.mxu0 0
      %1408 = vmatpush2.bf16.xpose.msra.mxu0 0
      %1409 = vmatprep.mubr.bf16.mxu0 0
      %1410 = vmatmul.mubr.bf16.gmra.mxu0 %v1372
      %v1411 = vpop.f32.mrf.mxu0
      %v1412 = vadd.f32 %v1369, %v1411
      %v1413 = vpop.f32.mrf.mxu0
      %v1414 = vpop.f32.mrf.mxu0
      %v1415 = vpop.f32.mrf.mxu0
      %1416 = vdwg.mxu0
      %vm1417 = vcmask 130048
      %v1418 = vsel %vm1417, %v1412, -inf
      %1419 = vmax.xlane.f32.xlu0 %v1418
      %v1420 = vpop.xlane.xlu0 %1419
      %v1421 = vsub.f32 %v1412, %v1420
      %v1422 = vmul.f32 %v1421, 1.442695
      %v1423 = vpow.pop %v1422
      %v1424 = vsel %vm1417, %v1423, 0.0
      %1425 = vadd.xlane.f32.xlu0 %v1424
      %v1426 = vpop.xlane.xlu0 %1425
      %v1427 = vpack.c.bf16 %v1423, %v1423
      %1429 = vrot.lane.b32.xlu0 %v1364, 96
      %v1430 = vpop.permute.xlu0 %1429
      %v1433 = vsel %vm1417, %v1427, 0
      %1435 = vmatprep.subr.bf16.mxu0 0
      %1436 = vmatpush1.bf16.msra.mxu0 0
      %1437 = vmatprep.subr.bf16.mxu0 0
      %1438 = vmatpush1.bf16.msra.mxu0 0
      %1439 = vmatprep.subr.bf16.mxu0 0
      %1440 = vmatpush1.bf16.msra.mxu0 0
      %1441 = vmatprep.subr.bf16.mxu0 0
      %1442 = vmatpush1.bf16.msra.mxu0 0
      %1443 = vmatprep.subr.bf16.mxu0 0
      %1444 = vmatpush1.bf16.msra.mxu0 0
      %1445 = vmatprep.subr.bf16.mxu0 0
      %1446 = vmatpush1.bf16.msra.mxu0 0
      %1447 = vmatprep.subr.bf16.mxu0 0
      %1448 = vmatpush1.bf16.msra.mxu0 0
      %1449 = vmatprep.subr.bf16.mxu0 0
      %1450 = vmatpush1.bf16.msra.mxu0 %v1430
      %1451 = vmatprep.subr.bf16.mxu0 0
      %1452 = vmatpush2.bf16.msra.mxu0 0
      %1453 = vmatprep.subr.bf16.mxu0 0
      %1454 = vmatpush2.bf16.msra.mxu0 0
      %1455 = vmatprep.subr.bf16.mxu0 0
      %1456 = vmatpush2.bf16.msra.mxu0 0
      %1457 = vmatprep.subr.bf16.mxu0 0
      %1458 = vmatpush2.bf16.msra.mxu0 0
      %1459 = vmatprep.subr.bf16.mxu0 0
      %1460 = vmatpush2.bf16.msra.mxu0 0
      %1461 = vmatprep.subr.bf16.mxu0 0
      %1462 = vmatpush2.bf16.msra.mxu0 0
      %1463 = vmatprep.subr.bf16.mxu0 0
      %1464 = vmatpush2.bf16.msra.mxu0 0
      %1465 = vmatprep.subr.bf16.mxu0 0
      %1466 = vmatpush2.bf16.msra.mxu0 0
      %1467 = vmatprep.mubr.bf16.mxu0 0
      %1468 = vmatmul.mubr.bf16.gmra.mxu0 %v1433
      %v1469 = vpop.f32.mrf.mxu0
      %v1470 = vadd.f32 0.0, %v1469
      %v1471 = vpop.f32.mrf.mxu0
      %v1472 = vpop.f32.mrf.mxu0
      %v1473 = vpop.f32.mrf.mxu0
      %1474 = vdwg.mxu0
      %v1475 = vrcp.pop %v1426
      %v1476 = vmul.f32 %v1470, %v1475
      %v1477 = vpack.c.bf16 %v1476, %v1476
      %v1478 = vld [vmem:[%s19] sm:$0xf]
      %v1479 = vld [vmem:[%s19 + $0x4] sm:$0xf]
      %v1480 = vld [vmem:[%s19 + $0x8] sm:$0xf]
      %v1481 = vld [vmem:[%s19 + $0xc] sm:$0xf]
      %v1486 = vunpack.c.l.b16 %v1478
      %v1487 = vunpack.c.l.b16 %v1479
      %v1488 = vunpack.c.l.b16 %v1480
      %v1489 = vunpack.c.l.b16 %v1481
      %v1490 = vpack.c.b16 %v1487, %v1486
      %v1491 = vpack.c.b16 %v1489, %v1488
      %v1495 = vsel %vm867, %v1477, 0
      %1497 = vmatprep.subr.bf16.mxu0 0
      %1498 = vmatpush1.bf16.msra.mxu0 0
      %1499 = vmatprep.subr.bf16.mxu0 0
      %1500 = vmatpush1.bf16.msra.mxu0 0
      %1501 = vmatprep.subr.bf16.mxu0 0
      %1502 = vmatpush1.bf16.msra.mxu0 0
      %1503 = vmatprep.subr.bf16.mxu0 0
      %1504 = vmatpush1.bf16.msra.mxu0 0
      %1505 = vmatprep.subr.bf16.mxu0 0
      %1506 = vmatpush1.bf16.msra.mxu0 0
      %1507 = vmatprep.subr.bf16.mxu0 0
      %1508 = vmatpush1.bf16.msra.mxu0 0
      %1509 = vmatprep.subr.bf16.mxu0 0
      %1510 = vmatpush1.bf16.msra.mxu0 %v1491
      %1511 = vmatprep.subr.bf16.mxu0 0
      %1512 = vmatpush1.bf16.msra.mxu0 %v1490
      %1513 = vmatprep.subr.bf16.mxu0 0
      %1514 = vmatpush2.bf16.msra.mxu0 0
      %1515 = vmatprep.subr.bf16.mxu0 0
      %1516 = vmatpush2.bf16.msra.mxu0 0
      %1517 = vmatprep.subr.bf16.mxu0 0
      %1518 = vmatpush2.bf16.msra.mxu0 0
      %1519 = vmatprep.subr.bf16.mxu0 0
      %1520 = vmatpush2.bf16.msra.mxu0 0
      %1521 = vmatprep.subr.bf16.mxu0 0
      %1522 = vmatpush2.bf16.msra.mxu0 0
      %1523 = vmatprep.subr.bf16.mxu0 0
      %1524 = vmatpush2.bf16.msra.mxu0 0
      %1525 = vmatprep.subr.bf16.mxu0 0
      %1526 = vmatpush2.bf16.msra.mxu0 0
      %1527 = vmatprep.subr.bf16.mxu0 0
      %1528 = vmatpush2.bf16.msra.mxu0 0
      %1529 = vmatprep.mubr.bf16.mxu0 0
      %1530 = vmatmul.mubr.bf16.gmra.mxu0 %v1495
      %v1531 = vpop.f32.mrf.mxu0
      %v1532 = vadd.f32 0.0, %v1531
      %v1533 = vpop.f32.mrf.mxu0
      %v1534 = vpop.f32.mrf.mxu0
      %v1535 = vpop.f32.mrf.mxu0
      %1536 = vdwg.mxu0
      %v1537 = vadd.f32 %v1151, %v1532
      %v1538 = vld [vmem:[%s20] sm:$0x1]
      %v1540 = vlaneseq
      %v1541 = vshrl.u32 %v1540, 7
      %v1542 = vsub.s32 0, %v1541
      %v1543 = vrot.slane %v1538, %v1542
      %v1545 = vadd.f32 %v1537, %v1543
      %v1546 = vld [vmem:[%s21] sm:$0x1]
      %v1547 = vld [vmem:[%s22] sm:$0x1]
      %v1548 = vsel %vm867, %v1545, 0.0
      %1549 = vadd.xlane.f32.xlu0 %v1548
      %v1550 = vpop.xlane.xlu0 %1549
      %v1551 = vmul.f32 %v1550, %v871
      %v1552 = vsub.f32 %v1545, %v1551
      %v1553 = vmul.f32 %v1552, %v1552
      %v1554 = vsel %vm867, %v1553, 0.0
      %1555 = vadd.xlane.f32.xlu0 %v1554
      %v1556 = vpop.xlane.xlu0 %1555
      %v1557 = vmul.f32 %v1556, %v871
      %v1558 = vadd.f32 %v1557, 1e-05
      %v1559 = vrsqrt.pop %v1558
      %v1560 = vmul.f32 %v1552, %v1559
      %v1562 = vlaneseq
      %v1563 = vshrl.u32 %v1562, 7
      %v1564 = vsub.s32 0, %v1563
      %v1565 = vrot.slane %v1546, %v1564
      %v1567 = vmul.f32 %v1560, %v1565
      %v1569 = vlaneseq
      %v1570 = vshrl.u32 %v1569, 7
      %v1571 = vsub.s32 0, %v1570
      %v1572 = vrot.slane %v1547, %v1571
      %v1574 = vadd.f32 %v1567, %v1572
      %v1575 = vpack.c.bf16 %v1574, %v1574
      %v1576 = vld [vmem:[%s23] sm:$0xf]
      %v1577 = vld [vmem:[%s23 + $0x4] sm:$0xf]
      %v1578 = vld [vmem:[%s23 + $0x8] sm:$0xf]
      %v1579 = vld [vmem:[%s23 + $0xc] sm:$0xf]
      %v1580 = vld [vmem:[%s24] sm:$0x1]
      %v1582 = vlaneseq
      %v1583 = vshrl.u32 %v1582, 7
      %v1584 = vsub.s32 0, %v1583
      %v1585 = vrot.slane %v1580, %v1584
      %v1591 = vunpack.c.l.b16 %v1576
      %v1592 = vunpack.c.l.b16 %v1577
      %v1593 = vunpack.c.l.b16 %v1578
      %v1594 = vunpack.c.l.b16 %v1579
      %v1595 = vpack.c.b16 %v1592, %v1591
      %v1596 = vpack.c.b16 %v1594, %v1593
      %v1600 = vsel %vm867, %v1575, 0
      %1602 = vmatprep.subr.bf16.mxu0 0
      %1603 = vmatpush1.bf16.msra.mxu0 0
      %1604 = vmatprep.subr.bf16.mxu0 0
      %1605 = vmatpush1.bf16.msra.mxu0 0
      %1606 = vmatprep.subr.bf16.mxu0 0
      %1607 = vmatpush1.bf16.msra.mxu0 0
      %1608 = vmatprep.subr.bf16.mxu0 0
      %1609 = vmatpush1.bf16.msra.mxu0 0
      %1610 = vmatprep.subr.bf16.mxu0 0
      %1611 = vmatpush1.bf16.msra.mxu0 0
      %1612 = vmatprep.subr.bf16.mxu0 0
      %1613 = vmatpush1.bf16.msra.mxu0 0
      %1614 = vmatprep.subr.bf16.mxu0 0
      %1615 = vmatpush1.bf16.msra.mxu0 %v1596
      %1616 = vmatprep.subr.bf16.mxu0 0
      %1617 = vmatpush1.bf16.msra.mxu0 %v1595
      %1618 = vmatprep.subr.bf16.mxu0 0
      %1619 = vmatpush2.bf16.msra.mxu0 0
      %1620 = vmatprep.subr.bf16.mxu0 0
      %1621 = vmatpush2.bf16.msra.mxu0 0
      %1622 = vmatprep.subr.bf16.mxu0 0
      %1623 = vmatpush2.bf16.msra.mxu0 0
      %1624 = vmatprep.subr.bf16.mxu0 0
      %1625 = vmatpush2.bf16.msra.mxu0 0
      %1626 = vmatprep.subr.bf16.mxu0 0
      %1627 = vmatpush2.bf16.msra.mxu0 0
      %1628 = vmatprep.subr.bf16.mxu0 0
      %1629 = vmatpush2.bf16.msra.mxu0 0
      %1630 = vmatprep.subr.bf16.mxu0 0
      %1631 = vmatpush2.bf16.msra.mxu0 0
      %1632 = vmatprep.subr.bf16.mxu0 0
      %1633 = vmatpush2.bf16.msra.mxu0 0
      %1634 = vmatprep.mubr.bf16.mxu0 0
      %1635 = vmatmul.mubr.bf16.gmra.mxu0 %v1600
      %v1636 = vpop.f32.mrf.mxu0
      %v1637 = vadd.f32 %v1585, %v1636
      %v1638 = vpop.f32.mrf.mxu0
      %v1639 = vpop.f32.mrf.mxu0
      %v1640 = vpop.f32.mrf.mxu0
      %1641 = vdwg.mxu0
      %v1642 = vmax.f32 %v1637, 0.0
      %v1643 = vpack.c.bf16 %v1642, %v1642
      %v1644 = vld [vmem:[%s25] sm:$0xf]
      %v1645 = vld [vmem:[%s25 + $0x4] sm:$0xf]
      %v1646 = vld [vmem:[%s25 + $0x8] sm:$0xf]
      %v1647 = vld [vmem:[%s25 + $0xc] sm:$0xf]
      %v1648 = vld [vmem:[%s25 + $0x10] sm:$0xf]
      %v1649 = vld [vmem:[%s25 + $0x14] sm:$0xf]
      %v1650 = vld [vmem:[%s25 + $0x18] sm:$0xf]
      %v1651 = vld [vmem:[%s25 + $0x1c] sm:$0xf]
      %v1652 = vld [vmem:[%s26] sm:$0x1]
      %v1654 = vlaneseq
      %v1655 = vshrl.u32 %v1654, 7
      %v1656 = vsub.s32 0, %v1655
      %v1657 = vrot.slane %v1652, %v1656
      %v1667 = vunpack.c.l.b16 %v1644
      %v1668 = vunpack.c.l.b16 %v1645
      %v1669 = vunpack.c.l.b16 %v1646
      %v1670 = vunpack.c.l.b16 %v1647
      %v1671 = vunpack.c.l.b16 %v1648
      %v1672 = vunpack.c.l.b16 %v1649
      %v1673 = vunpack.c.l.b16 %v1650
      %v1674 = vunpack.c.l.b16 %v1651
      %v1675 = vpack.c.b16 %v1668, %v1667
      %v1676 = vpack.c.b16 %v1670, %v1669
      %v1677 = vpack.c.b16 %v1672, %v1671
      %v1678 = vpack.c.b16 %v1674, %v1673
      %vm1683 = vcmask 523264
      %v1685 = vsel %vm1683, %v1643, 0
      %1687 = vmatprep.subr.bf16.mxu0 0
      %1688 = vmatpush1.bf16.msra.mxu0 0
      %1689 = vmatprep.subr.bf16.mxu0 0
      %1690 = vmatpush1.bf16.msra.mxu0 0
      %1691 = vmatprep.subr.bf16.mxu0 0
      %1692 = vmatpush1.bf16.msra.mxu0 0
      %1693 = vmatprep.subr.bf16.mxu0 0
      %1694 = vmatpush1.bf16.msra.mxu0 0
      %1695 = vmatprep.subr.bf16.mxu0 0
      %1696 = vmatpush1.bf16.msra.mxu0 %v1678
      %1697 = vmatprep.subr.bf16.mxu0 0
      %1698 = vmatpush1.bf16.msra.mxu0 %v1677
      %1699 = vmatprep.subr.bf16.mxu0 0
      %1700 = vmatpush1.bf16.msra.mxu0 %v1676
      %1701 = vmatprep.subr.bf16.mxu0 0
      %1702 = vmatpush1.bf16.msra.mxu0 %v1675
      %1703 = vmatprep.subr.bf16.mxu0 0
      %1704 = vmatpush2.bf16.msra.mxu0 0
      %1705 = vmatprep.subr.bf16.mxu0 0
      %1706 = vmatpush2.bf16.msra.mxu0 0
      %1707 = vmatprep.subr.bf16.mxu0 0
      %1708 = vmatpush2.bf16.msra.mxu0 0
      %1709 = vmatprep.subr.bf16.mxu0 0
      %1710 = vmatpush2.bf16.msra.mxu0 0
      %1711 = vmatprep.subr.bf16.mxu0 0
      %1712 = vmatpush2.bf16.msra.mxu0 0
      %1713 = vmatprep.subr.bf16.mxu0 0
      %1714 = vmatpush2.bf16.msra.mxu0 0
      %1715 = vmatprep.subr.bf16.mxu0 0
      %1716 = vmatpush2.bf16.msra.mxu0 0
      %1717 = vmatprep.subr.bf16.mxu0 0
      %1718 = vmatpush2.bf16.msra.mxu0 0
      %1719 = vmatprep.mubr.bf16.mxu0 0
      %1720 = vmatmul.mubr.bf16.gmra.mxu0 %v1685
      %v1721 = vpop.f32.mrf.mxu0
      %v1722 = vadd.f32 %v1657, %v1721
      %v1723 = vpop.f32.mrf.mxu0
      %v1724 = vpop.f32.mrf.mxu0
      %v1725 = vpop.f32.mrf.mxu0
      %1726 = vdwg.mxu0
      %v1727 = vadd.f32 %v1545, %v1722
      %1728 = vst.msk [vmem:[%s861] sm:$0xff] %vm867, %v1727
      %p1729 = scmp.lt.s32.totalorder %s38, 1
      %s1730 = scalar_select %p1729, %s38, 1
      %s1731 = smul.addr %s1730, 8
      %s1732 = scalar_lea.vmem %s27, %s1731
      // Predicated region
      $region129: #{transformer_cslr_forward.6} parent=127 // pred_check
        %p1733 = pneg %p643
      $region130: #{transformer_cslr_forward.6} parent=127 // pred_check_branch
        %1735 = sbr.rel (%p1733) target = $region132
      $region131: #{transformer_cslr_forward.6} parent=127 // pred_region
        _
      $region132: #{transformer_cslr_forward.6} parent=127 // pred_fallthru
        _
    $region128: #{transformer_cslr_forward.6} parent=5 // pred_fallthru
      _
    %p1736 = scmp.le.s32.totalorder 2, %s33
    // Predicated region
    $region133: #{transformer_cslr_forward.6} parent=5 // pred_check
      %p1737 = pneg %p1736
    $region134: #{transformer_cslr_forward.6} parent=5 // pred_check_branch
      %1739 = sbr.rel (%p1737) target = $region136
    $region135: #{transformer_cslr_forward.6} parent=5 // pred_region
      %s1740 = ssub.s32 %s33, 2
      // Predicated region
      $region137: #{transformer_cslr_forward.6} parent=135 // pred_check
        %p1741 = pneg %p649
      $region138: #{transformer_cslr_forward.6} parent=135 // pred_check_branch
        %1743 = sbr.rel (%p1741) target = $region140
      $region139: #{transformer_cslr_forward.6} parent=135 // pred_region
        %p1744 = scmp.lt.s32.totalorder %s39, 1
        %s1745 = scalar_select %p1744, %s39, 1
        %s1746 = smul.addr %s1745, 8
        %s1747 = scalar_lea.vmem %s27, %s1746
      $region140: #{transformer_cslr_forward.6} parent=135 // pred_fallthru
        _
    $region136: #{transformer_cslr_forward.6} parent=5 // pred_fallthru
      _
  $region6: #{transformer_cslr_forward.6} parent=0 // loop_footer
    %s37 = sadd.s32 1, %s33
  $region7: #{transformer_cslr_forward.6} parent=0 // loop_footer_branch
    %32 = sbr.rel target = $region3
  $region8: #{transformer_cslr_forward.6} parent=0 // loop_exit
    _

// kernel: transformer_cslr_forward.4
$region0: #{transformer_cslr_forward.4}
  #allocation0 [shape = 'u32[]', space=smem, size = 0x4, offset = 0x4, fixed_abs, tag = 'smem constant byte address 0x4 - core index']
  #allocation1 [shape = 'u32[144,128]{1,0:T(1,128)}', space=vmem, size = 0x12000, scoped, tag = 'internal scratch']
  %s0 = inlined_call_operand.vmem [shape: f32[2,16,16], index: 0, kind: input, shape index: {}]
  %s1 = inlined_call_operand.vmem [shape: bf16[16,32], index: 1, kind: input, shape index: {}]
  %s2 = inlined_call_operand.vmem [shape: f32[1,32], index: 2, kind: input, shape index: {}]
  %s3 = inlined_call_operand.vmem [shape: f32[16,32], index: 3, kind: input, shape index: {}]
  %s4 = inlined_call_operand.vmem [shape: f32[2,16,32], index: 4, kind: output, shape index: {}]
  %s5 = sld [smem:[#allocation0]]
  $region49: #{transformer_cslr_forward.4} parent=0
    _
  %s7 = ssub.s32 1, %s5
  %s8 = scalar_select 0, %s7, %s5
  loop: start=0, step=1, limit=4
  $region2: #{transformer_cslr_forward.4} parent=0 // loop_pre_header
    _
  $region3: #{transformer_cslr_forward.4} parent=0 // loop_header
    %s10 = sphi 0, %s14
    %p11 = scmp.ge.s32.totalorder %s10, 4
    %s20 = sphi 0, %s22
    %s23 = sphi 0, %s20
    %s24 = sphi 0, %s23
    %s40 = sphi 0, %s24
    %s44 = sphi 0, %s44
    %s46 = sphi 0, %s44
    %s47 = sphi 0, %s46
    %s61 = sphi 0, %s47
    %s65 = sphi 0, %s65
    %s67 = sphi 0, %s65
    %s68 = sphi 0, %s67
    %s82 = sphi 0, %s68
    %s86 = sphi 0, %s86
    %s88 = sphi 0, %s86
    %s89 = sphi 0, %s88
    %s103 = sphi 0, %s89
    %s109 = sphi 0, %s111
    %s112 = sphi 0, %s109
    %s113 = sphi 0, %s112
    %s129 = sphi 0, %s113
  $region4: #{transformer_cslr_forward.4} parent=0 // loop_header_branch
    %13 = sbr.rel (%p11) target = $region8
  $region5: #{transformer_cslr_forward.4} parent=0 // loop_body
    %s15 = ssub.s32 %s10, 1
    %s16 = ssub.s32 %s10, 2
    %s17 = sadd.s32 %s10, 1
    %s18 = ssub.s32 %s10, %s17
    %p19 = scmp.eq.s32.totalorder %s18, 0
    %s21 = sadd.s32 %s20, 1
    %s22 = scalar_select %p19, %s20, %s21
    %p25 = pneg %p19
    %p26 = scmp.eq.s32.totalorder %s10, 1
    %p27 = por %p25, %p26
    %p28 = scmp.ne.s32.totalorder %s20, %s23
    %p29 = scmp.eq.s32.totalorder %s10, 0
    %p30 = por %p28, %p29
    %p31 = scmp.ne.s32.totalorder %s20, %s23
    %p32 = scmp.eq.s32.totalorder %s15, 1
    %p33 = por %p31, %p32
    %p34 = scmp.ne.s32.totalorder %s23, %s24
    %p35 = scmp.eq.s32.totalorder %s15, 0
    %p36 = por %p34, %p35
    %p37 = scmp.ne.s32.totalorder %s23, %s24
    %p38 = scmp.eq.s32.totalorder %s16, 1
    %p39 = por %p37, %p38
    %p41 = scmp.ne.s32.totalorder %s24, %s40
    %p42 = scmp.eq.s32.totalorder %s16, 0
    %p43 = por %p41, %p42
    %s45 = sadd.s32 %s44, 1
    %p48 = scmp.eq.s32.totalorder %s10, 1
    %p49 = scmp.ne.s32.totalorder %s44, %s46
    %p50 = scmp.eq.s32.totalorder %s10, 0
    %p51 = por %p49, %p50
    %p52 = scmp.ne.s32.totalorder %s44, %s46
    %p53 = scmp.eq.s32.totalorder %s15, 1
    %p54 = por %p52, %p53
    %p55 = scmp.ne.s32.totalorder %s46, %s47
    %p56 = scmp.eq.s32.totalorder %s15, 0
    %p57 = por %p55, %p56
    %p58 = scmp.ne.s32.totalorder %s46, %s47
    %p59 = scmp.eq.s32.totalorder %s16, 1
    %p60 = por %p58, %p59
    %p62 = scmp.ne.s32.totalorder %s47, %s61
    %p63 = scmp.eq.s32.totalorder %s16, 0
    %p64 = por %p62, %p63
    %s66 = sadd.s32 %s65, 1
    %p69 = scmp.eq.s32.totalorder %s10, 1
    %p70 = scmp.ne.s32.totalorder %s65, %s67
    %p71 = scmp.eq.s32.totalorder %s10, 0
    %p72 = por %p70, %p71
    %p73 = scmp.ne.s32.totalorder %s65, %s67
    %p74 = scmp.eq.s32.totalorder %s15, 1
    %p75 = por %p73, %p74
    %p76 = scmp.ne.s32.totalorder %s67, %s68
    %p77 = scmp.eq.s32.totalorder %s15, 0
    %p78 = por %p76, %p77
    %p79 = scmp.ne.s32.totalorder %s67, %s68
    %p80 = scmp.eq.s32.totalorder %s16, 1
    %p81 = por %p79, %p80
    %p83 = scmp.ne.s32.totalorder %s68, %s82
    %p84 = scmp.eq.s32.totalorder %s16, 0
    %p85 = por %p83, %p84
    %s87 = sadd.s32 %s86, 1
    %p90 = scmp.eq.s32.totalorder %s10, 1
    %p91 = scmp.ne.s32.totalorder %s86, %s88
    %p92 = scmp.eq.s32.totalorder %s10, 0
    %p93 = por %p91, %p92
    %p94 = scmp.ne.s32.totalorder %s86, %s88
    %p95 = scmp.eq.s32.totalorder %s15, 1
    %p96 = por %p94, %p95
    %p97 = scmp.ne.s32.totalorder %s88, %s89
    %p98 = scmp.eq.s32.totalorder %s15, 0
    %p99 = por %p97, %p98
    %p100 = scmp.ne.s32.totalorder %s88, %s89
    %p101 = scmp.eq.s32.totalorder %s16, 1
    %p102 = por %p100, %p101
    %p104 = scmp.ne.s32.totalorder %s89, %s103
    %p105 = scmp.eq.s32.totalorder %s16, 0
    %p106 = por %p104, %p105
    %s107 = ssub.s32 %s10, %s17
    %p108 = scmp.eq.s32.totalorder %s107, 0
    %s110 = sadd.s32 %s109, 1
    %s111 = scalar_select %p108, %s109, %s110
    %p114 = pneg %p108
    %p115 = scmp.eq.s32.totalorder %s10, 1
    %p116 = por %p114, %p115
    %p117 = scmp.ne.s32.totalorder %s109, %s112
    %p118 = scmp.eq.s32.totalorder %s10, 0
    %p119 = por %p117, %p118
    %p120 = scmp.ne.s32.totalorder %s109, %s112
    %p121 = scmp.eq.s32.totalorder %s15, 1
    %p122 = por %p120, %p121
    %p123 = scmp.ne.s32.totalorder %s112, %s113
    %p124 = scmp.eq.s32.totalorder %s15, 0
    %p125 = por %p123, %p124
    %p126 = scmp.ne.s32.totalorder %s112, %s113
    %p127 = scmp.eq.s32.totalorder %s16, 1
    %p128 = por %p126, %p127
    %p130 = scmp.ne.s32.totalorder %s113, %s129
    %p131 = scmp.eq.s32.totalorder %s16, 0
    %p132 = por %p130, %p131
    %p133 = scmp.le.s32.totalorder 1, %s10
    %p134 = scmp.lt.s32.totalorder %s10, 3
    %p135 = pnand %p133, %p134
    %p136 = pneg %p135
    // Predicated region
    $region9: #{transformer_cslr_forward.4} parent=5 // pred_check
      _
    $region10: #{transformer_cslr_forward.4} parent=5 // pred_check_branch
      %138 = sbr.rel (%p135) target = $region12
    $region11: #{transformer_cslr_forward.4} parent=5 // pred_region
      %s139 = ssub.s32 %s10, 1
      // Predicated region
      $region13: #{transformer_cslr_forward.4} parent=11 // pred_check
        %p140 = pneg %p57
      $region14: #{transformer_cslr_forward.4} parent=11 // pred_check_branch
        %142 = sbr.rel (%p140) target = $region16
      $region15: #{transformer_cslr_forward.4} parent=11 // pred_region
        _
      $region16: #{transformer_cslr_forward.4} parent=11 // pred_fallthru
        _
      // Predicated region
      $region17: #{transformer_cslr_forward.4} parent=11 // pred_check
        %p143 = pneg %p78
      $region18: #{transformer_cslr_forward.4} parent=11 // pred_check_branch
        %145 = sbr.rel (%p143) target = $region20
      $region19: #{transformer_cslr_forward.4} parent=11 // pred_region
        _
      $region20: #{transformer_cslr_forward.4} parent=11 // pred_fallthru
        _
      // Predicated region
      $region21: #{transformer_cslr_forward.4} parent=11 // pred_check
        %p146 = pneg %p99
      $region22: #{transformer_cslr_forward.4} parent=11 // pred_check_branch
        %148 = sbr.rel (%p146) target = $region24
      $region23: #{transformer_cslr_forward.4} parent=11 // pred_region
        _
      $region24: #{transformer_cslr_forward.4} parent=11 // pred_fallthru
        _
    $region12: #{transformer_cslr_forward.4} parent=5 // pred_fallthru
      _
    %p149 = scmp.lt.s32.totalorder %s10, 2
    // Predicated region
    $region25: #{transformer_cslr_forward.4} parent=5 // pred_check
      %p150 = pneg %p149
    $region26: #{transformer_cslr_forward.4} parent=5 // pred_check_branch
      %152 = sbr.rel (%p150) target = $region28
    $region27: #{transformer_cslr_forward.4} parent=5 // pred_region
      // Predicated region
      $region29: #{transformer_cslr_forward.4} parent=27 // pred_check
        %p153 = pneg %p30
      $region30: #{transformer_cslr_forward.4} parent=27 // pred_check_branch
        %155 = sbr.rel (%p153) target = $region32
      $region31: #{transformer_cslr_forward.4} parent=27 // pred_region
        %p156 = scmp.lt.s32.totalorder %s10, 1
        %s157 = scalar_select %p156, %s10, 1
        %s158 = smul.addr %s157, 2
        %s159 = smul.addr %s158, 8
        %s160 = scalar_lea.vmem %s0, %s159
      $region32: #{transformer_cslr_forward.4} parent=27 // pred_fallthru
        _
    $region28: #{transformer_cslr_forward.4} parent=5 // pred_fallthru
      _
    %p161 = scmp.le.s32.totalorder 1, %s10
    %p162 = scmp.lt.s32.totalorder %s10, 3
    %p163 = pnand %p161, %p162
    %p164 = pneg %p163
    // Predicated region
    $region33: #{transformer_cslr_forward.4} parent=5 // pred_check
      _
    $region34: #{transformer_cslr_forward.4} parent=5 // pred_check_branch
      %166 = sbr.rel (%p163) target = $region36
    $region35: #{transformer_cslr_forward.4} parent=5 // pred_region
      %s167 = ssub.s32 %s10, 1
      %p168 = scmp.lt.s32.totalorder %s15, 1
      %s169 = scalar_select %p168, %s15, 1
      %s170 = smul.addr %s169, 2
      %s171 = smul.addr %s170, 8
      %s172 = scalar_lea.vmem %s0, %s171
      %p173 = pneg %p36
      %p174 = pneg %p33
      %p175 = pneg %p57
      %p176 = pneg %p54
      %p177 = pneg %p78
      %p178 = pneg %p75
      %p179 = pneg %p99
      %p180 = pneg %p96
      %p181 = pneg %p125
      %p182 = pneg %p122
      %p183 = scmp.lt.s32.totalorder %s15, 1
      %s184 = scalar_select %p183, %s15, 1
      %s185 = smul.addr %s184, 2
      %s186 = smul.addr %s185, 8
      %s187 = scalar_lea.vmem %s4, %s186
      %p188 = scmp.lt.s32.totalorder %s15, 1
      %s189 = scalar_select %p188, %s15, 1
      %s190 = smul.addr %s189, 2
      %s191 = smul.addr %s190, 8
      %s192 = scalar_lea.vmem %s0, %s191
      %p193 = scmp.lt.s32.totalorder %s15, 1
      %s194 = scalar_select %p193, %s15, 1
      %s195 = smul.addr %s194, 2
      %s196 = smul.addr %s195, 8
      %s197 = scalar_lea.vmem %s4, %s196
      %v199 = vld [vmem:[%s192] sm:$0xff]
      %v200 = vld [vmem:[%s192 + $0x8] sm:$0xff]
      %v201 = vpack.c.bf16 %v200, %v199
      %v202 = vld [vmem:[%s1] sm:$0xf]
      %v203 = vld [vmem:[%s1 + $0x4] sm:$0xf]
      %v204 = vld [vmem:[%s2] sm:$0x1]
      %v206 = vlaneseq
      %v207 = vshrl.u32 %v206, 7
      %v208 = vsub.s32 0, %v207
      %v209 = vrot.slane %v204, %v208
      %v213 = vunpack.c.l.b16 %v202
      %v214 = vunpack.c.l.b16 %v203
      %v215 = vpack.c.b16 %v214, %v213
      %vm217 = vcmask 130048
      %v219 = vsel %vm217, %v201, 0
      %221 = vmatprep.subr.bf16.mxu0 0
      %222 = vmatpush1.bf16.msra.mxu0 0
      %223 = vmatprep.subr.bf16.mxu0 0
      %224 = vmatpush1.bf16.msra.mxu0 0
      %225 = vmatprep.subr.bf16.mxu0 0
      %226 = vmatpush1.bf16.msra.mxu0 0
      %227 = vmatprep.subr.bf16.mxu0 0
      %228 = vmatpush1.bf16.msra.mxu0 0
      %229 = vmatprep.subr.bf16.mxu0 0
      %230 = vmatpush1.bf16.msra.mxu0 0
      %231 = vmatprep.subr.bf16.mxu0 0
      %232 = vmatpush1.bf16.msra.mxu0 0
      %233 = vmatprep.subr.bf16.mxu0 0
      %234 = vmatpush1.bf16.msra.mxu0 0
      %235 = vmatprep.subr.bf16.mxu0 0
      %236 = vmatpush1.bf16.msra.mxu0 %v215
      %237 = vmatprep.subr.bf16.mxu0 0
      %238 = vmatpush2.bf16.msra.mxu0 0
      %239 = vmatprep.subr.bf16.mxu0 0
      %240 = vmatpush2.bf16.msra.mxu0 0
      %241 = vmatprep.subr.bf16.mxu0 0
      %242 = vmatpush2.bf16.msra.mxu0 0
      %243 = vmatprep.subr.bf16.mxu0 0
      %244 = vmatpush2.bf16.msra.mxu0 0
      %245 = vmatprep.subr.bf16.mxu0 0
      %246 = vmatpush2.bf16.msra.mxu0 0
      %247 = vmatprep.subr.bf16.mxu0 0
      %248 = vmatpush2.bf16.msra.mxu0 0
      %249 = vmatprep.subr.bf16.mxu0 0
      %250 = vmatpush2.bf16.msra.mxu0 0
      %251 = vmatprep.subr.bf16.mxu0 0
      %252 = vmatpush2.bf16.msra.mxu0 0
      %253 = vmatprep.mubr.bf16.mxu0 0
      %254 = vmatmul.mubr.bf16.gmra.mxu0 %v219
      %v255 = vpop.f32.mrf.mxu0
      %v256 = vadd.f32 %v209, %v255
      %v257 = vpop.f32.mrf.mxu0
      %v258 = vpop.f32.mrf.mxu0
      %v259 = vadd.f32 %v209, %v258
      %v260 = vpop.f32.mrf.mxu0
      %261 = vdwg.mxu0
      %v262 = vld [vmem:[%s3] sm:$0xff]
      %v263 = vld [vmem:[%s3 + $0x8] sm:$0xff]
      %v264 = vadd.f32 %v256, %v262
      %v265 = vadd.f32 %v259, %v263
      %vm266 = vcmask 261120
      %267 = vst.msk [vmem:[%s197] sm:$0xff] %vm266, %v264
      %268 = vst.msk [vmem:[%s197 + $0x8] sm:$0xff] %vm266, %v265
      %p269 = scmp.lt.s32.totalorder %s15, 1
      %s270 = scalar_select %p269, %s15, 1
      %s271 = smul.addr %s270, 2
      %s272 = smul.addr %s271, 8
      %s273 = scalar_lea.vmem %s4, %s272
      // Predicated region
      $region37: #{transformer_cslr_forward.4} parent=35 // pred_check
        %p274 = pneg %p122
      $region38: #{transformer_cslr_forward.4} parent=35 // pred_check_branch
        %276 = sbr.rel (%p274) target = $region40
      $region39: #{transformer_cslr_forward.4} parent=35 // pred_region
        _
      $region40: #{transformer_cslr_forward.4} parent=35 // pred_fallthru
        _
    $region36: #{transformer_cslr_forward.4} parent=5 // pred_fallthru
      _
    %p277 = scmp.le.s32.totalorder 2, %s10
    // Predicated region
    $region41: #{transformer_cslr_forward.4} parent=5 // pred_check
      %p278 = pneg %p277
    $region42: #{transformer_cslr_forward.4} parent=5 // pred_check_branch
      %280 = sbr.rel (%p278) target = $region44
    $region43: #{transformer_cslr_forward.4} parent=5 // pred_region
      %s281 = ssub.s32 %s10, 2
      // Predicated region
      $region45: #{transformer_cslr_forward.4} parent=43 // pred_check
        %p282 = pneg %p128
      $region46: #{transformer_cslr_forward.4} parent=43 // pred_check_branch
        %284 = sbr.rel (%p282) target = $region48
      $region47: #{transformer_cslr_forward.4} parent=43 // pred_region
        %p285 = scmp.lt.s32.totalorder %s16, 1
        %s286 = scalar_select %p285, %s16, 1
        %s287 = smul.addr %s286, 2
        %s288 = smul.addr %s287, 8
        %s289 = scalar_lea.vmem %s4, %s288
      $region48: #{transformer_cslr_forward.4} parent=43 // pred_fallthru
        _
    $region44: #{transformer_cslr_forward.4} parent=5 // pred_fallthru
      _
  $region6: #{transformer_cslr_forward.4} parent=0 // loop_footer
    %s14 = sadd.s32 1, %s10
  $region7: #{transformer_cslr_forward.4} parent=0 // loop_footer_branch
    %9 = sbr.rel target = $region3
  $region8: #{transformer_cslr_forward.4} parent=0 // loop_exit
    _

// kernel: transformer_cslr_forward.5
$region0: #{transformer_cslr_forward.5}
  #allocation0 [shape = 'u32[]', space=smem, size = 0x4, offset = 0x4, fixed_abs, tag = 'smem constant byte address 0x4 - core index']
  #allocation1 [shape = 'u32[144,128]{1,0:T(1,128)}', space=vmem, size = 0x12000, scoped, tag = 'internal scratch']
  %s0 = inlined_call_operand.vmem [shape: f32[2,16,32], index: 0, kind: input, shape index: {}]
  %s1 = inlined_call_operand.vmem [shape: f32[2,1,16], index: 1, kind: input, shape index: {}]
  %s2 = inlined_call_operand.vmem [shape: f32[1,32], index: 2, kind: input, shape index: {}]
  %s3 = inlined_call_operand.vmem [shape: f32[1,32], index: 3, kind: input, shape index: {}]
  %s4 = inlined_call_operand.vmem [shape: bf16[32,96], index: 4, kind: input, shape index: {}]
  %s5 = inlined_call_operand.vmem [shape: f32[1,96], index: 5, kind: input, shape index: {}]
  %s6 = inlined_call_operand.vmem [shape: bf16[32,32], index: 6, kind: input, shape index: {}]
  %s7 = inlined_call_operand.vmem [shape: f32[1,32], index: 7, kind: input, shape index: {}]
  %s8 = inlined_call_operand.vmem [shape: f32[1,32], index: 8, kind: input, shape index: {}]
  %s9 = inlined_call_operand.vmem [shape: f32[1,32], index: 9, kind: input, shape index: {}]
  %s10 = inlined_call_operand.vmem [shape: bf16[32,64], index: 10, kind: input, shape index: {}]
  %s11 = inlined_call_operand.vmem [shape: f32[1,64], index: 11, kind: input, shape index: {}]
  %s12 = inlined_call_operand.vmem [shape: bf16[64,32], index: 12, kind: input, shape index: {}]
  %s13 = inlined_call_operand.vmem [shape: f32[1,32], index: 13, kind: input, shape index: {}]
  %s14 = inlined_call_operand.vmem [shape: f32[2,16,32], index: 14, kind: output, shape index: {}]
  %s15 = sld [smem:[#allocation0]]
  $region89: #{transformer_cslr_forward.5} parent=0
    _
  %s17 = ssub.s32 1, %s15
  %s18 = scalar_select 0, %s17, %s15
  loop: start=0, step=1, limit=4
  $region2: #{transformer_cslr_forward.5} parent=0 // loop_pre_header
    _
  $region3: #{transformer_cslr_forward.5} parent=0 // loop_header
    %s20 = sphi 0, %s24
    %p21 = scmp.ge.s32.totalorder %s20, 4
    %s30 = sphi 0, %s32
    %s33 = sphi 0, %s30
    %s34 = sphi 0, %s33
    %s50 = sphi 0, %s34
    %s56 = sphi 0, %s58
    %s59 = sphi 0, %s56
    %s60 = sphi 0, %s59
    %s76 = sphi 0, %s60
    %s80 = sphi 0, %s80
    %s82 = sphi 0, %s80
    %s83 = sphi 0, %s82
    %s97 = sphi 0, %s83
    %s101 = sphi 0, %s101
    %s103 = sphi 0, %s101
    %s104 = sphi 0, %s103
    %s118 = sphi 0, %s104
    %s122 = sphi 0, %s122
    %s124 = sphi 0, %s122
    %s125 = sphi 0, %s124
    %s139 = sphi 0, %s125
    %s143 = sphi 0, %s143
    %s145 = sphi 0, %s143
    %s146 = sphi 0, %s145
    %s160 = sphi 0, %s146
    %s164 = sphi 0, %s164
    %s166 = sphi 0, %s164
    %s167 = sphi 0, %s166
    %s181 = sphi 0, %s167
    %s185 = sphi 0, %s185
    %s187 = sphi 0, %s185
    %s188 = sphi 0, %s187
    %s202 = sphi 0, %s188
    %s206 = sphi 0, %s206
    %s208 = sphi 0, %s206
    %s209 = sphi 0, %s208
    %s223 = sphi 0, %s209
    %s227 = sphi 0, %s227
    %s229 = sphi 0, %s227
    %s230 = sphi 0, %s229
    %s244 = sphi 0, %s230
    %s248 = sphi 0, %s248
    %s250 = sphi 0, %s248
    %s251 = sphi 0, %s250
    %s265 = sphi 0, %s251
    %s269 = sphi 0, %s269
    %s271 = sphi 0, %s269
    %s272 = sphi 0, %s271
    %s286 = sphi 0, %s272
    %s290 = sphi 0, %s290
    %s292 = sphi 0, %s290
    %s293 = sphi 0, %s292
    %s307 = sphi 0, %s293
    %s311 = sphi 0, %s311
    %s313 = sphi 0, %s311
    %s314 = sphi 0, %s313
    %s328 = sphi 0, %s314
    %s334 = sphi 0, %s336
    %s337 = sphi 0, %s334
    %s338 = sphi 0, %s337
    %s354 = sphi 0, %s338
  $region4: #{transformer_cslr_forward.5} parent=0 // loop_header_branch
    %23 = sbr.rel (%p21) target = $region8
  $region5: #{transformer_cslr_forward.5} parent=0 // loop_body
    %s25 = ssub.s32 %s20, 1
    %s26 = ssub.s32 %s20, 2
    %s27 = sadd.s32 %s20, 1
    %s28 = ssub.s32 %s20, %s27
    %p29 = scmp.eq.s32.totalorder %s28, 0
    %s31 = sadd.s32 %s30, 1
    %s32 = scalar_select %p29, %s30, %s31
    %p35 = pneg %p29
    %p36 = scmp.eq.s32.totalorder %s20, 1
    %p37 = por %p35, %p36
    %p38 = scmp.ne.s32.totalorder %s30, %s33
    %p39 = scmp.eq.s32.totalorder %s20, 0
    %p40 = por %p38, %p39
    %p41 = scmp.ne.s32.totalorder %s30, %s33
    %p42 = scmp.eq.s32.totalorder %s25, 1
    %p43 = por %p41, %p42
    %p44 = scmp.ne.s32.totalorder %s33, %s34
    %p45 = scmp.eq.s32.totalorder %s25, 0
    %p46 = por %p44, %p45
    %p47 = scmp.ne.s32.totalorder %s33, %s34
    %p48 = scmp.eq.s32.totalorder %s26, 1
    %p49 = por %p47, %p48
    %p51 = scmp.ne.s32.totalorder %s34, %s50
    %p52 = scmp.eq.s32.totalorder %s26, 0
    %p53 = por %p51, %p52
    %s54 = ssub.s32 %s20, %s27
    %p55 = scmp.eq.s32.totalorder %s54, 0
    %s57 = sadd.s32 %s56, 1
    %s58 = scalar_select %p55, %s56, %s57
    %p61 = pneg %p55
    %p62 = scmp.eq.s32.totalorder %s20, 1
    %p63 = por %p61, %p62
    %p64 = scmp.ne.s32.totalorder %s56, %s59
    %p65 = scmp.eq.s32.totalorder %s20, 0
    %p66 = por %p64, %p65
    %p67 = scmp.ne.s32.totalorder %s56, %s59
    %p68 = scmp.eq.s32.totalorder %s25, 1
    %p69 = por %p67, %p68
    %p70 = scmp.ne.s32.totalorder %s59, %s60
    %p71 = scmp.eq.s32.totalorder %s25, 0
    %p72 = por %p70, %p71
    %p73 = scmp.ne.s32.totalorder %s59, %s60
    %p74 = scmp.eq.s32.totalorder %s26, 1
    %p75 = por %p73, %p74
    %p77 = scmp.ne.s32.totalorder %s60, %s76
    %p78 = scmp.eq.s32.totalorder %s26, 0
    %p79 = por %p77, %p78
    %s81 = sadd.s32 %s80, 1
    %p84 = scmp.eq.s32.totalorder %s20, 1
    %p85 = scmp.ne.s32.totalorder %s80, %s82
    %p86 = scmp.eq.s32.totalorder %s20, 0
    %p87 = por %p85, %p86
    %p88 = scmp.ne.s32.totalorder %s80, %s82
    %p89 = scmp.eq.s32.totalorder %s25, 1
    %p90 = por %p88, %p89
    %p91 = scmp.ne.s32.totalorder %s82, %s83
    %p92 = scmp.eq.s32.totalorder %s25, 0
    %p93 = por %p91, %p92
    %p94 = scmp.ne.s32.totalorder %s82, %s83
    %p95 = scmp.eq.s32.totalorder %s26, 1
    %p96 = por %p94, %p95
    %p98 = scmp.ne.s32.totalorder %s83, %s97
    %p99 = scmp.eq.s32.totalorder %s26, 0
    %p100 = por %p98, %p99
    %s102 = sadd.s32 %s101, 1
    %p105 = scmp.eq.s32.totalorder %s20, 1
    %p106 = scmp.ne.s32.totalorder %s101, %s103
    %p107 = scmp.eq.s32.totalorder %s20, 0
    %p108 = por %p106, %p107
    %p109 = scmp.ne.s32.totalorder %s101, %s103
    %p110 = scmp.eq.s32.totalorder %s25, 1
    %p111 = por %p109, %p110
    %p112 = scmp.ne.s32.totalorder %s103, %s104
    %p113 = scmp.eq.s32.totalorder %s25, 0
    %p114 = por %p112, %p113
    %p115 = scmp.ne.s32.totalorder %s103, %s104
    %p116 = scmp.eq.s32.totalorder %s26, 1
    %p117 = por %p115, %p116
    %p119 = scmp.ne.s32.totalorder %s104, %s118
    %p120 = scmp.eq.s32.totalorder %s26, 0
    %p121 = por %p119, %p120
    %s123 = sadd.s32 %s122, 1
    %p126 = scmp.eq.s32.totalorder %s20, 1
    %p127 = scmp.ne.s32.totalorder %s122, %s124
    %p128 = scmp.eq.s32.totalorder %s20, 0
    %p129 = por %p127, %p128
    %p130 = scmp.ne.s32.totalorder %s122, %s124
    %p131 = scmp.eq.s32.totalorder %s25, 1
    %p132 = por %p130, %p131
    %p133 = scmp.ne.s32.totalorder %s124, %s125
    %p134 = scmp.eq.s32.totalorder %s25, 0
    %p135 = por %p133, %p134
    %p136 = scmp.ne.s32.totalorder %s124, %s125
    %p137 = scmp.eq.s32.totalorder %s26, 1
    %p138 = por %p136, %p137
    %p140 = scmp.ne.s32.totalorder %s125, %s139
    %p141 = scmp.eq.s32.totalorder %s26, 0
    %p142 = por %p140, %p141
    %s144 = sadd.s32 %s143, 1
    %p147 = scmp.eq.s32.totalorder %s20, 1
    %p148 = scmp.ne.s32.totalorder %s143, %s145
    %p149 = scmp.eq.s32.totalorder %s20, 0
    %p150 = por %p148, %p149
    %p151 = scmp.ne.s32.totalorder %s143, %s145
    %p152 = scmp.eq.s32.totalorder %s25, 1
    %p153 = por %p151, %p152
    %p154 = scmp.ne.s32.totalorder %s145, %s146
    %p155 = scmp.eq.s32.totalorder %s25, 0
    %p156 = por %p154, %p155
    %p157 = scmp.ne.s32.totalorder %s145, %s146
    %p158 = scmp.eq.s32.totalorder %s26, 1
    %p159 = por %p157, %p158
    %p161 = scmp.ne.s32.totalorder %s146, %s160
    %p162 = scmp.eq.s32.totalorder %s26, 0
    %p163 = por %p161, %p162
    %s165 = sadd.s32 %s164, 1
    %p168 = scmp.eq.s32.totalorder %s20, 1
    %p169 = scmp.ne.s32.totalorder %s164, %s166
    %p170 = scmp.eq.s32.totalorder %s20, 0
    %p171 = por %p169, %p170
    %p172 = scmp.ne.s32.totalorder %s164, %s166
    %p173 = scmp.eq.s32.totalorder %s25, 1
    %p174 = por %p172, %p173
    %p175 = scmp.ne.s32.totalorder %s166, %s167
    %p176 = scmp.eq.s32.totalorder %s25, 0
    %p177 = por %p175, %p176
    %p178 = scmp.ne.s32.totalorder %s166, %s167
    %p179 = scmp.eq.s32.totalorder %s26, 1
    %p180 = por %p178, %p179
    %p182 = scmp.ne.s32.totalorder %s167, %s181
    %p183 = scmp.eq.s32.totalorder %s26, 0
    %p184 = por %p182, %p183
    %s186 = sadd.s32 %s185, 1
    %p189 = scmp.eq.s32.totalorder %s20, 1
    %p190 = scmp.ne.s32.totalorder %s185, %s187
    %p191 = scmp.eq.s32.totalorder %s20, 0
    %p192 = por %p190, %p191
    %p193 = scmp.ne.s32.totalorder %s185, %s187
    %p194 = scmp.eq.s32.totalorder %s25, 1
    %p195 = por %p193, %p194
    %p196 = scmp.ne.s32.totalorder %s187, %s188
    %p197 = scmp.eq.s32.totalorder %s25, 0
    %p198 = por %p196, %p197
    %p199 = scmp.ne.s32.totalorder %s187, %s188
    %p200 = scmp.eq.s32.totalorder %s26, 1
    %p201 = por %p199, %p200
    %p203 = scmp.ne.s32.totalorder %s188, %s202
    %p204 = scmp.eq.s32.totalorder %s26, 0
    %p205 = por %p203, %p204
    %s207 = sadd.s32 %s206, 1
    %p210 = scmp.eq.s32.totalorder %s20, 1
    %p211 = scmp.ne.s32.totalorder %s206, %s208
    %p212 = scmp.eq.s32.totalorder %s20, 0
    %p213 = por %p211, %p212
    %p214 = scmp.ne.s32.totalorder %s206, %s208
    %p215 = scmp.eq.s32.totalorder %s25, 1
    %p216 = por %p214, %p215
    %p217 = scmp.ne.s32.totalorder %s208, %s209
    %p218 = scmp.eq.s32.totalorder %s25, 0
    %p219 = por %p217, %p218
    %p220 = scmp.ne.s32.totalorder %s208, %s209
    %p221 = scmp.eq.s32.totalorder %s26, 1
    %p222 = por %p220, %p221
    %p224 = scmp.ne.s32.totalorder %s209, %s223
    %p225 = scmp.eq.s32.totalorder %s26, 0
    %p226 = por %p224, %p225
    %s228 = sadd.s32 %s227, 1
    %p231 = scmp.eq.s32.totalorder %s20, 1
    %p232 = scmp.ne.s32.totalorder %s227, %s229
    %p233 = scmp.eq.s32.totalorder %s20, 0
    %p234 = por %p232, %p233
    %p235 = scmp.ne.s32.totalorder %s227, %s229
    %p236 = scmp.eq.s32.totalorder %s25, 1
    %p237 = por %p235, %p236
    %p238 = scmp.ne.s32.totalorder %s229, %s230
    %p239 = scmp.eq.s32.totalorder %s25, 0
    %p240 = por %p238, %p239
    %p241 = scmp.ne.s32.totalorder %s229, %s230
    %p242 = scmp.eq.s32.totalorder %s26, 1
    %p243 = por %p241, %p242
    %p245 = scmp.ne.s32.totalorder %s230, %s244
    %p246 = scmp.eq.s32.totalorder %s26, 0
    %p247 = por %p245, %p246
    %s249 = sadd.s32 %s248, 1
    %p252 = scmp.eq.s32.totalorder %s20, 1
    %p253 = scmp.ne.s32.totalorder %s248, %s250
    %p254 = scmp.eq.s32.totalorder %s20, 0
    %p255 = por %p253, %p254
    %p256 = scmp.ne.s32.totalorder %s248, %s250
    %p257 = scmp.eq.s32.totalorder %s25, 1
    %p258 = por %p256, %p257
    %p259 = scmp.ne.s32.totalorder %s250, %s251
    %p260 = scmp.eq.s32.totalorder %s25, 0
    %p261 = por %p259, %p260
    %p262 = scmp.ne.s32.totalorder %s250, %s251
    %p263 = scmp.eq.s32.totalorder %s26, 1
    %p264 = por %p262, %p263
    %p266 = scmp.ne.s32.totalorder %s251, %s265
    %p267 = scmp.eq.s32.totalorder %s26, 0
    %p268 = por %p266, %p267
    %s270 = sadd.s32 %s269, 1
    %p273 = scmp.eq.s32.totalorder %s20, 1
    %p274 = scmp.ne.s32.totalorder %s269, %s271
    %p275 = scmp.eq.s32.totalorder %s20, 0
    %p276 = por %p274, %p275
    %p277 = scmp.ne.s32.totalorder %s269, %s271
    %p278 = scmp.eq.s32.totalorder %s25, 1
    %p279 = por %p277, %p278
    %p280 = scmp.ne.s32.totalorder %s271, %s272
    %p281 = scmp.eq.s32.totalorder %s25, 0
    %p282 = por %p280, %p281
    %p283 = scmp.ne.s32.totalorder %s271, %s272
    %p284 = scmp.eq.s32.totalorder %s26, 1
    %p285 = por %p283, %p284
    %p287 = scmp.ne.s32.totalorder %s272, %s286
    %p288 = scmp.eq.s32.totalorder %s26, 0
    %p289 = por %p287, %p288
    %s291 = sadd.s32 %s290, 1
    %p294 = scmp.eq.s32.totalorder %s20, 1
    %p295 = scmp.ne.s32.totalorder %s290, %s292
    %p296 = scmp.eq.s32.totalorder %s20, 0
    %p297 = por %p295, %p296
    %p298 = scmp.ne.s32.totalorder %s290, %s292
    %p299 = scmp.eq.s32.totalorder %s25, 1
    %p300 = por %p298, %p299
    %p301 = scmp.ne.s32.totalorder %s292, %s293
    %p302 = scmp.eq.s32.totalorder %s25, 0
    %p303 = por %p301, %p302
    %p304 = scmp.ne.s32.totalorder %s292, %s293
    %p305 = scmp.eq.s32.totalorder %s26, 1
    %p306 = por %p304, %p305
    %p308 = scmp.ne.s32.totalorder %s293, %s307
    %p309 = scmp.eq.s32.totalorder %s26, 0
    %p310 = por %p308, %p309
    %s312 = sadd.s32 %s311, 1
    %p315 = scmp.eq.s32.totalorder %s20, 1
    %p316 = scmp.ne.s32.totalorder %s311, %s313
    %p317 = scmp.eq.s32.totalorder %s20, 0
    %p318 = por %p316, %p317
    %p319 = scmp.ne.s32.totalorder %s311, %s313
    %p320 = scmp.eq.s32.totalorder %s25, 1
    %p321 = por %p319, %p320
    %p322 = scmp.ne.s32.totalorder %s313, %s314
    %p323 = scmp.eq.s32.totalorder %s25, 0
    %p324 = por %p322, %p323
    %p325 = scmp.ne.s32.totalorder %s313, %s314
    %p326 = scmp.eq.s32.totalorder %s26, 1
    %p327 = por %p325, %p326
    %p329 = scmp.ne.s32.totalorder %s314, %s328
    %p330 = scmp.eq.s32.totalorder %s26, 0
    %p331 = por %p329, %p330
    %s332 = ssub.s32 %s20, %s27
    %p333 = scmp.eq.s32.totalorder %s332, 0
    %s335 = sadd.s32 %s334, 1
    %s336 = scalar_select %p333, %s334, %s335
    %p339 = pneg %p333
    %p340 = scmp.eq.s32.totalorder %s20, 1
    %p341 = por %p339, %p340
    %p342 = scmp.ne.s32.totalorder %s334, %s337
    %p343 = scmp.eq.s32.totalorder %s20, 0
    %p344 = por %p342, %p343
    %p345 = scmp.ne.s32.totalorder %s334, %s337
    %p346 = scmp.eq.s32.totalorder %s25, 1
    %p347 = por %p345, %p346
    %p348 = scmp.ne.s32.totalorder %s337, %s338
    %p349 = scmp.eq.s32.totalorder %s25, 0
    %p350 = por %p348, %p349
    %p351 = scmp.ne.s32.totalorder %s337, %s338
    %p352 = scmp.eq.s32.totalorder %s26, 1
    %p353 = por %p351, %p352
    %p355 = scmp.ne.s32.totalorder %s338, %s354
    %p356 = scmp.eq.s32.totalorder %s26, 0
    %p357 = por %p355, %p356
    %p358 = scmp.le.s32.totalorder 1, %s20
    %p359 = scmp.lt.s32.totalorder %s20, 3
    %p360 = pnand %p358, %p359
    %p361 = pneg %p360
    // Predicated region
    $region9: #{transformer_cslr_forward.5} parent=5 // pred_check
      _
    $region10: #{transformer_cslr_forward.5} parent=5 // pred_check_branch
      %363 = sbr.rel (%p360) target = $region12
    $region11: #{transformer_cslr_forward.5} parent=5 // pred_region
      %s364 = ssub.s32 %s20, 1
      // Predicated region
      $region13: #{transformer_cslr_forward.5} parent=11 // pred_check
        %p365 = pneg %p93
      $region14: #{transformer_cslr_forward.5} parent=11 // pred_check_branch
        %367 = sbr.rel (%p365) target = $region16
      $region15: #{transformer_cslr_forward.5} parent=11 // pred_region
        _
      $region16: #{transformer_cslr_forward.5} parent=11 // pred_fallthru
        _
      // Predicated region
      $region17: #{transformer_cslr_forward.5} parent=11 // pred_check
        %p368 = pneg %p114
      $region18: #{transformer_cslr_forward.5} parent=11 // pred_check_branch
        %370 = sbr.rel (%p368) target = $region20
      $region19: #{transformer_cslr_forward.5} parent=11 // pred_region
        _
      $region20: #{transformer_cslr_forward.5} parent=11 // pred_fallthru
        _
      // Predicated region
      $region21: #{transformer_cslr_forward.5} parent=11 // pred_check
        %p371 = pneg %p135
      $region22: #{transformer_cslr_forward.5} parent=11 // pred_check_branch
        %373 = sbr.rel (%p371) target = $region24
      $region23: #{transformer_cslr_forward.5} parent=11 // pred_region
        _
      $region24: #{transformer_cslr_forward.5} parent=11 // pred_fallthru
        _
      // Predicated region
      $region25: #{transformer_cslr_forward.5} parent=11 // pred_check
        %p374 = pneg %p156
      $region26: #{transformer_cslr_forward.5} parent=11 // pred_check_branch
        %376 = sbr.rel (%p374) target = $region28
      $region27: #{transformer_cslr_forward.5} parent=11 // pred_region
        _
      $region28: #{transformer_cslr_forward.5} parent=11 // pred_fallthru
        _
      // Predicated region
      $region29: #{transformer_cslr_forward.5} parent=11 // pred_check
        %p377 = pneg %p177
      $region30: #{transformer_cslr_forward.5} parent=11 // pred_check_branch
        %379 = sbr.rel (%p377) target = $region32
      $region31: #{transformer_cslr_forward.5} parent=11 // pred_region
        _
      $region32: #{transformer_cslr_forward.5} parent=11 // pred_fallthru
        _
      // Predicated region
      $region33: #{transformer_cslr_forward.5} parent=11 // pred_check
        %p380 = pneg %p198
      $region34: #{transformer_cslr_forward.5} parent=11 // pred_check_branch
        %382 = sbr.rel (%p380) target = $region36
      $region35: #{transformer_cslr_forward.5} parent=11 // pred_region
        _
      $region36: #{transformer_cslr_forward.5} parent=11 // pred_fallthru
        _
      // Predicated region
      $region37: #{transformer_cslr_forward.5} parent=11 // pred_check
        %p383 = pneg %p219
      $region38: #{transformer_cslr_forward.5} parent=11 // pred_check_branch
        %385 = sbr.rel (%p383) target = $region40
      $region39: #{transformer_cslr_forward.5} parent=11 // pred_region
        _
      $region40: #{transformer_cslr_forward.5} parent=11 // pred_fallthru
        _
      // Predicated region
      $region41: #{transformer_cslr_forward.5} parent=11 // pred_check
        %p386 = pneg %p240
      $region42: #{transformer_cslr_forward.5} parent=11 // pred_check_branch
        %388 = sbr.rel (%p386) target = $region44
      $region43: #{transformer_cslr_forward.5} parent=11 // pred_region
        _
      $region44: #{transformer_cslr_forward.5} parent=11 // pred_fallthru
        _
      // Predicated region
      $region45: #{transformer_cslr_forward.5} parent=11 // pred_check
        %p389 = pneg %p261
      $region46: #{transformer_cslr_forward.5} parent=11 // pred_check_branch
        %391 = sbr.rel (%p389) target = $region48
      $region47: #{transformer_cslr_forward.5} parent=11 // pred_region
        _
      $region48: #{transformer_cslr_forward.5} parent=11 // pred_fallthru
        _
      // Predicated region
      $region49: #{transformer_cslr_forward.5} parent=11 // pred_check
        %p392 = pneg %p282
      $region50: #{transformer_cslr_forward.5} parent=11 // pred_check_branch
        %394 = sbr.rel (%p392) target = $region52
      $region51: #{transformer_cslr_forward.5} parent=11 // pred_region
        _
      $region52: #{transformer_cslr_forward.5} parent=11 // pred_fallthru
        _
      // Predicated region
      $region53: #{transformer_cslr_forward.5} parent=11 // pred_check
        %p395 = pneg %p303
      $region54: #{transformer_cslr_forward.5} parent=11 // pred_check_branch
        %397 = sbr.rel (%p395) target = $region56
      $region55: #{transformer_cslr_forward.5} parent=11 // pred_region
        _
      $region56: #{transformer_cslr_forward.5} parent=11 // pred_fallthru
        _
      // Predicated region
      $region57: #{transformer_cslr_forward.5} parent=11 // pred_check
        %p398 = pneg %p324
      $region58: #{transformer_cslr_forward.5} parent=11 // pred_check_branch
        %400 = sbr.rel (%p398) target = $region60
      $region59: #{transformer_cslr_forward.5} parent=11 // pred_region
        _
      $region60: #{transformer_cslr_forward.5} parent=11 // pred_fallthru
        _
    $region12: #{transformer_cslr_forward.5} parent=5 // pred_fallthru
      _
    %p401 = scmp.lt.s32.totalorder %s20, 2
    // Predicated region
    $region61: #{transformer_cslr_forward.5} parent=5 // pred_check
      %p402 = pneg %p401
    $region62: #{transformer_cslr_forward.5} parent=5 // pred_check_branch
      %404 = sbr.rel (%p402) target = $region64
    $region63: #{transformer_cslr_forward.5} parent=5 // pred_region
      // Predicated region
      $region65: #{transformer_cslr_forward.5} parent=63 // pred_check
        %p405 = pneg %p40
      $region66: #{transformer_cslr_forward.5} parent=63 // pred_check_branch
        %407 = sbr.rel (%p405) target = $region68
      $region67: #{transformer_cslr_forward.5} parent=63 // pred_region
        %p408 = scmp.lt.s32.totalorder %s20, 1
        %s409 = scalar_select %p408, %s20, 1
        %s410 = smul.addr %s409, 2
        %s411 = smul.addr %s410, 8
        %s412 = scalar_lea.vmem %s0, %s411
      $region68: #{transformer_cslr_forward.5} parent=63 // pred_fallthru
        _
      // Predicated region
      $region69: #{transformer_cslr_forward.5} parent=63 // pred_check
        %p413 = pneg %p66
      $region70: #{transformer_cslr_forward.5} parent=63 // pred_check_branch
        %415 = sbr.rel (%p413) target = $region72
      $region71: #{transformer_cslr_forward.5} parent=63 // pred_region
        %p416 = scmp.lt.s32.totalorder %s20, 1
        %s417 = scalar_select %p416, %s20, 1
        %s418 = scalar_lea.vmem %s1, %s417
      $region72: #{transformer_cslr_forward.5} parent=63 // pred_fallthru
        _
    $region64: #{transformer_cslr_forward.5} parent=5 // pred_fallthru
      _
    %p419 = scmp.le.s32.totalorder 1, %s20
    %p420 = scmp.lt.s32.totalorder %s20, 3
    %p421 = pnand %p419, %p420
    %p422 = pneg %p421
    // Predicated region
    $region73: #{transformer_cslr_forward.5} parent=5 // pred_check
      _
    $region74: #{transformer_cslr_forward.5} parent=5 // pred_check_branch
      %424 = sbr.rel (%p421) target = $region76
    $region75: #{transformer_cslr_forward.5} parent=5 // pred_region
      %s425 = ssub.s32 %s20, 1
      %p426 = scmp.lt.s32.totalorder %s25, 1
      %s427 = scalar_select %p426, %s25, 1
      %s428 = smul.addr %s427, 2
      %s429 = smul.addr %s428, 8
      %s430 = scalar_lea.vmem %s0, %s429
      %p431 = pneg %p46
      %p432 = pneg %p43
      %p433 = scmp.lt.s32.totalorder %s25, 1
      %s434 = scalar_select %p433, %s25, 1
      %s435 = scalar_lea.vmem %s1, %s434
      %p436 = pneg %p72
      %p437 = pneg %p69
      %p438 = pneg %p93
      %p439 = pneg %p90
      %p440 = pneg %p114
      %p441 = pneg %p111
      %p442 = pneg %p135
      %p443 = pneg %p132
      %p444 = pneg %p156
      %p445 = pneg %p153
      %p446 = pneg %p177
      %p447 = pneg %p174
      %p448 = pneg %p198
      %p449 = pneg %p195
      %p450 = pneg %p219
      %p451 = pneg %p216
      %p452 = pneg %p240
      %p453 = pneg %p237
      %p454 = pneg %p261
      %p455 = pneg %p258
      %p456 = pneg %p282
      %p457 = pneg %p279
      %p458 = pneg %p303
      %p459 = pneg %p300
      %p460 = pneg %p324
      %p461 = pneg %p321
      %p462 = pneg %p350
      %p463 = pneg %p347
      %p464 = scmp.lt.s32.totalorder %s25, 1
      %s465 = scalar_select %p464, %s25, 1
      %s466 = smul.addr %s465, 2
      %s467 = smul.addr %s466, 8
      %s468 = scalar_lea.vmem %s14, %s467
      %p469 = scmp.lt.s32.totalorder %s25, 1
      %s470 = scalar_select %p469, %s25, 1
      %s471 = smul.addr %s470, 2
      %s472 = smul.addr %s471, 8
      %s473 = scalar_lea.vmem %s0, %s472
      %p474 = scmp.lt.s32.totalorder %s25, 1
      %s475 = scalar_select %p474, %s25, 1
      %s476 = scalar_lea.vmem %s1, %s475
      %p477 = scmp.lt.s32.totalorder %s25, 1
      %s478 = scalar_select %p477, %s25, 1
      %s479 = smul.addr %s478, 2
      %s480 = smul.addr %s479, 8
      %s481 = scalar_lea.vmem %s14, %s480
      %v483 = vld [vmem:[%s473] sm:$0xff]
      %v484 = vld [vmem:[%s473 + $0x8] sm:$0xff]
      %v485 = vld [vmem:[%s476] sm:$0x1]
      %v486 = vld [vmem:[%s2] sm:$0x1]
      %v487 = vld [vmem:[%s3] sm:$0x1]
      %vm488 = vcmask 261120
      %v489 = vsel %vm488, %v483, 0.0
      %490 = vadd.xlane.f32.xlu0 %v489
      %v491 = vpop.xlane.xlu0 %490
      %v492 = vsel %vm488, %v484, 0.0
      %493 = vadd.xlane.f32.xlu0 %v492
      %v494 = vpop.xlane.xlu0 %493
      %v495 = vrcp.pop 32.0
      %v496 = vmul.f32 %v491, %v495
      %v497 = vmul.f32 %v494, %v495
      %v498 = vsub.f32 %v483, %v496
      %v499 = vsub.f32 %v484, %v497
      %v500 = vmul.f32 %v498, %v498
      %v501 = vmul.f32 %v499, %v499
      %v502 = vsel %vm488, %v500, 0.0
      %503 = vadd.xlane.f32.xlu0 %v502
      %v504 = vpop.xlane.xlu0 %503
      %v505 = vsel %vm488, %v501, 0.0
      %506 = vadd.xlane.f32.xlu0 %v505
      %v507 = vpop.xlane.xlu0 %506
      %v508 = vmul.f32 %v504, %v495
      %v509 = vmul.f32 %v507, %v495
      %v510 = vadd.f32 %v508, 1e-05
      %v511 = vadd.f32 %v509, 1e-05
      %v512 = vrsqrt.pop %v510
      %v513 = vrsqrt.pop %v511
      %v514 = vmul.f32 %v498, %v512
      %v515 = vmul.f32 %v499, %v513
      %v517 = vlaneseq
      %v518 = vshrl.u32 %v517, 7
      %v519 = vsub.s32 0, %v518
      %v520 = vrot.slane %v486, %v519
      %v522 = vmul.f32 %v514, %v520
      %v523 = vmul.f32 %v515, %v520
      %v525 = vlaneseq
      %v526 = vshrl.u32 %v525, 7
      %v527 = vsub.s32 0, %v526
      %v528 = vrot.slane %v487, %v527
      %v530 = vadd.f32 %v522, %v528
      %v531 = vadd.f32 %v523, %v528
      %v532 = vpack.c.bf16 %v531, %v530
      %v533 = vld [vmem:[%s4] sm:$0xf]
      %v534 = vld [vmem:[%s4 + $0x4] sm:$0xf]
      %v535 = vld [vmem:[%s4 + $0x8] sm:$0xf]
      %v536 = vld [vmem:[%s4 + $0xc] sm:$0xf]
      %v537 = vld [vmem:[%s5] sm:$0x1]
      %v539 = vlaneseq
      %v540 = vshrl.u32 %v539, 7
      %v541 = vsub.s32 0, %v540
      %v542 = vrot.slane %v537, %v541
      %v548 = vunpack.c.l.b16 %v533
      %v549 = vunpack.c.l.b16 %v534
      %v550 = vunpack.c.l.b16 %v535
      %v551 = vunpack.c.l.b16 %v536
      %v552 = vpack.c.b16 %v549, %v548
      %v553 = vpack.c.b16 %v551, %v550
      %v557 = vsel %vm488, %v532, 0
      %559 = vmatprep.subr.bf16.mxu0 0
      %560 = vmatpush1.bf16.msra.mxu0 0
      %561 = vmatprep.subr.bf16.mxu0 0
      %562 = vmatpush1.bf16.msra.mxu0 0
      %563 = vmatprep.subr.bf16.mxu0 0
      %564 = vmatpush1.bf16.msra.mxu0 0
      %565 = vmatprep.subr.bf16.mxu0 0
      %566 = vmatpush1.bf16.msra.mxu0 0
      %567 = vmatprep.subr.bf16.mxu0 0
      %568 = vmatpush1.bf16.msra.mxu0 0
      %569 = vmatprep.subr.bf16.mxu0 0
      %570 = vmatpush1.bf16.msra.mxu0 0
      %571 = vmatprep.subr.bf16.mxu0 0
      %572 = vmatpush1.bf16.msra.mxu0 %v553
      %573 = vmatprep.subr.bf16.mxu0 0
      %574 = vmatpush1.bf16.msra.mxu0 %v552
      %575 = vmatprep.subr.bf16.mxu0 0
      %576 = vmatpush2.bf16.msra.mxu0 0
      %577 = vmatprep.subr.bf16.mxu0 0
      %578 = vmatpush2.bf16.msra.mxu0 0
      %579 = vmatprep.subr.bf16.mxu0 0
      %580 = vmatpush2.bf16.msra.mxu0 0
      %581 = vmatprep.subr.bf16.mxu0 0
      %582 = vmatpush2.bf16.msra.mxu0 0
      %583 = vmatprep.subr.bf16.mxu0 0
      %584 = vmatpush2.bf16.msra.mxu0 0
      %585 = vmatprep.subr.bf16.mxu0 0
      %586 = vmatpush2.bf16.msra.mxu0 0
      %587 = vmatprep.subr.bf16.mxu0 0
      %588 = vmatpush2.bf16.msra.mxu0 0
      %589 = vmatprep.subr.bf16.mxu0 0
      %590 = vmatpush2.bf16.msra.mxu0 0
      %591 = vmatprep.mubr.bf16.mxu0 0
      %592 = vmatmul.mubr.bf16.gmra.mxu0 %v557
      %v593 = vpop.f32.mrf.mxu0
      %v594 = vadd.f32 %v542, %v593
      %v595 = vpop.f32.mrf.mxu0
      %v596 = vpop.f32.mrf.mxu0
      %v597 = vadd.f32 %v542, %v596
      %v598 = vpop.f32.mrf.mxu0
      %599 = vdwg.mxu0
      %v600 = vpack.c.bf16 %v597, %v594
      %v602 = vlaneseq
      %v603 = vshrl.u32 %v602, 7
      %v604 = vsub.s32 0, %v603
      %v605 = vrot.slane %v485, %v604
      %608 = vrot.lane.b32.xlu0 %v600, 96
      %v609 = vpop.permute.xlu0 %608
      %v611 = vsel %vm488, %v600, 0
      %v614 = vsel %vm488, %v609, 0
      %616 = vmatprep.subr.bf16.mxu0 0
      %617 = vmatpush1.bf16.xpose.msra.mxu0 0
      %618 = vmatprep.subr.bf16.mxu0 0
      %619 = vmatpush1.bf16.xpose.msra.mxu0 0
      %620 = vmatprep.subr.bf16.mxu0 0
      %621 = vmatpush1.bf16.xpose.msra.mxu0 0
      %622 = vmatprep.subr.bf16.mxu0 0
      %623 = vmatpush1.bf16.xpose.msra.mxu0 0
      %624 = vmatprep.subr.bf16.mxu0 0
      %625 = vmatpush1.bf16.xpose.msra.mxu0 0
      %626 = vmatprep.subr.bf16.mxu0 0
      %627 = vmatpush1.bf16.xpose.msra.mxu0 0
      %628 = vmatprep.subr.bf16.mxu0 0
      %629 = vmatpush1.bf16.xpose.msra.mxu0 0
      %630 = vmatprep.subr.bf16.mxu0 0
      %631 = vmatpush1.bf16.xpose.msra.mxu0 %v614
      %632 = vmatprep.subr.bf16.mxu0 0
      %633 = vmatpush2.bf16.xpose.msra.mxu0 0
      %634 = vmatprep.subr.bf16.mxu0 0
      %635 = vmatpush2.bf16.xpose.msra.mxu0 0
      %636 = vmatprep.subr.bf16.mxu0 0
      %637 = vmatpush2.bf16.xpose.msra.mxu0 0
      %638 = vmatprep.subr.bf16.mxu0 0
      %639 = vmatpush2.bf16.xpose.msra.mxu0 0
      %640 = vmatprep.subr.bf16.mxu0 0
      %641 = vmatpush2.bf16.xpose.msra.mxu0 0
      %642 = vmatprep.subr.bf16.mxu0 0
      %643 = vmatpush2.bf16.xpose.msra.mxu0 0
      %644 = vmatprep.subr.bf16.mxu0 0
      %645 = vmatpush2.bf16.xpose.msra.mxu0 0
      %646 = vmatprep.subr.bf16.mxu0 0
      %647 = vmatpush2.bf16.xpose.msra.mxu0 0
      %648 = vmatprep.mubr.bf16.mxu0 0
      %649 = vmatmul.mubr.bf16.gmra.mxu0 %v611
      %v650 = vpop.f32.mrf.mxu0
      %v651 = vadd.f32 %v605, %v650
      %v652 = vpop.f32.mrf.mxu0
      %v653 = vpop.f32.mrf.mxu0
      %v654 = vadd.f32 %v605, %v653
      %v655 = vpop.f32.mrf.mxu0
      %656 = vdwg.mxu0
      %vm657 = vcmask 130048
      %v658 = vsel %vm657, %v651, -inf
      %659 = vmax.xlane.f32.xlu0 %v658
      %v660 = vpop.xlane.xlu0 %659
      %v661 = vsel %vm657, %v654, -inf
      %662 = vmax.xlane.f32.xlu0 %v661
      %v663 = vpop.xlane.xlu0 %662
      %v664 = vsub.f32 %v651, %v660
      %v665 = vsub.f32 %v654, %v663
      %v666 = vmul.f32 %v664, 1.442695
      %v667 = vpow.pop %v666
      %v668 = vmul.f32 %v665, 1.442695
      %v669 = vpow.pop %v668
      %v670 = vsel %vm657, %v667, 0.0
      %671 = vadd.xlane.f32.xlu0 %v670
      %v672 = vpop.xlane.xlu0 %671
      %v673 = vsel %vm657, %v669, 0.0
      %674 = vadd.xlane.f32.xlu0 %v673
      %v675 = vpop.xlane.xlu0 %674
      %v676 = vpack.c.bf16 %v669, %v667
      %677 = vrot.lane.b32.xlu0 %v600, 64
      %v678 = vpop.permute.xlu0 %677
      %v681 = vsel %vm657, %v676, 0
      %683 = vmatprep.subr.bf16.mxu0 0
      %684 = vmatpush1.bf16.msra.mxu0 0
      %685 = vmatprep.subr.bf16.mxu0 0
      %686 = vmatpush1.bf16.msra.mxu0 0
      %687 = vmatprep.subr.bf16.mxu0 0
      %688 = vmatpush1.bf16.msra.mxu0 0
      %689 = vmatprep.subr.bf16.mxu0 0
      %690 = vmatpush1.bf16.msra.mxu0 0
      %691 = vmatprep.subr.bf16.mxu0 0
      %692 = vmatpush1.bf16.msra.mxu0 0
      %693 = vmatprep.subr.bf16.mxu0 0
      %694 = vmatpush1.bf16.msra.mxu0 0
      %695 = vmatprep.subr.bf16.mxu0 0
      %696 = vmatpush1.bf16.msra.mxu0 0
      %697 = vmatprep.subr.bf16.mxu0 0
      %698 = vmatpush1.bf16.msra.mxu0 %v678
      %699 = vmatprep.subr.bf16.mxu0 0
      %700 = vmatpush2.bf16.msra.mxu0 0
      %701 = vmatprep.subr.bf16.mxu0 0
      %702 = vmatpush2.bf16.msra.mxu0 0
      %703 = vmatprep.subr.bf16.mxu0 0
      %704 = vmatpush2.bf16.msra.mxu0 0
      %705 = vmatprep.subr.bf16.mxu0 0
      %706 = vmatpush2.bf16.msra.mxu0 0
      %707 = vmatprep.subr.bf16.mxu0 0
      %708 = vmatpush2.bf16.msra.mxu0 0
      %709 = vmatprep.subr.bf16.mxu0 0
      %710 = vmatpush2.bf16.msra.mxu0 0
      %711 = vmatprep.subr.bf16.mxu0 0
      %712 = vmatpush2.bf16.msra.mxu0 0
      %713 = vmatprep.subr.bf16.mxu0 0
      %714 = vmatpush2.bf16.msra.mxu0 0
      %715 = vmatprep.mubr.bf16.mxu0 0
      %716 = vmatmul.mubr.bf16.gmra.mxu0 %v681
      %v717 = vpop.f32.mrf.mxu0
      %v718 = vadd.f32 0.0, %v717
      %v719 = vpop.f32.mrf.mxu0
      %v720 = vpop.f32.mrf.mxu0
      %v721 = vadd.f32 0.0, %v720
      %v722 = vpop.f32.mrf.mxu0
      %723 = vdwg.mxu0
      %v724 = vrcp.pop %v672
      %v725 = vrcp.pop %v675
      %v726 = vmul.f32 %v718, %v724
      %v727 = vmul.f32 %v721, %v725
      %v728 = vpack.c.bf16 %v727, %v726
      %v729 = vld [vmem:[%s6] sm:$0xf]
      %v730 = vld [vmem:[%s6 + $0x4] sm:$0xf]
      %v731 = vld [vmem:[%s6 + $0x8] sm:$0xf]
      %v732 = vld [vmem:[%s6 + $0xc] sm:$0xf]
      %v737 = vunpack.c.l.b16 %v729
      %v738 = vunpack.c.l.b16 %v730
      %v739 = vunpack.c.l.b16 %v731
      %v740 = vunpack.c.l.b16 %v732
      %v741 = vpack.c.b16 %v738, %v737
      %v742 = vpack.c.b16 %v740, %v739
      %v746 = vsel %vm488, %v728, 0
      %748 = vmatprep.subr.bf16.mxu0 0
      %749 = vmatpush1.bf16.msra.mxu0 0
      %750 = vmatprep.subr.bf16.mxu0 0
      %751 = vmatpush1.bf16.msra.mxu0 0
      %752 = vmatprep.subr.bf16.mxu0 0
      %753 = vmatpush1.bf16.msra.mxu0 0
      %754 = vmatprep.subr.bf16.mxu0 0
      %755 = vmatpush1.bf16.msra.mxu0 0
      %756 = vmatprep.subr.bf16.mxu0 0
      %757 = vmatpush1.bf16.msra.mxu0 0
      %758 = vmatprep.subr.bf16.mxu0 0
      %759 = vmatpush1.bf16.msra.mxu0 0
      %760 = vmatprep.subr.bf16.mxu0 0
      %761 = vmatpush1.bf16.msra.mxu0 %v742
      %762 = vmatprep.subr.bf16.mxu0 0
      %763 = vmatpush1.bf16.msra.mxu0 %v741
      %764 = vmatprep.subr.bf16.mxu0 0
      %765 = vmatpush2.bf16.msra.mxu0 0
      %766 = vmatprep.subr.bf16.mxu0 0
      %767 = vmatpush2.bf16.msra.mxu0 0
      %768 = vmatprep.subr.bf16.mxu0 0
      %769 = vmatpush2.bf16.msra.mxu0 0
      %770 = vmatprep.subr.bf16.mxu0 0
      %771 = vmatpush2.bf16.msra.mxu0 0
      %772 = vmatprep.subr.bf16.mxu0 0
      %773 = vmatpush2.bf16.msra.mxu0 0
      %774 = vmatprep.subr.bf16.mxu0 0
      %775 = vmatpush2.bf16.msra.mxu0 0
      %776 = vmatprep.subr.bf16.mxu0 0
      %777 = vmatpush2.bf16.msra.mxu0 0
      %778 = vmatprep.subr.bf16.mxu0 0
      %779 = vmatpush2.bf16.msra.mxu0 0
      %780 = vmatprep.mubr.bf16.mxu0 0
      %781 = vmatmul.mubr.bf16.gmra.mxu0 %v746
      %v782 = vpop.f32.mrf.mxu0
      %v783 = vadd.f32 0.0, %v782
      %v784 = vpop.f32.mrf.mxu0
      %v785 = vpop.f32.mrf.mxu0
      %v786 = vadd.f32 0.0, %v785
      %v787 = vpop.f32.mrf.mxu0
      %788 = vdwg.mxu0
      %v789 = vadd.f32 %v483, %v783
      %v790 = vadd.f32 %v484, %v786
      %v791 = vld [vmem:[%s7] sm:$0x1]
      %v793 = vlaneseq
      %v794 = vshrl.u32 %v793, 7
      %v795 = vsub.s32 0, %v794
      %v796 = vrot.slane %v791, %v795
      %v798 = vadd.f32 %v789, %v796
      %v799 = vadd.f32 %v790, %v796
      %v800 = vld [vmem:[%s8] sm:$0x1]
      %v801 = vld [vmem:[%s9] sm:$0x1]
      %v802 = vsel %vm488, %v798, 0.0
      %803 = vadd.xlane.f32.xlu0 %v802
      %v804 = vpop.xlane.xlu0 %803
      %v805 = vsel %vm488, %v799, 0.0
      %806 = vadd.xlane.f32.xlu0 %v805
      %v807 = vpop.xlane.xlu0 %806
      %v808 = vmul.f32 %v804, %v495
      %v809 = vmul.f32 %v807, %v495
      %v810 = vsub.f32 %v798, %v808
      %v811 = vsub.f32 %v799, %v809
      %v812 = vmul.f32 %v810, %v810
      %v813 = vmul.f32 %v811, %v811
      %v814 = vsel %vm488, %v812, 0.0
      %815 = vadd.xlane.f32.xlu0 %v814
      %v816 = vpop.xlane.xlu0 %815
      %v817 = vsel %vm488, %v813, 0.0
      %818 = vadd.xlane.f32.xlu0 %v817
      %v819 = vpop.xlane.xlu0 %818
      %v820 = vmul.f32 %v816, %v495
      %v821 = vmul.f32 %v819, %v495
      %v822 = vadd.f32 %v820, 1e-05
      %v823 = vadd.f32 %v821, 1e-05
      %v824 = vrsqrt.pop %v822
      %v825 = vrsqrt.pop %v823
      %v826 = vmul.f32 %v810, %v824
      %v827 = vmul.f32 %v811, %v825
      %v829 = vlaneseq
      %v830 = vshrl.u32 %v829, 7
      %v831 = vsub.s32 0, %v830
      %v832 = vrot.slane %v800, %v831
      %v834 = vmul.f32 %v826, %v832
      %v835 = vmul.f32 %v827, %v832
      %v837 = vlaneseq
      %v838 = vshrl.u32 %v837, 7
      %v839 = vsub.s32 0, %v838
      %v840 = vrot.slane %v801, %v839
      %v842 = vadd.f32 %v834, %v840
      %v843 = vadd.f32 %v835, %v840
      %v844 = vpack.c.bf16 %v843, %v842
      %v845 = vld [vmem:[%s10] sm:$0xf]
      %v846 = vld [vmem:[%s10 + $0x4] sm:$0xf]
      %v847 = vld [vmem:[%s10 + $0x8] sm:$0xf]
      %v848 = vld [vmem:[%s10 + $0xc] sm:$0xf]
      %v849 = vld [vmem:[%s11] sm:$0x1]
      %v851 = vlaneseq
      %v852 = vshrl.u32 %v851, 7
      %v853 = vsub.s32 0, %v852
      %v854 = vrot.slane %v849, %v853
      %v860 = vunpack.c.l.b16 %v845
      %v861 = vunpack.c.l.b16 %v846
      %v862 = vunpack.c.l.b16 %v847
      %v863 = vunpack.c.l.b16 %v848
      %v864 = vpack.c.b16 %v861, %v860
      %v865 = vpack.c.b16 %v863, %v862
      %v869 = vsel %vm488, %v844, 0
      %871 = vmatprep.subr.bf16.mxu0 0
      %872 = vmatpush1.bf16.msra.mxu0 0
      %873 = vmatprep.subr.bf16.mxu0 0
      %874 = vmatpush1.bf16.msra.mxu0 0
      %875 = vmatprep.subr.bf16.mxu0 0
      %876 = vmatpush1.bf16.msra.mxu0 0
      %877 = vmatprep.subr.bf16.mxu0 0
      %878 = vmatpush1.bf16.msra.mxu0 0
      %879 = vmatprep.subr.bf16.mxu0 0
      %880 = vmatpush1.bf16.msra.mxu0 0
      %881 = vmatprep.subr.bf16.mxu0 0
      %882 = vmatpush1.bf16.msra.mxu0 0
      %883 = vmatprep.subr.bf16.mxu0 0
      %884 = vmatpush1.bf16.msra.mxu0 %v865
      %885 = vmatprep.subr.bf16.mxu0 0
      %886 = vmatpush1.bf16.msra.mxu0 %v864
      %887 = vmatprep.subr.bf16.mxu0 0
      %888 = vmatpush2.bf16.msra.mxu0 0
      %889 = vmatprep.subr.bf16.mxu0 0
      %890 = vmatpush2.bf16.msra.mxu0 0
      %891 = vmatprep.subr.bf16.mxu0 0
      %892 = vmatpush2.bf16.msra.mxu0 0
      %893 = vmatprep.subr.bf16.mxu0 0
      %894 = vmatpush2.bf16.msra.mxu0 0
      %895 = vmatprep.subr.bf16.mxu0 0
      %896 = vmatpush2.bf16.msra.mxu0 0
      %897 = vmatprep.subr.bf16.mxu0 0
      %898 = vmatpush2.bf16.msra.mxu0 0
      %899 = vmatprep.subr.bf16.mxu0 0
      %900 = vmatpush2.bf16.msra.mxu0 0
      %901 = vmatprep.subr.bf16.mxu0 0
      %902 = vmatpush2.bf16.msra.mxu0 0
      %903 = vmatprep.mubr.bf16.mxu0 0
      %904 = vmatmul.mubr.bf16.gmra.mxu0 %v869
      %v905 = vpop.f32.mrf.mxu0
      %v906 = vadd.f32 %v854, %v905
      %v907 = vpop.f32.mrf.mxu0
      %v908 = vpop.f32.mrf.mxu0
      %v909 = vadd.f32 %v854, %v908
      %v910 = vpop.f32.mrf.mxu0
      %911 = vdwg.mxu0
      %v912 = vmax.f32 %v906, 0.0
      %v913 = vmax.f32 %v909, 0.0
      %v914 = vpack.c.bf16 %v913, %v912
      %v915 = vld [vmem:[%s12] sm:$0xf]
      %v916 = vld [vmem:[%s12 + $0x4] sm:$0xf]
      %v917 = vld [vmem:[%s12 + $0x8] sm:$0xf]
      %v918 = vld [vmem:[%s12 + $0xc] sm:$0xf]
      %v919 = vld [vmem:[%s12 + $0x10] sm:$0xf]
      %v920 = vld [vmem:[%s12 + $0x14] sm:$0xf]
      %v921 = vld [vmem:[%s12 + $0x18] sm:$0xf]
      %v922 = vld [vmem:[%s12 + $0x1c] sm:$0xf]
      %v923 = vld [vmem:[%s13] sm:$0x1]
      %v925 = vlaneseq
      %v926 = vshrl.u32 %v925, 7
      %v927 = vsub.s32 0, %v926
      %v928 = vrot.slane %v923, %v927
      %v938 = vunpack.c.l.b16 %v915
      %v939 = vunpack.c.l.b16 %v916
      %v940 = vunpack.c.l.b16 %v917
      %v941 = vunpack.c.l.b16 %v918
      %v942 = vunpack.c.l.b16 %v919
      %v943 = vunpack.c.l.b16 %v920
      %v944 = vunpack.c.l.b16 %v921
      %v945 = vunpack.c.l.b16 %v922
      %v946 = vpack.c.b16 %v939, %v938
      %v947 = vpack.c.b16 %v941, %v940
      %v948 = vpack.c.b16 %v943, %v942
      %v949 = vpack.c.b16 %v945, %v944
      %vm954 = vcmask 523264
      %v956 = vsel %vm954, %v914, 0
      %958 = vmatprep.subr.bf16.mxu0 0
      %959 = vmatpush1.bf16.msra.mxu0 0
      %960 = vmatprep.subr.bf16.mxu0 0
      %961 = vmatpush1.bf16.msra.mxu0 0
      %962 = vmatprep.subr.bf16.mxu0 0
      %963 = vmatpush1.bf16.msra.mxu0 0
      %964 = vmatprep.subr.bf16.mxu0 0
      %965 = vmatpush1.bf16.msra.mxu0 0
      %966 = vmatprep.subr.bf16.mxu0 0
      %967 = vmatpush1.bf16.msra.mxu0 %v949
      %968 = vmatprep.subr.bf16.mxu0 0
      %969 = vmatpush1.bf16.msra.mxu0 %v948
      %970 = vmatprep.subr.bf16.mxu0 0
      %971 = vmatpush1.bf16.msra.mxu0 %v947
      %972 = vmatprep.subr.bf16.mxu0 0
      %973 = vmatpush1.bf16.msra.mxu0 %v946
      %974 = vmatprep.subr.bf16.mxu0 0
      %975 = vmatpush2.bf16.msra.mxu0 0
      %976 = vmatprep.subr.bf16.mxu0 0
      %977 = vmatpush2.bf16.msra.mxu0 0
      %978 = vmatprep.subr.bf16.mxu0 0
      %979 = vmatpush2.bf16.msra.mxu0 0
      %980 = vmatprep.subr.bf16.mxu0 0
      %981 = vmatpush2.bf16.msra.mxu0 0
      %982 = vmatprep.subr.bf16.mxu0 0
      %983 = vmatpush2.bf16.msra.mxu0 0
      %984 = vmatprep.subr.bf16.mxu0 0
      %985 = vmatpush2.bf16.msra.mxu0 0
      %986 = vmatprep.subr.bf16.mxu0 0
      %987 = vmatpush2.bf16.msra.mxu0 0
      %988 = vmatprep.subr.bf16.mxu0 0
      %989 = vmatpush2.bf16.msra.mxu0 0
      %990 = vmatprep.mubr.bf16.mxu0 0
      %991 = vmatmul.mubr.bf16.gmra.mxu0 %v956
      %v992 = vpop.f32.mrf.mxu0
      %v993 = vadd.f32 %v928, %v992
      %v994 = vpop.f32.mrf.mxu0
      %v995 = vpop.f32.mrf.mxu0
      %v996 = vadd.f32 %v928, %v995
      %v997 = vpop.f32.mrf.mxu0
      %998 = vdwg.mxu0
      %v999 = vadd.f32 %v798, %v993
      %v1000 = vadd.f32 %v799, %v996
      %1001 = vst.msk [vmem:[%s481] sm:$0xff] %vm488, %v999
      %1002 = vst.msk [vmem:[%s481 + $0x8] sm:$0xff] %vm488, %v1000
      %p1003 = scmp.lt.s32.totalorder %s25, 1
      %s1004 = scalar_select %p1003, %s25, 1
      %s1005 = smul.addr %s1004, 2
      %s1006 = smul.addr %s1005, 8
      %s1007 = scalar_lea.vmem %s14, %s1006
      // Predicated region
      $region77: #{transformer_cslr_forward.5} parent=75 // pred_check
        %p1008 = pneg %p347
      $region78: #{transformer_cslr_forward.5} parent=75 // pred_check_branch
        %1010 = sbr.rel (%p1008) target = $region80
      $region79: #{transformer_cslr_forward.5} parent=75 // pred_region
        _
      $region80: #{transformer_cslr_forward.5} parent=75 // pred_fallthru
        _
    $region76: #{transformer_cslr_forward.5} parent=5 // pred_fallthru
      _
    %p1011 = scmp.le.s32.totalorder 2, %s20
    // Predicated region
    $region81: #{transformer_cslr_forward.5} parent=5 // pred_check
      %p1012 = pneg %p1011
    $region82: #{transformer_cslr_forward.5} parent=5 // pred_check_branch
      %1014 = sbr.rel (%p1012) target = $region84
    $region83: #{transformer_cslr_forward.5} parent=5 // pred_region
      %s1015 = ssub.s32 %s20, 2
      // Predicated region
      $region85: #{transformer_cslr_forward.5} parent=83 // pred_check
        %p1016 = pneg %p353
      $region86: #{transformer_cslr_forward.5} parent=83 // pred_check_branch
        %1018 = sbr.rel (%p1016) target = $region88
      $region87: #{transformer_cslr_forward.5} parent=83 // pred_region
        %p1019 = scmp.lt.s32.totalorder %s26, 1
        %s1020 = scalar_select %p1019, %s26, 1
        %s1021 = smul.addr %s1020, 2
        %s1022 = smul.addr %s1021, 8
        %s1023 = scalar_lea.vmem %s14, %s1022
      $region88: #{transformer_cslr_forward.5} parent=83 // pred_fallthru
        _
    $region84: #{transformer_cslr_forward.5} parent=5 // pred_fallthru
      _
  $region6: #{transformer_cslr_forward.5} parent=0 // loop_footer
    %s24 = sadd.s32 1, %s20
  $region7: #{transformer_cslr_forward.5} parent=0 // loop_footer_branch
    %19 = sbr.rel target = $region3
  $region8: #{transformer_cslr_forward.5} parent=0 // loop_exit
    _

// kernel: transformer_cslr_forward.7
$region0: #{transformer_cslr_forward.7}
  #allocation0 [shape = 'u32[]', space=smem, size = 0x4, offset = 0x4, fixed_abs, tag = 'smem constant byte address 0x4 - core index']
  #allocation1 [shape = 'u32[144,128]{1,0:T(1,128)}', space=vmem, size = 0x12000, scoped, tag = 'internal scratch']
  %s0 = inlined_call_operand.vmem [shape: f32[2,8,32], index: 0, kind: input, shape index: {}]
  %s1 = inlined_call_operand.vmem [shape: f32[1,32], index: 1, kind: input, shape index: {}]
  %s2 = inlined_call_operand.vmem [shape: f32[1,32], index: 2, kind: input, shape index: {}]
  %s3 = inlined_call_operand.vmem [shape: bf16[32,128], index: 3, kind: input, shape index: {}]
  %s4 = inlined_call_operand.vmem [shape: f32[1,128], index: 4, kind: input, shape index: {}]
  %s5 = inlined_call_operand.hbm [shape: f32[2,8,128], index: 5, kind: output, shape index: {}]
  %s6 = sld [smem:[#allocation0]]
  $region53: #{transformer_cslr_forward.7} parent=0
    _
  %s8 = ssub.s32 1, %s6
  %s9 = scalar_select 0, %s8, %s6
  $region1: #{transformer_cslr_forward.7} parent=0
    #allocation2 [shape = 'u8[8192]{0}', space=vmem, size = 0x2000, scoped, tag = 'output window, operand 0']
    #allocation3 [shape = 's32[2]{0}', space=sflag, size = 0x8, scoped, tag = 'scoped memory for transformer_cslr_forward.7']
    %10 = vsyncpa [#allocation3], 0
    %s11 = scalar_lea.sflag [#allocation3], 1
    %12 = vsyncpa %s11, 0
    loop: start=0, step=1, limit=4
    $region2: #{transformer_cslr_forward.7} parent=1 // loop_pre_header
      _
    $region3: #{transformer_cslr_forward.7} parent=1 // loop_header
      %s14 = sphi 0, %s18
      %p15 = scmp.ge.s32.totalorder %s14, 4
      %s24 = sphi 0, %s26
      %s27 = sphi 0, %s24
      %s28 = sphi 0, %s27
      %s44 = sphi 0, %s28
      %s48 = sphi 0, %s48
      %s50 = sphi 0, %s48
      %s51 = sphi 0, %s50
      %s65 = sphi 0, %s51
      %s69 = sphi 0, %s69
      %s71 = sphi 0, %s69
      %s72 = sphi 0, %s71
      %s86 = sphi 0, %s72
      %s90 = sphi 0, %s90
      %s92 = sphi 0, %s90
      %s93 = sphi 0, %s92
      %s107 = sphi 0, %s93
      %s111 = sphi 0, %s111
      %s113 = sphi 0, %s111
      %s114 = sphi 0, %s113
      %s128 = sphi 0, %s114
      %s134 = sphi 0, %s136
      %s137 = sphi 0, %s134
      %s138 = sphi 0, %s137
      %s154 = sphi 0, %s138
    $region4: #{transformer_cslr_forward.7} parent=1 // loop_header_branch
      %17 = sbr.rel (%p15) target = $region8
    $region5: #{transformer_cslr_forward.7} parent=1 // loop_body
      %s19 = ssub.s32 %s14, 1
      %s20 = ssub.s32 %s14, 2
      %s21 = sadd.s32 %s14, 1
      %s22 = ssub.s32 %s14, %s21
      %p23 = scmp.eq.s32.totalorder %s22, 0
      %s25 = sadd.s32 %s24, 1
      %s26 = scalar_select %p23, %s24, %s25
      %p29 = pneg %p23
      %p30 = scmp.eq.s32.totalorder %s14, 1
      %p31 = por %p29, %p30
      %p32 = scmp.ne.s32.totalorder %s24, %s27
      %p33 = scmp.eq.s32.totalorder %s14, 0
      %p34 = por %p32, %p33
      %p35 = scmp.ne.s32.totalorder %s24, %s27
      %p36 = scmp.eq.s32.totalorder %s19, 1
      %p37 = por %p35, %p36
      %p38 = scmp.ne.s32.totalorder %s27, %s28
      %p39 = scmp.eq.s32.totalorder %s19, 0
      %p40 = por %p38, %p39
      %p41 = scmp.ne.s32.totalorder %s27, %s28
      %p42 = scmp.eq.s32.totalorder %s20, 1
      %p43 = por %p41, %p42
      %p45 = scmp.ne.s32.totalorder %s28, %s44
      %p46 = scmp.eq.s32.totalorder %s20, 0
      %p47 = por %p45, %p46
      %s49 = sadd.s32 %s48, 1
      %p52 = scmp.eq.s32.totalorder %s14, 1
      %p53 = scmp.ne.s32.totalorder %s48, %s50
      %p54 = scmp.eq.s32.totalorder %s14, 0
      %p55 = por %p53, %p54
      %p56 = scmp.ne.s32.totalorder %s48, %s50
      %p57 = scmp.eq.s32.totalorder %s19, 1
      %p58 = por %p56, %p57
      %p59 = scmp.ne.s32.totalorder %s50, %s51
      %p60 = scmp.eq.s32.totalorder %s19, 0
      %p61 = por %p59, %p60
      %p62 = scmp.ne.s32.totalorder %s50, %s51
      %p63 = scmp.eq.s32.totalorder %s20, 1
      %p64 = por %p62, %p63
      %p66 = scmp.ne.s32.totalorder %s51, %s65
      %p67 = scmp.eq.s32.totalorder %s20, 0
      %p68 = por %p66, %p67
      %s70 = sadd.s32 %s69, 1
      %p73 = scmp.eq.s32.totalorder %s14, 1
      %p74 = scmp.ne.s32.totalorder %s69, %s71
      %p75 = scmp.eq.s32.totalorder %s14, 0
      %p76 = por %p74, %p75
      %p77 = scmp.ne.s32.totalorder %s69, %s71
      %p78 = scmp.eq.s32.totalorder %s19, 1
      %p79 = por %p77, %p78
      %p80 = scmp.ne.s32.totalorder %s71, %s72
      %p81 = scmp.eq.s32.totalorder %s19, 0
      %p82 = por %p80, %p81
      %p83 = scmp.ne.s32.totalorder %s71, %s72
      %p84 = scmp.eq.s32.totalorder %s20, 1
      %p85 = por %p83, %p84
      %p87 = scmp.ne.s32.totalorder %s72, %s86
      %p88 = scmp.eq.s32.totalorder %s20, 0
      %p89 = por %p87, %p88
      %s91 = sadd.s32 %s90, 1
      %p94 = scmp.eq.s32.totalorder %s14, 1
      %p95 = scmp.ne.s32.totalorder %s90, %s92
      %p96 = scmp.eq.s32.totalorder %s14, 0
      %p97 = por %p95, %p96
      %p98 = scmp.ne.s32.totalorder %s90, %s92
      %p99 = scmp.eq.s32.totalorder %s19, 1
      %p100 = por %p98, %p99
      %p101 = scmp.ne.s32.totalorder %s92, %s93
      %p102 = scmp.eq.s32.totalorder %s19, 0
      %p103 = por %p101, %p102
      %p104 = scmp.ne.s32.totalorder %s92, %s93
      %p105 = scmp.eq.s32.totalorder %s20, 1
      %p106 = por %p104, %p105
      %p108 = scmp.ne.s32.totalorder %s93, %s107
      %p109 = scmp.eq.s32.totalorder %s20, 0
      %p110 = por %p108, %p109
      %s112 = sadd.s32 %s111, 1
      %p115 = scmp.eq.s32.totalorder %s14, 1
      %p116 = scmp.ne.s32.totalorder %s111, %s113
      %p117 = scmp.eq.s32.totalorder %s14, 0
      %p118 = por %p116, %p117
      %p119 = scmp.ne.s32.totalorder %s111, %s113
      %p120 = scmp.eq.s32.totalorder %s19, 1
      %p121 = por %p119, %p120
      %p122 = scmp.ne.s32.totalorder %s113, %s114
      %p123 = scmp.eq.s32.totalorder %s19, 0
      %p124 = por %p122, %p123
      %p125 = scmp.ne.s32.totalorder %s113, %s114
      %p126 = scmp.eq.s32.totalorder %s20, 1
      %p127 = por %p125, %p126
      %p129 = scmp.ne.s32.totalorder %s114, %s128
      %p130 = scmp.eq.s32.totalorder %s20, 0
      %p131 = por %p129, %p130
      %s132 = ssub.s32 %s14, %s21
      %p133 = scmp.eq.s32.totalorder %s132, 0
      %s135 = sadd.s32 %s134, 1
      %s136 = scalar_select %p133, %s134, %s135
      %p139 = pneg %p133
      %p140 = scmp.eq.s32.totalorder %s14, 1
      %p141 = por %p139, %p140
      %p142 = scmp.ne.s32.totalorder %s134, %s137
      %p143 = scmp.eq.s32.totalorder %s14, 0
      %p144 = por %p142, %p143
      %p145 = scmp.ne.s32.totalorder %s134, %s137
      %p146 = scmp.eq.s32.totalorder %s19, 1
      %p147 = por %p145, %p146
      %p148 = scmp.ne.s32.totalorder %s137, %s138
      %p149 = scmp.eq.s32.totalorder %s19, 0
      %p150 = por %p148, %p149
      %p151 = scmp.ne.s32.totalorder %s137, %s138
      %p152 = scmp.eq.s32.totalorder %s20, 1
      %p153 = por %p151, %p152
      %p155 = scmp.ne.s32.totalorder %s138, %s154
      %p156 = scmp.eq.s32.totalorder %s20, 0
      %p157 = por %p155, %p156
      %p158 = scmp.le.s32.totalorder 1, %s14
      %p159 = scmp.lt.s32.totalorder %s14, 3
      %p160 = pnand %p158, %p159
      %p161 = pneg %p160
      // Predicated region
      $region9: #{transformer_cslr_forward.7} parent=5 // pred_check
        _
      $region10: #{transformer_cslr_forward.7} parent=5 // pred_check_branch
        %163 = sbr.rel (%p160) target = $region12
      $region11: #{transformer_cslr_forward.7} parent=5 // pred_region
        %s164 = ssub.s32 %s14, 1
        // Predicated region
        $region13: #{transformer_cslr_forward.7} parent=11 // pred_check
          %p165 = pneg %p61
        $region14: #{transformer_cslr_forward.7} parent=11 // pred_check_branch
          %167 = sbr.rel (%p165) target = $region16
        $region15: #{transformer_cslr_forward.7} parent=11 // pred_region
          _
        $region16: #{transformer_cslr_forward.7} parent=11 // pred_fallthru
          _
        // Predicated region
        $region17: #{transformer_cslr_forward.7} parent=11 // pred_check
          %p168 = pneg %p82
        $region18: #{transformer_cslr_forward.7} parent=11 // pred_check_branch
          %170 = sbr.rel (%p168) target = $region20
        $region19: #{transformer_cslr_forward.7} parent=11 // pred_region
          _
        $region20: #{transformer_cslr_forward.7} parent=11 // pred_fallthru
          _
        // Predicated region
        $region21: #{transformer_cslr_forward.7} parent=11 // pred_check
          %p171 = pneg %p103
        $region22: #{transformer_cslr_forward.7} parent=11 // pred_check_branch
          %173 = sbr.rel (%p171) target = $region24
        $region23: #{transformer_cslr_forward.7} parent=11 // pred_region
          _
        $region24: #{transformer_cslr_forward.7} parent=11 // pred_fallthru
          _
        // Predicated region
        $region25: #{transformer_cslr_forward.7} parent=11 // pred_check
          %p174 = pneg %p124
        $region26: #{transformer_cslr_forward.7} parent=11 // pred_check_branch
          %176 = sbr.rel (%p174) target = $region28
        $region27: #{transformer_cslr_forward.7} parent=11 // pred_region
          _
        $region28: #{transformer_cslr_forward.7} parent=11 // pred_fallthru
          _
      $region12: #{transformer_cslr_forward.7} parent=5 // pred_fallthru
        _
      %p177 = scmp.lt.s32.totalorder %s14, 2
      // Predicated region
      $region29: #{transformer_cslr_forward.7} parent=5 // pred_check
        %p178 = pneg %p177
      $region30: #{transformer_cslr_forward.7} parent=5 // pred_check_branch
        %180 = sbr.rel (%p178) target = $region32
      $region31: #{transformer_cslr_forward.7} parent=5 // pred_region
        // Predicated region
        $region33: #{transformer_cslr_forward.7} parent=31 // pred_check
          %p181 = pneg %p34
        $region34: #{transformer_cslr_forward.7} parent=31 // pred_check_branch
          %183 = sbr.rel (%p181) target = $region36
        $region35: #{transformer_cslr_forward.7} parent=31 // pred_region
          %p184 = scmp.lt.s32.totalorder %s14, 1
          %s185 = scalar_select %p184, %s14, 1
          %s186 = smul.addr %s185, 8
          %s187 = scalar_lea.vmem %s0, %s186
        $region36: #{transformer_cslr_forward.7} parent=31 // pred_fallthru
          _
      $region32: #{transformer_cslr_forward.7} parent=5 // pred_fallthru
        _
      %p188 = scmp.le.s32.totalorder 1, %s14
      %p189 = scmp.lt.s32.totalorder %s14, 3
      %p190 = pnand %p188, %p189
      %p191 = pneg %p190
      // Predicated region
      $region37: #{transformer_cslr_forward.7} parent=5 // pred_check
        _
      $region38: #{transformer_cslr_forward.7} parent=5 // pred_check_branch
        %193 = sbr.rel (%p190) target = $region40
      $region39: #{transformer_cslr_forward.7} parent=5 // pred_region
        %s194 = ssub.s32 %s14, 1
        %p195 = scmp.lt.s32.totalorder %s19, 1
        %s196 = scalar_select %p195, %s19, 1
        %s197 = smul.addr %s196, 8
        %s198 = scalar_lea.vmem %s0, %s197
        %p199 = pneg %p40
        %p200 = pneg %p37
        %p201 = pneg %p61
        %p202 = pneg %p58
        %p203 = pneg %p82
        %p204 = pneg %p79
        %p205 = pneg %p103
        %p206 = pneg %p100
        %p207 = pneg %p124
        %p208 = pneg %p121
        %p209 = pneg %p150
        %p210 = pneg %p147
        %s211 = sand.u32 %s137, 1
        %s212 = scalar_lea.sflag [#allocation3], %s211
        %s213 = sand.u32 %s137, 1
        %s214 = smul.addr %s213, 8
        %s215 = scalar_lea.vmem [#allocation2], %s214
        %p216 = scmp.lt.s32.totalorder %s19, 1
        %s217 = scalar_select %p216, %s19, 1
        %s218 = smul.addr %s217, 8
        %s219 = scalar_lea.vmem %s0, %s218
        %v221 = vld [vmem:[%s219] sm:$0xff]
        %v222 = vld [vmem:[%s1] sm:$0x1]
        %v223 = vld [vmem:[%s2] sm:$0x1]
        %vm224 = vcmask 261120
        %v225 = vsel %vm224, %v221, 0.0
        %226 = vadd.xlane.f32.xlu0 %v225
        %v227 = vpop.xlane.xlu0 %226
        %v228 = vrcp.pop 32.0
        %v229 = vmul.f32 %v227, %v228
        %v230 = vsub.f32 %v221, %v229
        %v231 = vmul.f32 %v230, %v230
        %v232 = vsel %vm224, %v231, 0.0
        %233 = vadd.xlane.f32.xlu0 %v232
        %v234 = vpop.xlane.xlu0 %233
        %v235 = vmul.f32 %v234, %v228
        %v236 = vadd.f32 %v235, 1e-05
        %v237 = vrsqrt.pop %v236
        %v238 = vmul.f32 %v230, %v237
        %v240 = vlaneseq
        %v241 = vshrl.u32 %v240, 7
        %v242 = vsub.s32 0, %v241
        %v243 = vrot.slane %v222, %v242
        %v245 = vmul.f32 %v238, %v243
        %v247 = vlaneseq
        %v248 = vshrl.u32 %v247, 7
        %v249 = vsub.s32 0, %v248
        %v250 = vrot.slane %v223, %v249
        %v252 = vadd.f32 %v245, %v250
        %v253 = vpack.c.bf16 %v252, %v252
        %v254 = vld [vmem:[%s3] sm:$0xf]
        %v255 = vld [vmem:[%s3 + $0x4] sm:$0xf]
        %v256 = vld [vmem:[%s3 + $0x8] sm:$0xf]
        %v257 = vld [vmem:[%s3 + $0xc] sm:$0xf]
        %v258 = vld [vmem:[%s4] sm:$0x1]
        %v260 = vlaneseq
        %v261 = vshrl.u32 %v260, 7
        %v262 = vsub.s32 0, %v261
        %v263 = vrot.slane %v258, %v262
        %v269 = vunpack.c.l.b16 %v254
        %v270 = vunpack.c.l.b16 %v255
        %v271 = vunpack.c.l.b16 %v256
        %v272 = vunpack.c.l.b16 %v257
        %v273 = vpack.c.b16 %v270, %v269
        %v274 = vpack.c.b16 %v272, %v271
        %v278 = vsel %vm224, %v253, 0
        %280 = vmatprep.subr.bf16.mxu0 0
        %281 = vmatpush1.bf16.msra.mxu0 0
        %282 = vmatprep.subr.bf16.mxu0 0
        %283 = vmatpush1.bf16.msra.mxu0 0
        %284 = vmatprep.subr.bf16.mxu0 0
        %285 = vmatpush1.bf16.msra.mxu0 0
        %286 = vmatprep.subr.bf16.mxu0 0
        %287 = vmatpush1.bf16.msra.mxu0 0
        %288 = vmatprep.subr.bf16.mxu0 0
        %289 = vmatpush1.bf16.msra.mxu0 0
        %290 = vmatprep.subr.bf16.mxu0 0
        %291 = vmatpush1.bf16.msra.mxu0 0
        %292 = vmatprep.subr.bf16.mxu0 0
        %293 = vmatpush1.bf16.msra.mxu0 %v274
        %294 = vmatprep.subr.bf16.mxu0 0
        %295 = vmatpush1.bf16.msra.mxu0 %v273
        %296 = vmatprep.subr.bf16.mxu0 0
        %297 = vmatpush2.bf16.msra.mxu0 0
        %298 = vmatprep.subr.bf16.mxu0 0
        %299 = vmatpush2.bf16.msra.mxu0 0
        %300 = vmatprep.subr.bf16.mxu0 0
        %301 = vmatpush2.bf16.msra.mxu0 0
        %302 = vmatprep.subr.bf16.mxu0 0
        %303 = vmatpush2.bf16.msra.mxu0 0
        %304 = vmatprep.subr.bf16.mxu0 0
        %305 = vmatpush2.bf16.msra.mxu0 0
        %306 = vmatprep.subr.bf16.mxu0 0
        %307 = vmatpush2.bf16.msra.mxu0 0
        %308 = vmatprep.subr.bf16.mxu0 0
        %309 = vmatpush2.bf16.msra.mxu0 0
        %310 = vmatprep.subr.bf16.mxu0 0
        %311 = vmatpush2.bf16.msra.mxu0 0
        %312 = vmatprep.mubr.bf16.mxu0 0
        %313 = vmatmul.mubr.bf16.gmra.mxu0 %v278
        %v314 = vpop.f32.mrf.mxu0
        %v315 = vadd.f32 %v263, %v314
        %v316 = vpop.f32.mrf.mxu0
        %v317 = vpop.f32.mrf.mxu0
        %v318 = vpop.f32.mrf.mxu0
        %319 = vdwg.mxu0
        %320 = vst [vmem:[%s215] sm:$0xff] %v315
        %s321 = sand.u32 %s137, 1
        %s322 = scalar_lea.sflag [#allocation3], %s321
        %s323 = sand.u32 %s137, 1
        %s324 = smul.addr %s323, 8
        %s325 = scalar_lea.vmem [#allocation2], %s324
        // Predicated region
        $region41: #{transformer_cslr_forward.7} parent=39 // pred_check
          %p326 = pneg %p147
        $region42: #{transformer_cslr_forward.7} parent=39 // pred_check_branch
          %328 = sbr.rel (%p326) target = $region44
        $region43: #{transformer_cslr_forward.7} parent=39 // pred_region
          %s330 = ssub.s32 128, 128
          %331 = vsyncadd %s322, %s330
          %s332 = smul.addr %s19, 128
          %s333 = scalar_lea.hbm %s5, %s332
          %s335 = sshll.u32 %s325, 4
          %s336 = int_to_ptr.vmem [resolvable:$true] %s335
          %338 = dma.vmem_to_hbm [thread:$0]  %s336, 128, %s333, %s322
        $region44: #{transformer_cslr_forward.7} parent=39 // pred_fallthru
          _
      $region40: #{transformer_cslr_forward.7} parent=5 // pred_fallthru
        _
      %p339 = scmp.le.s32.totalorder 2, %s14
      // Predicated region
      $region45: #{transformer_cslr_forward.7} parent=5 // pred_check
        %p340 = pneg %p339
      $region46: #{transformer_cslr_forward.7} parent=5 // pred_check_branch
        %342 = sbr.rel (%p340) target = $region48
      $region47: #{transformer_cslr_forward.7} parent=5 // pred_region
        %s343 = ssub.s32 %s14, 2
        // Predicated region
        $region49: #{transformer_cslr_forward.7} parent=47 // pred_check
          %p344 = pneg %p153
        $region50: #{transformer_cslr_forward.7} parent=47 // pred_check_branch
          %346 = sbr.rel (%p344) target = $region52
        $region51: #{transformer_cslr_forward.7} parent=47 // pred_region
          %s347 = sand.u32 %s138, 1
          %s348 = scalar_lea.sflag [#allocation3], %s347
          %s349 = sand.u32 %s138, 1
          %s350 = smul.addr %s349, 8
          %s351 = scalar_lea.vmem [#allocation2], %s350
          %352 = dma.done %s348, 128
        $region52: #{transformer_cslr_forward.7} parent=47 // pred_fallthru
          _
      $region48: #{transformer_cslr_forward.7} parent=5 // pred_fallthru
        _
    $region6: #{transformer_cslr_forward.7} parent=1 // loop_footer
      %s18 = sadd.s32 1, %s14
    $region7: #{transformer_cslr_forward.7} parent=1 // loop_footer_branch
      %13 = sbr.rel target = $region3
    $region8: #{transformer_cslr_forward.7} parent=1 // loop_exit
      _
    %353 = vsyncpa [#allocation3], 1
    %s354 = scalar_lea.sflag [#allocation3], 1
    %355 = vsyncpa %s354, 1

// kernel: transformer_cslr_forward.6
$region0: #{transformer_cslr_forward.6}
  #allocation0 [shape = 'u32[]', space=smem, size = 0x4, offset = 0x4, fixed_abs, tag = 'smem constant byte address 0x4 - core index']
  #allocation1 [shape = 'u32[144,128]{1,0:T(1,128)}', space=vmem, size = 0x12000, scoped, tag = 'internal scratch']
  %s0 = inlined_call_operand.vmem [shape: f32[2,8,32], index: 0, kind: input, shape index: {}]
  %s1 = inlined_call_operand.vmem [shape: f32[2,16,32], index: 1, kind: input, shape index: {}]
  %s2 = inlined_call_operand.vmem [shape: f32[2,1,8], index: 2, kind: input, shape index: {}]
  %s3 = inlined_call_operand.vmem [shape: f32[1,8,8], index: 3, kind: input, shape index: {}]
  %s4 = inlined_call_operand.vmem [shape: f32[2,1,16], index: 4, kind: input, shape index: {}]
  %s5 = inlined_call_operand.vmem [shape: f32[1,32], index: 5, kind: input, shape index: {}]
  %s6 = inlined_call_operand.vmem [shape: f32[1,32], index: 6, kind: input, shape index: {}]
  %s7 = inlined_call_operand.vmem [shape: bf16[32,96], index: 7, kind: input, shape index: {}]
  %s8 = inlined_call_operand.vmem [shape: f32[1,96], index: 8, kind: input, shape index: {}]
  %s9 = inlined_call_operand.vmem [shape: bf16[32,32], index: 9, kind: input, shape index: {}]
  %s10 = inlined_call_operand.vmem [shape: f32[1,32], index: 10, kind: input, shape index: {}]
  %s11 = inlined_call_operand.vmem [shape: f32[1,32], index: 11, kind: input, shape index: {}]
  %s12 = inlined_call_operand.vmem [shape: f32[1,32], index: 12, kind: input, shape index: {}]
  %s13 = inlined_call_operand.vmem [shape: f32[1,32], index: 13, kind: input, shape index: {}]
  %s14 = inlined_call_operand.vmem [shape: f32[1,32], index: 14, kind: input, shape index: {}]
  %s15 = inlined_call_operand.vmem [shape: bf16[32,32], index: 15, kind: input, shape index: {}]
  %s16 = inlined_call_operand.vmem [shape: f32[1,32], index: 16, kind: input, shape index: {}]
  %s17 = inlined_call_operand.vmem [shape: bf16[32,64], index: 17, kind: input, shape index: {}]
  %s18 = inlined_call_operand.vmem [shape: f32[1,64], index: 18, kind: input, shape index: {}]
  %s19 = inlined_call_operand.vmem [shape: bf16[32,32], index: 19, kind: input, shape index: {}]
  %s20 = inlined_call_operand.vmem [shape: f32[1,32], index: 20, kind: input, shape index: {}]
  %s21 = inlined_call_operand.vmem [shape: f32[1,32], index: 21, kind: input, shape index: {}]
  %s22 = inlined_call_operand.vmem [shape: f32[1,32], index: 22, kind: input, shape index: {}]
  %s23 = inlined_call_operand.vmem [shape: bf16[32,64], index: 23, kind: input, shape index: {}]
  %s24 = inlined_call_operand.vmem [shape: f32[1,64], index: 24, kind: input, shape index: {}]
  %s25 = inlined_call_operand.vmem [shape: bf16[64,32], index: 25, kind: input, shape index: {}]
  %s26 = inlined_call_operand.vmem [shape: f32[1,32], index: 26, kind: input, shape index: {}]
  %s27 = inlined_call_operand.vmem [shape: f32[2,8,32], index: 27, kind: output, shape index: {}]
  %s28 = sld [smem:[#allocation0]]
  $region141: #{transformer_cslr_forward.6} parent=0
    _
  %s30 = ssub.s32 1, %s28
  %s31 = scalar_select 0, %s30, %s28
  loop: start=0, step=1, limit=4
  $region2: #{transformer_cslr_forward.6} parent=0 // loop_pre_header
    _
  $region3: #{transformer_cslr_forward.6} parent=0 // loop_header
    %s33 = sphi 0, %s37
    %p34 = scmp.ge.s32.totalorder %s33, 4
    %s43 = sphi 0, %s45
    %s46 = sphi 0, %s43
    %s47 = sphi 0, %s46
    %s63 = sphi 0, %s47
    %s69 = sphi 0, %s71
    %s72 = sphi 0, %s69
    %s73 = sphi 0, %s72
    %s89 = sphi 0, %s73
    %s95 = sphi 0, %s97
    %s98 = sphi 0, %s95
    %s99 = sphi 0, %s98
    %s115 = sphi 0, %s99
    %s119 = sphi 0, %s119
    %s121 = sphi 0, %s119
    %s122 = sphi 0, %s121
    %s136 = sphi 0, %s122
    %s142 = sphi 0, %s144
    %s145 = sphi 0, %s142
    %s146 = sphi 0, %s145
    %s162 = sphi 0, %s146
    %s166 = sphi 0, %s166
    %s168 = sphi 0, %s166
    %s169 = sphi 0, %s168
    %s183 = sphi 0, %s169
    %s187 = sphi 0, %s187
    %s189 = sphi 0, %s187
    %s190 = sphi 0, %s189
    %s204 = sphi 0, %s190
    %s208 = sphi 0, %s208
    %s210 = sphi 0, %s208
    %s211 = sphi 0, %s210
    %s225 = sphi 0, %s211
    %s229 = sphi 0, %s229
    %s231 = sphi 0, %s229
    %s232 = sphi 0, %s231
    %s246 = sphi 0, %s232
    %s250 = sphi 0, %s250
    %s252 = sphi 0, %s250
    %s253 = sphi 0, %s252
    %s267 = sphi 0, %s253
    %s271 = sphi 0, %s271
    %s273 = sphi 0, %s271
    %s274 = sphi 0, %s273
    %s288 = sphi 0, %s274
    %s292 = sphi 0, %s292
    %s294 = sphi 0, %s292
    %s295 = sphi 0, %s294
    %s309 = sphi 0, %s295
    %s313 = sphi 0, %s313
    %s315 = sphi 0, %s313
    %s316 = sphi 0, %s315
    %s330 = sphi 0, %s316
    %s334 = sphi 0, %s334
    %s336 = sphi 0, %s334
    %s337 = sphi 0, %s336
    %s351 = sphi 0, %s337
    %s355 = sphi 0, %s355
    %s357 = sphi 0, %s355
    %s358 = sphi 0, %s357
    %s372 = sphi 0, %s358
    %s376 = sphi 0, %s376
    %s378 = sphi 0, %s376
    %s379 = sphi 0, %s378
    %s393 = sphi 0, %s379
    %s397 = sphi 0, %s397
    %s399 = sphi 0, %s397
    %s400 = sphi 0, %s399
    %s414 = sphi 0, %s400
    %s418 = sphi 0, %s418
    %s420 = sphi 0, %s418
    %s421 = sphi 0, %s420
    %s435 = sphi 0, %s421
    %s439 = sphi 0, %s439
    %s441 = sphi 0, %s439
    %s442 = sphi 0, %s441
    %s456 = sphi 0, %s442
    %s460 = sphi 0, %s460
    %s462 = sphi 0, %s460
    %s463 = sphi 0, %s462
    %s477 = sphi 0, %s463
    %s481 = sphi 0, %s481
    %s483 = sphi 0, %s481
    %s484 = sphi 0, %s483
    %s498 = sphi 0, %s484
    %s502 = sphi 0, %s502
    %s504 = sphi 0, %s502
    %s505 = sphi 0, %s504
    %s519 = sphi 0, %s505
    %s523 = sphi 0, %s523
    %s525 = sphi 0, %s523
    %s526 = sphi 0, %s525
    %s540 = sphi 0, %s526
    %s544 = sphi 0, %s544
    %s546 = sphi 0, %s544
    %s547 = sphi 0, %s546
    %s561 = sphi 0, %s547
    %s565 = sphi 0, %s565
    %s567 = sphi 0, %s565
    %s568 = sphi 0, %s567
    %s582 = sphi 0, %s568
    %s586 = sphi 0, %s586
    %s588 = sphi 0, %s586
    %s589 = sphi 0, %s588
    %s603 = sphi 0, %s589
    %s607 = sphi 0, %s607
    %s609 = sphi 0, %s607
    %s610 = sphi 0, %s609
    %s624 = sphi 0, %s610
    %s630 = sphi 0, %s632
    %s633 = sphi 0, %s630
    %s634 = sphi 0, %s633
    %s650 = sphi 0, %s634
  $region4: #{transformer_cslr_forward.6} parent=0 // loop_header_branch
    %36 = sbr.rel (%p34) target = $region8
  $region5: #{transformer_cslr_forward.6} parent=0 // loop_body
    %s38 = ssub.s32 %s33, 1
    %s39 = ssub.s32 %s33, 2
    %s40 = sadd.s32 %s33, 1
    %s41 = ssub.s32 %s33, %s40
    %p42 = scmp.eq.s32.totalorder %s41, 0
    %s44 = sadd.s32 %s43, 1
    %s45 = scalar_select %p42, %s43, %s44
    %p48 = pneg %p42
    %p49 = scmp.eq.s32.totalorder %s33, 1
    %p50 = por %p48, %p49
    %p51 = scmp.ne.s32.totalorder %s43, %s46
    %p52 = scmp.eq.s32.totalorder %s33, 0
    %p53 = por %p51, %p52
    %p54 = scmp.ne.s32.totalorder %s43, %s46
    %p55 = scmp.eq.s32.totalorder %s38, 1
    %p56 = por %p54, %p55
    %p57 = scmp.ne.s32.totalorder %s46, %s47
    %p58 = scmp.eq.s32.totalorder %s38, 0
    %p59 = por %p57, %p58
    %p60 = scmp.ne.s32.totalorder %s46, %s47
    %p61 = scmp.eq.s32.totalorder %s39, 1
    %p62 = por %p60, %p61
    %p64 = scmp.ne.s32.totalorder %s47, %s63
    %p65 = scmp.eq.s32.totalorder %s39, 0
    %p66 = por %p64, %p65
    %s67 = ssub.s32 %s33, %s40
    %p68 = scmp.eq.s32.totalorder %s67, 0
    %s70 = sadd.s32 %s69, 1
    %s71 = scalar_select %p68, %s69, %s70
    %p74 = pneg %p68
    %p75 = scmp.eq.s32.totalorder %s33, 1
    %p76 = por %p74, %p75
    %p77 = scmp.ne.s32.totalorder %s69, %s72
    %p78 = scmp.eq.s32.totalorder %s33, 0
    %p79 = por %p77, %p78
    %p80 = scmp.ne.s32.totalorder %s69, %s72
    %p81 = scmp.eq.s32.totalorder %s38, 1
    %p82 = por %p80, %p81
    %p83 = scmp.ne.s32.totalorder %s72, %s73
    %p84 = scmp.eq.s32.totalorder %s38, 0
    %p85 = por %p83, %p84
    %p86 = scmp.ne.s32.totalorder %s72, %s73
    %p87 = scmp.eq.s32.totalorder %s39, 1
    %p88 = por %p86, %p87
    %p90 = scmp.ne.s32.totalorder %s73, %s89
    %p91 = scmp.eq.s32.totalorder %s39, 0
    %p92 = por %p90, %p91
    %s93 = ssub.s32 %s33, %s40
    %p94 = scmp.eq.s32.totalorder %s93, 0
    %s96 = sadd.s32 %s95, 1
    %s97 = scalar_select %p94, %s95, %s96
    %p100 = pneg %p94
    %p101 = scmp.eq.s32.totalorder %s33, 1
    %p102 = por %p100, %p101
    %p103 = scmp.ne.s32.totalorder %s95, %s98
    %p104 = scmp.eq.s32.totalorder %s33, 0
    %p105 = por %p103, %p104
    %p106 = scmp.ne.s32.totalorder %s95, %s98
    %p107 = scmp.eq.s32.totalorder %s38, 1
    %p108 = por %p106, %p107
    %p109 = scmp.ne.s32.totalorder %s98, %s99
    %p110 = scmp.eq.s32.totalorder %s38, 0
    %p111 = por %p109, %p110
    %p112 = scmp.ne.s32.totalorder %s98, %s99
    %p113 = scmp.eq.s32.totalorder %s39, 1
    %p114 = por %p112, %p113
    %p116 = scmp.ne.s32.totalorder %s99, %s115
    %p117 = scmp.eq.s32.totalorder %s39, 0
    %p118 = por %p116, %p117
    %s120 = sadd.s32 %s119, 1
    %p123 = scmp.eq.s32.totalorder %s33, 1
    %p124 = scmp.ne.s32.totalorder %s119, %s121
    %p125 = scmp.eq.s32.totalorder %s33, 0
    %p126 = por %p124, %p125
    %p127 = scmp.ne.s32.totalorder %s119, %s121
    %p128 = scmp.eq.s32.totalorder %s38, 1
    %p129 = por %p127, %p128
    %p130 = scmp.ne.s32.totalorder %s121, %s122
    %p131 = scmp.eq.s32.totalorder %s38, 0
    %p132 = por %p130, %p131
    %p133 = scmp.ne.s32.totalorder %s121, %s122
    %p134 = scmp.eq.s32.totalorder %s39, 1
    %p135 = por %p133, %p134
    %p137 = scmp.ne.s32.totalorder %s122, %s136
    %p138 = scmp.eq.s32.totalorder %s39, 0
    %p139 = por %p137, %p138
    %s140 = ssub.s32 %s33, %s40
    %p141 = scmp.eq.s32.totalorder %s140, 0
    %s143 = sadd.s32 %s142, 1
    %s144 = scalar_select %p141, %s142, %s143
    %p147 = pneg %p141
    %p148 = scmp.eq.s32.totalorder %s33, 1
    %p149 = por %p147, %p148
    %p150 = scmp.ne.s32.totalorder %s142, %s145
    %p151 = scmp.eq.s32.totalorder %s33, 0
    %p152 = por %p150, %p151
    %p153 = scmp.ne.s32.totalorder %s142, %s145
    %p154 = scmp.eq.s32.totalorder %s38, 1
    %p155 = por %p153, %p154
    %p156 = scmp.ne.s32.totalorder %s145, %s146
    %p157 = scmp.eq.s32.totalorder %s38, 0
    %p158 = por %p156, %p157
    %p159 = scmp.ne.s32.totalorder %s145, %s146
    %p160 = scmp.eq.s32.totalorder %s39, 1
    %p161 = por %p159, %p160
    %p163 = scmp.ne.s32.totalorder %s146, %s162
    %p164 = scmp.eq.s32.totalorder %s39, 0
    %p165 = por %p163, %p164
    %s167 = sadd.s32 %s166, 1
    %p170 = scmp.eq.s32.totalorder %s33, 1
    %p171 = scmp.ne.s32.totalorder %s166, %s168
    %p172 = scmp.eq.s32.totalorder %s33, 0
    %p173 = por %p171, %p172
    %p174 = scmp.ne.s32.totalorder %s166, %s168
    %p175 = scmp.eq.s32.totalorder %s38, 1
    %p176 = por %p174, %p175
    %p177 = scmp.ne.s32.totalorder %s168, %s169
    %p178 = scmp.eq.s32.totalorder %s38, 0
    %p179 = por %p177, %p178
    %p180 = scmp.ne.s32.totalorder %s168, %s169
    %p181 = scmp.eq.s32.totalorder %s39, 1
    %p182 = por %p180, %p181
    %p184 = scmp.ne.s32.totalorder %s169, %s183
    %p185 = scmp.eq.s32.totalorder %s39, 0
    %p186 = por %p184, %p185
    %s188 = sadd.s32 %s187, 1
    %p191 = scmp.eq.s32.totalorder %s33, 1
    %p192 = scmp.ne.s32.totalorder %s187, %s189
    %p193 = scmp.eq.s32.totalorder %s33, 0
    %p194 = por %p192, %p193
    %p195 = scmp.ne.s32.totalorder %s187, %s189
    %p196 = scmp.eq.s32.totalorder %s38, 1
    %p197 = por %p195, %p196
    %p198 = scmp.ne.s32.totalorder %s189, %s190
    %p199 = scmp.eq.s32.totalorder %s38, 0
    %p200 = por %p198, %p199
    %p201 = scmp.ne.s32.totalorder %s189, %s190
    %p202 = scmp.eq.s32.totalorder %s39, 1
    %p203 = por %p201, %p202
    %p205 = scmp.ne.s32.totalorder %s190, %s204
    %p206 = scmp.eq.s32.totalorder %s39, 0
    %p207 = por %p205, %p206
    %s209 = sadd.s32 %s208, 1
    %p212 = scmp.eq.s32.totalorder %s33, 1
    %p213 = scmp.ne.s32.totalorder %s208, %s210
    %p214 = scmp.eq.s32.totalorder %s33, 0
    %p215 = por %p213, %p214
    %p216 = scmp.ne.s32.totalorder %s208, %s210
    %p217 = scmp.eq.s32.totalorder %s38, 1
    %p218 = por %p216, %p217
    %p219 = scmp.ne.s32.totalorder %s210, %s211
    %p220 = scmp.eq.s32.totalorder %s38, 0
    %p221 = por %p219, %p220
    %p222 = scmp.ne.s32.totalorder %s210, %s211
    %p223 = scmp.eq.s32.totalorder %s39, 1
    %p224 = por %p222, %p223
    %p226 = scmp.ne.s32.totalorder %s211, %s225
    %p227 = scmp.eq.s32.totalorder %s39, 0
    %p228 = por %p226, %p227
    %s230 = sadd.s32 %s229, 1
    %p233 = scmp.eq.s32.totalorder %s33, 1
    %p234 = scmp.ne.s32.totalorder %s229, %s231
    %p235 = scmp.eq.s32.totalorder %s33, 0
    %p236 = por %p234, %p235
    %p237 = scmp.ne.s32.totalorder %s229, %s231
    %p238 = scmp.eq.s32.totalorder %s38, 1
    %p239 = por %p237, %p238
    %p240 = scmp.ne.s32.totalorder %s231, %s232
    %p241 = scmp.eq.s32.totalorder %s38, 0
    %p242 = por %p240, %p241
    %p243 = scmp.ne.s32.totalorder %s231, %s232
    %p244 = scmp.eq.s32.totalorder %s39, 1
    %p245 = por %p243, %p244
    %p247 = scmp.ne.s32.totalorder %s232, %s246
    %p248 = scmp.eq.s32.totalorder %s39, 0
    %p249 = por %p247, %p248
    %s251 = sadd.s32 %s250, 1
    %p254 = scmp.eq.s32.totalorder %s33, 1
    %p255 = scmp.ne.s32.totalorder %s250, %s252
    %p256 = scmp.eq.s32.totalorder %s33, 0
    %p257 = por %p255, %p256
    %p258 = scmp.ne.s32.totalorder %s250, %s252
    %p259 = scmp.eq.s32.totalorder %s38, 1
    %p260 = por %p258, %p259
    %p261 = scmp.ne.s32.totalorder %s252, %s253
    %p262 = scmp.eq.s32.totalorder %s38, 0
    %p263 = por %p261, %p262
    %p264 = scmp.ne.s32.totalorder %s252, %s253
    %p265 = scmp.eq.s32.totalorder %s39, 1
    %p266 = por %p264, %p265
    %p268 = scmp.ne.s32.totalorder %s253, %s267
    %p269 = scmp.eq.s32.totalorder %s39, 0
    %p270 = por %p268, %p269
    %s272 = sadd.s32 %s271, 1
    %p275 = scmp.eq.s32.totalorder %s33, 1
    %p276 = scmp.ne.s32.totalorder %s271, %s273
    %p277 = scmp.eq.s32.totalorder %s33, 0
    %p278 = por %p276, %p277
    %p279 = scmp.ne.s32.totalorder %s271, %s273
    %p280 = scmp.eq.s32.totalorder %s38, 1
    %p281 = por %p279, %p280
    %p282 = scmp.ne.s32.totalorder %s273, %s274
    %p283 = scmp.eq.s32.totalorder %s38, 0
    %p284 = por %p282, %p283
    %p285 = scmp.ne.s32.totalorder %s273, %s274
    %p286 = scmp.eq.s32.totalorder %s39, 1
    %p287 = por %p285, %p286
    %p289 = scmp.ne.s32.totalorder %s274, %s288
    %p290 = scmp.eq.s32.totalorder %s39, 0
    %p291 = por %p289, %p290
    %s293 = sadd.s32 %s292, 1
    %p296 = scmp.eq.s32.totalorder %s33, 1
    %p297 = scmp.ne.s32.totalorder %s292, %s294
    %p298 = scmp.eq.s32.totalorder %s33, 0
    %p299 = por %p297, %p298
    %p300 = scmp.ne.s32.totalorder %s292, %s294
    %p301 = scmp.eq.s32.totalorder %s38, 1
    %p302 = por %p300, %p301
    %p303 = scmp.ne.s32.totalorder %s294, %s295
    %p304 = scmp.eq.s32.totalorder %s38, 0
    %p305 = por %p303, %p304
    %p306 = scmp.ne.s32.totalorder %s294, %s295
    %p307 = scmp.eq.s32.totalorder %s39, 1
    %p308 = por %p306, %p307
    %p310 = scmp.ne.s32.totalorder %s295, %s309
    %p311 = scmp.eq.s32.totalorder %s39, 0
    %p312 = por %p310, %p311
    %s314 = sadd.s32 %s313, 1
    %p317 = scmp.eq.s32.totalorder %s33, 1
    %p318 = scmp.ne.s32.totalorder %s313, %s315
    %p319 = scmp.eq.s32.totalorder %s33, 0
    %p320 = por %p318, %p319
    %p321 = scmp.ne.s32.totalorder %s313, %s315
    %p322 = scmp.eq.s32.totalorder %s38, 1
    %p323 = por %p321, %p322
    %p324 = scmp.ne.s32.totalorder %s315, %s316
    %p325 = scmp.eq.s32.totalorder %s38, 0
    %p326 = por %p324, %p325
    %p327 = scmp.ne.s32.totalorder %s315, %s316
    %p328 = scmp.eq.s32.totalorder %s39, 1
    %p329 = por %p327, %p328
    %p331 = scmp.ne.s32.totalorder %s316, %s330
    %p332 = scmp.eq.s32.totalorder %s39, 0
    %p333 = por %p331, %p332
    %s335 = sadd.s32 %s334, 1
    %p338 = scmp.eq.s32.totalorder %s33, 1
    %p339 = scmp.ne.s32.totalorder %s334, %s336
    %p340 = scmp.eq.s32.totalorder %s33, 0
    %p341 = por %p339, %p340
    %p342 = scmp.ne.s32.totalorder %s334, %s336
    %p343 = scmp.eq.s32.totalorder %s38, 1
    %p344 = por %p342, %p343
    %p345 = scmp.ne.s32.totalorder %s336, %s337
    %p346 = scmp.eq.s32.totalorder %s38, 0
    %p347 = por %p345, %p346
    %p348 = scmp.ne.s32.totalorder %s336, %s337
    %p349 = scmp.eq.s32.totalorder %s39, 1
    %p350 = por %p348, %p349
    %p352 = scmp.ne.s32.totalorder %s337, %s351
    %p353 = scmp.eq.s32.totalorder %s39, 0
    %p354 = por %p352, %p353
    %s356 = sadd.s32 %s355, 1
    %p359 = scmp.eq.s32.totalorder %s33, 1
    %p360 = scmp.ne.s32.totalorder %s355, %s357
    %p361 = scmp.eq.s32.totalorder %s33, 0
    %p362 = por %p360, %p361
    %p363 = scmp.ne.s32.totalorder %s355, %s357
    %p364 = scmp.eq.s32.totalorder %s38, 1
    %p365 = por %p363, %p364
    %p366 = scmp.ne.s32.totalorder %s357, %s358
    %p367 = scmp.eq.s32.totalorder %s38, 0
    %p368 = por %p366, %p367
    %p369 = scmp.ne.s32.totalorder %s357, %s358
    %p370 = scmp.eq.s32.totalorder %s39, 1
    %p371 = por %p369, %p370
    %p373 = scmp.ne.s32.totalorder %s358, %s372
    %p374 = scmp.eq.s32.totalorder %s39, 0
    %p375 = por %p373, %p374
    %s377 = sadd.s32 %s376, 1
    %p380 = scmp.eq.s32.totalorder %s33, 1
    %p381 = scmp.ne.s32.totalorder %s376, %s378
    %p382 = scmp.eq.s32.totalorder %s33, 0
    %p383 = por %p381, %p382
    %p384 = scmp.ne.s32.totalorder %s376, %s378
    %p385 = scmp.eq.s32.totalorder %s38, 1
    %p386 = por %p384, %p385
    %p387 = scmp.ne.s32.totalorder %s378, %s379
    %p388 = scmp.eq.s32.totalorder %s38, 0
    %p389 = por %p387, %p388
    %p390 = scmp.ne.s32.totalorder %s378, %s379
    %p391 = scmp.eq.s32.totalorder %s39, 1
    %p392 = por %p390, %p391
    %p394 = scmp.ne.s32.totalorder %s379, %s393
    %p395 = scmp.eq.s32.totalorder %s39, 0
    %p396 = por %p394, %p395
    %s398 = sadd.s32 %s397, 1
    %p401 = scmp.eq.s32.totalorder %s33, 1
    %p402 = scmp.ne.s32.totalorder %s397, %s399
    %p403 = scmp.eq.s32.totalorder %s33, 0
    %p404 = por %p402, %p403
    %p405 = scmp.ne.s32.totalorder %s397, %s399
    %p406 = scmp.eq.s32.totalorder %s38, 1
    %p407 = por %p405, %p406
    %p408 = scmp.ne.s32.totalorder %s399, %s400
    %p409 = scmp.eq.s32.totalorder %s38, 0
    %p410 = por %p408, %p409
    %p411 = scmp.ne.s32.totalorder %s399, %s400
    %p412 = scmp.eq.s32.totalorder %s39, 1
    %p413 = por %p411, %p412
    %p415 = scmp.ne.s32.totalorder %s400, %s414
    %p416 = scmp.eq.s32.totalorder %s39, 0
    %p417 = por %p415, %p416
    %s419 = sadd.s32 %s418, 1
    %p422 = scmp.eq.s32.totalorder %s33, 1
    %p423 = scmp.ne.s32.totalorder %s418, %s420
    %p424 = scmp.eq.s32.totalorder %s33, 0
    %p425 = por %p423, %p424
    %p426 = scmp.ne.s32.totalorder %s418, %s420
    %p427 = scmp.eq.s32.totalorder %s38, 1
    %p428 = por %p426, %p427
    %p429 = scmp.ne.s32.totalorder %s420, %s421
    %p430 = scmp.eq.s32.totalorder %s38, 0
    %p431 = por %p429, %p430
    %p432 = scmp.ne.s32.totalorder %s420, %s421
    %p433 = scmp.eq.s32.totalorder %s39, 1
    %p434 = por %p432, %p433
    %p436 = scmp.ne.s32.totalorder %s421, %s435
    %p437 = scmp.eq.s32.totalorder %s39, 0
    %p438 = por %p436, %p437
    %s440 = sadd.s32 %s439, 1
    %p443 = scmp.eq.s32.totalorder %s33, 1
    %p444 = scmp.ne.s32.totalorder %s439, %s441
    %p445 = scmp.eq.s32.totalorder %s33, 0
    %p446 = por %p444, %p445
    %p447 = scmp.ne.s32.totalorder %s439, %s441
    %p448 = scmp.eq.s32.totalorder %s38, 1
    %p449 = por %p447, %p448
    %p450 = scmp.ne.s32.totalorder %s441, %s442
    %p451 = scmp.eq.s32.totalorder %s38, 0
    %p452 = por %p450, %p451
    %p453 = scmp.ne.s32.totalorder %s441, %s442
    %p454 = scmp.eq.s32.totalorder %s39, 1
    %p455 = por %p453, %p454
    %p457 = scmp.ne.s32.totalorder %s442, %s456
    %p458 = scmp.eq.s32.totalorder %s39, 0
    %p459 = por %p457, %p458
    %s461 = sadd.s32 %s460, 1
    %p464 = scmp.eq.s32.totalorder %s33, 1
    %p465 = scmp.ne.s32.totalorder %s460, %s462
    %p466 = scmp.eq.s32.totalorder %s33, 0
    %p467 = por %p465, %p466
    %p468 = scmp.ne.s32.totalorder %s460, %s462
    %p469 = scmp.eq.s32.totalorder %s38, 1
    %p470 = por %p468, %p469
    %p471 = scmp.ne.s32.totalorder %s462, %s463
    %p472 = scmp.eq.s32.totalorder %s38, 0
    %p473 = por %p471, %p472
    %p474 = scmp.ne.s32.totalorder %s462, %s463
    %p475 = scmp.eq.s32.totalorder %s39, 1
    %p476 = por %p474, %p475
    %p478 = scmp.ne.s32.totalorder %s463, %s477
    %p479 = scmp.eq.s32.totalorder %s39, 0
    %p480 = por %p478, %p479
    %s482 = sadd.s32 %s481, 1
    %p485 = scmp.eq.s32.totalorder %s33, 1
    %p486 = scmp.ne.s32.totalorder %s481, %s483
    %p487 = scmp.eq.s32.totalorder %s33, 0
    %p488 = por %p486, %p487
    %p489 = scmp.ne.s32.totalorder %s481, %s483
    %p490 = scmp.eq.s32.totalorder %s38, 1
    %p491 = por %p489, %p490
    %p492 = scmp.ne.s32.totalorder %s483, %s484
    %p493 = scmp.eq.s32.totalorder %s38, 0
    %p494 = por %p492, %p493
    %p495 = scmp.ne.s32.totalorder %s483, %s484
    %p496 = scmp.eq.s32.totalorder %s39, 1
    %p497 = por %p495, %p496
    %p499 = scmp.ne.s32.totalorder %s484, %s498
    %p500 = scmp.eq.s32.totalorder %s39, 0
    %p501 = por %p499, %p500
    %s503 = sadd.s32 %s502, 1
    %p506 = scmp.eq.s32.totalorder %s33, 1
    %p507 = scmp.ne.s32.totalorder %s502, %s504
    %p508 = scmp.eq.s32.totalorder %s33, 0
    %p509 = por %p507, %p508
    %p510 = scmp.ne.s32.totalorder %s502, %s504
    %p511 = scmp.eq.s32.totalorder %s38, 1
    %p512 = por %p510, %p511
    %p513 = scmp.ne.s32.totalorder %s504, %s505
    %p514 = scmp.eq.s32.totalorder %s38, 0
    %p515 = por %p513, %p514
    %p516 = scmp.ne.s32.totalorder %s504, %s505
    %p517 = scmp.eq.s32.totalorder %s39, 1
    %p518 = por %p516, %p517
    %p520 = scmp.ne.s32.totalorder %s505, %s519
    %p521 = scmp.eq.s32.totalorder %s39, 0
    %p522 = por %p520, %p521
    %s524 = sadd.s32 %s523, 1
    %p527 = scmp.eq.s32.totalorder %s33, 1
    %p528 = scmp.ne.s32.totalorder %s523, %s525
    %p529 = scmp.eq.s32.totalorder %s33, 0
    %p530 = por %p528, %p529
    %p531 = scmp.ne.s32.totalorder %s523, %s525
    %p532 = scmp.eq.s32.totalorder %s38, 1
    %p533 = por %p531, %p532
    %p534 = scmp.ne.s32.totalorder %s525, %s526
    %p535 = scmp.eq.s32.totalorder %s38, 0
    %p536 = por %p534, %p535
    %p537 = scmp.ne.s32.totalorder %s525, %s526
    %p538 = scmp.eq.s32.totalorder %s39, 1
    %p539 = por %p537, %p538
    %p541 = scmp.ne.s32.totalorder %s526, %s540
    %p542 = scmp.eq.s32.totalorder %s39, 0
    %p543 = por %p541, %p542
    %s545 = sadd.s32 %s544, 1
    %p548 = scmp.eq.s32.totalorder %s33, 1
    %p549 = scmp.ne.s32.totalorder %s544, %s546
    %p550 = scmp.eq.s32.totalorder %s33, 0
    %p551 = por %p549, %p550
    %p552 = scmp.ne.s32.totalorder %s544, %s546
    %p553 = scmp.eq.s32.totalorder %s38, 1
    %p554 = por %p552, %p553
    %p555 = scmp.ne.s32.totalorder %s546, %s547
    %p556 = scmp.eq.s32.totalorder %s38, 0
    %p557 = por %p555, %p556
    %p558 = scmp.ne.s32.totalorder %s546, %s547
    %p559 = scmp.eq.s32.totalorder %s39, 1
    %p560 = por %p558, %p559
    %p562 = scmp.ne.s32.totalorder %s547, %s561
    %p563 = scmp.eq.s32.totalorder %s39, 0
    %p564 = por %p562, %p563
    %s566 = sadd.s32 %s565, 1
    %p569 = scmp.eq.s32.totalorder %s33, 1
    %p570 = scmp.ne.s32.totalorder %s565, %s567
    %p571 = scmp.eq.s32.totalorder %s33, 0
    %p572 = por %p570, %p571
    %p573 = scmp.ne.s32.totalorder %s565, %s567
    %p574 = scmp.eq.s32.totalorder %s38, 1
    %p575 = por %p573, %p574
    %p576 = scmp.ne.s32.totalorder %s567, %s568
    %p577 = scmp.eq.s32.totalorder %s38, 0
    %p578 = por %p576, %p577
    %p579 = scmp.ne.s32.totalorder %s567, %s568
    %p580 = scmp.eq.s32.totalorder %s39, 1
    %p581 = por %p579, %p580
    %p583 = scmp.ne.s32.totalorder %s568, %s582
    %p584 = scmp.eq.s32.totalorder %s39, 0
    %p585 = por %p583, %p584
    %s587 = sadd.s32 %s586, 1
    %p590 = scmp.eq.s32.totalorder %s33, 1
    %p591 = scmp.ne.s32.totalorder %s586, %s588
    %p592 = scmp.eq.s32.totalorder %s33, 0
    %p593 = por %p591, %p592
    %p594 = scmp.ne.s32.totalorder %s586, %s588
    %p595 = scmp.eq.s32.totalorder %s38, 1
    %p596 = por %p594, %p595
    %p597 = scmp.ne.s32.totalorder %s588, %s589
    %p598 = scmp.eq.s32.totalorder %s38, 0
    %p599 = por %p597, %p598
    %p600 = scmp.ne.s32.totalorder %s588, %s589
    %p601 = scmp.eq.s32.totalorder %s39, 1
    %p602 = por %p600, %p601
    %p604 = scmp.ne.s32.totalorder %s589, %s603
    %p605 = scmp.eq.s32.totalorder %s39, 0
    %p606 = por %p604, %p605
    %s608 = sadd.s32 %s607, 1
    %p611 = scmp.eq.s32.totalorder %s33, 1
    %p612 = scmp.ne.s32.totalorder %s607, %s609
    %p613 = scmp.eq.s32.totalorder %s33, 0
    %p614 = por %p612, %p613
    %p615 = scmp.ne.s32.totalorder %s607, %s609
    %p616 = scmp.eq.s32.totalorder %s38, 1
    %p617 = por %p615, %p616
    %p618 = scmp.ne.s32.totalorder %s609, %s610
    %p619 = scmp.eq.s32.totalorder %s38, 0
    %p620 = por %p618, %p619
    %p621 = scmp.ne.s32.totalorder %s609, %s610
    %p622 = scmp.eq.s32.totalorder %s39, 1
    %p623 = por %p621, %p622
    %p625 = scmp.ne.s32.totalorder %s610, %s624
    %p626 = scmp.eq.s32.totalorder %s39, 0
    %p627 = por %p625, %p626
    %s628 = ssub.s32 %s33, %s40
    %p629 = scmp.eq.s32.totalorder %s628, 0
    %s631 = sadd.s32 %s630, 1
    %s632 = scalar_select %p629, %s630, %s631
    %p635 = pneg %p629
    %p636 = scmp.eq.s32.totalorder %s33, 1
    %p637 = por %p635, %p636
    %p638 = scmp.ne.s32.totalorder %s630, %s633
    %p639 = scmp.eq.s32.totalorder %s33, 0
    %p640 = por %p638, %p639
    %p641 = scmp.ne.s32.totalorder %s630, %s633
    %p642 = scmp.eq.s32.totalorder %s38, 1
    %p643 = por %p641, %p642
    %p644 = scmp.ne.s32.totalorder %s633, %s634
    %p645 = scmp.eq.s32.totalorder %s38, 0
    %p646 = por %p644, %p645
    %p647 = scmp.ne.s32.totalorder %s633, %s634
    %p648 = scmp.eq.s32.totalorder %s39, 1
    %p649 = por %p647, %p648
    %p651 = scmp.ne.s32.totalorder %s634, %s650
    %p652 = scmp.eq.s32.totalorder %s39, 0
    %p653 = por %p651, %p652
    %p654 = scmp.le.s32.totalorder 1, %s33
    %p655 = scmp.lt.s32.totalorder %s33, 3
    %p656 = pnand %p654, %p655
    %p657 = pneg %p656
    // Predicated region
    $region9: #{transformer_cslr_forward.6} parent=5 // pred_check
      _
    $region10: #{transformer_cslr_forward.6} parent=5 // pred_check_branch
      %659 = sbr.rel (%p656) target = $region12
    $region11: #{transformer_cslr_forward.6} parent=5 // pred_region
      %s660 = ssub.s32 %s33, 1
      // Predicated region
      $region13: #{transformer_cslr_forward.6} parent=11 // pred_check
        %p661 = pneg %p132
      $region14: #{transformer_cslr_forward.6} parent=11 // pred_check_branch
        %663 = sbr.rel (%p661) target = $region16
      $region15: #{transformer_cslr_forward.6} parent=11 // pred_region
        _
      $region16: #{transformer_cslr_forward.6} parent=11 // pred_fallthru
        _
      // Predicated region
      $region17: #{transformer_cslr_forward.6} parent=11 // pred_check
        %p664 = pneg %p179
      $region18: #{transformer_cslr_forward.6} parent=11 // pred_check_branch
        %666 = sbr.rel (%p664) target = $region20
      $region19: #{transformer_cslr_forward.6} parent=11 // pred_region
        _
      $region20: #{transformer_cslr_forward.6} parent=11 // pred_fallthru
        _
      // Predicated region
      $region21: #{transformer_cslr_forward.6} parent=11 // pred_check
        %p667 = pneg %p200
      $region22: #{transformer_cslr_forward.6} parent=11 // pred_check_branch
        %669 = sbr.rel (%p667) target = $region24
      $region23: #{transformer_cslr_forward.6} parent=11 // pred_region
        _
      $region24: #{transformer_cslr_forward.6} parent=11 // pred_fallthru
        _
      // Predicated region
      $region25: #{transformer_cslr_forward.6} parent=11 // pred_check
        %p670 = pneg %p221
      $region26: #{transformer_cslr_forward.6} parent=11 // pred_check_branch
        %672 = sbr.rel (%p670) target = $region28
      $region27: #{transformer_cslr_forward.6} parent=11 // pred_region
        _
      $region28: #{transformer_cslr_forward.6} parent=11 // pred_fallthru
        _
      // Predicated region
      $region29: #{transformer_cslr_forward.6} parent=11 // pred_check
        %p673 = pneg %p242
      $region30: #{transformer_cslr_forward.6} parent=11 // pred_check_branch
        %675 = sbr.rel (%p673) target = $region32
      $region31: #{transformer_cslr_forward.6} parent=11 // pred_region
        _
      $region32: #{transformer_cslr_forward.6} parent=11 // pred_fallthru
        _
      // Predicated region
      $region33: #{transformer_cslr_forward.6} parent=11 // pred_check
        %p676 = pneg %p263
      $region34: #{transformer_cslr_forward.6} parent=11 // pred_check_branch
        %678 = sbr.rel (%p676) target = $region36
      $region35: #{transformer_cslr_forward.6} parent=11 // pred_region
        _
      $region36: #{transformer_cslr_forward.6} parent=11 // pred_fallthru
        _
      // Predicated region
      $region37: #{transformer_cslr_forward.6} parent=11 // pred_check
        %p679 = pneg %p284
      $region38: #{transformer_cslr_forward.6} parent=11 // pred_check_branch
        %681 = sbr.rel (%p679) target = $region40
      $region39: #{transformer_cslr_forward.6} parent=11 // pred_region
        _
      $region40: #{transformer_cslr_forward.6} parent=11 // pred_fallthru
        _
      // Predicated region
      $region41: #{transformer_cslr_forward.6} parent=11 // pred_check
        %p682 = pneg %p305
      $region42: #{transformer_cslr_forward.6} parent=11 // pred_check_branch
        %684 = sbr.rel (%p682) target = $region44
      $region43: #{transformer_cslr_forward.6} parent=11 // pred_region
        _
      $region44: #{transformer_cslr_forward.6} parent=11 // pred_fallthru
        _
      // Predicated region
      $region45: #{transformer_cslr_forward.6} parent=11 // pred_check
        %p685 = pneg %p326
      $region46: #{transformer_cslr_forward.6} parent=11 // pred_check_branch
        %687 = sbr.rel (%p685) target = $region48
      $region47: #{transformer_cslr_forward.6} parent=11 // pred_region
        _
      $region48: #{transformer_cslr_forward.6} parent=11 // pred_fallthru
        _
      // Predicated region
      $region49: #{transformer_cslr_forward.6} parent=11 // pred_check
        %p688 = pneg %p347
      $region50: #{transformer_cslr_forward.6} parent=11 // pred_check_branch
        %690 = sbr.rel (%p688) target = $region52
      $region51: #{transformer_cslr_forward.6} parent=11 // pred_region
        _
      $region52: #{transformer_cslr_forward.6} parent=11 // pred_fallthru
        _
      // Predicated region
      $region53: #{transformer_cslr_forward.6} parent=11 // pred_check
        %p691 = pneg %p368
      $region54: #{transformer_cslr_forward.6} parent=11 // pred_check_branch
        %693 = sbr.rel (%p691) target = $region56
      $region55: #{transformer_cslr_forward.6} parent=11 // pred_region
        _
      $region56: #{transformer_cslr_forward.6} parent=11 // pred_fallthru
        _
      // Predicated region
      $region57: #{transformer_cslr_forward.6} parent=11 // pred_check
        %p694 = pneg %p389
      $region58: #{transformer_cslr_forward.6} parent=11 // pred_check_branch
        %696 = sbr.rel (%p694) target = $region60
      $region59: #{transformer_cslr_forward.6} parent=11 // pred_region
        _
      $region60: #{transformer_cslr_forward.6} parent=11 // pred_fallthru
        _
      // Predicated region
      $region61: #{transformer_cslr_forward.6} parent=11 // pred_check
        %p697 = pneg %p410
      $region62: #{transformer_cslr_forward.6} parent=11 // pred_check_branch
        %699 = sbr.rel (%p697) target = $region64
      $region63: #{transformer_cslr_forward.6} parent=11 // pred_region
        _
      $region64: #{transformer_cslr_forward.6} parent=11 // pred_fallthru
        _
      // Predicated region
      $region65: #{transformer_cslr_forward.6} parent=11 // pred_check
        %p700 = pneg %p431
      $region66: #{transformer_cslr_forward.6} parent=11 // pred_check_branch
        %702 = sbr.rel (%p700) target = $region68
      $region67: #{transformer_cslr_forward.6} parent=11 // pred_region
        _
      $region68: #{transformer_cslr_forward.6} parent=11 // pred_fallthru
        _
      // Predicated region
      $region69: #{transformer_cslr_forward.6} parent=11 // pred_check
        %p703 = pneg %p452
      $region70: #{transformer_cslr_forward.6} parent=11 // pred_check_branch
        %705 = sbr.rel (%p703) target = $region72
      $region71: #{transformer_cslr_forward.6} parent=11 // pred_region
        _
      $region72: #{transformer_cslr_forward.6} parent=11 // pred_fallthru
        _
      // Predicated region
      $region73: #{transformer_cslr_forward.6} parent=11 // pred_check
        %p706 = pneg %p473
      $region74: #{transformer_cslr_forward.6} parent=11 // pred_check_branch
        %708 = sbr.rel (%p706) target = $region76
      $region75: #{transformer_cslr_forward.6} parent=11 // pred_region
        _
      $region76: #{transformer_cslr_forward.6} parent=11 // pred_fallthru
        _
      // Predicated region
      $region77: #{transformer_cslr_forward.6} parent=11 // pred_check
        %p709 = pneg %p494
      $region78: #{transformer_cslr_forward.6} parent=11 // pred_check_branch
        %711 = sbr.rel (%p709) target = $region80
      $region79: #{transformer_cslr_forward.6} parent=11 // pred_region
        _
      $region80: #{transformer_cslr_forward.6} parent=11 // pred_fallthru
        _
      // Predicated region
      $region81: #{transformer_cslr_forward.6} parent=11 // pred_check
        %p712 = pneg %p515
      $region82: #{transformer_cslr_forward.6} parent=11 // pred_check_branch
        %714 = sbr.rel (%p712) target = $region84
      $region83: #{transformer_cslr_forward.6} parent=11 // pred_region
        _
      $region84: #{transformer_cslr_forward.6} parent=11 // pred_fallthru
        _
      // Predicated region
      $region85: #{transformer_cslr_forward.6} parent=11 // pred_check
        %p715 = pneg %p536
      $region86: #{transformer_cslr_forward.6} parent=11 // pred_check_branch
        %717 = sbr.rel (%p715) target = $region88
      $region87: #{transformer_cslr_forward.6} parent=11 // pred_region
        _
      $region88: #{transformer_cslr_forward.6} parent=11 // pred_fallthru
        _
      // Predicated region
      $region89: #{transformer_cslr_forward.6} parent=11 // pred_check
        %p718 = pneg %p557
      $region90: #{transformer_cslr_forward.6} parent=11 // pred_check_branch
        %720 = sbr.rel (%p718) target = $region92
      $region91: #{transformer_cslr_forward.6} parent=11 // pred_region
        _
      $region92: #{transformer_cslr_forward.6} parent=11 // pred_fallthru
        _
      // Predicated region
      $region93: #{transformer_cslr_forward.6} parent=11 // pred_check
        %p721 = pneg %p578
      $region94: #{transformer_cslr_forward.6} parent=11 // pred_check_branch
        %723 = sbr.rel (%p721) target = $region96
      $region95: #{transformer_cslr_forward.6} parent=11 // pred_region
        _
      $region96: #{transformer_cslr_forward.6} parent=11 // pred_fallthru
        _
      // Predicated region
      $region97: #{transformer_cslr_forward.6} parent=11 // pred_check
        %p724 = pneg %p599
      $region98: #{transformer_cslr_forward.6} parent=11 // pred_check_branch
        %726 = sbr.rel (%p724) target = $region100
      $region99: #{transformer_cslr_forward.6} parent=11 // pred_region
        _
      $region100: #{transformer_cslr_forward.6} parent=11 // pred_fallthru
        _
      // Predicated region
      $region101: #{transformer_cslr_forward.6} parent=11 // pred_check
        %p727 = pneg %p620
      $region102: #{transformer_cslr_forward.6} parent=11 // pred_check_branch
        %729 = sbr.rel (%p727) target = $region104
      $region103: #{transformer_cslr_forward.6} parent=11 // pred_region
        _
      $region104: #{transformer_cslr_forward.6} parent=11 // pred_fallthru
        _
    $region12: #{transformer_cslr_forward.6} parent=5 // pred_fallthru
      _
    %p730 = scmp.lt.s32.totalorder %s33, 2
    // Predicated region
    $region105: #{transformer_cslr_forward.6} parent=5 // pred_check
      %p731 = pneg %p730
    $region106: #{transformer_cslr_forward.6} parent=5 // pred_check_branch
      %733 = sbr.rel (%p731) target = $region108
    $region107: #{transformer_cslr_forward.6} parent=5 // pred_region
      // Predicated region
      $region109: #{transformer_cslr_forward.6} parent=107 // pred_check
        %p734 = pneg %p53
      $region110: #{transformer_cslr_forward.6} parent=107 // pred_check_branch
        %736 = sbr.rel (%p734) target = $region112
      $region111: #{transformer_cslr_forward.6} parent=107 // pred_region
        %p737 = scmp.lt.s32.totalorder %s33, 1
        %s738 = scalar_select %p737, %s33, 1
        %s739 = smul.addr %s738, 8
        %s740 = scalar_lea.vmem %s0, %s739
      $region112: #{transformer_cslr_forward.6} parent=107 // pred_fallthru
        _
      // Predicated region
      $region113: #{transformer_cslr_forward.6} parent=107 // pred_check
        %p741 = pneg %p79
      $region114: #{transformer_cslr_forward.6} parent=107 // pred_check_branch
        %743 = sbr.rel (%p741) target = $region116
      $region115: #{transformer_cslr_forward.6} parent=107 // pred_region
        %p744 = scmp.lt.s32.totalorder %s33, 1
        %s745 = scalar_select %p744, %s33, 1
        %s746 = smul.addr %s745, 2
        %s747 = smul.addr %s746, 8
        %s748 = scalar_lea.vmem %s1, %s747
      $region116: #{transformer_cslr_forward.6} parent=107 // pred_fallthru
        _
      // Predicated region
      $region117: #{transformer_cslr_forward.6} parent=107 // pred_check
        %p749 = pneg %p105
      $region118: #{transformer_cslr_forward.6} parent=107 // pred_check_branch
        %751 = sbr.rel (%p749) target = $region120
      $region119: #{transformer_cslr_forward.6} parent=107 // pred_region
        %p752 = scmp.lt.s32.totalorder %s33, 1
        %s753 = scalar_select %p752, %s33, 1
        %s754 = scalar_lea.vmem %s2, %s753
      $region120: #{transformer_cslr_forward.6} parent=107 // pred_fallthru
        _
      // Predicated region
      $region121: #{transformer_cslr_forward.6} parent=107 // pred_check
        %p755 = pneg %p152
      $region122: #{transformer_cslr_forward.6} parent=107 // pred_check_branch
        %757 = sbr.rel (%p755) target = $region124
      $region123: #{transformer_cslr_forward.6} parent=107 // pred_region
        %p758 = scmp.lt.s32.totalorder %s33, 1
        %s759 = scalar_select %p758, %s33, 1
        %s760 = scalar_lea.vmem %s4, %s759
      $region124: #{transformer_cslr_forward.6} parent=107 // pred_fallthru
        _
    $region108: #{transformer_cslr_forward.6} parent=5 // pred_fallthru
      _
    %p761 = scmp.le.s32.totalorder 1, %s33
    %p762 = scmp.lt.s32.totalorder %s33, 3
    %p763 = pnand %p761, %p762
    %p764 = pneg %p763
    // Predicated region
    $region125: #{transformer_cslr_forward.6} parent=5 // pred_check
      _
    $region126: #{transformer_cslr_forward.6} parent=5 // pred_check_branch
      %766 = sbr.rel (%p763) target = $region128
    $region127: #{transformer_cslr_forward.6} parent=5 // pred_region
      %s767 = ssub.s32 %s33, 1
      %p768 = scmp.lt.s32.totalorder %s38, 1
      %s769 = scalar_select %p768, %s38, 1
      %s770 = smul.addr %s769, 8
      %s771 = scalar_lea.vmem %s0, %s770
      %p772 = pneg %p59
      %p773 = pneg %p56
      %p774 = scmp.lt.s32.totalorder %s38, 1
      %s775 = scalar_select %p774, %s38, 1
      %s776 = smul.addr %s775, 2
      %s777 = smul.addr %s776, 8
      %s778 = scalar_lea.vmem %s1, %s777
      %p779 = pneg %p85
      %p780 = pneg %p82
      %p781 = scmp.lt.s32.totalorder %s38, 1
      %s782 = scalar_select %p781, %s38, 1
      %s783 = scalar_lea.vmem %s2, %s782
      %p784 = pneg %p111
      %p785 = pneg %p108
      %p786 = pneg %p132
      %p787 = pneg %p129
      %p788 = scmp.lt.s32.totalorder %s38, 1
      %s789 = scalar_select %p788, %s38, 1
      %s790 = scalar_lea.vmem %s4, %s789
      %p791 = pneg %p158
      %p792 = pneg %p155
      %p793 = pneg %p179
      %p794 = pneg %p176
      %p795 = pneg %p200
      %p796 = pneg %p197
      %p797 = pneg %p221
      %p798 = pneg %p218
      %p799 = pneg %p242
      %p800 = pneg %p239
      %p801 = pneg %p263
      %p802 = pneg %p260
      %p803 = pneg %p284
      %p804 = pneg %p281
      %p805 = pneg %p305
      %p806 = pneg %p302
      %p807 = pneg %p326
      %p808 = pneg %p323
      %p809 = pneg %p347
      %p810 = pneg %p344
      %p811 = pneg %p368
      %p812 = pneg %p365
      %p813 = pneg %p389
      %p814 = pneg %p386
      %p815 = pneg %p410
      %p816 = pneg %p407
      %p817 = pneg %p431
      %p818 = pneg %p428
      %p819 = pneg %p452
      %p820 = pneg %p449
      %p821 = pneg %p473
      %p822 = pneg %p470
      %p823 = pneg %p494
      %p824 = pneg %p491
      %p825 = pneg %p515
      %p826 = pneg %p512
      %p827 = pneg %p536
      %p828 = pneg %p533
      %p829 = pneg %p557
      %p830 = pneg %p554
      %p831 = pneg %p578
      %p832 = pneg %p575
      %p833 = pneg %p599
      %p834 = pneg %p596
      %p835 = pneg %p620
      %p836 = pneg %p617
      %p837 = pneg %p646
      %p838 = pneg %p643
      %p839 = scmp.lt.s32.totalorder %s38, 1
      %s840 = scalar_select %p839, %s38, 1
      %s841 = smul.addr %s840, 8
      %s842 = scalar_lea.vmem %s27, %s841
      %p843 = scmp.lt.s32.totalorder %s38, 1
      %s844 = scalar_select %p843, %s38, 1
      %s845 = smul.addr %s844, 8
      %s846 = scalar_lea.vmem %s0, %s845
      %p847 = scmp.lt.s32.totalorder %s38, 1
      %s848 = scalar_select %p847, %s38, 1
      %s849 = smul.addr %s848, 2
      %s850 = smul.addr %s849, 8
      %s851 = scalar_lea.vmem %s1, %s850
      %p852 = scmp.lt.s32.totalorder %s38, 1
      %s853 = scalar_select %p852, %s38, 1
      %s854 = scalar_lea.vmem %s2, %s853
      %p855 = scmp.lt.s32.totalorder %s38, 1
      %s856 = scalar_select %p855, %s38, 1
      %s857 = scalar_lea.vmem %s4, %s856
      %p858 = scmp.lt.s32.totalorder %s38, 1
      %s859 = scalar_select %p858, %s38, 1
      %s860 = smul.addr %s859, 8
      %s861 = scalar_lea.vmem %s27, %s860
      %v863 = vld [vmem:[%s3] sm:$0xff]
      %v864 = vld [vmem:[%s846] sm:$0xff]
      %v865 = vld [vmem:[%s5] sm:$0x1]
      %v866 = vld [vmem:[%s6] sm:$0x1]
      %vm867 = vcmask 261120
      %v868 = vsel %vm867, %v864, 0.0
      %869 = vadd.xlane.f32.xlu0 %v868
      %v870 = vpop.xlane.xlu0 %869
      %v871 = vrcp.pop 32.0
      %v872 = vmul.f32 %v870, %v871
      %v873 = vsub.f32 %v864, %v872
      %v874 = vmul.f32 %v873, %v873
      %v875 = vsel %vm867, %v874, 0.0
      %876 = vadd.xlane.f32.xlu0 %v875
      %v877 = vpop.xlane.xlu0 %876
      %v878 = vmul.f32 %v877, %v871
      %v879 = vadd.f32 %v878, 1e-05
      %v880 = vrsqrt.pop %v879
      %v881 = vmul.f32 %v873, %v880
      %v883 = vlaneseq
      %v884 = vshrl.u32 %v883, 7
      %v885 = vsub.s32 0, %v884
      %v886 = vrot.slane %v865, %v885
      %v888 = vmul.f32 %v881, %v886
      %v890 = vlaneseq
      %v891 = vshrl.u32 %v890, 7
      %v892 = vsub.s32 0, %v891
      %v893 = vrot.slane %v866, %v892
      %v895 = vadd.f32 %v888, %v893
      %v896 = vpack.c.bf16 %v895, %v895
      %v897 = vld [vmem:[%s7] sm:$0xf]
      %v898 = vld [vmem:[%s7 + $0x4] sm:$0xf]
      %v899 = vld [vmem:[%s7 + $0x8] sm:$0xf]
      %v900 = vld [vmem:[%s7 + $0xc] sm:$0xf]
      %v901 = vld [vmem:[%s8] sm:$0x1]
      %v903 = vlaneseq
      %v904 = vshrl.u32 %v903, 7
      %v905 = vsub.s32 0, %v904
      %v906 = vrot.slane %v901, %v905
      %v912 = vunpack.c.l.b16 %v897
      %v913 = vunpack.c.l.b16 %v898
      %v914 = vunpack.c.l.b16 %v899
      %v915 = vunpack.c.l.b16 %v900
      %v916 = vpack.c.b16 %v913, %v912
      %v917 = vpack.c.b16 %v915, %v914
      %v921 = vsel %vm867, %v896, 0
      %923 = vmatprep.subr.bf16.mxu0 0
      %924 = vmatpush1.bf16.msra.mxu0 0
      %925 = vmatprep.subr.bf16.mxu0 0
      %926 = vmatpush1.bf16.msra.mxu0 0
      %927 = vmatprep.subr.bf16.mxu0 0
      %928 = vmatpush1.bf16.msra.mxu0 0
      %929 = vmatprep.subr.bf16.mxu0 0
      %930 = vmatpush1.bf16.msra.mxu0 0
      %931 = vmatprep.subr.bf16.mxu0 0
      %932 = vmatpush1.bf16.msra.mxu0 0
      %933 = vmatprep.subr.bf16.mxu0 0
      %934 = vmatpush1.bf16.msra.mxu0 0
      %935 = vmatprep.subr.bf16.mxu0 0
      %936 = vmatpush1.bf16.msra.mxu0 %v917
      %937 = vmatprep.subr.bf16.mxu0 0
      %938 = vmatpush1.bf16.msra.mxu0 %v916
      %939 = vmatprep.subr.bf16.mxu0 0
      %940 = vmatpush2.bf16.msra.mxu0 0
      %941 = vmatprep.subr.bf16.mxu0 0
      %942 = vmatpush2.bf16.msra.mxu0 0
      %943 = vmatprep.subr.bf16.mxu0 0
      %944 = vmatpush2.bf16.msra.mxu0 0
      %945 = vmatprep.subr.bf16.mxu0 0
      %946 = vmatpush2.bf16.msra.mxu0 0
      %947 = vmatprep.subr.bf16.mxu0 0
      %948 = vmatpush2.bf16.msra.mxu0 0
      %949 = vmatprep.subr.bf16.mxu0 0
      %950 = vmatpush2.bf16.msra.mxu0 0
      %951 = vmatprep.subr.bf16.mxu0 0
      %952 = vmatpush2.bf16.msra.mxu0 0
      %953 = vmatprep.subr.bf16.mxu0 0
      %954 = vmatpush2.bf16.msra.mxu0 0
      %955 = vmatprep.mubr.bf16.mxu0 0
      %956 = vmatmul.mubr.bf16.gmra.mxu0 %v921
      %v957 = vpop.f32.mrf.mxu0
      %v958 = vadd.f32 %v906, %v957
      %v959 = vpop.f32.mrf.mxu0
      %v960 = vpop.f32.mrf.mxu0
      %v961 = vpop.f32.mrf.mxu0
      %962 = vdwg.mxu0
      %v963 = vld [vmem:[%s854] sm:$0x1]
      %v964 = vpack.c.bf16 %v958, %v958
      %v966 = vlaneseq
      %v967 = vshrl.u32 %v966, 7
      %v968 = vsub.s32 0, %v967
      %v969 = vrot.slane %v963, %v968
      %972 = vrot.lane.b32.xlu0 %v964, 96
      %v973 = vpop.permute.xlu0 %972
      %v975 = vsel %vm867, %v964, 0
      %v978 = vsel %vm867, %v973, 0
      %980 = vmatprep.subr.bf16.mxu0 0
      %981 = vmatpush1.bf16.xpose.msra.mxu0 0
      %982 = vmatprep.subr.bf16.mxu0 0
      %983 = vmatpush1.bf16.xpose.msra.mxu0 0
      %984 = vmatprep.subr.bf16.mxu0 0
      %985 = vmatpush1.bf16.xpose.msra.mxu0 0
      %986 = vmatprep.subr.bf16.mxu0 0
      %987 = vmatpush1.bf16.xpose.msra.mxu0 0
      %988 = vmatprep.subr.bf16.mxu0 0
      %989 = vmatpush1.bf16.xpose.msra.mxu0 0
      %990 = vmatprep.subr.bf16.mxu0 0
      %991 = vmatpush1.bf16.xpose.msra.mxu0 0
      %992 = vmatprep.subr.bf16.mxu0 0
      %993 = vmatpush1.bf16.xpose.msra.mxu0 0
      %994 = vmatprep.subr.bf16.mxu0 0
      %995 = vmatpush1.bf16.xpose.msra.mxu0 %v978
      %996 = vmatprep.subr.bf16.mxu0 0
      %997 = vmatpush2.bf16.xpose.msra.mxu0 0
      %998 = vmatprep.subr.bf16.mxu0 0
      %999 = vmatpush2.bf16.xpose.msra.mxu0 0
      %1000 = vmatprep.subr.bf16.mxu0 0
      %1001 = vmatpush2.bf16.xpose.msra.mxu0 0
      %1002 = vmatprep.subr.bf16.mxu0 0
      %1003 = vmatpush2.bf16.xpose.msra.mxu0 0
      %1004 = vmatprep.subr.bf16.mxu0 0
      %1005 = vmatpush2.bf16.xpose.msra.mxu0 0
      %1006 = vmatprep.subr.bf16.mxu0 0
      %1007 = vmatpush2.bf16.xpose.msra.mxu0 0
      %1008 = vmatprep.subr.bf16.mxu0 0
      %1009 = vmatpush2.bf16.xpose.msra.mxu0 0
      %1010 = vmatprep.subr.bf16.mxu0 0
      %1011 = vmatpush2.bf16.xpose.msra.mxu0 0
      %1012 = vmatprep.mubr.bf16.mxu0 0
      %1013 = vmatmul.mubr.bf16.gmra.mxu0 %v975
      %v1014 = vpop.f32.mrf.mxu0
      %v1015 = vadd.f32 %v969, %v1014
      %v1016 = vpop.f32.mrf.mxu0
      %v1017 = vpop.f32.mrf.mxu0
      %v1018 = vpop.f32.mrf.mxu0
      %1019 = vdwg.mxu0
      %v1020 = vadd.f32 %v1015, %v863
      %vm1021 = vcmask 64512
      %v1022 = vsel %vm1021, %v1020, -inf
      %1023 = vmax.xlane.f32.xlu0 %v1022
      %v1024 = vpop.xlane.xlu0 %1023
      %v1025 = vsub.f32 %v1020, %v1024
      %v1026 = vmul.f32 %v1025, 1.442695
      %v1027 = vpow.pop %v1026
      %v1028 = vsel %vm1021, %v1027, 0.0
      %1029 = vadd.xlane.f32.xlu0 %v1028
      %v1030 = vpop.xlane.xlu0 %1029
      %v1031 = vpack.c.bf16 %v1027, %v1027
      %1032 = vrot.lane.b32.xlu0 %v964, 64
      %v1033 = vpop.permute.xlu0 %1032
      %v1035 = vsel %vm1021, %v1031, 0
      %vm1037 = vcmask 1043456
      %v1039 = vsel %vm1037, %v1033, 0
      %1041 = vmatprep.subr.bf16.mxu0 0
      %1042 = vmatpush1.bf16.msra.mxu0 0
      %1043 = vmatprep.subr.bf16.mxu0 0
      %1044 = vmatpush1.bf16.msra.mxu0 0
      %1045 = vmatprep.subr.bf16.mxu0 0
      %1046 = vmatpush1.bf16.msra.mxu0 0
      %1047 = vmatprep.subr.bf16.mxu0 0
      %1048 = vmatpush1.bf16.msra.mxu0 0
      %1049 = vmatprep.subr.bf16.mxu0 0
      %1050 = vmatpush1.bf16.msra.mxu0 0
      %1051 = vmatprep.subr.bf16.mxu0 0
      %1052 = vmatpush1.bf16.msra.mxu0 0
      %1053 = vmatprep.subr.bf16.mxu0 0
      %1054 = vmatpush1.bf16.msra.mxu0 0
      %1055 = vmatprep.subr.bf16.mxu0 0
      %1056 = vmatpush1.bf16.msra.mxu0 %v1039
      %1057 = vmatprep.subr.bf16.mxu0 0
      %1058 = vmatpush2.bf16.msra.mxu0 0
      %1059 = vmatprep.subr.bf16.mxu0 0
      %1060 = vmatpush2.bf16.msra.mxu0 0
      %1061 = vmatprep.subr.bf16.mxu0 0
      %1062 = vmatpush2.bf16.msra.mxu0 0
      %1063 = vmatprep.subr.bf16.mxu0 0
      %1064 = vmatpush2.bf16.msra.mxu0 0
      %1065 = vmatprep.subr.bf16.mxu0 0
      %1066 = vmatpush2.bf16.msra.mxu0 0
      %1067 = vmatprep.subr.bf16.mxu0 0
      %1068 = vmatpush2.bf16.msra.mxu0 0
      %1069 = vmatprep.subr.bf16.mxu0 0
      %1070 = vmatpush2.bf16.msra.mxu0 0
      %1071 = vmatprep.subr.bf16.mxu0 0
      %1072 = vmatpush2.bf16.msra.mxu0 0
      %1073 = vmatprep.mubr.bf16.mxu0 0
      %1074 = vmatmul.mubr.bf16.gmra.mxu0 %v1035
      %v1075 = vpop.f32.mrf.mxu0
      %v1076 = vadd.f32 0.0, %v1075
      %v1077 = vpop.f32.mrf.mxu0
      %v1078 = vpop.f32.mrf.mxu0
      %v1079 = vpop.f32.mrf.mxu0
      %1080 = vdwg.mxu0
      %v1081 = vrcp.pop %v1030
      %v1082 = vmul.f32 %v1076, %v1081
      %v1083 = vpack.c.bf16 %v1082, %v1082
      %v1084 = vld [vmem:[%s9] sm:$0xf]
      %v1085 = vld [vmem:[%s9 + $0x4] sm:$0xf]
      %v1086 = vld [vmem:[%s9 + $0x8] sm:$0xf]
      %v1087 = vld [vmem:[%s9 + $0xc] sm:$0xf]
      %v1092 = vunpack.c.l.b16 %v1084
      %v1093 = vunpack.c.l.b16 %v1085
      %v1094 = vunpack.c.l.b16 %v1086
      %v1095 = vunpack.c.l.b16 %v1087
      %v1096 = vpack.c.b16 %v1093, %v1092
      %v1097 = vpack.c.b16 %v1095, %v1094
      %v1101 = vsel %vm867, %v1083, 0
      %1103 = vmatprep.subr.bf16.mxu0 0
      %1104 = vmatpush1.bf16.msra.mxu0 0
      %1105 = vmatprep.subr.bf16.mxu0 0
      %1106 = vmatpush1.bf16.msra.mxu0 0
      %1107 = vmatprep.subr.bf16.mxu0 0
      %1108 = vmatpush1.bf16.msra.mxu0 0
      %1109 = vmatprep.subr.bf16.mxu0 0
      %1110 = vmatpush1.bf16.msra.mxu0 0
      %1111 = vmatprep.subr.bf16.mxu0 0
      %1112 = vmatpush1.bf16.msra.mxu0 0
      %1113 = vmatprep.subr.bf16.mxu0 0
      %1114 = vmatpush1.bf16.msra.mxu0 0
      %1115 = vmatprep.subr.bf16.mxu0 0
      %1116 = vmatpush1.bf16.msra.mxu0 %v1097
      %1117 = vmatprep.subr.bf16.mxu0 0
      %1118 = vmatpush1.bf16.msra.mxu0 %v1096
      %1119 = vmatprep.subr.bf16.mxu0 0
      %1120 = vmatpush2.bf16.msra.mxu0 0
      %1121 = vmatprep.subr.bf16.mxu0 0
      %1122 = vmatpush2.bf16.msra.mxu0 0
      %1123 = vmatprep.subr.bf16.mxu0 0
      %1124 = vmatpush2.bf16.msra.mxu0 0
      %1125 = vmatprep.subr.bf16.mxu0 0
      %1126 = vmatpush2.bf16.msra.mxu0 0
      %1127 = vmatprep.subr.bf16.mxu0 0
      %1128 = vmatpush2.bf16.msra.mxu0 0
      %1129 = vmatprep.subr.bf16.mxu0 0
      %1130 = vmatpush2.bf16.msra.mxu0 0
      %1131 = vmatprep.subr.bf16.mxu0 0
      %1132 = vmatpush2.bf16.msra.mxu0 0
      %1133 = vmatprep.subr.bf16.mxu0 0
      %1134 = vmatpush2.bf16.msra.mxu0 0
      %1135 = vmatprep.mubr.bf16.mxu0 0
      %1136 = vmatmul.mubr.bf16.gmra.mxu0 %v1101
      %v1137 = vpop.f32.mrf.mxu0
      %v1138 = vadd.f32 0.0, %v1137
      %v1139 = vpop.f32.mrf.mxu0
      %v1140 = vpop.f32.mrf.mxu0
      %v1141 = vpop.f32.mrf.mxu0
      %1142 = vdwg.mxu0
      %v1143 = vadd.f32 %v864, %v1138
      %v1144 = vld [vmem:[%s10] sm:$0x1]
      %v1146 = vlaneseq
      %v1147 = vshrl.u32 %v1146, 7
      %v1148 = vsub.s32 0, %v1147
      %v1149 = vrot.slane %v1144, %v1148
      %v1151 = vadd.f32 %v1143, %v1149
      %v1152 = vld [vmem:[%s851] sm:$0xff]
      %v1153 = vld [vmem:[%s851 + $0x8] sm:$0xff]
      %v1154 = vld [vmem:[%s11] sm:$0x1]
      %v1155 = vld [vmem:[%s12] sm:$0x1]
      %v1156 = vsel %vm867, %v1152, 0.0
      %1157 = vadd.xlane.f32.xlu0 %v1156
      %v1158 = vpop.xlane.xlu0 %1157
      %v1159 = vsel %vm867, %v1153, 0.0
      %1160 = vadd.xlane.f32.xlu0 %v1159
      %v1161 = vpop.xlane.xlu0 %1160
      %v1162 = vmul.f32 %v1158, %v871
      %v1163 = vmul.f32 %v1161, %v871
      %v1164 = vsub.f32 %v1152, %v1162
      %v1165 = vsub.f32 %v1153, %v1163
      %v1166 = vmul.f32 %v1164, %v1164
      %v1167 = vmul.f32 %v1165, %v1165
      %v1168 = vsel %vm867, %v1166, 0.0
      %1169 = vadd.xlane.f32.xlu0 %v1168
      %v1170 = vpop.xlane.xlu0 %1169
      %v1171 = vsel %vm867, %v1167, 0.0
      %1172 = vadd.xlane.f32.xlu0 %v1171
      %v1173 = vpop.xlane.xlu0 %1172
      %v1174 = vmul.f32 %v1170, %v871
      %v1175 = vmul.f32 %v1173, %v871
      %v1176 = vadd.f32 %v1174, 1e-05
      %v1177 = vadd.f32 %v1175, 1e-05
      %v1178 = vrsqrt.pop %v1176
      %v1179 = vrsqrt.pop %v1177
      %v1180 = vmul.f32 %v1164, %v1178
      %v1181 = vmul.f32 %v1165, %v1179
      %v1183 = vlaneseq
      %v1184 = vshrl.u32 %v1183, 7
      %v1185 = vsub.s32 0, %v1184
      %v1186 = vrot.slane %v1154, %v1185
      %v1188 = vmul.f32 %v1180, %v1186
      %v1189 = vmul.f32 %v1181, %v1186
      %v1191 = vlaneseq
      %v1192 = vshrl.u32 %v1191, 7
      %v1193 = vsub.s32 0, %v1192
      %v1194 = vrot.slane %v1155, %v1193
      %v1196 = vadd.f32 %v1188, %v1194
      %v1197 = vadd.f32 %v1189, %v1194
      %v1198 = vpack.c.bf16 %v1197, %v1196
      %v1199 = vld [vmem:[%s17] sm:$0xf]
      %v1200 = vld [vmem:[%s17 + $0x4] sm:$0xf]
      %v1201 = vld [vmem:[%s17 + $0x8] sm:$0xf]
      %v1202 = vld [vmem:[%s17 + $0xc] sm:$0xf]
      %v1203 = vld [vmem:[%s18] sm:$0x1]
      %v1205 = vlaneseq
      %v1206 = vshrl.u32 %v1205, 7
      %v1207 = vsub.s32 0, %v1206
      %v1208 = vrot.slane %v1203, %v1207
      %v1214 = vunpack.c.l.b16 %v1199
      %v1215 = vunpack.c.l.b16 %v1200
      %v1216 = vunpack.c.l.b16 %v1201
      %v1217 = vunpack.c.l.b16 %v1202
      %v1218 = vpack.c.b16 %v1215, %v1214
      %v1219 = vpack.c.b16 %v1217, %v1216
      %v1223 = vsel %vm867, %v1198, 0
      %1225 = vmatprep.subr.bf16.mxu0 0
      %1226 = vmatpush1.bf16.msra.mxu0 0
      %1227 = vmatprep.subr.bf16.mxu0 0
      %1228 = vmatpush1.bf16.msra.mxu0 0
      %1229 = vmatprep.subr.bf16.mxu0 0
      %1230 = vmatpush1.bf16.msra.mxu0 0
      %1231 = vmatprep.subr.bf16.mxu0 0
      %1232 = vmatpush1.bf16.msra.mxu0 0
      %1233 = vmatprep.subr.bf16.mxu0 0
      %1234 = vmatpush1.bf16.msra.mxu0 0
      %1235 = vmatprep.subr.bf16.mxu0 0
      %1236 = vmatpush1.bf16.msra.mxu0 0
      %1237 = vmatprep.subr.bf16.mxu0 0
      %1238 = vmatpush1.bf16.msra.mxu0 %v1219
      %1239 = vmatprep.subr.bf16.mxu0 0
      %1240 = vmatpush1.bf16.msra.mxu0 %v1218
      %1241 = vmatprep.subr.bf16.mxu0 0
      %1242 = vmatpush2.bf16.msra.mxu0 0
      %1243 = vmatprep.subr.bf16.mxu0 0
      %1244 = vmatpush2.bf16.msra.mxu0 0
      %1245 = vmatprep.subr.bf16.mxu0 0
      %1246 = vmatpush2.bf16.msra.mxu0 0
      %1247 = vmatprep.subr.bf16.mxu0 0
      %1248 = vmatpush2.bf16.msra.mxu0 0
      %1249 = vmatprep.subr.bf16.mxu0 0
      %1250 = vmatpush2.bf16.msra.mxu0 0
      %1251 = vmatprep.subr.bf16.mxu0 0
      %1252 = vmatpush2.bf16.msra.mxu0 0
      %1253 = vmatprep.subr.bf16.mxu0 0
      %1254 = vmatpush2.bf16.msra.mxu0 0
      %1255 = vmatprep.subr.bf16.mxu0 0
      %1256 = vmatpush2.bf16.msra.mxu0 0
      %1257 = vmatprep.mubr.bf16.mxu0 0
      %1258 = vmatmul.mubr.bf16.gmra.mxu0 %v1223
      %v1259 = vpop.f32.mrf.mxu0
      %v1260 = vadd.f32 %v1208, %v1259
      %v1261 = vpop.f32.mrf.mxu0
      %v1262 = vpop.f32.mrf.mxu0
      %v1263 = vadd.f32 %v1208, %v1262
      %v1264 = vpop.f32.mrf.mxu0
      %1265 = vdwg.mxu0
      %v1266 = vld [vmem:[%s13] sm:$0x1]
      %v1267 = vld [vmem:[%s14] sm:$0x1]
      %v1268 = vsel %vm867, %v1151, 0.0
      %1269 = vadd.xlane.f32.xlu0 %v1268
      %v1270 = vpop.xlane.xlu0 %1269
      %v1271 = vmul.f32 %v1270, %v871
      %v1272 = vsub.f32 %v1151, %v1271
      %v1273 = vmul.f32 %v1272, %v1272
      %v1274 = vsel %vm867, %v1273, 0.0
      %1275 = vadd.xlane.f32.xlu0 %v1274
      %v1276 = vpop.xlane.xlu0 %1275
      %v1277 = vmul.f32 %v1276, %v871
      %v1278 = vadd.f32 %v1277, 1e-05
      %v1279 = vrsqrt.pop %v1278
      %v1280 = vmul.f32 %v1272, %v1279
      %v1282 = vlaneseq
      %v1283 = vshrl.u32 %v1282, 7
      %v1284 = vsub.s32 0, %v1283
      %v1285 = vrot.slane %v1266, %v1284
      %v1287 = vmul.f32 %v1280, %v1285
      %v1289 = vlaneseq
      %v1290 = vshrl.u32 %v1289, 7
      %v1291 = vsub.s32 0, %v1290
      %v1292 = vrot.slane %v1267, %v1291
      %v1294 = vadd.f32 %v1287, %v1292
      %v1295 = vpack.c.bf16 %v1294, %v1294
      %v1296 = vld [vmem:[%s15] sm:$0xf]
      %v1297 = vld [vmem:[%s15 + $0x4] sm:$0xf]
      %v1298 = vld [vmem:[%s15 + $0x8] sm:$0xf]
      %v1299 = vld [vmem:[%s15 + $0xc] sm:$0xf]
      %v1300 = vld [vmem:[%s16] sm:$0x1]
      %v1302 = vlaneseq
      %v1303 = vshrl.u32 %v1302, 7
      %v1304 = vsub.s32 0, %v1303
      %v1305 = vrot.slane %v1300, %v1304
      %v1311 = vunpack.c.l.b16 %v1296
      %v1312 = vunpack.c.l.b16 %v1297
      %v1313 = vunpack.c.l.b16 %v1298
      %v1314 = vunpack.c.l.b16 %v1299
      %v1315 = vpack.c.b16 %v1312, %v1311
      %v1316 = vpack.c.b16 %v1314, %v1313
      %v1320 = vsel %vm867, %v1295, 0
      %1322 = vmatprep.subr.bf16.mxu0 0
      %1323 = vmatpush1.bf16.msra.mxu0 0
      %1324 = vmatprep.subr.bf16.mxu0 0
      %1325 = vmatpush1.bf16.msra.mxu0 0
      %1326 = vmatprep.subr.bf16.mxu0 0
      %1327 = vmatpush1.bf16.msra.mxu0 0
      %1328 = vmatprep.subr.bf16.mxu0 0
      %1329 = vmatpush1.bf16.msra.mxu0 0
      %1330 = vmatprep.subr.bf16.mxu0 0
      %1331 = vmatpush1.bf16.msra.mxu0 0
      %1332 = vmatprep.subr.bf16.mxu0 0
      %1333 = vmatpush1.bf16.msra.mxu0 0
      %1334 = vmatprep.subr.bf16.mxu0 0
      %1335 = vmatpush1.bf16.msra.mxu0 %v1316
      %1336 = vmatprep.subr.bf16.mxu0 0
      %1337 = vmatpush1.bf16.msra.mxu0 %v1315
      %1338 = vmatprep.subr.bf16.mxu0 0
      %1339 = vmatpush2.bf16.msra.mxu0 0
      %1340 = vmatprep.subr.bf16.mxu0 0
      %1341 = vmatpush2.bf16.msra.mxu0 0
      %1342 = vmatprep.subr.bf16.mxu0 0
      %1343 = vmatpush2.bf16.msra.mxu0 0
      %1344 = vmatprep.subr.bf16.mxu0 0
      %1345 = vmatpush2.bf16.msra.mxu0 0
      %1346 = vmatprep.subr.bf16.mxu0 0
      %1347 = vmatpush2.bf16.msra.mxu0 0
      %1348 = vmatprep.subr.bf16.mxu0 0
      %1349 = vmatpush2.bf16.msra.mxu0 0
      %1350 = vmatprep.subr.bf16.mxu0 0
      %1351 = vmatpush2.bf16.msra.mxu0 0
      %1352 = vmatprep.subr.bf16.mxu0 0
      %1353 = vmatpush2.bf16.msra.mxu0 0
      %1354 = vmatprep.mubr.bf16.mxu0 0
      %1355 = vmatmul.mubr.bf16.gmra.mxu0 %v1320
      %v1356 = vpop.f32.mrf.mxu0
      %v1357 = vadd.f32 %v1305, %v1356
      %v1358 = vpop.f32.mrf.mxu0
      %v1359 = vpop.f32.mrf.mxu0
      %v1360 = vpop.f32.mrf.mxu0
      %1361 = vdwg.mxu0
      %v1362 = vld [vmem:[%s857] sm:$0x1]
      %v1363 = vpack.c.bf16 %v1357, %v1357
      %v1364 = vpack.c.bf16 %v1263, %v1260
      %v1366 = vlaneseq
      %v1367 = vshrl.u32 %v1366, 7
      %v1368 = vsub.s32 0, %v1367
      %v1369 = vrot.slane %v1362, %v1368
      %v1372 = vsel %vm867, %v1363, 0
      %v1375 = vsel %vm867, %v1364, 0
      %1377 = vmatprep.subr.bf16.mxu0 0
      %1378 = vmatpush1.bf16.xpose.msra.mxu0 0
      %1379 = vmatprep.subr.bf16.mxu0 0
      %1380 = vmatpush1.bf16.xpose.msra.mxu0 0
      %1381 = vmatprep.subr.bf16.mxu0 0
      %1382 = vmatpush1.bf16.xpose.msra.mxu0 0
      %1383 = vmatprep.subr.bf16.mxu0 0
      %1384 = vmatpush1.bf16.xpose.msra.mxu0 0
      %1385 = vmatprep.subr.bf16.mxu0 0
      %1386 = vmatpush1.bf16.xpose.msra.mxu0 0
      %1387 = vmatprep.subr.bf16.mxu0 0
      %1388 = vmatpush1.bf16.xpose.msra.mxu0 0
      %1389 = vmatprep.subr.bf16.mxu0 0
      %1390 = vmatpush1.bf16.xpose.msra.mxu0 0
      %1391 = vmatprep.subr.bf16.mxu0 0
      %1392 = vmatpush1.bf16.xpose.msra.mxu0 %v1375
      %1393 = vmatprep.subr.bf16.mxu0 0
      %1394 = vmatpush2.bf16.xpose.msra.mxu0 0
      %1395 = vmatprep.subr.bf16.mxu0 0
      %1396 = vmatpush2.bf16.xpose.msra.mxu0 0
      %1397 = vmatprep.subr.bf16.mxu0 0
      %1398 = vmatpush2.bf16.xpose.msra.mxu0 0
      %1399 = vmatprep.subr.bf16.mxu0 0
      %1400 = vmatpush2.bf16.xpose.msra.mxu0 0
      %1401 = vmatprep.subr.bf16.mxu0 0
      %1402 = vmatpush2.bf16.xpose.msra.mxu0 0
      %1403 = vmatprep.subr.bf16.mxu0 0
      %1404 = vmatpush2.bf16.xpose.msra.mxu0 0
      %1405 = vmatprep.subr.bf16.mxu0 0
      %1406 = vmatpush2.bf16.xpose.msra.mxu0 0
      %1407 = vmatprep.subr.bf16.mxu0 0
      %1408 = vmatpush2.bf16.xpose.msra.mxu0 0
      %1409 = vmatprep.mubr.bf16.mxu0 0
      %1410 = vmatmul.mubr.bf16.gmra.mxu0 %v1372
      %v1411 = vpop.f32.mrf.mxu0
      %v1412 = vadd.f32 %v1369, %v1411
      %v1413 = vpop.f32.mrf.mxu0
      %v1414 = vpop.f32.mrf.mxu0
      %v1415 = vpop.f32.mrf.mxu0
      %1416 = vdwg.mxu0
      %vm1417 = vcmask 130048
      %v1418 = vsel %vm1417, %v1412, -inf
      %1419 = vmax.xlane.f32.xlu0 %v1418
      %v1420 = vpop.xlane.xlu0 %1419
      %v1421 = vsub.f32 %v1412, %v1420
      %v1422 = vmul.f32 %v1421, 1.442695
      %v1423 = vpow.pop %v1422
      %v1424 = vsel %vm1417, %v1423, 0.0
      %1425 = vadd.xlane.f32.xlu0 %v1424
      %v1426 = vpop.xlane.xlu0 %1425
      %v1427 = vpack.c.bf16 %v1423, %v1423
      %1429 = vrot.lane.b32.xlu0 %v1364, 96
      %v1430 = vpop.permute.xlu0 %1429
      %v1433 = vsel %vm1417, %v1427, 0
      %1435 = vmatprep.subr.bf16.mxu0 0
      %1436 = vmatpush1.bf16.msra.mxu0 0
      %1437 = vmatprep.subr.bf16.mxu0 0
      %1438 = vmatpush1.bf16.msra.mxu0 0
      %1439 = vmatprep.subr.bf16.mxu0 0
      %1440 = vmatpush1.bf16.msra.mxu0 0
      %1441 = vmatprep.subr.bf16.mxu0 0
      %1442 = vmatpush1.bf16.msra.mxu0 0
      %1443 = vmatprep.subr.bf16.mxu0 0
      %1444 = vmatpush1.bf16.msra.mxu0 0
      %1445 = vmatprep.subr.bf16.mxu0 0
      %1446 = vmatpush1.bf16.msra.mxu0 0
      %1447 = vmatprep.subr.bf16.mxu0 0
      %1448 = vmatpush1.bf16.msra.mxu0 0
      %1449 = vmatprep.subr.bf16.mxu0 0
      %1450 = vmatpush1.bf16.msra.mxu0 %v1430
      %1451 = vmatprep.subr.bf16.mxu0 0
      %1452 = vmatpush2.bf16.msra.mxu0 0
      %1453 = vmatprep.subr.bf16.mxu0 0
      %1454 = vmatpush2.bf16.msra.mxu0 0
      %1455 = vmatprep.subr.bf16.mxu0 0
      %1456 = vmatpush2.bf16.msra.mxu0 0
      %1457 = vmatprep.subr.bf16.mxu0 0
      %1458 = vmatpush2.bf16.msra.mxu0 0
      %1459 = vmatprep.subr.bf16.mxu0 0
      %1460 = vmatpush2.bf16.msra.mxu0 0
      %1461 = vmatprep.subr.bf16.mxu0 0
      %1462 = vmatpush2.bf16.msra.mxu0 0
      %1463 = vmatprep.subr.bf16.mxu0 0
      %1464 = vmatpush2.bf16.msra.mxu0 0
      %1465 = vmatprep.subr.bf16.mxu0 0
      %1466 = vmatpush2.bf16.msra.mxu0 0
      %1467 = vmatprep.mubr.bf16.mxu0 0
      %1468 = vmatmul.mubr.bf16.gmra.mxu0 %v1433
      %v1469 = vpop.f32.mrf.mxu0
      %v1470 = vadd.f32 0.0, %v1469
      %v1471 = vpop.f32.mrf.mxu0
      %v1472 = vpop.f32.mrf.mxu0
      %v1473 = vpop.f32.mrf.mxu0
      %1474 = vdwg.mxu0
      %v1475 = vrcp.pop %v1426
      %v1476 = vmul.f32 %v1470, %v1475
      %v1477 = vpack.c.bf16 %v1476, %v1476
      %v1478 = vld [vmem:[%s19] sm:$0xf]
      %v1479 = vld [vmem:[%s19 + $0x4] sm:$0xf]
      %v1480 = vld [vmem:[%s19 + $0x8] sm:$0xf]
      %v1481 = vld [vmem:[%s19 + $0xc] sm:$0xf]
      %v1486 = vunpack.c.l.b16 %v1478
      %v1487 = vunpack.c.l.b16 %v1479
      %v1488 = vunpack.c.l.b16 %v1480
      %v1489 = vunpack.c.l.b16 %v1481
      %v1490 = vpack.c.b16 %v1487, %v1486
      %v1491 = vpack.c.b16 %v1489, %v1488
      %v1495 = vsel %vm867, %v1477, 0
      %1497 = vmatprep.subr.bf16.mxu0 0
      %1498 = vmatpush1.bf16.msra.mxu0 0
      %1499 = vmatprep.subr.bf16.mxu0 0
      %1500 = vmatpush1.bf16.msra.mxu0 0
      %1501 = vmatprep.subr.bf16.mxu0 0
      %1502 = vmatpush1.bf16.msra.mxu0 0
      %1503 = vmatprep.subr.bf16.mxu0 0
      %1504 = vmatpush1.bf16.msra.mxu0 0
      %1505 = vmatprep.subr.bf16.mxu0 0
      %1506 = vmatpush1.bf16.msra.mxu0 0
      %1507 = vmatprep.subr.bf16.mxu0 0
      %1508 = vmatpush1.bf16.msra.mxu0 0
      %1509 = vmatprep.subr.bf16.mxu0 0
      %1510 = vmatpush1.bf16.msra.mxu0 %v1491
      %1511 = vmatprep.subr.bf16.mxu0 0
      %1512 = vmatpush1.bf16.msra.mxu0 %v1490
      %1513 = vmatprep.subr.bf16.mxu0 0
      %1514 = vmatpush2.bf16.msra.mxu0 0
      %1515 = vmatprep.subr.bf16.mxu0 0
      %1516 = vmatpush2.bf16.msra.mxu0 0
      %1517 = vmatprep.subr.bf16.mxu0 0
      %1518 = vmatpush2.bf16.msra.mxu0 0
      %1519 = vmatprep.subr.bf16.mxu0 0
      %1520 = vmatpush2.bf16.msra.mxu0 0
      %1521 = vmatprep.subr.bf16.mxu0 0
      %1522 = vmatpush2.bf16.msra.mxu0 0
      %1523 = vmatprep.subr.bf16.mxu0 0
      %1524 = vmatpush2.bf16.msra.mxu0 0
      %1525 = vmatprep.subr.bf16.mxu0 0
      %1526 = vmatpush2.bf16.msra.mxu0 0
      %1527 = vmatprep.subr.bf16.mxu0 0
      %1528 = vmatpush2.bf16.msra.mxu0 0
      %1529 = vmatprep.mubr.bf16.mxu0 0
      %1530 = vmatmul.mubr.bf16.gmra.mxu0 %v1495
      %v1531 = vpop.f32.mrf.mxu0
      %v1532 = vadd.f32 0.0, %v1531
      %v1533 = vpop.f32.mrf.mxu0
      %v1534 = vpop.f32.mrf.mxu0
      %v1535 = vpop.f32.mrf.mxu0
      %1536 = vdwg.mxu0
      %v1537 = vadd.f32 %v1151, %v1532
      %v1538 = vld [vmem:[%s20] sm:$0x1]
      %v1540 = vlaneseq
      %v1541 = vshrl.u32 %v1540, 7
      %v1542 = vsub.s32 0, %v1541
      %v1543 = vrot.slane %v1538, %v1542
      %v1545 = vadd.f32 %v1537, %v1543
      %v1546 = vld [vmem:[%s21] sm:$0x1]
      %v1547 = vld [vmem:[%s22] sm:$0x1]
      %v1548 = vsel %vm867, %v1545, 0.0
      %1549 = vadd.xlane.f32.xlu0 %v1548
      %v1550 = vpop.xlane.xlu0 %1549
      %v1551 = vmul.f32 %v1550, %v871
      %v1552 = vsub.f32 %v1545, %v1551
      %v1553 = vmul.f32 %v1552, %v1552
      %v1554 = vsel %vm867, %v1553, 0.0
      %1555 = vadd.xlane.f32.xlu0 %v1554
      %v1556 = vpop.xlane.xlu0 %1555
      %v1557 = vmul.f32 %v1556, %v871
      %v1558 = vadd.f32 %v1557, 1e-05
      %v1559 = vrsqrt.pop %v1558
      %v1560 = vmul.f32 %v1552, %v1559
      %v1562 = vlaneseq
      %v1563 = vshrl.u32 %v1562, 7
      %v1564 = vsub.s32 0, %v1563
      %v1565 = vrot.slane %v1546, %v1564
      %v1567 = vmul.f32 %v1560, %v1565
      %v1569 = vlaneseq
      %v1570 = vshrl.u32 %v1569, 7
      %v1571 = vsub.s32 0, %v1570
      %v1572 = vrot.slane %v1547, %v1571
      %v1574 = vadd.f32 %v1567, %v1572
      %v1575 = vpack.c.bf16 %v1574, %v1574
      %v1576 = vld [vmem:[%s23] sm:$0xf]
      %v1577 = vld [vmem:[%s23 + $0x4] sm:$0xf]
      %v1578 = vld [vmem:[%s23 + $0x8] sm:$0xf]
      %v1579 = vld [vmem:[%s23 + $0xc] sm:$0xf]
      %v1580 = vld [vmem:[%s24] sm:$0x1]
      %v1582 = vlaneseq
      %v1583 = vshrl.u32 %v1582, 7
      %v1584 = vsub.s32 0, %v1583
      %v1585 = vrot.slane %v1580, %v1584
      %v1591 = vunpack.c.l.b16 %v1576
      %v1592 = vunpack.c.l.b16 %v1577
      %v1593 = vunpack.c.l.b16 %v1578
      %v1594 = vunpack.c.l.b16 %v1579
      %v1595 = vpack.c.b16 %v1592, %v1591
      %v1596 = vpack.c.b16 %v1594, %v1593
      %v1600 = vsel %vm867, %v1575, 0
      %1602 = vmatprep.subr.bf16.mxu0 0
      %1603 = vmatpush1.bf16.msra.mxu0 0
      %1604 = vmatprep.subr.bf16.mxu0 0
      %1605 = vmatpush1.bf16.msra.mxu0 0
      %1606 = vmatprep.subr.bf16.mxu0 0
      %1607 = vmatpush1.bf16.msra.mxu0 0
      %1608 = vmatprep.subr.bf16.mxu0 0
      %1609 = vmatpush1.bf16.msra.mxu0 0
      %1610 = vmatprep.subr.bf16.mxu0 0
      %1611 = vmatpush1.bf16.msra.mxu0 0
      %1612 = vmatprep.subr.bf16.mxu0 0
      %1613 = vmatpush1.bf16.msra.mxu0 0
      %1614 = vmatprep.subr.bf16.mxu0 0
      %1615 = vmatpush1.bf16.msra.mxu0 %v1596
      %1616 = vmatprep.subr.bf16.mxu0 0
      %1617 = vmatpush1.bf16.msra.mxu0 %v1595
      %1618 = vmatprep.subr.bf16.mxu0 0
      %1619 = vmatpush2.bf16.msra.mxu0 0
      %1620 = vmatprep.subr.bf16.mxu0 0
      %1621 = vmatpush2.bf16.msra.mxu0 0
      %1622 = vmatprep.subr.bf16.mxu0 0
      %1623 = vmatpush2.bf16.msra.mxu0 0
      %1624 = vmatprep.subr.bf16.mxu0 0
      %1625 = vmatpush2.bf16.msra.mxu0 0
      %1626 = vmatprep.subr.bf16.mxu0 0
      %1627 = vmatpush2.bf16.msra.mxu0 0
      %1628 = vmatprep.subr.bf16.mxu0 0
      %1629 = vmatpush2.bf16.msra.mxu0 0
      %1630 = vmatprep.subr.bf16.mxu0 0
      %1631 = vmatpush2.bf16.msra.mxu0 0
      %1632 = vmatprep.subr.bf16.mxu0 0
      %1633 = vmatpush2.bf16.msra.mxu0 0
      %1634 = vmatprep.mubr.bf16.mxu0 0
      %1635 = vmatmul.mubr.bf16.gmra.mxu0 %v1600
      %v1636 = vpop.f32.mrf.mxu0
      %v1637 = vadd.f32 %v1585, %v1636
      %v1638 = vpop.f32.mrf.mxu0
      %v1639 = vpop.f32.mrf.mxu0
      %v1640 = vpop.f32.mrf.mxu0
      %1641 = vdwg.mxu0
      %v1642 = vmax.f32 %v1637, 0.0
      %v1643 = vpack.c.bf16 %v1642, %v1642
      %v1644 = vld [vmem:[%s25] sm:$0xf]
      %v1645 = vld [vmem:[%s25 + $0x4] sm:$0xf]
      %v1646 = vld [vmem:[%s25 + $0x8] sm:$0xf]
      %v1647 = vld [vmem:[%s25 + $0xc] sm:$0xf]
      %v1648 = vld [vmem:[%s25 + $0x10] sm:$0xf]
      %v1649 = vld [vmem:[%s25 + $0x14] sm:$0xf]
      %v1650 = vld [vmem:[%s25 + $0x18] sm:$0xf]
      %v1651 = vld [vmem:[%s25 + $0x1c] sm:$0xf]
      %v1652 = vld [vmem:[%s26] sm:$0x1]
      %v1654 = vlaneseq
      %v1655 = vshrl.u32 %v1654, 7
      %v1656 = vsub.s32 0, %v1655
      %v1657 = vrot.slane %v1652, %v1656
      %v1667 = vunpack.c.l.b16 %v1644
      %v1668 = vunpack.c.l.b16 %v1645
      %v1669 = vunpack.c.l.b16 %v1646
      %v1670 = vunpack.c.l.b16 %v1647
      %v1671 = vunpack.c.l.b16 %v1648
      %v1672 = vunpack.c.l.b16 %v1649
      %v1673 = vunpack.c.l.b16 %v1650
      %v1674 = vunpack.c.l.b16 %v1651
      %v1675 = vpack.c.b16 %v1668, %v1667
      %v1676 = vpack.c.b16 %v1670, %v1669
      %v1677 = vpack.c.b16 %v1672, %v1671
      %v1678 = vpack.c.b16 %v1674, %v1673
      %vm1683 = vcmask 523264
      %v1685 = vsel %vm1683, %v1643, 0
      %1687 = vmatprep.subr.bf16.mxu0 0
      %1688 = vmatpush1.bf16.msra.mxu0 0
      %1689 = vmatprep.subr.bf16.mxu0 0
      %1690 = vmatpush1.bf16.msra.mxu0 0
      %1691 = vmatprep.subr.bf16.mxu0 0
      %1692 = vmatpush1.bf16.msra.mxu0 0
      %1693 = vmatprep.subr.bf16.mxu0 0
      %1694 = vmatpush1.bf16.msra.mxu0 0
      %1695 = vmatprep.subr.bf16.mxu0 0
      %1696 = vmatpush1.bf16.msra.mxu0 %v1678
      %1697 = vmatprep.subr.bf16.mxu0 0
      %1698 = vmatpush1.bf16.msra.mxu0 %v1677
      %1699 = vmatprep.subr.bf16.mxu0 0
      %1700 = vmatpush1.bf16.msra.mxu0 %v1676
      %1701 = vmatprep.subr.bf16.mxu0 0
      %1702 = vmatpush1.bf16.msra.mxu0 %v1675
      %1703 = vmatprep.subr.bf16.mxu0 0
      %1704 = vmatpush2.bf16.msra.mxu0 0
      %1705 = vmatprep.subr.bf16.mxu0 0
      %1706 = vmatpush2.bf16.msra.mxu0 0
      %1707 = vmatprep.subr.bf16.mxu0 0
      %1708 = vmatpush2.bf16.msra.mxu0 0
      %1709 = vmatprep.subr.bf16.mxu0 0
      %1710 = vmatpush2.bf16.msra.mxu0 0
      %1711 = vmatprep.subr.bf16.mxu0 0
      %1712 = vmatpush2.bf16.msra.mxu0 0
      %1713 = vmatprep.subr.bf16.mxu0 0
      %1714 = vmatpush2.bf16.msra.mxu0 0
      %1715 = vmatprep.subr.bf16.mxu0 0
      %1716 = vmatpush2.bf16.msra.mxu0 0
      %1717 = vmatprep.subr.bf16.mxu0 0
      %1718 = vmatpush2.bf16.msra.mxu0 0
      %1719 = vmatprep.mubr.bf16.mxu0 0
      %1720 = vmatmul.mubr.bf16.gmra.mxu0 %v1685
      %v1721 = vpop.f32.mrf.mxu0
      %v1722 = vadd.f32 %v1657, %v1721
      %v1723 = vpop.f32.mrf.mxu0
      %v1724 = vpop.f32.mrf.mxu0
      %v1725 = vpop.f32.mrf.mxu0
      %1726 = vdwg.mxu0
      %v1727 = vadd.f32 %v1545, %v1722
      %1728 = vst.msk [vmem:[%s861] sm:$0xff] %vm867, %v1727
      %p1729 = scmp.lt.s32.totalorder %s38, 1
      %s1730 = scalar_select %p1729, %s38, 1
      %s1731 = smul.addr %s1730, 8
      %s1732 = scalar_lea.vmem %s27, %s1731
      // Predicated region
      $region129: #{transformer_cslr_forward.6} parent=127 // pred_check
        %p1733 = pneg %p643
      $region130: #{transformer_cslr_forward.6} parent=127 // pred_check_branch
        %1735 = sbr.rel (%p1733) target = $region132
      $region131: #{transformer_cslr_forward.6} parent=127 // pred_region
        _
      $region132: #{transformer_cslr_forward.6} parent=127 // pred_fallthru
        _
    $region128: #{transformer_cslr_forward.6} parent=5 // pred_fallthru
      _
    %p1736 = scmp.le.s32.totalorder 2, %s33
    // Predicated region
    $region133: #{transformer_cslr_forward.6} parent=5 // pred_check
      %p1737 = pneg %p1736
    $region134: #{transformer_cslr_forward.6} parent=5 // pred_check_branch
      %1739 = sbr.rel (%p1737) target = $region136
    $region135: #{transformer_cslr_forward.6} parent=5 // pred_region
      %s1740 = ssub.s32 %s33, 2
      // Predicated region
      $region137: #{transformer_cslr_forward.6} parent=135 // pred_check
        %p1741 = pneg %p649
      $region138: #{transformer_cslr_forward.6} parent=135 // pred_check_branch
        %1743 = sbr.rel (%p1741) target = $region140
      $region139: #{transformer_cslr_forward.6} parent=135 // pred_region
        %p1744 = scmp.lt.s32.totalorder %s39, 1
        %s1745 = scalar_select %p1744, %s39, 1
        %s1746 = smul.addr %s1745, 8
        %s1747 = scalar_lea.vmem %s27, %s1746
      $region140: #{transformer_cslr_forward.6} parent=135 // pred_fallthru
        _
    $region136: #{transformer_cslr_forward.6} parent=5 // pred_fallthru
      _
  $region6: #{transformer_cslr_forward.6} parent=0 // loop_footer
    %s37 = sadd.s32 1, %s33
  $region7: #{transformer_cslr_forward.6} parent=0 // loop_footer_branch
    %32 = sbr.rel target = $region3
  $region8: #{transformer_cslr_forward.6} parent=0 // loop_exit
    _

</llo_original>
